<compile_context>
chip_gen: v7x
topology: tpu7x:2x2x1
jax: 0.10.0
libtpu: 0.0.40
codegen_flags: <defaults>
</compile_context>

<pallas_src>
import jax
import jax.numpy as jnp
from jax.experimental import pallas as pl
from jax.experimental.pallas import tpu as pltpu

# ---- hyper-parameters (small, forward-consistent) ---------------------------
BATCH = 2
NUM_GENE = 64
DRUGS_DIM = 128
CELLS_DIM = 64
GENE_IN_DIM = 16
GENE_EMB_DIM = 32
PERT_IN_DIM = 8
EMBED_DIM = 32
FUSED_DIM = 48
N_LAYERS = 2
N_HEADS = 4
PF_DIM = 512
HEAD_DIM = GENE_EMB_DIM // N_HEADS            # 8
CAT_DIM = 2 * EMBED_DIM + 2 * GENE_EMB_DIM    # 128: cat(x_drugs, gene_feat, drug_gene, fused)
BH = BATCH * N_HEADS                          # 8
BG = BATCH * NUM_GENE                         # 128

# ---- packed-buffer row offsets ----------------------------------------------
# w32 : all (·, 32) weight matrices stacked along rows (bf16)
_W_F1 = 0                           # fused_w1 (BN folded), 48 rows
_W_F2 = _W_F1 + FUSED_DIM           # 48, fused_w2, 32 rows
_W_D1 = _W_F2 + EMBED_DIM           # 80, drugs_w1 (BN folded), 128 rows
_W_D2 = _W_D1 + DRUGS_DIM           # 208, drugs_w2, 32 rows
_W_GE = _W_D2 + EMBED_DIM           # 240, gene_embed, 16 rows
_W_CROSS = _W_GE + GENE_IN_DIM      # 256, per layer: cross-V (32) + cross-O (32)
_W32_ROWS = _W_CROSS + N_LAYERS * 2 * GENE_EMB_DIM          # 384

# vec32 : all width-32 bias / LayerNorm rows (f32)
_V_BF1, _V_BF2, _V_BD1, _V_BD2, _V_BGE = 0, 1, 2, 3, 4
_V_LAYER = 5                        # per-layer stride 10:
#   +0 sa_out_b, +1 cross_v_b, +2 cross_o_b, +3/+4 ln0 g/b, +5/+6 ln1 g/b,
#   +7/+8 ln2 g/b, +9 pf2_b
_VEC32_USED = _V_LAYER + 10 * N_LAYERS                        # 25
_VEC32_ROWS = ((_VEC32_USED + 7) // 8) * 8                    # 32

# headw : linear_1 weight rows re-ordered to [gene | drug_gene | drugs | fused]
_H_PER_GENE = 0     # rows  0: 64  -> multiply [relu(gene_feat) | relu(drug_gene)]
_H_PER_ROW = 64     # rows 64:128  -> multiply [relu(x_drugs)   | relu(x_fused) ]
# headvec : width-128 f32 rows: 0 = l1_b, 1 = l2_w, 2 = l2_b (broadcast)
_HV_B1, _HV_W2, _HV_B2 = 0, 1, 2


def idclp_kernel(drug_ref, fused_ref, gene_ref,
                 w32_ref, vec32_ref, headw_ref, headvec_ref,
                 qkvw_ref, qkvb_ref, ow_ref,
                 pf1w_ref, pf1b_ref, pf2w_ref,
                 out_ref):
    f32 = jnp.float32
    bf16 = jnp.bfloat16
    Gd = GENE_EMB_DIM

    def vrow(i):                                      # (1, 32) parameter row
        return vec32_ref[i:i + 1, :]

    def relu(x):
        return jnp.maximum(x, 0.0)

    def layer_norm(x, g, b, eps=1e-5):
        mu = jnp.mean(x, axis=-1, keepdims=True)
        var = jnp.mean(jnp.square(x - mu), axis=-1, keepdims=True)
        return (x - mu) * jax.lax.rsqrt(var + eps) * g + b

    def rows_to_flat(rows, width):                    # (B, width) -> (B*G, width)
        return jnp.broadcast_to(rows[:, None, :],
                                (BATCH, NUM_GENE, width)).reshape(BG, width)

    def split_heads(x2d):                             # (BG, Gd) -> (BH, G, hd)
        return jnp.stack(
            [x2d[b * NUM_GENE:(b + 1) * NUM_GENE, h * HEAD_DIM:(h + 1) * HEAD_DIM]
             for b in range(BATCH) for h in range(N_HEADS)], axis=0)

    def merge_heads(x3d):                             # (BH, G, hd) -> (BG, Gd)
        return jnp.concatenate(
            [jnp.concatenate([x3d[b * N_HEADS + h] for h in range(N_HEADS)], axis=-1)
             for b in range(BATCH)], axis=0)

    # ---------------- per-batch branch MLPs (BN folded into the first linear) --------
    h = relu(jnp.dot(fused_ref[...].astype(bf16), w32_ref[_W_F1:_W_F1 + FUSED_DIM, :],
                     preferred_element_type=f32) + vrow(_V_BF1))
    x_fused = jnp.dot(h.astype(bf16), w32_ref[_W_F2:_W_F2 + EMBED_DIM, :],
                      preferred_element_type=f32) + vrow(_V_BF2)              # (B, E)
    h = relu(jnp.dot(drug_ref[...].astype(bf16), w32_ref[_W_D1:_W_D1 + DRUGS_DIM, :],
                     preferred_element_type=f32) + vrow(_V_BD1))
    x_drugs = jnp.dot(h.astype(bf16), w32_ref[_W_D2:_W_D2 + EMBED_DIM, :],
                      preferred_element_type=f32) + vrow(_V_BD2)              # (B, E)

    # ---------------- gene embedding, all B*G rows at once ----------------
    gene_feat = jnp.dot(gene_ref[...].astype(bf16), w32_ref[_W_GE:_W_GE + GENE_IN_DIM, :],
                        preferred_element_type=f32) + vrow(_V_BGE)            # (BG, Gd)

    # ---------------- DrugGeneAttention: 2-layer decoder ----------------
    scale = 1.0 / float(HEAD_DIM) ** 0.5
    trg = gene_feat
    for l in range(N_LAYERS):
        vb = _V_LAYER + l * 10

        # -- multi-head self-attention: one fused QKV projection --
        qkv = jnp.dot(trg.astype(bf16), qkvw_ref[l],
                      preferred_element_type=f32) + qkvb_ref[l]               # (BG, 96)
        qkv16 = qkv.astype(bf16)
        qh = split_heads(qkv16[:, 0:Gd])                                      # (BH, G, hd)
        kh = split_heads(qkv16[:, Gd:2 * Gd])
        vh = split_heads(qkv16[:, 2 * Gd:3 * Gd])

        s = jnp.einsum('xqe,xke->xqk', qh, kh, preferred_element_type=f32) * scale
        s = s - jnp.max(s, axis=-1, keepdims=True)
        p = jnp.exp(s)
        p = p * pl.reciprocal(jnp.sum(p, axis=-1, keepdims=True), approx=True)
        ctx = jnp.einsum('xqk,xke->xqe', p.astype(bf16), vh,
                         preferred_element_type=f32)                          # (BH, G, hd)
        sa = jnp.dot(merge_heads(ctx).astype(bf16), ow_ref[l],
                     preferred_element_type=f32) + vrow(vb + 0)               # (BG, Gd)
        trg = layer_norm(trg + sa, vrow(vb + 3), vrow(vb + 4))

        # -- cross-attention to the single drug token (exact closed form) --
        cb = _W_CROSS + l * (2 * Gd)
        ca = jnp.dot(x_drugs.astype(bf16), w32_ref[cb:cb + Gd, :],
                     preferred_element_type=f32) + vrow(vb + 1)
        ca = jnp.dot(ca.astype(bf16), w32_ref[cb + Gd:cb + 2 * Gd, :],
                     preferred_element_type=f32) + vrow(vb + 2)               # (B, Gd)
        trg = layer_norm(trg + rows_to_flat(ca, Gd), vrow(vb + 5), vrow(vb + 6))

        # -- position-wise feed-forward (bf16 MXU operands, f32 accumulation) --
        ff = relu(jnp.dot(trg.astype(bf16), pf1w_ref[l],
                          preferred_element_type=f32) + pf1b_ref[l])          # (BG, PF)
        ff = jnp.dot(ff.astype(bf16), pf2w_ref[l],
                     preferred_element_type=f32) + vrow(vb + 9)               # (BG, Gd)
        trg = layer_norm(trg + ff, vrow(vb + 7), vrow(vb + 8))

    drug_gene_embed = trg                                                     # (BG, Gd)

    # ---------------- output head: linear_1 fused into two matmuls ----------------
    # relu applied per concat piece == relu(concat); per-batch pieces computed
    # once per row and broadcast into the per-gene rows.
    per_gene = jnp.concatenate([relu(gene_feat), relu(drug_gene_embed)],
                               axis=-1).astype(bf16)                          # (BG, 64)
    h1 = jnp.dot(per_gene, headw_ref[_H_PER_GENE:_H_PER_GENE + 64, :],
                 preferred_element_type=f32)                                  # (BG, 128)
    per_row = jnp.concatenate([relu(x_drugs), relu(x_fused)],
                              axis=-1).astype(bf16)                           # (B, 64)
    row_df = jnp.dot(per_row, headw_ref[_H_PER_ROW:_H_PER_ROW + 64, :],
                     preferred_element_type=f32) + headvec_ref[_HV_B1:_HV_B1 + 1, :]
    h1 = relu(h1 + rows_to_flat(row_df, 128))                                 # (BG, 128)

    # linear_2 as a VPU multiply + lane reduce (avoids any transpose / lane-sparse matmul)
    o = (jnp.sum(h1 * headvec_ref[_HV_W2:_HV_W2 + 1, :], axis=-1, keepdims=True)
         + headvec_ref[_HV_B2:_HV_B2 + 1, 0:1])                               # (BG, 1)
    out_ref[...] = o


@jax.jit
def idclp_forward(packed, drug_features, cell_features, fused_network,
                  input_gene, input_pert_idose):
    # TODO(synk): cell_features / input_pert_idose feed branches (cells MLP,
    # pert_idose embed, drug_cell_attn) that never reach the returned `out`
    # in the reference forward; they are intentionally unused here.
    del cell_features, input_pert_idose
    B, G = input_gene.shape[0], input_gene.shape[1]
    gene_flat = input_gene.reshape(B * G, input_gene.shape[2])

    vmem_spec = pl.BlockSpec(memory_space=pltpu.MemorySpace.VMEM)
    out = pl.pallas_call(
        idclp_kernel,
        out_shape=jax.ShapeDtypeStruct((B * G, 1), jnp.float32),
        in_specs=[vmem_spec] * (3 + len(packed)),
        out_specs=vmem_spec,
        cost_estimate=pl.CostEstimate(flops=20_000_000, transcendentals=70_000,
                                      bytes_accessed=1_500_000),
        compiler_params=pltpu.CompilerParams(vmem_limit_bytes=8 * 1024 * 1024),
    )(drug_features, fused_network, gene_flat, *packed)
    return out.reshape(B, G)                     # torch: out.squeeze(2)


# ---------------------------------------------------------------------------
# Parameter construction (logical module parameters) and wrapper-side packing.
# ---------------------------------------------------------------------------
def init_params(key):
    ks = iter(jax.random.split(key, 96))
    E, Gd = EMBED_DIM, GENE_EMB_DIM

    def w(shape, scale=0.1):
        return jax.random.normal(next(ks), shape, jnp.float32) * scale

    def b(shape, scale=0.01):
        return jax.random.normal(next(ks), shape, jnp.float32) * scale

    p = {
        "fused_w1": w((FUSED_DIM, E)), "fused_b1": b((E,)),
        "fused_w2": w((E, E)), "fused_b2": b((E,)),
        "drugs_w1": w((DRUGS_DIM, E)), "drugs_b1": b((E,)),
        "drugs_w2": w((E, E)), "drugs_b2": b((E,)),
        "gene_w": w((GENE_IN_DIM, Gd)), "gene_b": b((Gd,)),
        "l1_w": w((CAT_DIM, 128)), "l1_b": b((128,)),
        "l2_w": w((128,)), "l2_b": jnp.zeros((), jnp.float32),
    }
    # BatchNorm1d eval-mode stats / affine (fresh: mean 0, var 1, gamma 1, beta 0)
    for name in ("fused", "drugs"):
        p[f"{name}_bn_gamma"] = jnp.ones((E,), jnp.float32)
        p[f"{name}_bn_beta"] = jnp.zeros((E,), jnp.float32)
        p[f"{name}_bn_mean"] = jnp.zeros((E,), jnp.float32)
        p[f"{name}_bn_var"] = jnp.ones((E,), jnp.float32)
    # DrugGeneAttention (2 layers, 4 heads, pf_dim=512)
    p["sa_w"] = [[w((Gd, Gd)) for _ in range(4)] for _ in range(N_LAYERS)]    # q, k, v, o
    p["sa_b"] = [[b((Gd,)) for _ in range(4)] for _ in range(N_LAYERS)]
    p["ca_vw"] = [w((E, Gd)) for _ in range(N_LAYERS)]                        # cross-attn V proj
    p["ca_vb"] = [b((Gd,)) for _ in range(N_LAYERS)]
    p["ca_ow"] = [w((Gd, Gd)) for _ in range(N_LAYERS)]                       # cross-attn out proj
    p["ca_ob"] = [b((Gd,)) for _ in range(N_LAYERS)]
    p["ln_g"] = [[jnp.ones((Gd,), jnp.float32) for _ in range(3)] for _ in range(N_LAYERS)]
    p["ln_b"] = [[jnp.zeros((Gd,), jnp.float32) for _ in range(3)] for _ in range(N_LAYERS)]
    p["pf1_w"] = [w((Gd, PF_DIM)) for _ in range(N_LAYERS)]
    p["pf1_b"] = [b((PF_DIM,)) for _ in range(N_LAYERS)]
    p["pf2_w"] = [w((PF_DIM, Gd)) for _ in range(N_LAYERS)]
    p["pf2_b"] = [b((Gd,)) for _ in range(N_LAYERS)]
    # TODO(synk): cells branch / pert_idose embed / drug_cell_attn / cross-attn Q,K
    # parameters are omitted: they never influence the returned output.
    return p


def pack_params(p):
    bf16 = jnp.bfloat16

    def fold_bn(w1, b1, gamma, beta, mean, var, eps=1e-5):
        s = gamma / jnp.sqrt(var + eps)
        return w1 * s[None, :], b1 * s + (beta - mean * s)

    wf1, bf1 = fold_bn(p["fused_w1"], p["fused_b1"], p["fused_bn_gamma"],
                       p["fused_bn_beta"], p["fused_bn_mean"], p["fused_bn_var"])
    wd1, bd1 = fold_bn(p["drugs_w1"], p["drugs_b1"], p["drugs_bn_gamma"],
                       p["drugs_bn_beta"], p["drugs_bn_mean"], p["drugs_bn_var"])

    w32 = jnp.concatenate(
        [wf1, p["fused_w2"], wd1, p["drugs_w2"], p["gene_w"]]
        + [m for l in range(N_LAYERS) for m in (p["ca_vw"][l], p["ca_ow"][l])],
        axis=0).astype(bf16)
    assert w32.shape == (_W32_ROWS, GENE_EMB_DIM)

    vec_rows = [bf1, p["fused_b2"], bd1, p["drugs_b2"], p["gene_b"]]
    for l in range(N_LAYERS):
        vec_rows += [p["sa_b"][l][3], p["ca_vb"][l], p["ca_ob"][l],
                     p["ln_g"][l][0], p["ln_b"][l][0],
                     p["ln_g"][l][1], p["ln_b"][l][1],
                     p["ln_g"][l][2], p["ln_b"][l][2],
                     p["pf2_b"][l]]
    vec32 = jnp.stack(vec_rows)
    vec32 = jnp.pad(vec32, ((0, _VEC32_ROWS - vec32.shape[0]), (0, 0)))

    # linear_1 weight rows re-ordered so the fused matmul pairs are contiguous:
    # torch concat order is [drugs 0:32 | gene 32:64 | drug_gene 64:96 | fused 96:128];
    # headw order is        [gene | drug_gene | drugs | fused].
    l1 = p["l1_w"]
    headw = jnp.concatenate([l1[32:96], l1[0:32], l1[96:128]], axis=0).astype(bf16)

    headvec = jnp.stack(
        [p["l1_b"], p["l2_w"], jnp.full((128,), p["l2_b"], jnp.float32)]
        + [jnp.zeros((128,), jnp.float32)] * 5)                               # (8, 128) f32

    # fused [Wq | Wk | Wv] per layer, unreplicated (head split done on activations)
    qkvw = jnp.stack([jnp.concatenate([p["sa_w"][l][0], p["sa_w"][l][1], p["sa_w"][l][2]],
                                      axis=1) for l in range(N_LAYERS)]).astype(bf16)  # (L,32,96)
    qkvb = jnp.stack([jnp.concatenate([p["sa_b"][l][0], p["sa_b"][l][1],
                                       p["sa_b"][l][2]])[None, :]
                      for l in range(N_LAYERS)])                              # (L, 1, 96) f32
    ow = jnp.stack([p["sa_w"][l][3] for l in range(N_LAYERS)]).astype(bf16)   # (L, 32, 32)

    pf1_w = jnp.stack(p["pf1_w"]).astype(bf16)                                # (L, 32, 512)
    pf1_b = jnp.stack(p["pf1_b"])[:, None, :]                                 # (L, 1, 512) f32
    pf2_w = jnp.stack(p["pf2_w"]).astype(bf16)                                # (L, 512, 32)

    return (w32, vec32, headw, headvec, qkvw, qkvb, ow, pf1_w, pf1_b, pf2_w)


if __name__ == "__main__":
    key = jax.random.PRNGKey(0)
    kp, kd, kc, kf, kg, ki = jax.random.split(key, 6)
    packed = pack_params(init_params(kp))

    drug = jax.random.normal(kd, (BATCH, DRUGS_DIM), jnp.float32)
    cell = jax.random.normal(kc, (BATCH, CELLS_DIM), jnp.float32)
    fused = jax.random.normal(kf, (BATCH, FUSED_DIM), jnp.float32)
    gene = jax.random.normal(kg, (BATCH, NUM_GENE, GENE_IN_DIM), jnp.float32)
    pert = jax.random.normal(ki, (BATCH, PERT_IN_DIM), jnp.float32)

    out = idclp_forward(packed, drug, cell, fused, gene, pert)
    out = jax.block_until_ready(out)
    assert out.shape == (BATCH, NUM_GENE)
    assert bool(jnp.all(jnp.isfinite(out)))
    print("KERNEL_OK")
</pallas_src>

<mosaic_0001>
module attributes {stable_mosaic.version = 11 : i64} {
  func.func @idclp_kernel(%arg0: memref<2x128xf32, #tpu.memory_space<vmem>>, %arg1: memref<2x48xf32, #tpu.memory_space<vmem>>, %arg2: memref<128x16xf32, #tpu.memory_space<vmem>>, %arg3: memref<384x32xbf16, #tpu.memory_space<vmem>>, %arg4: memref<32x32xf32, #tpu.memory_space<vmem>>, %arg5: memref<128x128xbf16, #tpu.memory_space<vmem>>, %arg6: memref<8x128xf32, #tpu.memory_space<vmem>>, %arg7: memref<2x32x96xbf16, #tpu.memory_space<vmem>>, %arg8: memref<2x1x96xf32, #tpu.memory_space<vmem>>, %arg9: memref<2x32x32xbf16, #tpu.memory_space<vmem>>, %arg10: memref<2x32x512xbf16, #tpu.memory_space<vmem>>, %arg11: memref<2x1x512xf32, #tpu.memory_space<vmem>>, %arg12: memref<2x512x32xbf16, #tpu.memory_space<vmem>>, %arg13: memref<128x1xf32, #tpu.memory_space<vmem>>) attributes {dimension_semantics = [], scalar_prefetch = 0 : i64, scratch_operands = 0 : i64, tpu.core_type = #tpu.core_type<tc>} {
    %c0 = arith.constant 0 : index
    %c0_0 = arith.constant 0 : index
    %0 = vector.load %arg1[%c0, %c0_0] : memref<2x48xf32, #tpu.memory_space<vmem>>, vector<2x48xf32>
    %1 = arith.truncf %0 : vector<2x48xf32> to vector<2x48xbf16>
    %c0_1 = arith.constant 0 : index
    %c0_2 = arith.constant 0 : index
    %2 = vector.load %arg3[%c0_1, %c0_2] : memref<384x32xbf16, #tpu.memory_space<vmem>>, vector<48x32xbf16>
    %cst = arith.constant dense<0.000000e+00> : vector<2x32xf32>
    %3 = tpu.matmul %1, %2, %cst {dimension_numbers = #tpu.dot_dimension_numbers<[1], [0], [0], [1], [0, 0, 1, 1], [], []>} : vector<2x48xbf16>, vector<48x32xbf16>, vector<2x32xf32> -> vector<2x32xf32>
    %c0_3 = arith.constant 0 : index
    %c0_4 = arith.constant 0 : index
    %4 = vector.load %arg4[%c0_3, %c0_4] : memref<32x32xf32, #tpu.memory_space<vmem>>, vector<1x32xf32>
    %5 = vector.broadcast %4 : vector<1x32xf32> to vector<2x32xf32>
    %6 = arith.addf %3, %5 : vector<2x32xf32>
    %cst_5 = arith.constant 0.000000e+00 : f32
    %7 = vector.broadcast %cst_5 : f32 to vector<2x32xf32>
    %8 = arith.maximumf %6, %7 : vector<2x32xf32>
    %9 = arith.truncf %8 : vector<2x32xf32> to vector<2x32xbf16>
    %c48 = arith.constant 48 : index
    %c0_6 = arith.constant 0 : index
    %10 = vector.load %arg3[%c48, %c0_6] : memref<384x32xbf16, #tpu.memory_space<vmem>>, vector<32x32xbf16>
    %cst_7 = arith.constant dense<0.000000e+00> : vector<2x32xf32>
    %11 = tpu.matmul %9, %10, %cst_7 {dimension_numbers = #tpu.dot_dimension_numbers<[1], [0], [0], [1], [0, 0, 1, 1], [], []>} : vector<2x32xbf16>, vector<32x32xbf16>, vector<2x32xf32> -> vector<2x32xf32>
    %c1 = arith.constant 1 : index
    %c0_8 = arith.constant 0 : index
    %12 = vector.load %arg4[%c1, %c0_8] : memref<32x32xf32, #tpu.memory_space<vmem>>, vector<1x32xf32>
    %13 = vector.broadcast %12 : vector<1x32xf32> to vector<2x32xf32>
    %14 = arith.addf %11, %13 : vector<2x32xf32>
    %c0_9 = arith.constant 0 : index
    %c0_10 = arith.constant 0 : index
    %15 = vector.load %arg0[%c0_9, %c0_10] : memref<2x128xf32, #tpu.memory_space<vmem>>, vector<2x128xf32>
    %16 = arith.truncf %15 : vector<2x128xf32> to vector<2x128xbf16>
    %c80 = arith.constant 80 : index
    %c0_11 = arith.constant 0 : index
    %17 = vector.load %arg3[%c80, %c0_11] : memref<384x32xbf16, #tpu.memory_space<vmem>>, vector<128x32xbf16>
    %cst_12 = arith.constant dense<0.000000e+00> : vector<2x32xf32>
    %18 = tpu.matmul %16, %17, %cst_12 {dimension_numbers = #tpu.dot_dimension_numbers<[1], [0], [0], [1], [0, 0, 1, 1], [], []>} : vector<2x128xbf16>, vector<128x32xbf16>, vector<2x32xf32> -> vector<2x32xf32>
    %c2 = arith.constant 2 : index
    %c0_13 = arith.constant 0 : index
    %19 = vector.load %arg4[%c2, %c0_13] : memref<32x32xf32, #tpu.memory_space<vmem>>, vector<1x32xf32>
    %20 = vector.broadcast %19 : vector<1x32xf32> to vector<2x32xf32>
    %21 = arith.addf %18, %20 : vector<2x32xf32>
    %cst_14 = arith.constant 0.000000e+00 : f32
    %22 = vector.broadcast %cst_14 : f32 to vector<2x32xf32>
    %23 = arith.maximumf %21, %22 : vector<2x32xf32>
    %24 = arith.truncf %23 : vector<2x32xf32> to vector<2x32xbf16>
    %c208 = arith.constant 208 : index
    %c0_15 = arith.constant 0 : index
    %25 = vector.load %arg3[%c208, %c0_15] : memref<384x32xbf16, #tpu.memory_space<vmem>>, vector<32x32xbf16>
    %cst_16 = arith.constant dense<0.000000e+00> : vector<2x32xf32>
    %26 = tpu.matmul %24, %25, %cst_16 {dimension_numbers = #tpu.dot_dimension_numbers<[1], [0], [0], [1], [0, 0, 1, 1], [], []>} : vector<2x32xbf16>, vector<32x32xbf16>, vector<2x32xf32> -> vector<2x32xf32>
    %c3 = arith.constant 3 : index
    %c0_17 = arith.constant 0 : index
    %27 = vector.load %arg4[%c3, %c0_17] : memref<32x32xf32, #tpu.memory_space<vmem>>, vector<1x32xf32>
    %28 = vector.broadcast %27 : vector<1x32xf32> to vector<2x32xf32>
    %29 = arith.addf %26, %28 : vector<2x32xf32>
    %c0_18 = arith.constant 0 : index
    %c0_19 = arith.constant 0 : index
    %30 = vector.load %arg2[%c0_18, %c0_19] : memref<128x16xf32, #tpu.memory_space<vmem>>, vector<128x16xf32>
    %31 = arith.truncf %30 : vector<128x16xf32> to vector<128x16xbf16>
    %c240 = arith.constant 240 : index
    %c0_20 = arith.constant 0 : index
    %32 = vector.load %arg3[%c240, %c0_20] : memref<384x32xbf16, #tpu.memory_space<vmem>>, vector<16x32xbf16>
    %cst_21 = arith.constant dense<0.000000e+00> : vector<128x32xf32>
    %33 = tpu.matmul %31, %32, %cst_21 {dimension_numbers = #tpu.dot_dimension_numbers<[1], [0], [0], [1], [0, 0, 1, 1], [], []>} : vector<128x16xbf16>, vector<16x32xbf16>, vector<128x32xf32> -> vector<128x32xf32>
    %c4 = arith.constant 4 : index
    %c0_22 = arith.constant 0 : index
    %34 = vector.load %arg4[%c4, %c0_22] : memref<32x32xf32, #tpu.memory_space<vmem>>, vector<1x32xf32>
    %35 = vector.broadcast %34 : vector<1x32xf32> to vector<128x32xf32>
    %36 = arith.addf %33, %35 : vector<128x32xf32>
    %37 = arith.truncf %36 : vector<128x32xf32> to vector<128x32xbf16>
    %c0_23 = arith.constant 0 : index
    %c0_24 = arith.constant 0 : index
    %c0_25 = arith.constant 0 : index
    %38 = vector.load %arg7[%c0_23, %c0_24, %c0_25] : memref<2x32x96xbf16, #tpu.memory_space<vmem>>, vector<1x32x96xbf16>
    %39 = vector.shape_cast %38 : vector<1x32x96xbf16> to vector<32x96xbf16>
    %cst_26 = arith.constant dense<0.000000e+00> : vector<128x96xf32>
    %40 = tpu.matmul %37, %39, %cst_26 {dimension_numbers = #tpu.dot_dimension_numbers<[1], [0], [0], [1], [0, 0, 1, 1], [], []>} : vector<128x32xbf16>, vector<32x96xbf16>, vector<128x96xf32> -> vector<128x96xf32>
    %c0_27 = arith.constant 0 : index
    %c0_28 = arith.constant 0 : index
    %c0_29 = arith.constant 0 : index
    %41 = vector.load %arg8[%c0_27, %c0_28, %c0_29] : memref<2x1x96xf32, #tpu.memory_space<vmem>>, vector<1x1x96xf32>
    %42 = vector.shape_cast %41 : vector<1x1x96xf32> to vector<1x96xf32>
    %43 = vector.broadcast %42 : vector<1x96xf32> to vector<128x96xf32>
    %44 = arith.addf %40, %43 : vector<128x96xf32>
    %45 = arith.truncf %44 : vector<128x96xf32> to vector<128x96xbf16>
    %46 = vector.extract_strided_slice %45 {offsets = [0, 0], sizes = [128, 32], strides = [1, 1]} : vector<128x96xbf16> to vector<128x32xbf16>
    %47 = vector.extract_strided_slice %46 {offsets = [0, 0], sizes = [64, 8], strides = [1, 1]} : vector<128x32xbf16> to vector<64x8xbf16>
    %48 = vector.extract_strided_slice %46 {offsets = [0, 8], sizes = [64, 8], strides = [1, 1]} : vector<128x32xbf16> to vector<64x8xbf16>
    %49 = vector.extract_strided_slice %46 {offsets = [0, 16], sizes = [64, 8], strides = [1, 1]} : vector<128x32xbf16> to vector<64x8xbf16>
    %50 = vector.extract_strided_slice %46 {offsets = [0, 24], sizes = [64, 8], strides = [1, 1]} : vector<128x32xbf16> to vector<64x8xbf16>
    %51 = vector.extract_strided_slice %46 {offsets = [64, 0], sizes = [64, 8], strides = [1, 1]} : vector<128x32xbf16> to vector<64x8xbf16>
    %52 = vector.extract_strided_slice %46 {offsets = [64, 8], sizes = [64, 8], strides = [1, 1]} : vector<128x32xbf16> to vector<64x8xbf16>
    %53 = vector.extract_strided_slice %46 {offsets = [64, 16], sizes = [64, 8], strides = [1, 1]} : vector<128x32xbf16> to vector<64x8xbf16>
    %54 = vector.extract_strided_slice %46 {offsets = [64, 24], sizes = [64, 8], strides = [1, 1]} : vector<128x32xbf16> to vector<64x8xbf16>
    %55 = vector.shape_cast %47 : vector<64x8xbf16> to vector<1x64x8xbf16>
    %56 = vector.shape_cast %48 : vector<64x8xbf16> to vector<1x64x8xbf16>
    %57 = vector.shape_cast %49 : vector<64x8xbf16> to vector<1x64x8xbf16>
    %58 = vector.shape_cast %50 : vector<64x8xbf16> to vector<1x64x8xbf16>
    %59 = vector.shape_cast %51 : vector<64x8xbf16> to vector<1x64x8xbf16>
    %60 = vector.shape_cast %52 : vector<64x8xbf16> to vector<1x64x8xbf16>
    %61 = vector.shape_cast %53 : vector<64x8xbf16> to vector<1x64x8xbf16>
    %62 = vector.shape_cast %54 : vector<64x8xbf16> to vector<1x64x8xbf16>
    %63 = tpu.concatenate %55, %56, %57, %58, %59, %60, %61, %62 in 0 : vector<1x64x8xbf16>, vector<1x64x8xbf16>, vector<1x64x8xbf16>, vector<1x64x8xbf16>, vector<1x64x8xbf16>, vector<1x64x8xbf16>, vector<1x64x8xbf16>, vector<1x64x8xbf16> -> vector<8x64x8xbf16>
    %64 = vector.extract_strided_slice %45 {offsets = [0, 32], sizes = [128, 32], strides = [1, 1]} : vector<128x96xbf16> to vector<128x32xbf16>
    %65 = vector.extract_strided_slice %64 {offsets = [0, 0], sizes = [64, 8], strides = [1, 1]} : vector<128x32xbf16> to vector<64x8xbf16>
    %66 = vector.extract_strided_slice %64 {offsets = [0, 8], sizes = [64, 8], strides = [1, 1]} : vector<128x32xbf16> to vector<64x8xbf16>
    %67 = vector.extract_strided_slice %64 {offsets = [0, 16], sizes = [64, 8], strides = [1, 1]} : vector<128x32xbf16> to vector<64x8xbf16>
    %68 = vector.extract_strided_slice %64 {offsets = [0, 24], sizes = [64, 8], strides = [1, 1]} : vector<128x32xbf16> to vector<64x8xbf16>
    %69 = vector.extract_strided_slice %64 {offsets = [64, 0], sizes = [64, 8], strides = [1, 1]} : vector<128x32xbf16> to vector<64x8xbf16>
    %70 = vector.extract_strided_slice %64 {offsets = [64, 8], sizes = [64, 8], strides = [1, 1]} : vector<128x32xbf16> to vector<64x8xbf16>
    %71 = vector.extract_strided_slice %64 {offsets = [64, 16], sizes = [64, 8], strides = [1, 1]} : vector<128x32xbf16> to vector<64x8xbf16>
    %72 = vector.extract_strided_slice %64 {offsets = [64, 24], sizes = [64, 8], strides = [1, 1]} : vector<128x32xbf16> to vector<64x8xbf16>
    %73 = vector.shape_cast %65 : vector<64x8xbf16> to vector<1x64x8xbf16>
    %74 = vector.shape_cast %66 : vector<64x8xbf16> to vector<1x64x8xbf16>
    %75 = vector.shape_cast %67 : vector<64x8xbf16> to vector<1x64x8xbf16>
    %76 = vector.shape_cast %68 : vector<64x8xbf16> to vector<1x64x8xbf16>
    %77 = vector.shape_cast %69 : vector<64x8xbf16> to vector<1x64x8xbf16>
    %78 = vector.shape_cast %70 : vector<64x8xbf16> to vector<1x64x8xbf16>
    %79 = vector.shape_cast %71 : vector<64x8xbf16> to vector<1x64x8xbf16>
    %80 = vector.shape_cast %72 : vector<64x8xbf16> to vector<1x64x8xbf16>
    %81 = tpu.concatenate %73, %74, %75, %76, %77, %78, %79, %80 in 0 : vector<1x64x8xbf16>, vector<1x64x8xbf16>, vector<1x64x8xbf16>, vector<1x64x8xbf16>, vector<1x64x8xbf16>, vector<1x64x8xbf16>, vector<1x64x8xbf16>, vector<1x64x8xbf16> -> vector<8x64x8xbf16>
    %82 = vector.extract_strided_slice %45 {offsets = [0, 64], sizes = [128, 32], strides = [1, 1]} : vector<128x96xbf16> to vector<128x32xbf16>
    %83 = vector.extract_strided_slice %82 {offsets = [0, 0], sizes = [64, 8], strides = [1, 1]} : vector<128x32xbf16> to vector<64x8xbf16>
    %84 = vector.extract_strided_slice %82 {offsets = [0, 8], sizes = [64, 8], strides = [1, 1]} : vector<128x32xbf16> to vector<64x8xbf16>
    %85 = vector.extract_strided_slice %82 {offsets = [0, 16], sizes = [64, 8], strides = [1, 1]} : vector<128x32xbf16> to vector<64x8xbf16>
    %86 = vector.extract_strided_slice %82 {offsets = [0, 24], sizes = [64, 8], strides = [1, 1]} : vector<128x32xbf16> to vector<64x8xbf16>
    %87 = vector.extract_strided_slice %82 {offsets = [64, 0], sizes = [64, 8], strides = [1, 1]} : vector<128x32xbf16> to vector<64x8xbf16>
    %88 = vector.extract_strided_slice %82 {offsets = [64, 8], sizes = [64, 8], strides = [1, 1]} : vector<128x32xbf16> to vector<64x8xbf16>
    %89 = vector.extract_strided_slice %82 {offsets = [64, 16], sizes = [64, 8], strides = [1, 1]} : vector<128x32xbf16> to vector<64x8xbf16>
    %90 = vector.extract_strided_slice %82 {offsets = [64, 24], sizes = [64, 8], strides = [1, 1]} : vector<128x32xbf16> to vector<64x8xbf16>
    %91 = vector.shape_cast %83 : vector<64x8xbf16> to vector<1x64x8xbf16>
    %92 = vector.shape_cast %84 : vector<64x8xbf16> to vector<1x64x8xbf16>
    %93 = vector.shape_cast %85 : vector<64x8xbf16> to vector<1x64x8xbf16>
    %94 = vector.shape_cast %86 : vector<64x8xbf16> to vector<1x64x8xbf16>
    %95 = vector.shape_cast %87 : vector<64x8xbf16> to vector<1x64x8xbf16>
    %96 = vector.shape_cast %88 : vector<64x8xbf16> to vector<1x64x8xbf16>
    %97 = vector.shape_cast %89 : vector<64x8xbf16> to vector<1x64x8xbf16>
    %98 = vector.shape_cast %90 : vector<64x8xbf16> to vector<1x64x8xbf16>
    %99 = tpu.concatenate %91, %92, %93, %94, %95, %96, %97, %98 in 0 : vector<1x64x8xbf16>, vector<1x64x8xbf16>, vector<1x64x8xbf16>, vector<1x64x8xbf16>, vector<1x64x8xbf16>, vector<1x64x8xbf16>, vector<1x64x8xbf16>, vector<1x64x8xbf16> -> vector<8x64x8xbf16>
    "tpu.trace_start"() <{level = 10 : i32, message = "xqe,xke->xqk"}> : () -> ()
    %cst_30 = arith.constant dense<0.000000e+00> : vector<8x64x64xf32>
    %100 = tpu.matmul %63, %81, %cst_30 {dimension_numbers = #tpu.dot_dimension_numbers<[2], [2], [1], [1], [0, 0, 0, 1, 1, 1], [0], [0]>} : vector<8x64x8xbf16>, vector<8x64x8xbf16>, vector<8x64x64xf32> -> vector<8x64x64xf32>
    "tpu.trace_stop"() : () -> ()
    %cst_31 = arith.constant 0.353553385 : f32
    %101 = vector.broadcast %cst_31 : f32 to vector<8x64x64xf32>
    %102 = arith.mulf %100, %101 : vector<8x64x64xf32>
    %cst_32 = arith.constant dense<0xFF800000> : vector<8x64xf32>
    %103 = vector.multi_reduction <maximumf>, %102, %cst_32 [2] : vector<8x64x64xf32> to vector<8x64xf32>
    %104 = vector.shape_cast %103 : vector<8x64xf32> to vector<8x64x1xf32>
    %105 = vector.broadcast %104 : vector<8x64x1xf32> to vector<8x64x64xf32>
    %106 = arith.subf %102, %105 : vector<8x64x64xf32>
    %107 = math.exp %106 : vector<8x64x64xf32>
    %cst_33 = arith.constant dense<0.000000e+00> : vector<8x64xf32>
    %108 = vector.multi_reduction <add>, %107, %cst_33 [2] : vector<8x64x64xf32> to vector<8x64xf32>
    %109 = vector.shape_cast %108 : vector<8x64xf32> to vector<8x64x1xf32>
    %110 = tpu.reciprocal %109 {approx = true} : vector<8x64x1xf32> -> vector<8x64x1xf32>
    %111 = vector.broadcast %110 : vector<8x64x1xf32> to vector<8x64x64xf32>
    %112 = arith.mulf %107, %111 : vector<8x64x64xf32>
    %113 = arith.truncf %112 : vector<8x64x64xf32> to vector<8x64x64xbf16>
    "tpu.trace_start"() <{level = 10 : i32, message = "xqk,xke->xqe"}> : () -> ()
    %cst_34 = arith.constant dense<0.000000e+00> : vector<8x64x8xf32>
    %114 = tpu.matmul %113, %99, %cst_34 {dimension_numbers = #tpu.dot_dimension_numbers<[2], [1], [1], [2], [0, 0, 0, 1, 1, 2], [0], [0]>} : vector<8x64x64xbf16>, vector<8x64x8xbf16>, vector<8x64x8xf32> -> vector<8x64x8xf32>
    "tpu.trace_stop"() : () -> ()
    %115 = vector.extract_strided_slice %114 {offsets = [0, 0, 0], sizes = [1, 64, 8], strides = [1, 1, 1]} : vector<8x64x8xf32> to vector<1x64x8xf32>
    %116 = vector.shape_cast %115 : vector<1x64x8xf32> to vector<64x8xf32>
    %117 = vector.extract_strided_slice %114 {offsets = [1, 0, 0], sizes = [1, 64, 8], strides = [1, 1, 1]} : vector<8x64x8xf32> to vector<1x64x8xf32>
    %118 = vector.shape_cast %117 : vector<1x64x8xf32> to vector<64x8xf32>
    %119 = vector.extract_strided_slice %114 {offsets = [2, 0, 0], sizes = [1, 64, 8], strides = [1, 1, 1]} : vector<8x64x8xf32> to vector<1x64x8xf32>
    %120 = vector.shape_cast %119 : vector<1x64x8xf32> to vector<64x8xf32>
    %121 = vector.extract_strided_slice %114 {offsets = [3, 0, 0], sizes = [1, 64, 8], strides = [1, 1, 1]} : vector<8x64x8xf32> to vector<1x64x8xf32>
    %122 = vector.shape_cast %121 : vector<1x64x8xf32> to vector<64x8xf32>
    %123 = tpu.concatenate %116, %118, %120, %122 in 1 : vector<64x8xf32>, vector<64x8xf32>, vector<64x8xf32>, vector<64x8xf32> -> vector<64x32xf32>
    %124 = vector.extract_strided_slice %114 {offsets = [4, 0, 0], sizes = [1, 64, 8], strides = [1, 1, 1]} : vector<8x64x8xf32> to vector<1x64x8xf32>
    %125 = vector.shape_cast %124 : vector<1x64x8xf32> to vector<64x8xf32>
    %126 = vector.extract_strided_slice %114 {offsets = [5, 0, 0], sizes = [1, 64, 8], strides = [1, 1, 1]} : vector<8x64x8xf32> to vector<1x64x8xf32>
    %127 = vector.shape_cast %126 : vector<1x64x8xf32> to vector<64x8xf32>
    %128 = vector.extract_strided_slice %114 {offsets = [6, 0, 0], sizes = [1, 64, 8], strides = [1, 1, 1]} : vector<8x64x8xf32> to vector<1x64x8xf32>
    %129 = vector.shape_cast %128 : vector<1x64x8xf32> to vector<64x8xf32>
    %130 = vector.extract_strided_slice %114 {offsets = [7, 0, 0], sizes = [1, 64, 8], strides = [1, 1, 1]} : vector<8x64x8xf32> to vector<1x64x8xf32>
    %131 = vector.shape_cast %130 : vector<1x64x8xf32> to vector<64x8xf32>
    %132 = tpu.concatenate %125, %127, %129, %131 in 1 : vector<64x8xf32>, vector<64x8xf32>, vector<64x8xf32>, vector<64x8xf32> -> vector<64x32xf32>
    %133 = tpu.concatenate %123, %132 in 0 : vector<64x32xf32>, vector<64x32xf32> -> vector<128x32xf32>
    %134 = arith.truncf %133 : vector<128x32xf32> to vector<128x32xbf16>
    %c0_35 = arith.constant 0 : index
    %c0_36 = arith.constant 0 : index
    %c0_37 = arith.constant 0 : index
    %135 = vector.load %arg9[%c0_35, %c0_36, %c0_37] : memref<2x32x32xbf16, #tpu.memory_space<vmem>>, vector<1x32x32xbf16>
    %136 = vector.shape_cast %135 : vector<1x32x32xbf16> to vector<32x32xbf16>
    %cst_38 = arith.constant dense<0.000000e+00> : vector<128x32xf32>
    %137 = tpu.matmul %134, %136, %cst_38 {dimension_numbers = #tpu.dot_dimension_numbers<[1], [0], [0], [1], [0, 0, 1, 1], [], []>} : vector<128x32xbf16>, vector<32x32xbf16>, vector<128x32xf32> -> vector<128x32xf32>
    %c5 = arith.constant 5 : index
    %c0_39 = arith.constant 0 : index
    %138 = vector.load %arg4[%c5, %c0_39] : memref<32x32xf32, #tpu.memory_space<vmem>>, vector<1x32xf32>
    %139 = vector.broadcast %138 : vector<1x32xf32> to vector<128x32xf32>
    %140 = arith.addf %137, %139 : vector<128x32xf32>
    %141 = arith.addf %36, %140 : vector<128x32xf32>
    %c8 = arith.constant 8 : index
    %c0_40 = arith.constant 0 : index
    %142 = vector.load %arg4[%c8, %c0_40] : memref<32x32xf32, #tpu.memory_space<vmem>>, vector<1x32xf32>
    %c9 = arith.constant 9 : index
    %c0_41 = arith.constant 0 : index
    %143 = vector.load %arg4[%c9, %c0_41] : memref<32x32xf32, #tpu.memory_space<vmem>>, vector<1x32xf32>
    %cst_42 = arith.constant dense<0.000000e+00> : vector<128xf32>
    %144 = vector.multi_reduction <add>, %141, %cst_42 [1] : vector<128x32xf32> to vector<128xf32>
    %145 = vector.shape_cast %144 : vector<128xf32> to vector<128x1xf32>
    %cst_43 = arith.constant 3.200000e+01 : f32
    %146 = vector.broadcast %cst_43 : f32 to vector<128x1xf32>
    %147 = arith.divf %145, %146 : vector<128x1xf32>
    %148 = vector.broadcast %147 : vector<128x1xf32> to vector<128x32xf32>
    %149 = arith.subf %141, %148 : vector<128x32xf32>
    %150 = arith.mulf %149, %149 : vector<128x32xf32>
    %cst_44 = arith.constant dense<0.000000e+00> : vector<128xf32>
    %151 = vector.multi_reduction <add>, %150, %cst_44 [1] : vector<128x32xf32> to vector<128xf32>
    %152 = vector.shape_cast %151 : vector<128xf32> to vector<128x1xf32>
    %cst_45 = arith.constant 3.200000e+01 : f32
    %153 = vector.broadcast %cst_45 : f32 to vector<128x1xf32>
    %154 = arith.divf %152, %153 : vector<128x1xf32>
    %155 = vector.broadcast %147 : vector<128x1xf32> to vector<128x32xf32>
    %156 = arith.subf %141, %155 : vector<128x32xf32>
    %cst_46 = arith.constant 9.99999974E-6 : f32
    %157 = vector.broadcast %cst_46 : f32 to vector<128x1xf32>
    %158 = arith.addf %154, %157 : vector<128x1xf32>
    %159 = math.rsqrt %158 : vector<128x1xf32>
    %160 = vector.broadcast %159 : vector<128x1xf32> to vector<128x32xf32>
    %161 = arith.mulf %156, %160 : vector<128x32xf32>
    %162 = vector.broadcast %142 : vector<1x32xf32> to vector<128x32xf32>
    %163 = arith.mulf %161, %162 : vector<128x32xf32>
    %164 = vector.broadcast %143 : vector<1x32xf32> to vector<128x32xf32>
    %165 = arith.addf %163, %164 : vector<128x32xf32>
    %166 = arith.truncf %29 : vector<2x32xf32> to vector<2x32xbf16>
    %c256 = arith.constant 256 : index
    %c0_47 = arith.constant 0 : index
    %167 = vector.load %arg3[%c256, %c0_47] : memref<384x32xbf16, #tpu.memory_space<vmem>>, vector<32x32xbf16>
    %cst_48 = arith.constant dense<0.000000e+00> : vector<2x32xf32>
    %168 = tpu.matmul %166, %167, %cst_48 {dimension_numbers = #tpu.dot_dimension_numbers<[1], [0], [0], [1], [0, 0, 1, 1], [], []>} : vector<2x32xbf16>, vector<32x32xbf16>, vector<2x32xf32> -> vector<2x32xf32>
    %c6 = arith.constant 6 : index
    %c0_49 = arith.constant 0 : index
    %169 = vector.load %arg4[%c6, %c0_49] : memref<32x32xf32, #tpu.memory_space<vmem>>, vector<1x32xf32>
    %170 = vector.broadcast %169 : vector<1x32xf32> to vector<2x32xf32>
    %171 = arith.addf %168, %170 : vector<2x32xf32>
    %172 = arith.truncf %171 : vector<2x32xf32> to vector<2x32xbf16>
    %c288 = arith.constant 288 : index
    %c0_50 = arith.constant 0 : index
    %173 = vector.load %arg3[%c288, %c0_50] : memref<384x32xbf16, #tpu.memory_space<vmem>>, vector<32x32xbf16>
    %cst_51 = arith.constant dense<0.000000e+00> : vector<2x32xf32>
    %174 = tpu.matmul %172, %173, %cst_51 {dimension_numbers = #tpu.dot_dimension_numbers<[1], [0], [0], [1], [0, 0, 1, 1], [], []>} : vector<2x32xbf16>, vector<32x32xbf16>, vector<2x32xf32> -> vector<2x32xf32>
    %c7 = arith.constant 7 : index
    %c0_52 = arith.constant 0 : index
    %175 = vector.load %arg4[%c7, %c0_52] : memref<32x32xf32, #tpu.memory_space<vmem>>, vector<1x32xf32>
    %176 = vector.broadcast %175 : vector<1x32xf32> to vector<2x32xf32>
    %177 = arith.addf %174, %176 : vector<2x32xf32>
    %178 = vector.shape_cast %177 : vector<2x32xf32> to vector<2x1x32xf32>
    %179 = vector.shape_cast %178 : vector<2x1x32xf32> to vector<2x1x32xf32>
    %180 = vector.broadcast %179 : vector<2x1x32xf32> to vector<2x64x32xf32>
    %181 = vector.shape_cast %180 : vector<2x64x32xf32> to vector<128x32xf32>
    %182 = arith.addf %165, %181 : vector<128x32xf32>
    %c10 = arith.constant 10 : index
    %c0_53 = arith.constant 0 : index
    %183 = vector.load %arg4[%c10, %c0_53] : memref<32x32xf32, #tpu.memory_space<vmem>>, vector<1x32xf32>
    %c11 = arith.constant 11 : index
    %c0_54 = arith.constant 0 : index
    %184 = vector.load %arg4[%c11, %c0_54] : memref<32x32xf32, #tpu.memory_space<vmem>>, vector<1x32xf32>
    %cst_55 = arith.constant dense<0.000000e+00> : vector<128xf32>
    %185 = vector.multi_reduction <add>, %182, %cst_55 [1] : vector<128x32xf32> to vector<128xf32>
    %186 = vector.shape_cast %185 : vector<128xf32> to vector<128x1xf32>
    %cst_56 = arith.constant 3.200000e+01 : f32
    %187 = vector.broadcast %cst_56 : f32 to vector<128x1xf32>
    %188 = arith.divf %186, %187 : vector<128x1xf32>
    %189 = vector.broadcast %188 : vector<128x1xf32> to vector<128x32xf32>
    %190 = arith.subf %182, %189 : vector<128x32xf32>
    %191 = arith.mulf %190, %190 : vector<128x32xf32>
    %cst_57 = arith.constant dense<0.000000e+00> : vector<128xf32>
    %192 = vector.multi_reduction <add>, %191, %cst_57 [1] : vector<128x32xf32> to vector<128xf32>
    %193 = vector.shape_cast %192 : vector<128xf32> to vector<128x1xf32>
    %cst_58 = arith.constant 3.200000e+01 : f32
    %194 = vector.broadcast %cst_58 : f32 to vector<128x1xf32>
    %195 = arith.divf %193, %194 : vector<128x1xf32>
    %196 = vector.broadcast %188 : vector<128x1xf32> to vector<128x32xf32>
    %197 = arith.subf %182, %196 : vector<128x32xf32>
    %cst_59 = arith.constant 9.99999974E-6 : f32
    %198 = vector.broadcast %cst_59 : f32 to vector<128x1xf32>
    %199 = arith.addf %195, %198 : vector<128x1xf32>
    %200 = math.rsqrt %199 : vector<128x1xf32>
    %201 = vector.broadcast %200 : vector<128x1xf32> to vector<128x32xf32>
    %202 = arith.mulf %197, %201 : vector<128x32xf32>
    %203 = vector.broadcast %183 : vector<1x32xf32> to vector<128x32xf32>
    %204 = arith.mulf %202, %203 : vector<128x32xf32>
    %205 = vector.broadcast %184 : vector<1x32xf32> to vector<128x32xf32>
    %206 = arith.addf %204, %205 : vector<128x32xf32>
    %207 = arith.truncf %206 : vector<128x32xf32> to vector<128x32xbf16>
    %c0_60 = arith.constant 0 : index
    %c0_61 = arith.constant 0 : index
    %c0_62 = arith.constant 0 : index
    %208 = vector.load %arg10[%c0_60, %c0_61, %c0_62] : memref<2x32x512xbf16, #tpu.memory_space<vmem>>, vector<1x32x512xbf16>
    %209 = vector.shape_cast %208 : vector<1x32x512xbf16> to vector<32x512xbf16>
    %cst_63 = arith.constant dense<0.000000e+00> : vector<128x512xf32>
    %210 = tpu.matmul %207, %209, %cst_63 {dimension_numbers = #tpu.dot_dimension_numbers<[1], [0], [0], [1], [0, 0, 1, 1], [], []>} : vector<128x32xbf16>, vector<32x512xbf16>, vector<128x512xf32> -> vector<128x512xf32>
    %c0_64 = arith.constant 0 : index
    %c0_65 = arith.constant 0 : index
    %c0_66 = arith.constant 0 : index
    %211 = vector.load %arg11[%c0_64, %c0_65, %c0_66] : memref<2x1x512xf32, #tpu.memory_space<vmem>>, vector<1x1x512xf32>
    %212 = vector.shape_cast %211 : vector<1x1x512xf32> to vector<1x512xf32>
    %213 = vector.broadcast %212 : vector<1x512xf32> to vector<128x512xf32>
    %214 = arith.addf %210, %213 : vector<128x512xf32>
    %cst_67 = arith.constant 0.000000e+00 : f32
    %215 = vector.broadcast %cst_67 : f32 to vector<128x512xf32>
    %216 = arith.maximumf %214, %215 : vector<128x512xf32>
    %217 = arith.truncf %216 : vector<128x512xf32> to vector<128x512xbf16>
    %c0_68 = arith.constant 0 : index
    %c0_69 = arith.constant 0 : index
    %c0_70 = arith.constant 0 : index
    %218 = vector.load %arg12[%c0_68, %c0_69, %c0_70] : memref<2x512x32xbf16, #tpu.memory_space<vmem>>, vector<1x512x32xbf16>
    %219 = vector.shape_cast %218 : vector<1x512x32xbf16> to vector<512x32xbf16>
    %cst_71 = arith.constant dense<0.000000e+00> : vector<128x32xf32>
    %220 = tpu.matmul %217, %219, %cst_71 {dimension_numbers = #tpu.dot_dimension_numbers<[1], [0], [0], [1], [0, 0, 1, 1], [], []>} : vector<128x512xbf16>, vector<512x32xbf16>, vector<128x32xf32> -> vector<128x32xf32>
    %c14 = arith.constant 14 : index
    %c0_72 = arith.constant 0 : index
    %221 = vector.load %arg4[%c14, %c0_72] : memref<32x32xf32, #tpu.memory_space<vmem>>, vector<1x32xf32>
    %222 = vector.broadcast %221 : vector<1x32xf32> to vector<128x32xf32>
    %223 = arith.addf %220, %222 : vector<128x32xf32>
    %224 = arith.addf %206, %223 : vector<128x32xf32>
    %c12 = arith.constant 12 : index
    %c0_73 = arith.constant 0 : index
    %225 = vector.load %arg4[%c12, %c0_73] : memref<32x32xf32, #tpu.memory_space<vmem>>, vector<1x32xf32>
    %c13 = arith.constant 13 : index
    %c0_74 = arith.constant 0 : index
    %226 = vector.load %arg4[%c13, %c0_74] : memref<32x32xf32, #tpu.memory_space<vmem>>, vector<1x32xf32>
    %cst_75 = arith.constant dense<0.000000e+00> : vector<128xf32>
    %227 = vector.multi_reduction <add>, %224, %cst_75 [1] : vector<128x32xf32> to vector<128xf32>
    %228 = vector.shape_cast %227 : vector<128xf32> to vector<128x1xf32>
    %cst_76 = arith.constant 3.200000e+01 : f32
    %229 = vector.broadcast %cst_76 : f32 to vector<128x1xf32>
    %230 = arith.divf %228, %229 : vector<128x1xf32>
    %231 = vector.broadcast %230 : vector<128x1xf32> to vector<128x32xf32>
    %232 = arith.subf %224, %231 : vector<128x32xf32>
    %233 = arith.mulf %232, %232 : vector<128x32xf32>
    %cst_77 = arith.constant dense<0.000000e+00> : vector<128xf32>
    %234 = vector.multi_reduction <add>, %233, %cst_77 [1] : vector<128x32xf32> to vector<128xf32>
    %235 = vector.shape_cast %234 : vector<128xf32> to vector<128x1xf32>
    %cst_78 = arith.constant 3.200000e+01 : f32
    %236 = vector.broadcast %cst_78 : f32 to vector<128x1xf32>
    %237 = arith.divf %235, %236 : vector<128x1xf32>
    %238 = vector.broadcast %230 : vector<128x1xf32> to vector<128x32xf32>
    %239 = arith.subf %224, %238 : vector<128x32xf32>
    %cst_79 = arith.constant 9.99999974E-6 : f32
    %240 = vector.broadcast %cst_79 : f32 to vector<128x1xf32>
    %241 = arith.addf %237, %240 : vector<128x1xf32>
    %242 = math.rsqrt %241 : vector<128x1xf32>
    %243 = vector.broadcast %242 : vector<128x1xf32> to vector<128x32xf32>
    %244 = arith.mulf %239, %243 : vector<128x32xf32>
    %245 = vector.broadcast %225 : vector<1x32xf32> to vector<128x32xf32>
    %246 = arith.mulf %244, %245 : vector<128x32xf32>
    %247 = vector.broadcast %226 : vector<1x32xf32> to vector<128x32xf32>
    %248 = arith.addf %246, %247 : vector<128x32xf32>
    %249 = arith.truncf %248 : vector<128x32xf32> to vector<128x32xbf16>
    %c1_80 = arith.constant 1 : index
    %c0_81 = arith.constant 0 : index
    %c0_82 = arith.constant 0 : index
    %250 = vector.load %arg7[%c1_80, %c0_81, %c0_82] : memref<2x32x96xbf16, #tpu.memory_space<vmem>>, vector<1x32x96xbf16>
    %251 = vector.shape_cast %250 : vector<1x32x96xbf16> to vector<32x96xbf16>
    %cst_83 = arith.constant dense<0.000000e+00> : vector<128x96xf32>
    %252 = tpu.matmul %249, %251, %cst_83 {dimension_numbers = #tpu.dot_dimension_numbers<[1], [0], [0], [1], [0, 0, 1, 1], [], []>} : vector<128x32xbf16>, vector<32x96xbf16>, vector<128x96xf32> -> vector<128x96xf32>
    %c1_84 = arith.constant 1 : index
    %c0_85 = arith.constant 0 : index
    %c0_86 = arith.constant 0 : index
    %253 = vector.load %arg8[%c1_84, %c0_85, %c0_86] : memref<2x1x96xf32, #tpu.memory_space<vmem>>, vector<1x1x96xf32>
    %254 = vector.shape_cast %253 : vector<1x1x96xf32> to vector<1x96xf32>
    %255 = vector.broadcast %254 : vector<1x96xf32> to vector<128x96xf32>
    %256 = arith.addf %252, %255 : vector<128x96xf32>
    %257 = arith.truncf %256 : vector<128x96xf32> to vector<128x96xbf16>
    %258 = vector.extract_strided_slice %257 {offsets = [0, 0], sizes = [128, 32], strides = [1, 1]} : vector<128x96xbf16> to vector<128x32xbf16>
    %259 = vector.extract_strided_slice %258 {offsets = [0, 0], sizes = [64, 8], strides = [1, 1]} : vector<128x32xbf16> to vector<64x8xbf16>
    %260 = vector.extract_strided_slice %258 {offsets = [0, 8], sizes = [64, 8], strides = [1, 1]} : vector<128x32xbf16> to vector<64x8xbf16>
    %261 = vector.extract_strided_slice %258 {offsets = [0, 16], sizes = [64, 8], strides = [1, 1]} : vector<128x32xbf16> to vector<64x8xbf16>
    %262 = vector.extract_strided_slice %258 {offsets = [0, 24], sizes = [64, 8], strides = [1, 1]} : vector<128x32xbf16> to vector<64x8xbf16>
    %263 = vector.extract_strided_slice %258 {offsets = [64, 0], sizes = [64, 8], strides = [1, 1]} : vector<128x32xbf16> to vector<64x8xbf16>
    %264 = vector.extract_strided_slice %258 {offsets = [64, 8], sizes = [64, 8], strides = [1, 1]} : vector<128x32xbf16> to vector<64x8xbf16>
    %265 = vector.extract_strided_slice %258 {offsets = [64, 16], sizes = [64, 8], strides = [1, 1]} : vector<128x32xbf16> to vector<64x8xbf16>
    %266 = vector.extract_strided_slice %258 {offsets = [64, 24], sizes = [64, 8], strides = [1, 1]} : vector<128x32xbf16> to vector<64x8xbf16>
    %267 = vector.shape_cast %259 : vector<64x8xbf16> to vector<1x64x8xbf16>
    %268 = vector.shape_cast %260 : vector<64x8xbf16> to vector<1x64x8xbf16>
    %269 = vector.shape_cast %261 : vector<64x8xbf16> to vector<1x64x8xbf16>
    %270 = vector.shape_cast %262 : vector<64x8xbf16> to vector<1x64x8xbf16>
    %271 = vector.shape_cast %263 : vector<64x8xbf16> to vector<1x64x8xbf16>
    %272 = vector.shape_cast %264 : vector<64x8xbf16> to vector<1x64x8xbf16>
    %273 = vector.shape_cast %265 : vector<64x8xbf16> to vector<1x64x8xbf16>
    %274 = vector.shape_cast %266 : vector<64x8xbf16> to vector<1x64x8xbf16>
    %275 = tpu.concatenate %267, %268, %269, %270, %271, %272, %273, %274 in 0 : vector<1x64x8xbf16>, vector<1x64x8xbf16>, vector<1x64x8xbf16>, vector<1x64x8xbf16>, vector<1x64x8xbf16>, vector<1x64x8xbf16>, vector<1x64x8xbf16>, vector<1x64x8xbf16> -> vector<8x64x8xbf16>
    %276 = vector.extract_strided_slice %257 {offsets = [0, 32], sizes = [128, 32], strides = [1, 1]} : vector<128x96xbf16> to vector<128x32xbf16>
    %277 = vector.extract_strided_slice %276 {offsets = [0, 0], sizes = [64, 8], strides = [1, 1]} : vector<128x32xbf16> to vector<64x8xbf16>
    %278 = vector.extract_strided_slice %276 {offsets = [0, 8], sizes = [64, 8], strides = [1, 1]} : vector<128x32xbf16> to vector<64x8xbf16>
    %279 = vector.extract_strided_slice %276 {offsets = [0, 16], sizes = [64, 8], strides = [1, 1]} : vector<128x32xbf16> to vector<64x8xbf16>
    %280 = vector.extract_strided_slice %276 {offsets = [0, 24], sizes = [64, 8], strides = [1, 1]} : vector<128x32xbf16> to vector<64x8xbf16>
    %281 = vector.extract_strided_slice %276 {offsets = [64, 0], sizes = [64, 8], strides = [1, 1]} : vector<128x32xbf16> to vector<64x8xbf16>
    %282 = vector.extract_strided_slice %276 {offsets = [64, 8], sizes = [64, 8], strides = [1, 1]} : vector<128x32xbf16> to vector<64x8xbf16>
    %283 = vector.extract_strided_slice %276 {offsets = [64, 16], sizes = [64, 8], strides = [1, 1]} : vector<128x32xbf16> to vector<64x8xbf16>
    %284 = vector.extract_strided_slice %276 {offsets = [64, 24], sizes = [64, 8], strides = [1, 1]} : vector<128x32xbf16> to vector<64x8xbf16>
    %285 = vector.shape_cast %277 : vector<64x8xbf16> to vector<1x64x8xbf16>
    %286 = vector.shape_cast %278 : vector<64x8xbf16> to vector<1x64x8xbf16>
    %287 = vector.shape_cast %279 : vector<64x8xbf16> to vector<1x64x8xbf16>
    %288 = vector.shape_cast %280 : vector<64x8xbf16> to vector<1x64x8xbf16>
    %289 = vector.shape_cast %281 : vector<64x8xbf16> to vector<1x64x8xbf16>
    %290 = vector.shape_cast %282 : vector<64x8xbf16> to vector<1x64x8xbf16>
    %291 = vector.shape_cast %283 : vector<64x8xbf16> to vector<1x64x8xbf16>
    %292 = vector.shape_cast %284 : vector<64x8xbf16> to vector<1x64x8xbf16>
    %293 = tpu.concatenate %285, %286, %287, %288, %289, %290, %291, %292 in 0 : vector<1x64x8xbf16>, vector<1x64x8xbf16>, vector<1x64x8xbf16>, vector<1x64x8xbf16>, vector<1x64x8xbf16>, vector<1x64x8xbf16>, vector<1x64x8xbf16>, vector<1x64x8xbf16> -> vector<8x64x8xbf16>
    %294 = vector.extract_strided_slice %257 {offsets = [0, 64], sizes = [128, 32], strides = [1, 1]} : vector<128x96xbf16> to vector<128x32xbf16>
    %295 = vector.extract_strided_slice %294 {offsets = [0, 0], sizes = [64, 8], strides = [1, 1]} : vector<128x32xbf16> to vector<64x8xbf16>
    %296 = vector.extract_strided_slice %294 {offsets = [0, 8], sizes = [64, 8], strides = [1, 1]} : vector<128x32xbf16> to vector<64x8xbf16>
    %297 = vector.extract_strided_slice %294 {offsets = [0, 16], sizes = [64, 8], strides = [1, 1]} : vector<128x32xbf16> to vector<64x8xbf16>
    %298 = vector.extract_strided_slice %294 {offsets = [0, 24], sizes = [64, 8], strides = [1, 1]} : vector<128x32xbf16> to vector<64x8xbf16>
    %299 = vector.extract_strided_slice %294 {offsets = [64, 0], sizes = [64, 8], strides = [1, 1]} : vector<128x32xbf16> to vector<64x8xbf16>
    %300 = vector.extract_strided_slice %294 {offsets = [64, 8], sizes = [64, 8], strides = [1, 1]} : vector<128x32xbf16> to vector<64x8xbf16>
    %301 = vector.extract_strided_slice %294 {offsets = [64, 16], sizes = [64, 8], strides = [1, 1]} : vector<128x32xbf16> to vector<64x8xbf16>
    %302 = vector.extract_strided_slice %294 {offsets = [64, 24], sizes = [64, 8], strides = [1, 1]} : vector<128x32xbf16> to vector<64x8xbf16>
    %303 = vector.shape_cast %295 : vector<64x8xbf16> to vector<1x64x8xbf16>
    %304 = vector.shape_cast %296 : vector<64x8xbf16> to vector<1x64x8xbf16>
    %305 = vector.shape_cast %297 : vector<64x8xbf16> to vector<1x64x8xbf16>
    %306 = vector.shape_cast %298 : vector<64x8xbf16> to vector<1x64x8xbf16>
    %307 = vector.shape_cast %299 : vector<64x8xbf16> to vector<1x64x8xbf16>
    %308 = vector.shape_cast %300 : vector<64x8xbf16> to vector<1x64x8xbf16>
    %309 = vector.shape_cast %301 : vector<64x8xbf16> to vector<1x64x8xbf16>
    %310 = vector.shape_cast %302 : vector<64x8xbf16> to vector<1x64x8xbf16>
    %311 = tpu.concatenate %303, %304, %305, %306, %307, %308, %309, %310 in 0 : vector<1x64x8xbf16>, vector<1x64x8xbf16>, vector<1x64x8xbf16>, vector<1x64x8xbf16>, vector<1x64x8xbf16>, vector<1x64x8xbf16>, vector<1x64x8xbf16>, vector<1x64x8xbf16> -> vector<8x64x8xbf16>
    "tpu.trace_start"() <{level = 10 : i32, message = "xqe,xke->xqk"}> : () -> ()
    %cst_87 = arith.constant dense<0.000000e+00> : vector<8x64x64xf32>
    %312 = tpu.matmul %275, %293, %cst_87 {dimension_numbers = #tpu.dot_dimension_numbers<[2], [2], [1], [1], [0, 0, 0, 1, 1, 1], [0], [0]>} : vector<8x64x8xbf16>, vector<8x64x8xbf16>, vector<8x64x64xf32> -> vector<8x64x64xf32>
    "tpu.trace_stop"() : () -> ()
    %cst_88 = arith.constant 0.353553385 : f32
    %313 = vector.broadcast %cst_88 : f32 to vector<8x64x64xf32>
    %314 = arith.mulf %312, %313 : vector<8x64x64xf32>
    %cst_89 = arith.constant dense<0xFF800000> : vector<8x64xf32>
    %315 = vector.multi_reduction <maximumf>, %314, %cst_89 [2] : vector<8x64x64xf32> to vector<8x64xf32>
    %316 = vector.shape_cast %315 : vector<8x64xf32> to vector<8x64x1xf32>
    %317 = vector.broadcast %316 : vector<8x64x1xf32> to vector<8x64x64xf32>
    %318 = arith.subf %314, %317 : vector<8x64x64xf32>
    %319 = math.exp %318 : vector<8x64x64xf32>
    %cst_90 = arith.constant dense<0.000000e+00> : vector<8x64xf32>
    %320 = vector.multi_reduction <add>, %319, %cst_90 [2] : vector<8x64x64xf32> to vector<8x64xf32>
    %321 = vector.shape_cast %320 : vector<8x64xf32> to vector<8x64x1xf32>
    %322 = tpu.reciprocal %321 {approx = true} : vector<8x64x1xf32> -> vector<8x64x1xf32>
    %323 = vector.broadcast %322 : vector<8x64x1xf32> to vector<8x64x64xf32>
    %324 = arith.mulf %319, %323 : vector<8x64x64xf32>
    %325 = arith.truncf %324 : vector<8x64x64xf32> to vector<8x64x64xbf16>
    "tpu.trace_start"() <{level = 10 : i32, message = "xqk,xke->xqe"}> : () -> ()
    %cst_91 = arith.constant dense<0.000000e+00> : vector<8x64x8xf32>
    %326 = tpu.matmul %325, %311, %cst_91 {dimension_numbers = #tpu.dot_dimension_numbers<[2], [1], [1], [2], [0, 0, 0, 1, 1, 2], [0], [0]>} : vector<8x64x64xbf16>, vector<8x64x8xbf16>, vector<8x64x8xf32> -> vector<8x64x8xf32>
    "tpu.trace_stop"() : () -> ()
    %327 = vector.extract_strided_slice %326 {offsets = [0, 0, 0], sizes = [1, 64, 8], strides = [1, 1, 1]} : vector<8x64x8xf32> to vector<1x64x8xf32>
    %328 = vector.shape_cast %327 : vector<1x64x8xf32> to vector<64x8xf32>
    %329 = vector.extract_strided_slice %326 {offsets = [1, 0, 0], sizes = [1, 64, 8], strides = [1, 1, 1]} : vector<8x64x8xf32> to vector<1x64x8xf32>
    %330 = vector.shape_cast %329 : vector<1x64x8xf32> to vector<64x8xf32>
    %331 = vector.extract_strided_slice %326 {offsets = [2, 0, 0], sizes = [1, 64, 8], strides = [1, 1, 1]} : vector<8x64x8xf32> to vector<1x64x8xf32>
    %332 = vector.shape_cast %331 : vector<1x64x8xf32> to vector<64x8xf32>
    %333 = vector.extract_strided_slice %326 {offsets = [3, 0, 0], sizes = [1, 64, 8], strides = [1, 1, 1]} : vector<8x64x8xf32> to vector<1x64x8xf32>
    %334 = vector.shape_cast %333 : vector<1x64x8xf32> to vector<64x8xf32>
    %335 = tpu.concatenate %328, %330, %332, %334 in 1 : vector<64x8xf32>, vector<64x8xf32>, vector<64x8xf32>, vector<64x8xf32> -> vector<64x32xf32>
    %336 = vector.extract_strided_slice %326 {offsets = [4, 0, 0], sizes = [1, 64, 8], strides = [1, 1, 1]} : vector<8x64x8xf32> to vector<1x64x8xf32>
    %337 = vector.shape_cast %336 : vector<1x64x8xf32> to vector<64x8xf32>
    %338 = vector.extract_strided_slice %326 {offsets = [5, 0, 0], sizes = [1, 64, 8], strides = [1, 1, 1]} : vector<8x64x8xf32> to vector<1x64x8xf32>
    %339 = vector.shape_cast %338 : vector<1x64x8xf32> to vector<64x8xf32>
    %340 = vector.extract_strided_slice %326 {offsets = [6, 0, 0], sizes = [1, 64, 8], strides = [1, 1, 1]} : vector<8x64x8xf32> to vector<1x64x8xf32>
    %341 = vector.shape_cast %340 : vector<1x64x8xf32> to vector<64x8xf32>
    %342 = vector.extract_strided_slice %326 {offsets = [7, 0, 0], sizes = [1, 64, 8], strides = [1, 1, 1]} : vector<8x64x8xf32> to vector<1x64x8xf32>
    %343 = vector.shape_cast %342 : vector<1x64x8xf32> to vector<64x8xf32>
    %344 = tpu.concatenate %337, %339, %341, %343 in 1 : vector<64x8xf32>, vector<64x8xf32>, vector<64x8xf32>, vector<64x8xf32> -> vector<64x32xf32>
    %345 = tpu.concatenate %335, %344 in 0 : vector<64x32xf32>, vector<64x32xf32> -> vector<128x32xf32>
    %346 = arith.truncf %345 : vector<128x32xf32> to vector<128x32xbf16>
    %c1_92 = arith.constant 1 : index
    %c0_93 = arith.constant 0 : index
    %c0_94 = arith.constant 0 : index
    %347 = vector.load %arg9[%c1_92, %c0_93, %c0_94] : memref<2x32x32xbf16, #tpu.memory_space<vmem>>, vector<1x32x32xbf16>
    %348 = vector.shape_cast %347 : vector<1x32x32xbf16> to vector<32x32xbf16>
    %cst_95 = arith.constant dense<0.000000e+00> : vector<128x32xf32>
    %349 = tpu.matmul %346, %348, %cst_95 {dimension_numbers = #tpu.dot_dimension_numbers<[1], [0], [0], [1], [0, 0, 1, 1], [], []>} : vector<128x32xbf16>, vector<32x32xbf16>, vector<128x32xf32> -> vector<128x32xf32>
    %c15 = arith.constant 15 : index
    %c0_96 = arith.constant 0 : index
    %350 = vector.load %arg4[%c15, %c0_96] : memref<32x32xf32, #tpu.memory_space<vmem>>, vector<1x32xf32>
    %351 = vector.broadcast %350 : vector<1x32xf32> to vector<128x32xf32>
    %352 = arith.addf %349, %351 : vector<128x32xf32>
    %353 = arith.addf %248, %352 : vector<128x32xf32>
    %c18 = arith.constant 18 : index
    %c0_97 = arith.constant 0 : index
    %354 = vector.load %arg4[%c18, %c0_97] : memref<32x32xf32, #tpu.memory_space<vmem>>, vector<1x32xf32>
    %c19 = arith.constant 19 : index
    %c0_98 = arith.constant 0 : index
    %355 = vector.load %arg4[%c19, %c0_98] : memref<32x32xf32, #tpu.memory_space<vmem>>, vector<1x32xf32>
    %cst_99 = arith.constant dense<0.000000e+00> : vector<128xf32>
    %356 = vector.multi_reduction <add>, %353, %cst_99 [1] : vector<128x32xf32> to vector<128xf32>
    %357 = vector.shape_cast %356 : vector<128xf32> to vector<128x1xf32>
    %cst_100 = arith.constant 3.200000e+01 : f32
    %358 = vector.broadcast %cst_100 : f32 to vector<128x1xf32>
    %359 = arith.divf %357, %358 : vector<128x1xf32>
    %360 = vector.broadcast %359 : vector<128x1xf32> to vector<128x32xf32>
    %361 = arith.subf %353, %360 : vector<128x32xf32>
    %362 = arith.mulf %361, %361 : vector<128x32xf32>
    %cst_101 = arith.constant dense<0.000000e+00> : vector<128xf32>
    %363 = vector.multi_reduction <add>, %362, %cst_101 [1] : vector<128x32xf32> to vector<128xf32>
    %364 = vector.shape_cast %363 : vector<128xf32> to vector<128x1xf32>
    %cst_102 = arith.constant 3.200000e+01 : f32
    %365 = vector.broadcast %cst_102 : f32 to vector<128x1xf32>
    %366 = arith.divf %364, %365 : vector<128x1xf32>
    %367 = vector.broadcast %359 : vector<128x1xf32> to vector<128x32xf32>
    %368 = arith.subf %353, %367 : vector<128x32xf32>
    %cst_103 = arith.constant 9.99999974E-6 : f32
    %369 = vector.broadcast %cst_103 : f32 to vector<128x1xf32>
    %370 = arith.addf %366, %369 : vector<128x1xf32>
    %371 = math.rsqrt %370 : vector<128x1xf32>
    %372 = vector.broadcast %371 : vector<128x1xf32> to vector<128x32xf32>
    %373 = arith.mulf %368, %372 : vector<128x32xf32>
    %374 = vector.broadcast %354 : vector<1x32xf32> to vector<128x32xf32>
    %375 = arith.mulf %373, %374 : vector<128x32xf32>
    %376 = vector.broadcast %355 : vector<1x32xf32> to vector<128x32xf32>
    %377 = arith.addf %375, %376 : vector<128x32xf32>
    %378 = arith.truncf %29 : vector<2x32xf32> to vector<2x32xbf16>
    %c320 = arith.constant 320 : index
    %c0_104 = arith.constant 0 : index
    %379 = vector.load %arg3[%c320, %c0_104] : memref<384x32xbf16, #tpu.memory_space<vmem>>, vector<32x32xbf16>
    %cst_105 = arith.constant dense<0.000000e+00> : vector<2x32xf32>
    %380 = tpu.matmul %378, %379, %cst_105 {dimension_numbers = #tpu.dot_dimension_numbers<[1], [0], [0], [1], [0, 0, 1, 1], [], []>} : vector<2x32xbf16>, vector<32x32xbf16>, vector<2x32xf32> -> vector<2x32xf32>
    %c16 = arith.constant 16 : index
    %c0_106 = arith.constant 0 : index
    %381 = vector.load %arg4[%c16, %c0_106] : memref<32x32xf32, #tpu.memory_space<vmem>>, vector<1x32xf32>
    %382 = vector.broadcast %381 : vector<1x32xf32> to vector<2x32xf32>
    %383 = arith.addf %380, %382 : vector<2x32xf32>
    %384 = arith.truncf %383 : vector<2x32xf32> to vector<2x32xbf16>
    %c352 = arith.constant 352 : index
    %c0_107 = arith.constant 0 : index
    %385 = vector.load %arg3[%c352, %c0_107] : memref<384x32xbf16, #tpu.memory_space<vmem>>, vector<32x32xbf16>
    %cst_108 = arith.constant dense<0.000000e+00> : vector<2x32xf32>
    %386 = tpu.matmul %384, %385, %cst_108 {dimension_numbers = #tpu.dot_dimension_numbers<[1], [0], [0], [1], [0, 0, 1, 1], [], []>} : vector<2x32xbf16>, vector<32x32xbf16>, vector<2x32xf32> -> vector<2x32xf32>
    %c17 = arith.constant 17 : index
    %c0_109 = arith.constant 0 : index
    %387 = vector.load %arg4[%c17, %c0_109] : memref<32x32xf32, #tpu.memory_space<vmem>>, vector<1x32xf32>
    %388 = vector.broadcast %387 : vector<1x32xf32> to vector<2x32xf32>
    %389 = arith.addf %386, %388 : vector<2x32xf32>
    %390 = vector.shape_cast %389 : vector<2x32xf32> to vector<2x1x32xf32>
    %391 = vector.shape_cast %390 : vector<2x1x32xf32> to vector<2x1x32xf32>
    %392 = vector.broadcast %391 : vector<2x1x32xf32> to vector<2x64x32xf32>
    %393 = vector.shape_cast %392 : vector<2x64x32xf32> to vector<128x32xf32>
    %394 = arith.addf %377, %393 : vector<128x32xf32>
    %c20 = arith.constant 20 : index
    %c0_110 = arith.constant 0 : index
    %395 = vector.load %arg4[%c20, %c0_110] : memref<32x32xf32, #tpu.memory_space<vmem>>, vector<1x32xf32>
    %c21 = arith.constant 21 : index
    %c0_111 = arith.constant 0 : index
    %396 = vector.load %arg4[%c21, %c0_111] : memref<32x32xf32, #tpu.memory_space<vmem>>, vector<1x32xf32>
    %cst_112 = arith.constant dense<0.000000e+00> : vector<128xf32>
    %397 = vector.multi_reduction <add>, %394, %cst_112 [1] : vector<128x32xf32> to vector<128xf32>
    %398 = vector.shape_cast %397 : vector<128xf32> to vector<128x1xf32>
    %cst_113 = arith.constant 3.200000e+01 : f32
    %399 = vector.broadcast %cst_113 : f32 to vector<128x1xf32>
    %400 = arith.divf %398, %399 : vector<128x1xf32>
    %401 = vector.broadcast %400 : vector<128x1xf32> to vector<128x32xf32>
    %402 = arith.subf %394, %401 : vector<128x32xf32>
    %403 = arith.mulf %402, %402 : vector<128x32xf32>
    %cst_114 = arith.constant dense<0.000000e+00> : vector<128xf32>
    %404 = vector.multi_reduction <add>, %403, %cst_114 [1] : vector<128x32xf32> to vector<128xf32>
    %405 = vector.shape_cast %404 : vector<128xf32> to vector<128x1xf32>
    %cst_115 = arith.constant 3.200000e+01 : f32
    %406 = vector.broadcast %cst_115 : f32 to vector<128x1xf32>
    %407 = arith.divf %405, %406 : vector<128x1xf32>
    %408 = vector.broadcast %400 : vector<128x1xf32> to vector<128x32xf32>
    %409 = arith.subf %394, %408 : vector<128x32xf32>
    %cst_116 = arith.constant 9.99999974E-6 : f32
    %410 = vector.broadcast %cst_116 : f32 to vector<128x1xf32>
    %411 = arith.addf %407, %410 : vector<128x1xf32>
    %412 = math.rsqrt %411 : vector<128x1xf32>
    %413 = vector.broadcast %412 : vector<128x1xf32> to vector<128x32xf32>
    %414 = arith.mulf %409, %413 : vector<128x32xf32>
    %415 = vector.broadcast %395 : vector<1x32xf32> to vector<128x32xf32>
    %416 = arith.mulf %414, %415 : vector<128x32xf32>
    %417 = vector.broadcast %396 : vector<1x32xf32> to vector<128x32xf32>
    %418 = arith.addf %416, %417 : vector<128x32xf32>
    %419 = arith.truncf %418 : vector<128x32xf32> to vector<128x32xbf16>
    %c1_117 = arith.constant 1 : index
    %c0_118 = arith.constant 0 : index
    %c0_119 = arith.constant 0 : index
    %420 = vector.load %arg10[%c1_117, %c0_118, %c0_119] : memref<2x32x512xbf16, #tpu.memory_space<vmem>>, vector<1x32x512xbf16>
    %421 = vector.shape_cast %420 : vector<1x32x512xbf16> to vector<32x512xbf16>
    %cst_120 = arith.constant dense<0.000000e+00> : vector<128x512xf32>
    %422 = tpu.matmul %419, %421, %cst_120 {dimension_numbers = #tpu.dot_dimension_numbers<[1], [0], [0], [1], [0, 0, 1, 1], [], []>} : vector<128x32xbf16>, vector<32x512xbf16>, vector<128x512xf32> -> vector<128x512xf32>
    %c1_121 = arith.constant 1 : index
    %c0_122 = arith.constant 0 : index
    %c0_123 = arith.constant 0 : index
    %423 = vector.load %arg11[%c1_121, %c0_122, %c0_123] : memref<2x1x512xf32, #tpu.memory_space<vmem>>, vector<1x1x512xf32>
    %424 = vector.shape_cast %423 : vector<1x1x512xf32> to vector<1x512xf32>
    %425 = vector.broadcast %424 : vector<1x512xf32> to vector<128x512xf32>
    %426 = arith.addf %422, %425 : vector<128x512xf32>
    %cst_124 = arith.constant 0.000000e+00 : f32
    %427 = vector.broadcast %cst_124 : f32 to vector<128x512xf32>
    %428 = arith.maximumf %426, %427 : vector<128x512xf32>
    %429 = arith.truncf %428 : vector<128x512xf32> to vector<128x512xbf16>
    %c1_125 = arith.constant 1 : index
    %c0_126 = arith.constant 0 : index
    %c0_127 = arith.constant 0 : index
    %430 = vector.load %arg12[%c1_125, %c0_126, %c0_127] : memref<2x512x32xbf16, #tpu.memory_space<vmem>>, vector<1x512x32xbf16>
    %431 = vector.shape_cast %430 : vector<1x512x32xbf16> to vector<512x32xbf16>
    %cst_128 = arith.constant dense<0.000000e+00> : vector<128x32xf32>
    %432 = tpu.matmul %429, %431, %cst_128 {dimension_numbers = #tpu.dot_dimension_numbers<[1], [0], [0], [1], [0, 0, 1, 1], [], []>} : vector<128x512xbf16>, vector<512x32xbf16>, vector<128x32xf32> -> vector<128x32xf32>
    %c24 = arith.constant 24 : index
    %c0_129 = arith.constant 0 : index
    %433 = vector.load %arg4[%c24, %c0_129] : memref<32x32xf32, #tpu.memory_space<vmem>>, vector<1x32xf32>
    %434 = vector.broadcast %433 : vector<1x32xf32> to vector<128x32xf32>
    %435 = arith.addf %432, %434 : vector<128x32xf32>
    %436 = arith.addf %418, %435 : vector<128x32xf32>
    %c22 = arith.constant 22 : index
    %c0_130 = arith.constant 0 : index
    %437 = vector.load %arg4[%c22, %c0_130] : memref<32x32xf32, #tpu.memory_space<vmem>>, vector<1x32xf32>
    %c23 = arith.constant 23 : index
    %c0_131 = arith.constant 0 : index
    %438 = vector.load %arg4[%c23, %c0_131] : memref<32x32xf32, #tpu.memory_space<vmem>>, vector<1x32xf32>
    %cst_132 = arith.constant dense<0.000000e+00> : vector<128xf32>
    %439 = vector.multi_reduction <add>, %436, %cst_132 [1] : vector<128x32xf32> to vector<128xf32>
    %440 = vector.shape_cast %439 : vector<128xf32> to vector<128x1xf32>
    %cst_133 = arith.constant 3.200000e+01 : f32
    %441 = vector.broadcast %cst_133 : f32 to vector<128x1xf32>
    %442 = arith.divf %440, %441 : vector<128x1xf32>
    %443 = vector.broadcast %442 : vector<128x1xf32> to vector<128x32xf32>
    %444 = arith.subf %436, %443 : vector<128x32xf32>
    %445 = arith.mulf %444, %444 : vector<128x32xf32>
    %cst_134 = arith.constant dense<0.000000e+00> : vector<128xf32>
    %446 = vector.multi_reduction <add>, %445, %cst_134 [1] : vector<128x32xf32> to vector<128xf32>
    %447 = vector.shape_cast %446 : vector<128xf32> to vector<128x1xf32>
    %cst_135 = arith.constant 3.200000e+01 : f32
    %448 = vector.broadcast %cst_135 : f32 to vector<128x1xf32>
    %449 = arith.divf %447, %448 : vector<128x1xf32>
    %450 = vector.broadcast %442 : vector<128x1xf32> to vector<128x32xf32>
    %451 = arith.subf %436, %450 : vector<128x32xf32>
    %cst_136 = arith.constant 9.99999974E-6 : f32
    %452 = vector.broadcast %cst_136 : f32 to vector<128x1xf32>
    %453 = arith.addf %449, %452 : vector<128x1xf32>
    %454 = math.rsqrt %453 : vector<128x1xf32>
    %455 = vector.broadcast %454 : vector<128x1xf32> to vector<128x32xf32>
    %456 = arith.mulf %451, %455 : vector<128x32xf32>
    %457 = vector.broadcast %437 : vector<1x32xf32> to vector<128x32xf32>
    %458 = arith.mulf %456, %457 : vector<128x32xf32>
    %459 = vector.broadcast %438 : vector<1x32xf32> to vector<128x32xf32>
    %460 = arith.addf %458, %459 : vector<128x32xf32>
    %cst_137 = arith.constant 0.000000e+00 : f32
    %461 = vector.broadcast %cst_137 : f32 to vector<128x32xf32>
    %462 = arith.maximumf %36, %461 : vector<128x32xf32>
    %cst_138 = arith.constant 0.000000e+00 : f32
    %463 = vector.broadcast %cst_138 : f32 to vector<128x32xf32>
    %464 = arith.maximumf %460, %463 : vector<128x32xf32>
    %465 = tpu.concatenate %462, %464 in 1 : vector<128x32xf32>, vector<128x32xf32> -> vector<128x64xf32>
    %466 = arith.truncf %465 : vector<128x64xf32> to vector<128x64xbf16>
    %c0_139 = arith.constant 0 : index
    %c0_140 = arith.constant 0 : index
    %467 = vector.load %arg5[%c0_139, %c0_140] : memref<128x128xbf16, #tpu.memory_space<vmem>>, vector<64x128xbf16>
    %cst_141 = arith.constant dense<0.000000e+00> : vector<128x128xf32>
    %468 = tpu.matmul %466, %467, %cst_141 {dimension_numbers = #tpu.dot_dimension_numbers<[1], [0], [0], [1], [0, 0, 1, 1], [], []>} : vector<128x64xbf16>, vector<64x128xbf16>, vector<128x128xf32> -> vector<128x128xf32>
    %cst_142 = arith.constant 0.000000e+00 : f32
    %469 = vector.broadcast %cst_142 : f32 to vector<2x32xf32>
    %470 = arith.maximumf %29, %469 : vector<2x32xf32>
    %cst_143 = arith.constant 0.000000e+00 : f32
    %471 = vector.broadcast %cst_143 : f32 to vector<2x32xf32>
    %472 = arith.maximumf %14, %471 : vector<2x32xf32>
    %473 = tpu.concatenate %470, %472 in 1 : vector<2x32xf32>, vector<2x32xf32> -> vector<2x64xf32>
    %474 = arith.truncf %473 : vector<2x64xf32> to vector<2x64xbf16>
    %c64 = arith.constant 64 : index
    %c0_144 = arith.constant 0 : index
    %475 = vector.load %arg5[%c64, %c0_144] : memref<128x128xbf16, #tpu.memory_space<vmem>>, vector<64x128xbf16>
    %cst_145 = arith.constant dense<0.000000e+00> : vector<2x128xf32>
    %476 = tpu.matmul %474, %475, %cst_145 {dimension_numbers = #tpu.dot_dimension_numbers<[1], [0], [0], [1], [0, 0, 1, 1], [], []>} : vector<2x64xbf16>, vector<64x128xbf16>, vector<2x128xf32> -> vector<2x128xf32>
    %c0_146 = arith.constant 0 : index
    %c0_147 = arith.constant 0 : index
    %477 = vector.load %arg6[%c0_146, %c0_147] : memref<8x128xf32, #tpu.memory_space<vmem>>, vector<1x128xf32>
    %478 = vector.broadcast %477 : vector<1x128xf32> to vector<2x128xf32>
    %479 = arith.addf %476, %478 : vector<2x128xf32>
    %480 = vector.shape_cast %479 : vector<2x128xf32> to vector<2x1x128xf32>
    %481 = vector.shape_cast %480 : vector<2x1x128xf32> to vector<2x1x128xf32>
    %482 = vector.broadcast %481 : vector<2x1x128xf32> to vector<2x64x128xf32>
    %483 = vector.shape_cast %482 : vector<2x64x128xf32> to vector<128x128xf32>
    %484 = arith.addf %468, %483 : vector<128x128xf32>
    %cst_148 = arith.constant 0.000000e+00 : f32
    %485 = vector.broadcast %cst_148 : f32 to vector<128x128xf32>
    %486 = arith.maximumf %484, %485 : vector<128x128xf32>
    %c1_149 = arith.constant 1 : index
    %c0_150 = arith.constant 0 : index
    %487 = vector.load %arg6[%c1_149, %c0_150] : memref<8x128xf32, #tpu.memory_space<vmem>>, vector<1x128xf32>
    %488 = vector.broadcast %487 : vector<1x128xf32> to vector<128x128xf32>
    %489 = arith.mulf %486, %488 : vector<128x128xf32>
    %cst_151 = arith.constant dense<0.000000e+00> : vector<128xf32>
    %490 = vector.multi_reduction <add>, %489, %cst_151 [1] : vector<128x128xf32> to vector<128xf32>
    %491 = vector.shape_cast %490 : vector<128xf32> to vector<128x1xf32>
    %c2_152 = arith.constant 2 : index
    %c0_153 = arith.constant 0 : index
    %492 = vector.load %arg6[%c2_152, %c0_153] : memref<8x128xf32, #tpu.memory_space<vmem>>, vector<1x1xf32>
    %493 = vector.broadcast %492 : vector<1x1xf32> to vector<128x1xf32>
    %494 = arith.addf %491, %493 : vector<128x1xf32>
    %c0_154 = arith.constant 0 : index
    %c0_155 = arith.constant 0 : index
    %495 = vector.load %arg13[%c0_154, %c0_155] : memref<128x1xf32, #tpu.memory_space<vmem>>, vector<128x1xf32>
    tpu.vector_store %arg13[%c0_154, %c0_155], %494 {strides = array<i32>} : memref<128x1xf32, #tpu.memory_space<vmem>>, vector<128x1xf32>,
    return
  }
}

</mosaic_0001>

<llo_original>
// kernel: idclp_forward.1
$region0: #{idclp_forward.1}
  #allocation0 [shape = 'u32[]', space=smem, size = 0x4, offset = 0x4, fixed_abs, tag = 'smem constant byte address 0x4 - core index']
  #allocation1 [shape = 'u32[144,128]{1,0:T(1,128)}', space=vmem, size = 0x12000, scoped, tag = 'internal scratch']
  %s0 = inlined_call_operand.vmem [shape: f32[2,128], index: 0, kind: input, shape index: {}]
  %s1 = inlined_call_operand.vmem [shape: f32[2,48], index: 1, kind: input, shape index: {}]
  %s2 = inlined_call_operand.vmem [shape: f32[128,16], index: 2, kind: input, shape index: {}]
  %s3 = inlined_call_operand.vmem [shape: bf16[384,32], index: 3, kind: input, shape index: {}]
  %s4 = inlined_call_operand.vmem [shape: f32[32,32], index: 4, kind: input, shape index: {}]
  %s5 = inlined_call_operand.vmem [shape: bf16[128,128], index: 5, kind: input, shape index: {}]
  %s6 = inlined_call_operand.vmem [shape: f32[8,128], index: 6, kind: input, shape index: {}]
  %s7 = inlined_call_operand.vmem [shape: bf16[2,32,96], index: 7, kind: input, shape index: {}]
  %s8 = inlined_call_operand.vmem [shape: f32[2,1,96], index: 8, kind: input, shape index: {}]
  %s9 = inlined_call_operand.vmem [shape: bf16[2,32,32], index: 9, kind: input, shape index: {}]
  %s10 = inlined_call_operand.vmem [shape: bf16[2,32,512], index: 10, kind: input, shape index: {}]
  %s11 = inlined_call_operand.vmem [shape: f32[2,1,512], index: 11, kind: input, shape index: {}]
  %s12 = inlined_call_operand.vmem [shape: bf16[2,512,32], index: 12, kind: input, shape index: {}]
  %s13 = inlined_call_operand.vmem [shape: f32[128,1], index: 13, kind: output, shape index: {}]
  %s14 = sld [smem:[#allocation0]]
  $region62: #{idclp_forward.1} parent=0
    _
  %s16 = ssub.s32 1, %s14
  %s17 = scalar_select 0, %s16, %s14
  // Predicated region
  $region2: #{idclp_forward.1} parent=0 // pred_check
    _
  $region3: #{idclp_forward.1} parent=0 // pred_check_branch
    %19 = sbr.rel (0) target = $region5
  $region4: #{idclp_forward.1} parent=0 // pred_region
    _
  $region5: #{idclp_forward.1} parent=0 // pred_fallthru
    _
  // Predicated region
  $region6: #{idclp_forward.1} parent=0 // pred_check
    _
  $region7: #{idclp_forward.1} parent=0 // pred_check_branch
    %21 = sbr.rel (0) target = $region9
  $region8: #{idclp_forward.1} parent=0 // pred_region
    _
  $region9: #{idclp_forward.1} parent=0 // pred_fallthru
    _
  // Predicated region
  $region10: #{idclp_forward.1} parent=0 // pred_check
    _
  $region11: #{idclp_forward.1} parent=0 // pred_check_branch
    %23 = sbr.rel (0) target = $region13
  $region12: #{idclp_forward.1} parent=0 // pred_region
    _
  $region13: #{idclp_forward.1} parent=0 // pred_fallthru
    _
  // Predicated region
  $region14: #{idclp_forward.1} parent=0 // pred_check
    _
  $region15: #{idclp_forward.1} parent=0 // pred_check_branch
    %25 = sbr.rel (0) target = $region17
  $region16: #{idclp_forward.1} parent=0 // pred_region
    _
  $region17: #{idclp_forward.1} parent=0 // pred_fallthru
    _
  // Predicated region
  $region18: #{idclp_forward.1} parent=0 // pred_check
    _
  $region19: #{idclp_forward.1} parent=0 // pred_check_branch
    %27 = sbr.rel (0) target = $region21
  $region20: #{idclp_forward.1} parent=0 // pred_region
    _
  $region21: #{idclp_forward.1} parent=0 // pred_fallthru
    _
  // Predicated region
  $region22: #{idclp_forward.1} parent=0 // pred_check
    _
  $region23: #{idclp_forward.1} parent=0 // pred_check_branch
    %29 = sbr.rel (0) target = $region25
  $region24: #{idclp_forward.1} parent=0 // pred_region
    _
  $region25: #{idclp_forward.1} parent=0 // pred_fallthru
    _
  // Predicated region
  $region26: #{idclp_forward.1} parent=0 // pred_check
    _
  $region27: #{idclp_forward.1} parent=0 // pred_check_branch
    %31 = sbr.rel (0) target = $region29
  $region28: #{idclp_forward.1} parent=0 // pred_region
    _
  $region29: #{idclp_forward.1} parent=0 // pred_fallthru
    _
  // Predicated region
  $region30: #{idclp_forward.1} parent=0 // pred_check
    _
  $region31: #{idclp_forward.1} parent=0 // pred_check_branch
    %33 = sbr.rel (0) target = $region33
  $region32: #{idclp_forward.1} parent=0 // pred_region
    _
  $region33: #{idclp_forward.1} parent=0 // pred_fallthru
    _
  // Predicated region
  $region34: #{idclp_forward.1} parent=0 // pred_check
    _
  $region35: #{idclp_forward.1} parent=0 // pred_check_branch
    %35 = sbr.rel (0) target = $region37
  $region36: #{idclp_forward.1} parent=0 // pred_region
    _
  $region37: #{idclp_forward.1} parent=0 // pred_fallthru
    _
  // Predicated region
  $region38: #{idclp_forward.1} parent=0 // pred_check
    _
  $region39: #{idclp_forward.1} parent=0 // pred_check_branch
    %37 = sbr.rel (0) target = $region41
  $region40: #{idclp_forward.1} parent=0 // pred_region
    _
  $region41: #{idclp_forward.1} parent=0 // pred_fallthru
    _
  // Predicated region
  $region42: #{idclp_forward.1} parent=0 // pred_check
    _
  $region43: #{idclp_forward.1} parent=0 // pred_check_branch
    %39 = sbr.rel (0) target = $region45
  $region44: #{idclp_forward.1} parent=0 // pred_region
    _
  $region45: #{idclp_forward.1} parent=0 // pred_fallthru
    _
  // Predicated region
  $region46: #{idclp_forward.1} parent=0 // pred_check
    _
  $region47: #{idclp_forward.1} parent=0 // pred_check_branch
    %41 = sbr.rel (0) target = $region49
  $region48: #{idclp_forward.1} parent=0 // pred_region
    _
  $region49: #{idclp_forward.1} parent=0 // pred_fallthru
    _
  // Predicated region
  $region50: #{idclp_forward.1} parent=0 // pred_check
    _
  $region51: #{idclp_forward.1} parent=0 // pred_check_branch
    %43 = sbr.rel (0) target = $region53
  $region52: #{idclp_forward.1} parent=0 // pred_region
    _
  $region53: #{idclp_forward.1} parent=0 // pred_fallthru
    _
  %v45 = vld [vmem:[%s1] sm:$0x3]
  %v46 = vpack.c.bf16 %v45, %v45
  %v47 = vld [vmem:[%s3] sm:$0xf]
  %v48 = vld [vmem:[%s3 + $0x4] sm:$0xf]
  %v49 = vld [vmem:[%s3 + $0x8] sm:$0xf]
  %v50 = vld [vmem:[%s3 + $0xc] sm:$0xf]
  %v51 = vld [vmem:[%s3 + $0x10] sm:$0xf]
  %v52 = vld [vmem:[%s3 + $0x14] sm:$0xf]
  %v53 = vld [vmem:[%s4] sm:$0x1]
  %v54 = vlaneseq
  %v55 = vshrl.u32 %v54, 7
  %v56 = vsub.s32 0, %v55
  %v57 = vrot.slane %v53, %v56
  %v64 = vunpack.c.l.b16 %v47
  %v65 = vunpack.c.l.b16 %v48
  %v66 = vunpack.c.l.b16 %v49
  %v67 = vunpack.c.l.b16 %v50
  %v68 = vunpack.c.l.b16 %v51
  %v69 = vunpack.c.l.b16 %v52
  %v70 = vpack.c.b16 %v65, %v64
  %v71 = vpack.c.b16 %v67, %v66
  %v72 = vpack.c.b16 %v69, %v68
  %vm76 = vcmask 392192
  %v78 = vsel %vm76, %v46, 0
  %80 = vmatprep.subr.bf16.mxu0 0
  %81 = vmatpush1.bf16.msra.mxu0 %v70
  %82 = vmatprep.subr.bf16.mxu0 0
  %83 = vmatpush1.bf16.msra.mxu0 %v71
  %84 = vmatprep.subr.bf16.mxu0 0
  %85 = vmatpush1.bf16.msra.mxu0 %v72
  %86 = vmatprep.subr.bf16.mxu0 0
  %87 = vmatpush1.bf16.msra.mxu0 0
  %88 = vmatprep.subr.bf16.mxu0 0
  %89 = vmatpush1.bf16.msra.mxu0 0
  %90 = vmatprep.subr.bf16.mxu0 0
  %91 = vmatpush1.bf16.msra.mxu0 0
  %92 = vmatprep.subr.bf16.mxu0 0
  %93 = vmatpush1.bf16.msra.mxu0 0
  %94 = vmatprep.subr.bf16.mxu0 0
  %95 = vmatpush1.bf16.msra.mxu0 0
  %96 = vmatprep.subr.bf16.mxu0 0
  %97 = vmatpush1.bf16.msra.mxu0 0
  %98 = vmatprep.subr.bf16.mxu0 0
  %99 = vmatpush1.bf16.msra.mxu0 0
  %100 = vmatprep.subr.bf16.mxu0 0
  %101 = vmatpush1.bf16.msra.mxu0 0
  %102 = vmatprep.subr.bf16.mxu0 0
  %103 = vmatpush1.bf16.msra.mxu0 0
  %104 = vmatprep.subr.bf16.mxu0 0
  %105 = vmatpush1.bf16.msra.mxu0 0
  %106 = vmatprep.subr.bf16.mxu0 0
  %107 = vmatpush1.bf16.msra.mxu0 0
  %108 = vmatprep.subr.bf16.mxu0 0
  %109 = vmatpush1.bf16.msra.mxu0 0
  %110 = vmatprep.subr.bf16.mxu0 0
  %111 = vmatpush1.bf16.msra.mxu0 0
  %112 = vmatprep.mubr.bf16.mxu0 0
  %113 = vmatmul.mubr.bf16.gmra.mrb[0].mxu0 %v78
  %v114 = vpop.f32.mrb[0].mxu0
  %v115 = vadd.f32 %v57, %v114
  %v116 = vpop.f32.mrb[0].mxu0
  %v117 = vpop.f32.mrb[0].mxu0
  %v118 = vpop.f32.mrb[0].mxu0
  %119 = vdwg.mxu0
  %v120 = vmax.f32 %v115, 0.0
  %v121 = vpack.c.bf16 %v120, %v120
  %v122 = vld [vmem:[%s3 + $0x18] sm:$0xf]
  %v123 = vld [vmem:[%s3 + $0x1c] sm:$0xf]
  %v124 = vld [vmem:[%s3 + $0x20] sm:$0xf]
  %v125 = vld [vmem:[%s3 + $0x24] sm:$0xf]
  %v126 = vld [vmem:[%s4 + $0x1] sm:$0x1]
  %v127 = vlaneseq
  %v128 = vshrl.u32 %v127, 7
  %v129 = vsub.s32 0, %v128
  %v130 = vrot.slane %v126, %v129
  %v135 = vunpack.c.l.b16 %v122
  %v136 = vunpack.c.l.b16 %v123
  %v137 = vunpack.c.l.b16 %v124
  %v138 = vunpack.c.l.b16 %v125
  %v139 = vpack.c.b16 %v136, %v135
  %v140 = vpack.c.b16 %v138, %v137
  %vm143 = vcmask 261120
  %v145 = vsel %vm143, %v121, 0
  %147 = vmatprep.subr.bf16.mxu0 0
  %148 = vmatpush1.bf16.msra.mxu0 %v139
  %149 = vmatprep.subr.bf16.mxu0 0
  %150 = vmatpush1.bf16.msra.mxu0 %v140
  %151 = vmatprep.subr.bf16.mxu0 0
  %152 = vmatpush1.bf16.msra.mxu0 0
  %153 = vmatprep.subr.bf16.mxu0 0
  %154 = vmatpush1.bf16.msra.mxu0 0
  %155 = vmatprep.subr.bf16.mxu0 0
  %156 = vmatpush1.bf16.msra.mxu0 0
  %157 = vmatprep.subr.bf16.mxu0 0
  %158 = vmatpush1.bf16.msra.mxu0 0
  %159 = vmatprep.subr.bf16.mxu0 0
  %160 = vmatpush1.bf16.msra.mxu0 0
  %161 = vmatprep.subr.bf16.mxu0 0
  %162 = vmatpush1.bf16.msra.mxu0 0
  %163 = vmatprep.subr.bf16.mxu0 0
  %164 = vmatpush1.bf16.msra.mxu0 0
  %165 = vmatprep.subr.bf16.mxu0 0
  %166 = vmatpush1.bf16.msra.mxu0 0
  %167 = vmatprep.subr.bf16.mxu0 0
  %168 = vmatpush1.bf16.msra.mxu0 0
  %169 = vmatprep.subr.bf16.mxu0 0
  %170 = vmatpush1.bf16.msra.mxu0 0
  %171 = vmatprep.subr.bf16.mxu0 0
  %172 = vmatpush1.bf16.msra.mxu0 0
  %173 = vmatprep.subr.bf16.mxu0 0
  %174 = vmatpush1.bf16.msra.mxu0 0
  %175 = vmatprep.subr.bf16.mxu0 0
  %176 = vmatpush1.bf16.msra.mxu0 0
  %177 = vmatprep.subr.bf16.mxu0 0
  %178 = vmatpush1.bf16.msra.mxu0 0
  %179 = vmatprep.mubr.bf16.mxu0 0
  %180 = vmatmul.mubr.bf16.gmra.mrb[0].mxu0 %v145
  %v181 = vpop.f32.mrb[0].mxu0
  %v182 = vadd.f32 %v130, %v181
  %v183 = vpop.f32.mrb[0].mxu0
  %v184 = vpop.f32.mrb[0].mxu0
  %v185 = vpop.f32.mrb[0].mxu0
  %186 = vdwg.mxu0
  %v187 = vld [vmem:[%s0] sm:$0x3]
  %v188 = vpack.c.bf16 %v187, %v187
  %v189 = vld [vmem:[%s3 + $0x28] sm:$0xf]
  %v190 = vld [vmem:[%s3 + $0x2c] sm:$0xf]
  %v191 = vld [vmem:[%s3 + $0x30] sm:$0xf]
  %v192 = vld [vmem:[%s3 + $0x34] sm:$0xf]
  %v193 = vld [vmem:[%s3 + $0x38] sm:$0xf]
  %v194 = vld [vmem:[%s3 + $0x3c] sm:$0xf]
  %v195 = vld [vmem:[%s3 + $0x40] sm:$0xf]
  %v196 = vld [vmem:[%s3 + $0x44] sm:$0xf]
  %v197 = vld [vmem:[%s3 + $0x48] sm:$0xf]
  %v198 = vld [vmem:[%s3 + $0x4c] sm:$0xf]
  %v199 = vld [vmem:[%s3 + $0x50] sm:$0xf]
  %v200 = vld [vmem:[%s3 + $0x54] sm:$0xf]
  %v201 = vld [vmem:[%s3 + $0x58] sm:$0xf]
  %v202 = vld [vmem:[%s3 + $0x5c] sm:$0xf]
  %v203 = vld [vmem:[%s3 + $0x60] sm:$0xf]
  %v204 = vld [vmem:[%s3 + $0x64] sm:$0xf]
  %v205 = vld [vmem:[%s4 + $0x2] sm:$0x1]
  %v206 = vlaneseq
  %v207 = vshrl.u32 %v206, 7
  %v208 = vsub.s32 0, %v207
  %v209 = vrot.slane %v205, %v208
  %v226 = vunpack.c.l.b16 %v189
  %v227 = vunpack.c.l.b16 %v190
  %v228 = vunpack.c.l.b16 %v191
  %v229 = vunpack.c.l.b16 %v192
  %v230 = vunpack.c.l.b16 %v193
  %v231 = vunpack.c.l.b16 %v194
  %v232 = vunpack.c.l.b16 %v195
  %v233 = vunpack.c.l.b16 %v196
  %v234 = vunpack.c.l.b16 %v197
  %v235 = vunpack.c.l.b16 %v198
  %v236 = vunpack.c.l.b16 %v199
  %v237 = vunpack.c.l.b16 %v200
  %v238 = vunpack.c.l.b16 %v201
  %v239 = vunpack.c.l.b16 %v202
  %v240 = vunpack.c.l.b16 %v203
  %v241 = vunpack.c.l.b16 %v204
  %v242 = vpack.c.b16 %v227, %v226
  %v243 = vpack.c.b16 %v229, %v228
  %v244 = vpack.c.b16 %v231, %v230
  %v245 = vpack.c.b16 %v233, %v232
  %v246 = vpack.c.b16 %v235, %v234
  %v247 = vpack.c.b16 %v237, %v236
  %v248 = vpack.c.b16 %v239, %v238
  %v249 = vpack.c.b16 %v241, %v240
  %258 = vmatprep.subr.bf16.mxu0 0
  %259 = vmatpush1.bf16.msra.mxu0 %v242
  %260 = vmatprep.subr.bf16.mxu0 0
  %261 = vmatpush1.bf16.msra.mxu0 %v243
  %262 = vmatprep.subr.bf16.mxu0 0
  %263 = vmatpush1.bf16.msra.mxu0 %v244
  %264 = vmatprep.subr.bf16.mxu0 0
  %265 = vmatpush1.bf16.msra.mxu0 %v245
  %266 = vmatprep.subr.bf16.mxu0 0
  %267 = vmatpush1.bf16.msra.mxu0 %v246
  %268 = vmatprep.subr.bf16.mxu0 0
  %269 = vmatpush1.bf16.msra.mxu0 %v247
  %270 = vmatprep.subr.bf16.mxu0 0
  %271 = vmatpush1.bf16.msra.mxu0 %v248
  %272 = vmatprep.subr.bf16.mxu0 0
  %273 = vmatpush1.bf16.msra.mxu0 %v249
  %274 = vmatprep.subr.bf16.mxu0 0
  %275 = vmatpush1.bf16.msra.mxu0 0
  %276 = vmatprep.subr.bf16.mxu0 0
  %277 = vmatpush1.bf16.msra.mxu0 0
  %278 = vmatprep.subr.bf16.mxu0 0
  %279 = vmatpush1.bf16.msra.mxu0 0
  %280 = vmatprep.subr.bf16.mxu0 0
  %281 = vmatpush1.bf16.msra.mxu0 0
  %282 = vmatprep.subr.bf16.mxu0 0
  %283 = vmatpush1.bf16.msra.mxu0 0
  %284 = vmatprep.subr.bf16.mxu0 0
  %285 = vmatpush1.bf16.msra.mxu0 0
  %286 = vmatprep.subr.bf16.mxu0 0
  %287 = vmatpush1.bf16.msra.mxu0 0
  %288 = vmatprep.subr.bf16.mxu0 0
  %289 = vmatpush1.bf16.msra.mxu0 0
  %290 = vmatprep.mubr.bf16.mxu0 0
  %291 = vmatmul.mubr.bf16.gmra.mrb[0].mxu0 %v188
  %v292 = vpop.f32.mrb[0].mxu0
  %v293 = vadd.f32 %v209, %v292
  %v294 = vpop.f32.mrb[0].mxu0
  %v295 = vpop.f32.mrb[0].mxu0
  %v296 = vpop.f32.mrb[0].mxu0
  %297 = vdwg.mxu0
  %v298 = vmax.f32 %v293, 0.0
  %v299 = vpack.c.bf16 %v298, %v298
  %v300 = vld [vmem:[%s3 + $0x68] sm:$0xf]
  %v301 = vld [vmem:[%s3 + $0x6c] sm:$0xf]
  %v302 = vld [vmem:[%s3 + $0x70] sm:$0xf]
  %v303 = vld [vmem:[%s3 + $0x74] sm:$0xf]
  %v304 = vld [vmem:[%s4 + $0x3] sm:$0x1]
  %v305 = vlaneseq
  %v306 = vshrl.u32 %v305, 7
  %v307 = vsub.s32 0, %v306
  %v308 = vrot.slane %v304, %v307
  %v313 = vunpack.c.l.b16 %v300
  %v314 = vunpack.c.l.b16 %v301
  %v315 = vunpack.c.l.b16 %v302
  %v316 = vunpack.c.l.b16 %v303
  %v317 = vpack.c.b16 %v314, %v313
  %v318 = vpack.c.b16 %v316, %v315
  %v322 = vsel %vm143, %v299, 0
  %324 = vmatprep.subr.bf16.mxu0 0
  %325 = vmatpush1.bf16.msra.mxu0 %v317
  %326 = vmatprep.subr.bf16.mxu0 0
  %327 = vmatpush1.bf16.msra.mxu0 %v318
  %328 = vmatprep.subr.bf16.mxu0 0
  %329 = vmatpush1.bf16.msra.mxu0 0
  %330 = vmatprep.subr.bf16.mxu0 0
  %331 = vmatpush1.bf16.msra.mxu0 0
  %332 = vmatprep.subr.bf16.mxu0 0
  %333 = vmatpush1.bf16.msra.mxu0 0
  %334 = vmatprep.subr.bf16.mxu0 0
  %335 = vmatpush1.bf16.msra.mxu0 0
  %336 = vmatprep.subr.bf16.mxu0 0
  %337 = vmatpush1.bf16.msra.mxu0 0
  %338 = vmatprep.subr.bf16.mxu0 0
  %339 = vmatpush1.bf16.msra.mxu0 0
  %340 = vmatprep.subr.bf16.mxu0 0
  %341 = vmatpush1.bf16.msra.mxu0 0
  %342 = vmatprep.subr.bf16.mxu0 0
  %343 = vmatpush1.bf16.msra.mxu0 0
  %344 = vmatprep.subr.bf16.mxu0 0
  %345 = vmatpush1.bf16.msra.mxu0 0
  %346 = vmatprep.subr.bf16.mxu0 0
  %347 = vmatpush1.bf16.msra.mxu0 0
  %348 = vmatprep.subr.bf16.mxu0 0
  %349 = vmatpush1.bf16.msra.mxu0 0
  %350 = vmatprep.subr.bf16.mxu0 0
  %351 = vmatpush1.bf16.msra.mxu0 0
  %352 = vmatprep.subr.bf16.mxu0 0
  %353 = vmatpush1.bf16.msra.mxu0 0
  %354 = vmatprep.subr.bf16.mxu0 0
  %355 = vmatpush1.bf16.msra.mxu0 0
  %356 = vmatprep.mubr.bf16.mxu0 0
  %357 = vmatmul.mubr.bf16.gmra.mrb[0].mxu0 %v322
  %v358 = vpop.f32.mrb[0].mxu0
  %v359 = vadd.f32 %v308, %v358
  %v360 = vpop.f32.mrb[0].mxu0
  %v361 = vpop.f32.mrb[0].mxu0
  %v362 = vpop.f32.mrb[0].mxu0
  %363 = vdwg.mxu0
  %v364 = vld [vmem:[%s2] sm:$0xff]
  %v365 = vld [vmem:[%s2 + $0x8] sm:$0xff]
  %v366 = vld [vmem:[%s2 + $0x10] sm:$0xff]
  %v367 = vld [vmem:[%s2 + $0x18] sm:$0xff]
  %v368 = vld [vmem:[%s2 + $0x20] sm:$0xff]
  %v369 = vld [vmem:[%s2 + $0x28] sm:$0xff]
  %v370 = vld [vmem:[%s2 + $0x30] sm:$0xff]
  %v371 = vld [vmem:[%s2 + $0x38] sm:$0xff]
  %v372 = vld [vmem:[%s2 + $0x40] sm:$0xff]
  %v373 = vld [vmem:[%s2 + $0x48] sm:$0xff]
  %v374 = vld [vmem:[%s2 + $0x50] sm:$0xff]
  %v375 = vld [vmem:[%s2 + $0x58] sm:$0xff]
  %v376 = vld [vmem:[%s2 + $0x60] sm:$0xff]
  %v377 = vld [vmem:[%s2 + $0x68] sm:$0xff]
  %v378 = vld [vmem:[%s2 + $0x70] sm:$0xff]
  %v379 = vld [vmem:[%s2 + $0x78] sm:$0xff]
  %v380 = vpack.c.bf16 %v365, %v364
  %v381 = vpack.c.bf16 %v367, %v366
  %v382 = vpack.c.bf16 %v369, %v368
  %v383 = vpack.c.bf16 %v371, %v370
  %v384 = vpack.c.bf16 %v373, %v372
  %v385 = vpack.c.bf16 %v375, %v374
  %v386 = vpack.c.bf16 %v377, %v376
  %v387 = vpack.c.bf16 %v379, %v378
  %v388 = vld [vmem:[%s3 + $0x78] sm:$0xf]
  %v389 = vld [vmem:[%s3 + $0x7c] sm:$0xf]
  %v390 = vld [vmem:[%s4 + $0x4] sm:$0x1]
  %v391 = vlaneseq
  %v392 = vshrl.u32 %v391, 7
  %v393 = vsub.s32 0, %v392
  %v394 = vrot.slane %v390, %v393
  %v397 = vunpack.c.l.b16 %v388
  %v398 = vunpack.c.l.b16 %v389
  %v399 = vpack.c.b16 %v398, %v397
  %vm401 = vcmask 130048
  %v403 = vsel %vm401, %v380, 0
  %v406 = vsel %vm401, %v381, 0
  %v409 = vsel %vm401, %v382, 0
  %v412 = vsel %vm401, %v383, 0
  %v415 = vsel %vm401, %v384, 0
  %v418 = vsel %vm401, %v385, 0
  %v421 = vsel %vm401, %v386, 0
  %v424 = vsel %vm401, %v387, 0
  %426 = vmatprep.subr.bf16.mxu0 0
  %427 = vmatpush1.bf16.msra.mxu0 %v399
  %428 = vmatprep.subr.bf16.mxu0 0
  %429 = vmatpush1.bf16.msra.mxu0 0
  %430 = vmatprep.subr.bf16.mxu0 0
  %431 = vmatpush1.bf16.msra.mxu0 0
  %432 = vmatprep.subr.bf16.mxu0 0
  %433 = vmatpush1.bf16.msra.mxu0 0
  %434 = vmatprep.subr.bf16.mxu0 0
  %435 = vmatpush1.bf16.msra.mxu0 0
  %436 = vmatprep.subr.bf16.mxu0 0
  %437 = vmatpush1.bf16.msra.mxu0 0
  %438 = vmatprep.subr.bf16.mxu0 0
  %439 = vmatpush1.bf16.msra.mxu0 0
  %440 = vmatprep.subr.bf16.mxu0 0
  %441 = vmatpush1.bf16.msra.mxu0 0
  %442 = vmatprep.subr.bf16.mxu0 0
  %443 = vmatpush1.bf16.msra.mxu0 0
  %444 = vmatprep.subr.bf16.mxu0 0
  %445 = vmatpush1.bf16.msra.mxu0 0
  %446 = vmatprep.subr.bf16.mxu0 0
  %447 = vmatpush1.bf16.msra.mxu0 0
  %448 = vmatprep.subr.bf16.mxu0 0
  %449 = vmatpush1.bf16.msra.mxu0 0
  %450 = vmatprep.subr.bf16.mxu0 0
  %451 = vmatpush1.bf16.msra.mxu0 0
  %452 = vmatprep.subr.bf16.mxu0 0
  %453 = vmatpush1.bf16.msra.mxu0 0
  %454 = vmatprep.subr.bf16.mxu0 0
  %455 = vmatpush1.bf16.msra.mxu0 0
  %456 = vmatprep.subr.bf16.mxu0 0
  %457 = vmatpush1.bf16.msra.mxu0 0
  %458 = vmatprep.mubr.bf16.mxu0 0
  %459 = vmatmul.mubr.bf16.gmra.mrb[0].mxu0 %v403
  %v460 = vpop.f32.mrb[0].mxu0
  %v461 = vadd.f32 %v394, %v460
  %v462 = vpop.f32.mrb[0].mxu0
  %v463 = vpop.f32.mrb[0].mxu0
  %v464 = vadd.f32 %v394, %v463
  %v465 = vpop.f32.mrb[0].mxu0
  %466 = vmatprep.mubr.bf16.mxu0 0
  %467 = vmatmul.mubr.bf16.gmra.mrb[0].mxu0 %v406
  %v468 = vpop.f32.mrb[0].mxu0
  %v469 = vadd.f32 %v394, %v468
  %v470 = vpop.f32.mrb[0].mxu0
  %v471 = vpop.f32.mrb[0].mxu0
  %v472 = vadd.f32 %v394, %v471
  %v473 = vpop.f32.mrb[0].mxu0
  %474 = vmatprep.mubr.bf16.mxu0 0
  %475 = vmatmul.mubr.bf16.gmra.mrb[0].mxu0 %v409
  %v476 = vpop.f32.mrb[0].mxu0
  %v477 = vadd.f32 %v394, %v476
  %v478 = vpop.f32.mrb[0].mxu0
  %v479 = vpop.f32.mrb[0].mxu0
  %v480 = vadd.f32 %v394, %v479
  %v481 = vpop.f32.mrb[0].mxu0
  %482 = vmatprep.mubr.bf16.mxu0 0
  %483 = vmatmul.mubr.bf16.gmra.mrb[0].mxu0 %v412
  %v484 = vpop.f32.mrb[0].mxu0
  %v485 = vadd.f32 %v394, %v484
  %v486 = vpop.f32.mrb[0].mxu0
  %v487 = vpop.f32.mrb[0].mxu0
  %v488 = vadd.f32 %v394, %v487
  %v489 = vpop.f32.mrb[0].mxu0
  %490 = vmatprep.mubr.bf16.mxu0 0
  %491 = vmatmul.mubr.bf16.gmra.mrb[0].mxu0 %v415
  %v492 = vpop.f32.mrb[0].mxu0
  %v493 = vadd.f32 %v394, %v492
  %v494 = vpop.f32.mrb[0].mxu0
  %v495 = vpop.f32.mrb[0].mxu0
  %v496 = vadd.f32 %v394, %v495
  %v497 = vpop.f32.mrb[0].mxu0
  %498 = vmatprep.mubr.bf16.mxu0 0
  %499 = vmatmul.mubr.bf16.gmra.mrb[0].mxu0 %v418
  %v500 = vpop.f32.mrb[0].mxu0
  %v501 = vadd.f32 %v394, %v500
  %v502 = vpop.f32.mrb[0].mxu0
  %v503 = vpop.f32.mrb[0].mxu0
  %v504 = vadd.f32 %v394, %v503
  %v505 = vpop.f32.mrb[0].mxu0
  %506 = vmatprep.mubr.bf16.mxu0 0
  %507 = vmatmul.mubr.bf16.gmra.mrb[0].mxu0 %v421
  %v508 = vpop.f32.mrb[0].mxu0
  %v509 = vadd.f32 %v394, %v508
  %v510 = vpop.f32.mrb[0].mxu0
  %v511 = vpop.f32.mrb[0].mxu0
  %v512 = vadd.f32 %v394, %v511
  %v513 = vpop.f32.mrb[0].mxu0
  %514 = vmatprep.mubr.bf16.mxu0 0
  %515 = vmatmul.mubr.bf16.gmra.mrb[0].mxu0 %v424
  %v516 = vpop.f32.mrb[0].mxu0
  %v517 = vadd.f32 %v394, %v516
  %v518 = vpop.f32.mrb[0].mxu0
  %v519 = vpop.f32.mrb[0].mxu0
  %v520 = vadd.f32 %v394, %v519
  %v521 = vpop.f32.mrb[0].mxu0
  %522 = vdwg.mxu0
  %v523 = vpack.c.bf16 %v464, %v461
  %v524 = vpack.c.bf16 %v472, %v469
  %v525 = vpack.c.bf16 %v480, %v477
  %v526 = vpack.c.bf16 %v488, %v485
  %v527 = vpack.c.bf16 %v496, %v493
  %v528 = vpack.c.bf16 %v504, %v501
  %v529 = vpack.c.bf16 %v512, %v509
  %v530 = vpack.c.bf16 %v520, %v517
  %v531 = vld [vmem:[%s7] sm:$0xf]
  %v532 = vld [vmem:[%s7 + $0x4] sm:$0xf]
  %v533 = vld [vmem:[%s7 + $0x8] sm:$0xf]
  %v534 = vld [vmem:[%s7 + $0xc] sm:$0xf]
  %v535 = vld [vmem:[%s8] sm:$0x1]
  %v537 = vlaneseq
  %v538 = vshrl.u32 %v537, 7
  %v539 = vsub.s32 0, %v538
  %v540 = vrot.slane %v535, %v539
  %v546 = vunpack.c.l.b16 %v531
  %v547 = vunpack.c.l.b16 %v532
  %v548 = vunpack.c.l.b16 %v533
  %v549 = vunpack.c.l.b16 %v534
  %v550 = vpack.c.b16 %v547, %v546
  %v551 = vpack.c.b16 %v549, %v548
  %v555 = vsel %vm143, %v523, 0
  %v558 = vsel %vm143, %v524, 0
  %v561 = vsel %vm143, %v525, 0
  %v564 = vsel %vm143, %v526, 0
  %v567 = vsel %vm143, %v527, 0
  %v570 = vsel %vm143, %v528, 0
  %v573 = vsel %vm143, %v529, 0
  %v576 = vsel %vm143, %v530, 0
  %578 = vmatprep.subr.bf16.mxu0 0
  %579 = vmatpush1.bf16.msra.mxu0 %v550
  %580 = vmatprep.subr.bf16.mxu0 0
  %581 = vmatpush1.bf16.msra.mxu0 %v551
  %582 = vmatprep.subr.bf16.mxu0 0
  %583 = vmatpush1.bf16.msra.mxu0 0
  %584 = vmatprep.subr.bf16.mxu0 0
  %585 = vmatpush1.bf16.msra.mxu0 0
  %586 = vmatprep.subr.bf16.mxu0 0
  %587 = vmatpush1.bf16.msra.mxu0 0
  %588 = vmatprep.subr.bf16.mxu0 0
  %589 = vmatpush1.bf16.msra.mxu0 0
  %590 = vmatprep.subr.bf16.mxu0 0
  %591 = vmatpush1.bf16.msra.mxu0 0
  %592 = vmatprep.subr.bf16.mxu0 0
  %593 = vmatpush1.bf16.msra.mxu0 0
  %594 = vmatprep.subr.bf16.mxu0 0
  %595 = vmatpush1.bf16.msra.mxu0 0
  %596 = vmatprep.subr.bf16.mxu0 0
  %597 = vmatpush1.bf16.msra.mxu0 0
  %598 = vmatprep.subr.bf16.mxu0 0
  %599 = vmatpush1.bf16.msra.mxu0 0
  %600 = vmatprep.subr.bf16.mxu0 0
  %601 = vmatpush1.bf16.msra.mxu0 0
  %602 = vmatprep.subr.bf16.mxu0 0
  %603 = vmatpush1.bf16.msra.mxu0 0
  %604 = vmatprep.subr.bf16.mxu0 0
  %605 = vmatpush1.bf16.msra.mxu0 0
  %606 = vmatprep.subr.bf16.mxu0 0
  %607 = vmatpush1.bf16.msra.mxu0 0
  %608 = vmatprep.subr.bf16.mxu0 0
  %609 = vmatpush1.bf16.msra.mxu0 0
  %610 = vmatprep.mubr.bf16.mxu0 0
  %611 = vmatmul.mubr.bf16.gmra.mrb[0].mxu0 %v555
  %v612 = vpop.f32.mrb[0].mxu0
  %v613 = vadd.f32 %v540, %v612
  %v614 = vpop.f32.mrb[0].mxu0
  %v615 = vpop.f32.mrb[0].mxu0
  %v616 = vadd.f32 %v540, %v615
  %v617 = vpop.f32.mrb[0].mxu0
  %618 = vmatprep.mubr.bf16.mxu0 0
  %619 = vmatmul.mubr.bf16.gmra.mrb[0].mxu0 %v558
  %v620 = vpop.f32.mrb[0].mxu0
  %v621 = vadd.f32 %v540, %v620
  %v622 = vpop.f32.mrb[0].mxu0
  %v623 = vpop.f32.mrb[0].mxu0
  %v624 = vadd.f32 %v540, %v623
  %v625 = vpop.f32.mrb[0].mxu0
  %626 = vmatprep.mubr.bf16.mxu0 0
  %627 = vmatmul.mubr.bf16.gmra.mrb[0].mxu0 %v561
  %v628 = vpop.f32.mrb[0].mxu0
  %v629 = vadd.f32 %v540, %v628
  %v630 = vpop.f32.mrb[0].mxu0
  %v631 = vpop.f32.mrb[0].mxu0
  %v632 = vadd.f32 %v540, %v631
  %v633 = vpop.f32.mrb[0].mxu0
  %634 = vmatprep.mubr.bf16.mxu0 0
  %635 = vmatmul.mubr.bf16.gmra.mrb[0].mxu0 %v564
  %v636 = vpop.f32.mrb[0].mxu0
  %v637 = vadd.f32 %v540, %v636
  %v638 = vpop.f32.mrb[0].mxu0
  %v639 = vpop.f32.mrb[0].mxu0
  %v640 = vadd.f32 %v540, %v639
  %v641 = vpop.f32.mrb[0].mxu0
  %642 = vmatprep.mubr.bf16.mxu0 0
  %643 = vmatmul.mubr.bf16.gmra.mrb[0].mxu0 %v567
  %v644 = vpop.f32.mrb[0].mxu0
  %v645 = vadd.f32 %v540, %v644
  %v646 = vpop.f32.mrb[0].mxu0
  %v647 = vpop.f32.mrb[0].mxu0
  %v648 = vadd.f32 %v540, %v647
  %v649 = vpop.f32.mrb[0].mxu0
  %650 = vmatprep.mubr.bf16.mxu0 0
  %651 = vmatmul.mubr.bf16.gmra.mrb[0].mxu0 %v570
  %v652 = vpop.f32.mrb[0].mxu0
  %v653 = vadd.f32 %v540, %v652
  %v654 = vpop.f32.mrb[0].mxu0
  %v655 = vpop.f32.mrb[0].mxu0
  %v656 = vadd.f32 %v540, %v655
  %v657 = vpop.f32.mrb[0].mxu0
  %658 = vmatprep.mubr.bf16.mxu0 0
  %659 = vmatmul.mubr.bf16.gmra.mrb[0].mxu0 %v573
  %v660 = vpop.f32.mrb[0].mxu0
  %v661 = vadd.f32 %v540, %v660
  %v662 = vpop.f32.mrb[0].mxu0
  %v663 = vpop.f32.mrb[0].mxu0
  %v664 = vadd.f32 %v540, %v663
  %v665 = vpop.f32.mrb[0].mxu0
  %666 = vmatprep.mubr.bf16.mxu0 0
  %667 = vmatmul.mubr.bf16.gmra.mrb[0].mxu0 %v576
  %v668 = vpop.f32.mrb[0].mxu0
  %v669 = vadd.f32 %v540, %v668
  %v670 = vpop.f32.mrb[0].mxu0
  %v671 = vpop.f32.mrb[0].mxu0
  %v672 = vadd.f32 %v540, %v671
  %v673 = vpop.f32.mrb[0].mxu0
  %674 = vdwg.mxu0
  %v675 = vpack.c.bf16 %v616, %v613
  %v676 = vpack.c.bf16 %v624, %v621
  %v677 = vpack.c.bf16 %v632, %v629
  %v678 = vpack.c.bf16 %v640, %v637
  %v679 = vpack.c.bf16 %v648, %v645
  %v680 = vpack.c.bf16 %v656, %v653
  %v681 = vpack.c.bf16 %v664, %v661
  %v682 = vpack.c.bf16 %v672, %v669
  %687 = vrot.lane.b32.xlu0 %v675, 120
  %v688 = vpop.permute.xlu0 %687
  %689 = vrot.lane.b32.xlu0 %v676, 120
  %v690 = vpop.permute.xlu0 %689
  %691 = vrot.lane.b32.xlu0 %v677, 120
  %v692 = vpop.permute.xlu0 %691
  %693 = vrot.lane.b32.xlu0 %v678, 120
  %v694 = vpop.permute.xlu0 %693
  %695 = vrot.lane.b32.xlu0 %v675, 112
  %v696 = vpop.permute.xlu0 %695
  %697 = vrot.lane.b32.xlu0 %v676, 112
  %v698 = vpop.permute.xlu0 %697
  %699 = vrot.lane.b32.xlu0 %v677, 112
  %v700 = vpop.permute.xlu0 %699
  %701 = vrot.lane.b32.xlu0 %v678, 112
  %v702 = vpop.permute.xlu0 %701
  %703 = vrot.lane.b32.xlu0 %v675, 104
  %v704 = vpop.permute.xlu0 %703
  %705 = vrot.lane.b32.xlu0 %v676, 104
  %v706 = vpop.permute.xlu0 %705
  %707 = vrot.lane.b32.xlu0 %v677, 104
  %v708 = vpop.permute.xlu0 %707
  %709 = vrot.lane.b32.xlu0 %v678, 104
  %v710 = vpop.permute.xlu0 %709
  %715 = vrot.lane.b32.xlu0 %v679, 120
  %v716 = vpop.permute.xlu0 %715
  %717 = vrot.lane.b32.xlu0 %v680, 120
  %v718 = vpop.permute.xlu0 %717
  %719 = vrot.lane.b32.xlu0 %v681, 120
  %v720 = vpop.permute.xlu0 %719
  %721 = vrot.lane.b32.xlu0 %v682, 120
  %v722 = vpop.permute.xlu0 %721
  %723 = vrot.lane.b32.xlu0 %v679, 112
  %v724 = vpop.permute.xlu0 %723
  %725 = vrot.lane.b32.xlu0 %v680, 112
  %v726 = vpop.permute.xlu0 %725
  %727 = vrot.lane.b32.xlu0 %v681, 112
  %v728 = vpop.permute.xlu0 %727
  %729 = vrot.lane.b32.xlu0 %v682, 112
  %v730 = vpop.permute.xlu0 %729
  %731 = vrot.lane.b32.xlu0 %v679, 104
  %v732 = vpop.permute.xlu0 %731
  %733 = vrot.lane.b32.xlu0 %v680, 104
  %v734 = vpop.permute.xlu0 %733
  %735 = vrot.lane.b32.xlu0 %v681, 104
  %v736 = vpop.permute.xlu0 %735
  %737 = vrot.lane.b32.xlu0 %v682, 104
  %v738 = vpop.permute.xlu0 %737
  %739 = vrot.lane.b32.xlu0 %v675, 96
  %v740 = vpop.permute.xlu0 %739
  %741 = vrot.lane.b32.xlu0 %v676, 96
  %v742 = vpop.permute.xlu0 %741
  %743 = vrot.lane.b32.xlu0 %v677, 96
  %v744 = vpop.permute.xlu0 %743
  %745 = vrot.lane.b32.xlu0 %v678, 96
  %v746 = vpop.permute.xlu0 %745
  %vm747 = vcmask 64512
  %v749 = vsel %vm747, %v675, 0
  %v752 = vsel %vm747, %v676, 0
  %v755 = vsel %vm747, %v677, 0
  %v758 = vsel %vm747, %v678, 0
  %v761 = vsel %vm747, %v740, 0
  %v764 = vsel %vm747, %v742, 0
  %v767 = vsel %vm747, %v744, 0
  %v770 = vsel %vm747, %v746, 0
  %772 = vmatprep.subr.bf16.mxu0 0
  %773 = vmatpush1.bf16.xpose.msra.mxu0 %v761
  %774 = vmatprep.subr.bf16.mxu0 0
  %775 = vmatpush1.bf16.xpose.msra.mxu0 %v764
  %776 = vmatprep.subr.bf16.mxu0 0
  %777 = vmatpush1.bf16.xpose.msra.mxu0 %v767
  %778 = vmatprep.subr.bf16.mxu0 0
  %779 = vmatpush1.bf16.xpose.msra.mxu0 %v770
  %780 = vmatprep.subr.bf16.mxu0 0
  %781 = vmatpush1.bf16.xpose.msra.mxu0 0
  %782 = vmatprep.subr.bf16.mxu0 0
  %783 = vmatpush1.bf16.xpose.msra.mxu0 0
  %784 = vmatprep.subr.bf16.mxu0 0
  %785 = vmatpush1.bf16.xpose.msra.mxu0 0
  %786 = vmatprep.subr.bf16.mxu0 0
  %787 = vmatpush1.bf16.xpose.msra.mxu0 0
  %788 = vmatprep.subr.bf16.mxu0 0
  %789 = vmatpush1.bf16.xpose.msra.mxu0 0
  %790 = vmatprep.subr.bf16.mxu0 0
  %791 = vmatpush1.bf16.xpose.msra.mxu0 0
  %792 = vmatprep.subr.bf16.mxu0 0
  %793 = vmatpush1.bf16.xpose.msra.mxu0 0
  %794 = vmatprep.subr.bf16.mxu0 0
  %795 = vmatpush1.bf16.xpose.msra.mxu0 0
  %796 = vmatprep.subr.bf16.mxu0 0
  %797 = vmatpush1.bf16.xpose.msra.mxu0 0
  %798 = vmatprep.subr.bf16.mxu0 0
  %799 = vmatpush1.bf16.xpose.msra.mxu0 0
  %800 = vmatprep.subr.bf16.mxu0 0
  %801 = vmatpush1.bf16.xpose.msra.mxu0 0
  %802 = vmatprep.subr.bf16.mxu0 0
  %803 = vmatpush1.bf16.xpose.msra.mxu0 0
  %804 = vmatprep.mubr.bf16.mxu0 0
  %805 = vmatmul.mubr.bf16.gmra.mrb[0].mxu0 %v749
  %v806 = vpop.f32.mrb[0].mxu0
  %v807 = vadd.f32 0.0, %v806
  %v808 = vpop.f32.mrb[0].mxu0
  %v809 = vpop.f32.mrb[0].mxu0
  %v810 = vadd.f32 0.0, %v809
  %v811 = vpop.f32.mrb[0].mxu0
  %812 = vmatprep.mubr.bf16.mxu0 0
  %813 = vmatmul.mubr.bf16.gmra.mrb[0].mxu0 %v752
  %v814 = vpop.f32.mrb[0].mxu0
  %v815 = vadd.f32 0.0, %v814
  %v816 = vpop.f32.mrb[0].mxu0
  %v817 = vpop.f32.mrb[0].mxu0
  %v818 = vadd.f32 0.0, %v817
  %v819 = vpop.f32.mrb[0].mxu0
  %820 = vmatprep.mubr.bf16.mxu0 0
  %821 = vmatmul.mubr.bf16.gmra.mrb[0].mxu0 %v755
  %v822 = vpop.f32.mrb[0].mxu0
  %v823 = vadd.f32 0.0, %v822
  %v824 = vpop.f32.mrb[0].mxu0
  %v825 = vpop.f32.mrb[0].mxu0
  %v826 = vadd.f32 0.0, %v825
  %v827 = vpop.f32.mrb[0].mxu0
  %828 = vmatprep.mubr.bf16.mxu0 0
  %829 = vmatmul.mubr.bf16.gmra.mrb[0].mxu0 %v758
  %v830 = vpop.f32.mrb[0].mxu0
  %v831 = vadd.f32 0.0, %v830
  %v832 = vpop.f32.mrb[0].mxu0
  %v833 = vpop.f32.mrb[0].mxu0
  %v834 = vadd.f32 0.0, %v833
  %v835 = vpop.f32.mrb[0].mxu0
  %836 = vdwg.mxu0
  %837 = vrot.lane.b32.xlu0 %v688, 96
  %v838 = vpop.permute.xlu0 %837
  %839 = vrot.lane.b32.xlu0 %v690, 96
  %v840 = vpop.permute.xlu0 %839
  %841 = vrot.lane.b32.xlu0 %v692, 96
  %v842 = vpop.permute.xlu0 %841
  %843 = vrot.lane.b32.xlu0 %v694, 96
  %v844 = vpop.permute.xlu0 %843
  %v846 = vsel %vm747, %v688, 0
  %v849 = vsel %vm747, %v690, 0
  %v852 = vsel %vm747, %v692, 0
  %v855 = vsel %vm747, %v694, 0
  %v858 = vsel %vm747, %v838, 0
  %v861 = vsel %vm747, %v840, 0
  %v864 = vsel %vm747, %v842, 0
  %v867 = vsel %vm747, %v844, 0
  %869 = vmatprep.subr.bf16.mxu0 0
  %870 = vmatpush1.bf16.xpose.msra.mxu0 %v858
  %871 = vmatprep.subr.bf16.mxu0 0
  %872 = vmatpush1.bf16.xpose.msra.mxu0 %v861
  %873 = vmatprep.subr.bf16.mxu0 0
  %874 = vmatpush1.bf16.xpose.msra.mxu0 %v864
  %875 = vmatprep.subr.bf16.mxu0 0
  %876 = vmatpush1.bf16.xpose.msra.mxu0 %v867
  %877 = vmatprep.subr.bf16.mxu0 0
  %878 = vmatpush1.bf16.xpose.msra.mxu0 0
  %879 = vmatprep.subr.bf16.mxu0 0
  %880 = vmatpush1.bf16.xpose.msra.mxu0 0
  %881 = vmatprep.subr.bf16.mxu0 0
  %882 = vmatpush1.bf16.xpose.msra.mxu0 0
  %883 = vmatprep.subr.bf16.mxu0 0
  %884 = vmatpush1.bf16.xpose.msra.mxu0 0
  %885 = vmatprep.subr.bf16.mxu0 0
  %886 = vmatpush1.bf16.xpose.msra.mxu0 0
  %887 = vmatprep.subr.bf16.mxu0 0
  %888 = vmatpush1.bf16.xpose.msra.mxu0 0
  %889 = vmatprep.subr.bf16.mxu0 0
  %890 = vmatpush1.bf16.xpose.msra.mxu0 0
  %891 = vmatprep.subr.bf16.mxu0 0
  %892 = vmatpush1.bf16.xpose.msra.mxu0 0
  %893 = vmatprep.subr.bf16.mxu0 0
  %894 = vmatpush1.bf16.xpose.msra.mxu0 0
  %895 = vmatprep.subr.bf16.mxu0 0
  %896 = vmatpush1.bf16.xpose.msra.mxu0 0
  %897 = vmatprep.subr.bf16.mxu0 0
  %898 = vmatpush1.bf16.xpose.msra.mxu0 0
  %899 = vmatprep.subr.bf16.mxu0 0
  %900 = vmatpush1.bf16.xpose.msra.mxu0 0
  %901 = vmatprep.mubr.bf16.mxu0 0
  %902 = vmatmul.mubr.bf16.gmra.mrb[0].mxu0 %v846
  %v903 = vpop.f32.mrb[0].mxu0
  %v904 = vadd.f32 0.0, %v903
  %v905 = vpop.f32.mrb[0].mxu0
  %v906 = vpop.f32.mrb[0].mxu0
  %v907 = vadd.f32 0.0, %v906
  %v908 = vpop.f32.mrb[0].mxu0
  %909 = vmatprep.mubr.bf16.mxu0 0
  %910 = vmatmul.mubr.bf16.gmra.mrb[0].mxu0 %v849
  %v911 = vpop.f32.mrb[0].mxu0
  %v912 = vadd.f32 0.0, %v911
  %v913 = vpop.f32.mrb[0].mxu0
  %v914 = vpop.f32.mrb[0].mxu0
  %v915 = vadd.f32 0.0, %v914
  %v916 = vpop.f32.mrb[0].mxu0
  %917 = vmatprep.mubr.bf16.mxu0 0
  %918 = vmatmul.mubr.bf16.gmra.mrb[0].mxu0 %v852
  %v919 = vpop.f32.mrb[0].mxu0
  %v920 = vadd.f32 0.0, %v919
  %v921 = vpop.f32.mrb[0].mxu0
  %v922 = vpop.f32.mrb[0].mxu0
  %v923 = vadd.f32 0.0, %v922
  %v924 = vpop.f32.mrb[0].mxu0
  %925 = vmatprep.mubr.bf16.mxu0 0
  %926 = vmatmul.mubr.bf16.gmra.mrb[0].mxu0 %v855
  %v927 = vpop.f32.mrb[0].mxu0
  %v928 = vadd.f32 0.0, %v927
  %v929 = vpop.f32.mrb[0].mxu0
  %v930 = vpop.f32.mrb[0].mxu0
  %v931 = vadd.f32 0.0, %v930
  %v932 = vpop.f32.mrb[0].mxu0
  %933 = vdwg.mxu0
  %934 = vrot.lane.b32.xlu0 %v696, 96
  %v935 = vpop.permute.xlu0 %934
  %936 = vrot.lane.b32.xlu0 %v698, 96
  %v937 = vpop.permute.xlu0 %936
  %938 = vrot.lane.b32.xlu0 %v700, 96
  %v939 = vpop.permute.xlu0 %938
  %940 = vrot.lane.b32.xlu0 %v702, 96
  %v941 = vpop.permute.xlu0 %940
  %v943 = vsel %vm747, %v696, 0
  %v946 = vsel %vm747, %v698, 0
  %v949 = vsel %vm747, %v700, 0
  %v952 = vsel %vm747, %v702, 0
  %v955 = vsel %vm747, %v935, 0
  %v958 = vsel %vm747, %v937, 0
  %v961 = vsel %vm747, %v939, 0
  %v964 = vsel %vm747, %v941, 0
  %966 = vmatprep.subr.bf16.mxu0 0
  %967 = vmatpush1.bf16.xpose.msra.mxu0 %v955
  %968 = vmatprep.subr.bf16.mxu0 0
  %969 = vmatpush1.bf16.xpose.msra.mxu0 %v958
  %970 = vmatprep.subr.bf16.mxu0 0
  %971 = vmatpush1.bf16.xpose.msra.mxu0 %v961
  %972 = vmatprep.subr.bf16.mxu0 0
  %973 = vmatpush1.bf16.xpose.msra.mxu0 %v964
  %974 = vmatprep.subr.bf16.mxu0 0
  %975 = vmatpush1.bf16.xpose.msra.mxu0 0
  %976 = vmatprep.subr.bf16.mxu0 0
  %977 = vmatpush1.bf16.xpose.msra.mxu0 0
  %978 = vmatprep.subr.bf16.mxu0 0
  %979 = vmatpush1.bf16.xpose.msra.mxu0 0
  %980 = vmatprep.subr.bf16.mxu0 0
  %981 = vmatpush1.bf16.xpose.msra.mxu0 0
  %982 = vmatprep.subr.bf16.mxu0 0
  %983 = vmatpush1.bf16.xpose.msra.mxu0 0
  %984 = vmatprep.subr.bf16.mxu0 0
  %985 = vmatpush1.bf16.xpose.msra.mxu0 0
  %986 = vmatprep.subr.bf16.mxu0 0
  %987 = vmatpush1.bf16.xpose.msra.mxu0 0
  %988 = vmatprep.subr.bf16.mxu0 0
  %989 = vmatpush1.bf16.xpose.msra.mxu0 0
  %990 = vmatprep.subr.bf16.mxu0 0
  %991 = vmatpush1.bf16.xpose.msra.mxu0 0
  %992 = vmatprep.subr.bf16.mxu0 0
  %993 = vmatpush1.bf16.xpose.msra.mxu0 0
  %994 = vmatprep.subr.bf16.mxu0 0
  %995 = vmatpush1.bf16.xpose.msra.mxu0 0
  %996 = vmatprep.subr.bf16.mxu0 0
  %997 = vmatpush1.bf16.xpose.msra.mxu0 0
  %998 = vmatprep.mubr.bf16.mxu0 0
  %999 = vmatmul.mubr.bf16.gmra.mrb[0].mxu0 %v943
  %v1000 = vpop.f32.mrb[0].mxu0
  %v1001 = vadd.f32 0.0, %v1000
  %v1002 = vpop.f32.mrb[0].mxu0
  %v1003 = vpop.f32.mrb[0].mxu0
  %v1004 = vadd.f32 0.0, %v1003
  %v1005 = vpop.f32.mrb[0].mxu0
  %1006 = vmatprep.mubr.bf16.mxu0 0
  %1007 = vmatmul.mubr.bf16.gmra.mrb[0].mxu0 %v946
  %v1008 = vpop.f32.mrb[0].mxu0
  %v1009 = vadd.f32 0.0, %v1008
  %v1010 = vpop.f32.mrb[0].mxu0
  %v1011 = vpop.f32.mrb[0].mxu0
  %v1012 = vadd.f32 0.0, %v1011
  %v1013 = vpop.f32.mrb[0].mxu0
  %1014 = vmatprep.mubr.bf16.mxu0 0
  %1015 = vmatmul.mubr.bf16.gmra.mrb[0].mxu0 %v949
  %v1016 = vpop.f32.mrb[0].mxu0
  %v1017 = vadd.f32 0.0, %v1016
  %v1018 = vpop.f32.mrb[0].mxu0
  %v1019 = vpop.f32.mrb[0].mxu0
  %v1020 = vadd.f32 0.0, %v1019
  %v1021 = vpop.f32.mrb[0].mxu0
  %1022 = vmatprep.mubr.bf16.mxu0 0
  %1023 = vmatmul.mubr.bf16.gmra.mrb[0].mxu0 %v952
  %v1024 = vpop.f32.mrb[0].mxu0
  %v1025 = vadd.f32 0.0, %v1024
  %v1026 = vpop.f32.mrb[0].mxu0
  %v1027 = vpop.f32.mrb[0].mxu0
  %v1028 = vadd.f32 0.0, %v1027
  %v1029 = vpop.f32.mrb[0].mxu0
  %1030 = vdwg.mxu0
  %1031 = vrot.lane.b32.xlu0 %v704, 96
  %v1032 = vpop.permute.xlu0 %1031
  %1033 = vrot.lane.b32.xlu0 %v706, 96
  %v1034 = vpop.permute.xlu0 %1033
  %1035 = vrot.lane.b32.xlu0 %v708, 96
  %v1036 = vpop.permute.xlu0 %1035
  %1037 = vrot.lane.b32.xlu0 %v710, 96
  %v1038 = vpop.permute.xlu0 %1037
  %v1040 = vsel %vm747, %v704, 0
  %v1043 = vsel %vm747, %v706, 0
  %v1046 = vsel %vm747, %v708, 0
  %v1049 = vsel %vm747, %v710, 0
  %v1052 = vsel %vm747, %v1032, 0
  %v1055 = vsel %vm747, %v1034, 0
  %v1058 = vsel %vm747, %v1036, 0
  %v1061 = vsel %vm747, %v1038, 0
  %1063 = vmatprep.subr.bf16.mxu0 0
  %1064 = vmatpush1.bf16.xpose.msra.mxu0 %v1052
  %1065 = vmatprep.subr.bf16.mxu0 0
  %1066 = vmatpush1.bf16.xpose.msra.mxu0 %v1055
  %1067 = vmatprep.subr.bf16.mxu0 0
  %1068 = vmatpush1.bf16.xpose.msra.mxu0 %v1058
  %1069 = vmatprep.subr.bf16.mxu0 0
  %1070 = vmatpush1.bf16.xpose.msra.mxu0 %v1061
  %1071 = vmatprep.subr.bf16.mxu0 0
  %1072 = vmatpush1.bf16.xpose.msra.mxu0 0
  %1073 = vmatprep.subr.bf16.mxu0 0
  %1074 = vmatpush1.bf16.xpose.msra.mxu0 0
  %1075 = vmatprep.subr.bf16.mxu0 0
  %1076 = vmatpush1.bf16.xpose.msra.mxu0 0
  %1077 = vmatprep.subr.bf16.mxu0 0
  %1078 = vmatpush1.bf16.xpose.msra.mxu0 0
  %1079 = vmatprep.subr.bf16.mxu0 0
  %1080 = vmatpush1.bf16.xpose.msra.mxu0 0
  %1081 = vmatprep.subr.bf16.mxu0 0
  %1082 = vmatpush1.bf16.xpose.msra.mxu0 0
  %1083 = vmatprep.subr.bf16.mxu0 0
  %1084 = vmatpush1.bf16.xpose.msra.mxu0 0
  %1085 = vmatprep.subr.bf16.mxu0 0
  %1086 = vmatpush1.bf16.xpose.msra.mxu0 0
  %1087 = vmatprep.subr.bf16.mxu0 0
  %1088 = vmatpush1.bf16.xpose.msra.mxu0 0
  %1089 = vmatprep.subr.bf16.mxu0 0
  %1090 = vmatpush1.bf16.xpose.msra.mxu0 0
  %1091 = vmatprep.subr.bf16.mxu0 0
  %1092 = vmatpush1.bf16.xpose.msra.mxu0 0
  %1093 = vmatprep.subr.bf16.mxu0 0
  %1094 = vmatpush1.bf16.xpose.msra.mxu0 0
  %1095 = vmatprep.mubr.bf16.mxu0 0
  %1096 = vmatmul.mubr.bf16.gmra.mrb[0].mxu0 %v1040
  %v1097 = vpop.f32.mrb[0].mxu0
  %v1098 = vadd.f32 0.0, %v1097
  %v1099 = vpop.f32.mrb[0].mxu0
  %v1100 = vpop.f32.mrb[0].mxu0
  %v1101 = vadd.f32 0.0, %v1100
  %v1102 = vpop.f32.mrb[0].mxu0
  %1103 = vmatprep.mubr.bf16.mxu0 0
  %1104 = vmatmul.mubr.bf16.gmra.mrb[0].mxu0 %v1043
  %v1105 = vpop.f32.mrb[0].mxu0
  %v1106 = vadd.f32 0.0, %v1105
  %v1107 = vpop.f32.mrb[0].mxu0
  %v1108 = vpop.f32.mrb[0].mxu0
  %v1109 = vadd.f32 0.0, %v1108
  %v1110 = vpop.f32.mrb[0].mxu0
  %1111 = vmatprep.mubr.bf16.mxu0 0
  %1112 = vmatmul.mubr.bf16.gmra.mrb[0].mxu0 %v1046
  %v1113 = vpop.f32.mrb[0].mxu0
  %v1114 = vadd.f32 0.0, %v1113
  %v1115 = vpop.f32.mrb[0].mxu0
  %v1116 = vpop.f32.mrb[0].mxu0
  %v1117 = vadd.f32 0.0, %v1116
  %v1118 = vpop.f32.mrb[0].mxu0
  %1119 = vmatprep.mubr.bf16.mxu0 0
  %1120 = vmatmul.mubr.bf16.gmra.mrb[0].mxu0 %v1049
  %v1121 = vpop.f32.mrb[0].mxu0
  %v1122 = vadd.f32 0.0, %v1121
  %v1123 = vpop.f32.mrb[0].mxu0
  %v1124 = vpop.f32.mrb[0].mxu0
  %v1125 = vadd.f32 0.0, %v1124
  %v1126 = vpop.f32.mrb[0].mxu0
  %1127 = vdwg.mxu0
  %1128 = vrot.lane.b32.xlu0 %v679, 96
  %v1129 = vpop.permute.xlu0 %1128
  %1130 = vrot.lane.b32.xlu0 %v680, 96
  %v1131 = vpop.permute.xlu0 %1130
  %1132 = vrot.lane.b32.xlu0 %v681, 96
  %v1133 = vpop.permute.xlu0 %1132
  %1134 = vrot.lane.b32.xlu0 %v682, 96
  %v1135 = vpop.permute.xlu0 %1134
  %v1137 = vsel %vm747, %v679, 0
  %v1140 = vsel %vm747, %v680, 0
  %v1143 = vsel %vm747, %v681, 0
  %v1146 = vsel %vm747, %v682, 0
  %v1149 = vsel %vm747, %v1129, 0
  %v1152 = vsel %vm747, %v1131, 0
  %v1155 = vsel %vm747, %v1133, 0
  %v1158 = vsel %vm747, %v1135, 0
  %1160 = vmatprep.subr.bf16.mxu0 0
  %1161 = vmatpush1.bf16.xpose.msra.mxu0 %v1149
  %1162 = vmatprep.subr.bf16.mxu0 0
  %1163 = vmatpush1.bf16.xpose.msra.mxu0 %v1152
  %1164 = vmatprep.subr.bf16.mxu0 0
  %1165 = vmatpush1.bf16.xpose.msra.mxu0 %v1155
  %1166 = vmatprep.subr.bf16.mxu0 0
  %1167 = vmatpush1.bf16.xpose.msra.mxu0 %v1158
  %1168 = vmatprep.subr.bf16.mxu0 0
  %1169 = vmatpush1.bf16.xpose.msra.mxu0 0
  %1170 = vmatprep.subr.bf16.mxu0 0
  %1171 = vmatpush1.bf16.xpose.msra.mxu0 0
  %1172 = vmatprep.subr.bf16.mxu0 0
  %1173 = vmatpush1.bf16.xpose.msra.mxu0 0
  %1174 = vmatprep.subr.bf16.mxu0 0
  %1175 = vmatpush1.bf16.xpose.msra.mxu0 0
  %1176 = vmatprep.subr.bf16.mxu0 0
  %1177 = vmatpush1.bf16.xpose.msra.mxu0 0
  %1178 = vmatprep.subr.bf16.mxu0 0
  %1179 = vmatpush1.bf16.xpose.msra.mxu0 0
  %1180 = vmatprep.subr.bf16.mxu0 0
  %1181 = vmatpush1.bf16.xpose.msra.mxu0 0
  %1182 = vmatprep.subr.bf16.mxu0 0
  %1183 = vmatpush1.bf16.xpose.msra.mxu0 0
  %1184 = vmatprep.subr.bf16.mxu0 0
  %1185 = vmatpush1.bf16.xpose.msra.mxu0 0
  %1186 = vmatprep.subr.bf16.mxu0 0
  %1187 = vmatpush1.bf16.xpose.msra.mxu0 0
  %1188 = vmatprep.subr.bf16.mxu0 0
  %1189 = vmatpush1.bf16.xpose.msra.mxu0 0
  %1190 = vmatprep.subr.bf16.mxu0 0
  %1191 = vmatpush1.bf16.xpose.msra.mxu0 0
  %1192 = vmatprep.mubr.bf16.mxu0 0
  %1193 = vmatmul.mubr.bf16.gmra.mrb[0].mxu0 %v1137
  %v1194 = vpop.f32.mrb[0].mxu0
  %v1195 = vadd.f32 0.0, %v1194
  %v1196 = vpop.f32.mrb[0].mxu0
  %v1197 = vpop.f32.mrb[0].mxu0
  %v1198 = vadd.f32 0.0, %v1197
  %v1199 = vpop.f32.mrb[0].mxu0
  %1200 = vmatprep.mubr.bf16.mxu0 0
  %1201 = vmatmul.mubr.bf16.gmra.mrb[0].mxu0 %v1140
  %v1202 = vpop.f32.mrb[0].mxu0
  %v1203 = vadd.f32 0.0, %v1202
  %v1204 = vpop.f32.mrb[0].mxu0
  %v1205 = vpop.f32.mrb[0].mxu0
  %v1206 = vadd.f32 0.0, %v1205
  %v1207 = vpop.f32.mrb[0].mxu0
  %1208 = vmatprep.mubr.bf16.mxu0 0
  %1209 = vmatmul.mubr.bf16.gmra.mrb[0].mxu0 %v1143
  %v1210 = vpop.f32.mrb[0].mxu0
  %v1211 = vadd.f32 0.0, %v1210
  %v1212 = vpop.f32.mrb[0].mxu0
  %v1213 = vpop.f32.mrb[0].mxu0
  %v1214 = vadd.f32 0.0, %v1213
  %v1215 = vpop.f32.mrb[0].mxu0
  %1216 = vmatprep.mubr.bf16.mxu0 0
  %1217 = vmatmul.mubr.bf16.gmra.mrb[0].mxu0 %v1146
  %v1218 = vpop.f32.mrb[0].mxu0
  %v1219 = vadd.f32 0.0, %v1218
  %v1220 = vpop.f32.mrb[0].mxu0
  %v1221 = vpop.f32.mrb[0].mxu0
  %v1222 = vadd.f32 0.0, %v1221
  %v1223 = vpop.f32.mrb[0].mxu0
  %1224 = vdwg.mxu0
  %1225 = vrot.lane.b32.xlu0 %v716, 96
  %v1226 = vpop.permute.xlu0 %1225
  %1227 = vrot.lane.b32.xlu0 %v718, 96
  %v1228 = vpop.permute.xlu0 %1227
  %1229 = vrot.lane.b32.xlu0 %v720, 96
  %v1230 = vpop.permute.xlu0 %1229
  %1231 = vrot.lane.b32.xlu0 %v722, 96
  %v1232 = vpop.permute.xlu0 %1231
  %v1234 = vsel %vm747, %v716, 0
  %v1237 = vsel %vm747, %v718, 0
  %v1240 = vsel %vm747, %v720, 0
  %v1243 = vsel %vm747, %v722, 0
  %v1246 = vsel %vm747, %v1226, 0
  %v1249 = vsel %vm747, %v1228, 0
  %v1252 = vsel %vm747, %v1230, 0
  %v1255 = vsel %vm747, %v1232, 0
  %1257 = vmatprep.subr.bf16.mxu0 0
  %1258 = vmatpush1.bf16.xpose.msra.mxu0 %v1246
  %1259 = vmatprep.subr.bf16.mxu0 0
  %1260 = vmatpush1.bf16.xpose.msra.mxu0 %v1249
  %1261 = vmatprep.subr.bf16.mxu0 0
  %1262 = vmatpush1.bf16.xpose.msra.mxu0 %v1252
  %1263 = vmatprep.subr.bf16.mxu0 0
  %1264 = vmatpush1.bf16.xpose.msra.mxu0 %v1255
  %1265 = vmatprep.subr.bf16.mxu0 0
  %1266 = vmatpush1.bf16.xpose.msra.mxu0 0
  %1267 = vmatprep.subr.bf16.mxu0 0
  %1268 = vmatpush1.bf16.xpose.msra.mxu0 0
  %1269 = vmatprep.subr.bf16.mxu0 0
  %1270 = vmatpush1.bf16.xpose.msra.mxu0 0
  %1271 = vmatprep.subr.bf16.mxu0 0
  %1272 = vmatpush1.bf16.xpose.msra.mxu0 0
  %1273 = vmatprep.subr.bf16.mxu0 0
  %1274 = vmatpush1.bf16.xpose.msra.mxu0 0
  %1275 = vmatprep.subr.bf16.mxu0 0
  %1276 = vmatpush1.bf16.xpose.msra.mxu0 0
  %1277 = vmatprep.subr.bf16.mxu0 0
  %1278 = vmatpush1.bf16.xpose.msra.mxu0 0
  %1279 = vmatprep.subr.bf16.mxu0 0
  %1280 = vmatpush1.bf16.xpose.msra.mxu0 0
  %1281 = vmatprep.subr.bf16.mxu0 0
  %1282 = vmatpush1.bf16.xpose.msra.mxu0 0
  %1283 = vmatprep.subr.bf16.mxu0 0
  %1284 = vmatpush1.bf16.xpose.msra.mxu0 0
  %1285 = vmatprep.subr.bf16.mxu0 0
  %1286 = vmatpush1.bf16.xpose.msra.mxu0 0
  %1287 = vmatprep.subr.bf16.mxu0 0
  %1288 = vmatpush1.bf16.xpose.msra.mxu0 0
  %1289 = vmatprep.mubr.bf16.mxu0 0
  %1290 = vmatmul.mubr.bf16.gmra.mrb[0].mxu0 %v1234
  %v1291 = vpop.f32.mrb[0].mxu0
  %v1292 = vadd.f32 0.0, %v1291
  %v1293 = vpop.f32.mrb[0].mxu0
  %v1294 = vpop.f32.mrb[0].mxu0
  %v1295 = vadd.f32 0.0, %v1294
  %v1296 = vpop.f32.mrb[0].mxu0
  %1297 = vmatprep.mubr.bf16.mxu0 0
  %1298 = vmatmul.mubr.bf16.gmra.mrb[0].mxu0 %v1237
  %v1299 = vpop.f32.mrb[0].mxu0
  %v1300 = vadd.f32 0.0, %v1299
  %v1301 = vpop.f32.mrb[0].mxu0
  %v1302 = vpop.f32.mrb[0].mxu0
  %v1303 = vadd.f32 0.0, %v1302
  %v1304 = vpop.f32.mrb[0].mxu0
  %1305 = vmatprep.mubr.bf16.mxu0 0
  %1306 = vmatmul.mubr.bf16.gmra.mrb[0].mxu0 %v1240
  %v1307 = vpop.f32.mrb[0].mxu0
  %v1308 = vadd.f32 0.0, %v1307
  %v1309 = vpop.f32.mrb[0].mxu0
  %v1310 = vpop.f32.mrb[0].mxu0
  %v1311 = vadd.f32 0.0, %v1310
  %v1312 = vpop.f32.mrb[0].mxu0
  %1313 = vmatprep.mubr.bf16.mxu0 0
  %1314 = vmatmul.mubr.bf16.gmra.mrb[0].mxu0 %v1243
  %v1315 = vpop.f32.mrb[0].mxu0
  %v1316 = vadd.f32 0.0, %v1315
  %v1317 = vpop.f32.mrb[0].mxu0
  %v1318 = vpop.f32.mrb[0].mxu0
  %v1319 = vadd.f32 0.0, %v1318
  %v1320 = vpop.f32.mrb[0].mxu0
  %1321 = vdwg.mxu0
  %1322 = vrot.lane.b32.xlu0 %v724, 96
  %v1323 = vpop.permute.xlu0 %1322
  %1324 = vrot.lane.b32.xlu0 %v726, 96
  %v1325 = vpop.permute.xlu0 %1324
  %1326 = vrot.lane.b32.xlu0 %v728, 96
  %v1327 = vpop.permute.xlu0 %1326
  %1328 = vrot.lane.b32.xlu0 %v730, 96
  %v1329 = vpop.permute.xlu0 %1328
  %v1331 = vsel %vm747, %v724, 0
  %v1334 = vsel %vm747, %v726, 0
  %v1337 = vsel %vm747, %v728, 0
  %v1340 = vsel %vm747, %v730, 0
  %v1343 = vsel %vm747, %v1323, 0
  %v1346 = vsel %vm747, %v1325, 0
  %v1349 = vsel %vm747, %v1327, 0
  %v1352 = vsel %vm747, %v1329, 0
  %1354 = vmatprep.subr.bf16.mxu0 0
  %1355 = vmatpush1.bf16.xpose.msra.mxu0 %v1343
  %1356 = vmatprep.subr.bf16.mxu0 0
  %1357 = vmatpush1.bf16.xpose.msra.mxu0 %v1346
  %1358 = vmatprep.subr.bf16.mxu0 0
  %1359 = vmatpush1.bf16.xpose.msra.mxu0 %v1349
  %1360 = vmatprep.subr.bf16.mxu0 0
  %1361 = vmatpush1.bf16.xpose.msra.mxu0 %v1352
  %1362 = vmatprep.subr.bf16.mxu0 0
  %1363 = vmatpush1.bf16.xpose.msra.mxu0 0
  %1364 = vmatprep.subr.bf16.mxu0 0
  %1365 = vmatpush1.bf16.xpose.msra.mxu0 0
  %1366 = vmatprep.subr.bf16.mxu0 0
  %1367 = vmatpush1.bf16.xpose.msra.mxu0 0
  %1368 = vmatprep.subr.bf16.mxu0 0
  %1369 = vmatpush1.bf16.xpose.msra.mxu0 0
  %1370 = vmatprep.subr.bf16.mxu0 0
  %1371 = vmatpush1.bf16.xpose.msra.mxu0 0
  %1372 = vmatprep.subr.bf16.mxu0 0
  %1373 = vmatpush1.bf16.xpose.msra.mxu0 0
  %1374 = vmatprep.subr.bf16.mxu0 0
  %1375 = vmatpush1.bf16.xpose.msra.mxu0 0
  %1376 = vmatprep.subr.bf16.mxu0 0
  %1377 = vmatpush1.bf16.xpose.msra.mxu0 0
  %1378 = vmatprep.subr.bf16.mxu0 0
  %1379 = vmatpush1.bf16.xpose.msra.mxu0 0
  %1380 = vmatprep.subr.bf16.mxu0 0
  %1381 = vmatpush1.bf16.xpose.msra.mxu0 0
  %1382 = vmatprep.subr.bf16.mxu0 0
  %1383 = vmatpush1.bf16.xpose.msra.mxu0 0
  %1384 = vmatprep.subr.bf16.mxu0 0
  %1385 = vmatpush1.bf16.xpose.msra.mxu0 0
  %1386 = vmatprep.mubr.bf16.mxu0 0
  %1387 = vmatmul.mubr.bf16.gmra.mrb[0].mxu0 %v1331
  %v1388 = vpop.f32.mrb[0].mxu0
  %v1389 = vadd.f32 0.0, %v1388
  %v1390 = vpop.f32.mrb[0].mxu0
  %v1391 = vpop.f32.mrb[0].mxu0
  %v1392 = vadd.f32 0.0, %v1391
  %v1393 = vpop.f32.mrb[0].mxu0
  %1394 = vmatprep.mubr.bf16.mxu0 0
  %1395 = vmatmul.mubr.bf16.gmra.mrb[0].mxu0 %v1334
  %v1396 = vpop.f32.mrb[0].mxu0
  %v1397 = vadd.f32 0.0, %v1396
  %v1398 = vpop.f32.mrb[0].mxu0
  %v1399 = vpop.f32.mrb[0].mxu0
  %v1400 = vadd.f32 0.0, %v1399
  %v1401 = vpop.f32.mrb[0].mxu0
  %1402 = vmatprep.mubr.bf16.mxu0 0
  %1403 = vmatmul.mubr.bf16.gmra.mrb[0].mxu0 %v1337
  %v1404 = vpop.f32.mrb[0].mxu0
  %v1405 = vadd.f32 0.0, %v1404
  %v1406 = vpop.f32.mrb[0].mxu0
  %v1407 = vpop.f32.mrb[0].mxu0
  %v1408 = vadd.f32 0.0, %v1407
  %v1409 = vpop.f32.mrb[0].mxu0
  %1410 = vmatprep.mubr.bf16.mxu0 0
  %1411 = vmatmul.mubr.bf16.gmra.mrb[0].mxu0 %v1340
  %v1412 = vpop.f32.mrb[0].mxu0
  %v1413 = vadd.f32 0.0, %v1412
  %v1414 = vpop.f32.mrb[0].mxu0
  %v1415 = vpop.f32.mrb[0].mxu0
  %v1416 = vadd.f32 0.0, %v1415
  %v1417 = vpop.f32.mrb[0].mxu0
  %1418 = vdwg.mxu0
  %1419 = vrot.lane.b32.xlu0 %v732, 96
  %v1420 = vpop.permute.xlu0 %1419
  %1421 = vrot.lane.b32.xlu0 %v734, 96
  %v1422 = vpop.permute.xlu0 %1421
  %1423 = vrot.lane.b32.xlu0 %v736, 96
  %v1424 = vpop.permute.xlu0 %1423
  %1425 = vrot.lane.b32.xlu0 %v738, 96
  %v1426 = vpop.permute.xlu0 %1425
  %v1428 = vsel %vm747, %v732, 0
  %v1431 = vsel %vm747, %v734, 0
  %v1434 = vsel %vm747, %v736, 0
  %v1437 = vsel %vm747, %v738, 0
  %v1440 = vsel %vm747, %v1420, 0
  %v1443 = vsel %vm747, %v1422, 0
  %v1446 = vsel %vm747, %v1424, 0
  %v1449 = vsel %vm747, %v1426, 0
  %1451 = vmatprep.subr.bf16.mxu0 0
  %1452 = vmatpush1.bf16.xpose.msra.mxu0 %v1440
  %1453 = vmatprep.subr.bf16.mxu0 0
  %1454 = vmatpush1.bf16.xpose.msra.mxu0 %v1443
  %1455 = vmatprep.subr.bf16.mxu0 0
  %1456 = vmatpush1.bf16.xpose.msra.mxu0 %v1446
  %1457 = vmatprep.subr.bf16.mxu0 0
  %1458 = vmatpush1.bf16.xpose.msra.mxu0 %v1449
  %1459 = vmatprep.subr.bf16.mxu0 0
  %1460 = vmatpush1.bf16.xpose.msra.mxu0 0
  %1461 = vmatprep.subr.bf16.mxu0 0
  %1462 = vmatpush1.bf16.xpose.msra.mxu0 0
  %1463 = vmatprep.subr.bf16.mxu0 0
  %1464 = vmatpush1.bf16.xpose.msra.mxu0 0
  %1465 = vmatprep.subr.bf16.mxu0 0
  %1466 = vmatpush1.bf16.xpose.msra.mxu0 0
  %1467 = vmatprep.subr.bf16.mxu0 0
  %1468 = vmatpush1.bf16.xpose.msra.mxu0 0
  %1469 = vmatprep.subr.bf16.mxu0 0
  %1470 = vmatpush1.bf16.xpose.msra.mxu0 0
  %1471 = vmatprep.subr.bf16.mxu0 0
  %1472 = vmatpush1.bf16.xpose.msra.mxu0 0
  %1473 = vmatprep.subr.bf16.mxu0 0
  %1474 = vmatpush1.bf16.xpose.msra.mxu0 0
  %1475 = vmatprep.subr.bf16.mxu0 0
  %1476 = vmatpush1.bf16.xpose.msra.mxu0 0
  %1477 = vmatprep.subr.bf16.mxu0 0
  %1478 = vmatpush1.bf16.xpose.msra.mxu0 0
  %1479 = vmatprep.subr.bf16.mxu0 0
  %1480 = vmatpush1.bf16.xpose.msra.mxu0 0
  %1481 = vmatprep.subr.bf16.mxu0 0
  %1482 = vmatpush1.bf16.xpose.msra.mxu0 0
  %1483 = vmatprep.mubr.bf16.mxu0 0
  %1484 = vmatmul.mubr.bf16.gmra.mrb[0].mxu0 %v1428
  %v1485 = vpop.f32.mrb[0].mxu0
  %v1486 = vadd.f32 0.0, %v1485
  %v1487 = vpop.f32.mrb[0].mxu0
  %v1488 = vpop.f32.mrb[0].mxu0
  %v1489 = vadd.f32 0.0, %v1488
  %v1490 = vpop.f32.mrb[0].mxu0
  %1491 = vmatprep.mubr.bf16.mxu0 0
  %1492 = vmatmul.mubr.bf16.gmra.mrb[0].mxu0 %v1431
  %v1493 = vpop.f32.mrb[0].mxu0
  %v1494 = vadd.f32 0.0, %v1493
  %v1495 = vpop.f32.mrb[0].mxu0
  %v1496 = vpop.f32.mrb[0].mxu0
  %v1497 = vadd.f32 0.0, %v1496
  %v1498 = vpop.f32.mrb[0].mxu0
  %1499 = vmatprep.mubr.bf16.mxu0 0
  %1500 = vmatmul.mubr.bf16.gmra.mrb[0].mxu0 %v1434
  %v1501 = vpop.f32.mrb[0].mxu0
  %v1502 = vadd.f32 0.0, %v1501
  %v1503 = vpop.f32.mrb[0].mxu0
  %v1504 = vpop.f32.mrb[0].mxu0
  %v1505 = vadd.f32 0.0, %v1504
  %v1506 = vpop.f32.mrb[0].mxu0
  %1507 = vmatprep.mubr.bf16.mxu0 0
  %1508 = vmatmul.mubr.bf16.gmra.mrb[0].mxu0 %v1437
  %v1509 = vpop.f32.mrb[0].mxu0
  %v1510 = vadd.f32 0.0, %v1509
  %v1511 = vpop.f32.mrb[0].mxu0
  %v1512 = vpop.f32.mrb[0].mxu0
  %v1513 = vadd.f32 0.0, %v1512
  %v1514 = vpop.f32.mrb[0].mxu0
  %1515 = vdwg.mxu0
  %v1516 = vmul.f32 %v807, 0.35355338
  %v1517 = vmul.f32 %v810, 0.35355338
  %v1518 = vmul.f32 %v815, 0.35355338
  %v1519 = vmul.f32 %v818, 0.35355338
  %v1520 = vmul.f32 %v823, 0.35355338
  %v1521 = vmul.f32 %v826, 0.35355338
  %v1522 = vmul.f32 %v831, 0.35355338
  %v1523 = vmul.f32 %v834, 0.35355338
  %v1524 = vmul.f32 %v904, 0.35355338
  %v1525 = vmul.f32 %v907, 0.35355338
  %v1526 = vmul.f32 %v912, 0.35355338
  %v1527 = vmul.f32 %v915, 0.35355338
  %v1528 = vmul.f32 %v920, 0.35355338
  %v1529 = vmul.f32 %v923, 0.35355338
  %v1530 = vmul.f32 %v928, 0.35355338
  %v1531 = vmul.f32 %v931, 0.35355338
  %v1532 = vmul.f32 %v1001, 0.35355338
  %v1533 = vmul.f32 %v1004, 0.35355338
  %v1534 = vmul.f32 %v1009, 0.35355338
  %v1535 = vmul.f32 %v1012, 0.35355338
  %v1536 = vmul.f32 %v1017, 0.35355338
  %v1537 = vmul.f32 %v1020, 0.35355338
  %v1538 = vmul.f32 %v1025, 0.35355338
  %v1539 = vmul.f32 %v1028, 0.35355338
  %v1540 = vmul.f32 %v1098, 0.35355338
  %v1541 = vmul.f32 %v1101, 0.35355338
  %v1542 = vmul.f32 %v1106, 0.35355338
  %v1543 = vmul.f32 %v1109, 0.35355338
  %v1544 = vmul.f32 %v1114, 0.35355338
  %v1545 = vmul.f32 %v1117, 0.35355338
  %v1546 = vmul.f32 %v1122, 0.35355338
  %v1547 = vmul.f32 %v1125, 0.35355338
  %v1548 = vmul.f32 %v1195, 0.35355338
  %v1549 = vmul.f32 %v1198, 0.35355338
  %v1550 = vmul.f32 %v1203, 0.35355338
  %v1551 = vmul.f32 %v1206, 0.35355338
  %v1552 = vmul.f32 %v1211, 0.35355338
  %v1553 = vmul.f32 %v1214, 0.35355338
  %v1554 = vmul.f32 %v1219, 0.35355338
  %v1555 = vmul.f32 %v1222, 0.35355338
  %v1556 = vmul.f32 %v1292, 0.35355338
  %v1557 = vmul.f32 %v1295, 0.35355338
  %v1558 = vmul.f32 %v1300, 0.35355338
  %v1559 = vmul.f32 %v1303, 0.35355338
  %v1560 = vmul.f32 %v1308, 0.35355338
  %v1561 = vmul.f32 %v1311, 0.35355338
  %v1562 = vmul.f32 %v1316, 0.35355338
  %v1563 = vmul.f32 %v1319, 0.35355338
  %v1564 = vmul.f32 %v1389, 0.35355338
  %v1565 = vmul.f32 %v1392, 0.35355338
  %v1566 = vmul.f32 %v1397, 0.35355338
  %v1567 = vmul.f32 %v1400, 0.35355338
  %v1568 = vmul.f32 %v1405, 0.35355338
  %v1569 = vmul.f32 %v1408, 0.35355338
  %v1570 = vmul.f32 %v1413, 0.35355338
  %v1571 = vmul.f32 %v1416, 0.35355338
  %v1572 = vmul.f32 %v1486, 0.35355338
  %v1573 = vmul.f32 %v1489, 0.35355338
  %v1574 = vmul.f32 %v1494, 0.35355338
  %v1575 = vmul.f32 %v1497, 0.35355338
  %v1576 = vmul.f32 %v1502, 0.35355338
  %v1577 = vmul.f32 %v1505, 0.35355338
  %v1578 = vmul.f32 %v1510, 0.35355338
  %v1579 = vmul.f32 %v1513, 0.35355338
  %vm1580 = vcmask 523264
  %v1581 = vsel %vm1580, %v1516, -inf
  %1582 = vmax.xlane.f32.xlu0 %v1581
  %v1583 = vpop.xlane.xlu0 %1582
  %v1584 = vsel %vm1580, %v1517, -inf
  %1585 = vmax.xlane.f32.xlu0 %v1584
  %v1586 = vpop.xlane.xlu0 %1585
  %v1587 = vsel %vm1580, %v1518, -inf
  %1588 = vmax.xlane.f32.xlu0 %v1587
  %v1589 = vpop.xlane.xlu0 %1588
  %v1590 = vsel %vm1580, %v1519, -inf
  %1591 = vmax.xlane.f32.xlu0 %v1590
  %v1592 = vpop.xlane.xlu0 %1591
  %v1593 = vsel %vm1580, %v1520, -inf
  %1594 = vmax.xlane.f32.xlu0 %v1593
  %v1595 = vpop.xlane.xlu0 %1594
  %v1596 = vsel %vm1580, %v1521, -inf
  %1597 = vmax.xlane.f32.xlu0 %v1596
  %v1598 = vpop.xlane.xlu0 %1597
  %v1599 = vsel %vm1580, %v1522, -inf
  %1600 = vmax.xlane.f32.xlu0 %v1599
  %v1601 = vpop.xlane.xlu0 %1600
  %v1602 = vsel %vm1580, %v1523, -inf
  %1603 = vmax.xlane.f32.xlu0 %v1602
  %v1604 = vpop.xlane.xlu0 %1603
  %v1605 = vsel %vm1580, %v1524, -inf
  %1606 = vmax.xlane.f32.xlu0 %v1605
  %v1607 = vpop.xlane.xlu0 %1606
  %v1608 = vsel %vm1580, %v1525, -inf
  %1609 = vmax.xlane.f32.xlu0 %v1608
  %v1610 = vpop.xlane.xlu0 %1609
  %v1611 = vsel %vm1580, %v1526, -inf
  %1612 = vmax.xlane.f32.xlu0 %v1611
  %v1613 = vpop.xlane.xlu0 %1612
  %v1614 = vsel %vm1580, %v1527, -inf
  %1615 = vmax.xlane.f32.xlu0 %v1614
  %v1616 = vpop.xlane.xlu0 %1615
  %v1617 = vsel %vm1580, %v1528, -inf
  %1618 = vmax.xlane.f32.xlu0 %v1617
  %v1619 = vpop.xlane.xlu0 %1618
  %v1620 = vsel %vm1580, %v1529, -inf
  %1621 = vmax.xlane.f32.xlu0 %v1620
  %v1622 = vpop.xlane.xlu0 %1621
  %v1623 = vsel %vm1580, %v1530, -inf
  %1624 = vmax.xlane.f32.xlu0 %v1623
  %v1625 = vpop.xlane.xlu0 %1624
  %v1626 = vsel %vm1580, %v1531, -inf
  %1627 = vmax.xlane.f32.xlu0 %v1626
  %v1628 = vpop.xlane.xlu0 %1627
  %v1629 = vsel %vm1580, %v1532, -inf
  %1630 = vmax.xlane.f32.xlu0 %v1629
  %v1631 = vpop.xlane.xlu0 %1630
  %v1632 = vsel %vm1580, %v1533, -inf
  %1633 = vmax.xlane.f32.xlu0 %v1632
  %v1634 = vpop.xlane.xlu0 %1633
  %v1635 = vsel %vm1580, %v1534, -inf
  %1636 = vmax.xlane.f32.xlu0 %v1635
  %v1637 = vpop.xlane.xlu0 %1636
  %v1638 = vsel %vm1580, %v1535, -inf
  %1639 = vmax.xlane.f32.xlu0 %v1638
  %v1640 = vpop.xlane.xlu0 %1639
  %v1641 = vsel %vm1580, %v1536, -inf
  %1642 = vmax.xlane.f32.xlu0 %v1641
  %v1643 = vpop.xlane.xlu0 %1642
  %v1644 = vsel %vm1580, %v1537, -inf
  %1645 = vmax.xlane.f32.xlu0 %v1644
  %v1646 = vpop.xlane.xlu0 %1645
  %v1647 = vsel %vm1580, %v1538, -inf
  %1648 = vmax.xlane.f32.xlu0 %v1647
  %v1649 = vpop.xlane.xlu0 %1648
  %v1650 = vsel %vm1580, %v1539, -inf
  %1651 = vmax.xlane.f32.xlu0 %v1650
  %v1652 = vpop.xlane.xlu0 %1651
  %v1653 = vsel %vm1580, %v1540, -inf
  %1654 = vmax.xlane.f32.xlu0 %v1653
  %v1655 = vpop.xlane.xlu0 %1654
  %v1656 = vsel %vm1580, %v1541, -inf
  %1657 = vmax.xlane.f32.xlu0 %v1656
  %v1658 = vpop.xlane.xlu0 %1657
  %v1659 = vsel %vm1580, %v1542, -inf
  %1660 = vmax.xlane.f32.xlu0 %v1659
  %v1661 = vpop.xlane.xlu0 %1660
  %v1662 = vsel %vm1580, %v1543, -inf
  %1663 = vmax.xlane.f32.xlu0 %v1662
  %v1664 = vpop.xlane.xlu0 %1663
  %v1665 = vsel %vm1580, %v1544, -inf
  %1666 = vmax.xlane.f32.xlu0 %v1665
  %v1667 = vpop.xlane.xlu0 %1666
  %v1668 = vsel %vm1580, %v1545, -inf
  %1669 = vmax.xlane.f32.xlu0 %v1668
  %v1670 = vpop.xlane.xlu0 %1669
  %v1671 = vsel %vm1580, %v1546, -inf
  %1672 = vmax.xlane.f32.xlu0 %v1671
  %v1673 = vpop.xlane.xlu0 %1672
  %v1674 = vsel %vm1580, %v1547, -inf
  %1675 = vmax.xlane.f32.xlu0 %v1674
  %v1676 = vpop.xlane.xlu0 %1675
  %v1677 = vsel %vm1580, %v1548, -inf
  %1678 = vmax.xlane.f32.xlu0 %v1677
  %v1679 = vpop.xlane.xlu0 %1678
  %v1680 = vsel %vm1580, %v1549, -inf
  %1681 = vmax.xlane.f32.xlu0 %v1680
  %v1682 = vpop.xlane.xlu0 %1681
  %v1683 = vsel %vm1580, %v1550, -inf
  %1684 = vmax.xlane.f32.xlu0 %v1683
  %v1685 = vpop.xlane.xlu0 %1684
  %v1686 = vsel %vm1580, %v1551, -inf
  %1687 = vmax.xlane.f32.xlu0 %v1686
  %v1688 = vpop.xlane.xlu0 %1687
  %v1689 = vsel %vm1580, %v1552, -inf
  %1690 = vmax.xlane.f32.xlu0 %v1689
  %v1691 = vpop.xlane.xlu0 %1690
  %v1692 = vsel %vm1580, %v1553, -inf
  %1693 = vmax.xlane.f32.xlu0 %v1692
  %v1694 = vpop.xlane.xlu0 %1693
  %v1695 = vsel %vm1580, %v1554, -inf
  %1696 = vmax.xlane.f32.xlu0 %v1695
  %v1697 = vpop.xlane.xlu0 %1696
  %v1698 = vsel %vm1580, %v1555, -inf
  %1699 = vmax.xlane.f32.xlu0 %v1698
  %v1700 = vpop.xlane.xlu0 %1699
  %v1701 = vsel %vm1580, %v1556, -inf
  %1702 = vmax.xlane.f32.xlu0 %v1701
  %v1703 = vpop.xlane.xlu0 %1702
  %v1704 = vsel %vm1580, %v1557, -inf
  %1705 = vmax.xlane.f32.xlu0 %v1704
  %v1706 = vpop.xlane.xlu0 %1705
  %v1707 = vsel %vm1580, %v1558, -inf
  %1708 = vmax.xlane.f32.xlu0 %v1707
  %v1709 = vpop.xlane.xlu0 %1708
  %v1710 = vsel %vm1580, %v1559, -inf
  %1711 = vmax.xlane.f32.xlu0 %v1710
  %v1712 = vpop.xlane.xlu0 %1711
  %v1713 = vsel %vm1580, %v1560, -inf
  %1714 = vmax.xlane.f32.xlu0 %v1713
  %v1715 = vpop.xlane.xlu0 %1714
  %v1716 = vsel %vm1580, %v1561, -inf
  %1717 = vmax.xlane.f32.xlu0 %v1716
  %v1718 = vpop.xlane.xlu0 %1717
  %v1719 = vsel %vm1580, %v1562, -inf
  %1720 = vmax.xlane.f32.xlu0 %v1719
  %v1721 = vpop.xlane.xlu0 %1720
  %v1722 = vsel %vm1580, %v1563, -inf
  %1723 = vmax.xlane.f32.xlu0 %v1722
  %v1724 = vpop.xlane.xlu0 %1723
  %v1725 = vsel %vm1580, %v1564, -inf
  %1726 = vmax.xlane.f32.xlu0 %v1725
  %v1727 = vpop.xlane.xlu0 %1726
  %v1728 = vsel %vm1580, %v1565, -inf
  %1729 = vmax.xlane.f32.xlu0 %v1728
  %v1730 = vpop.xlane.xlu0 %1729
  %v1731 = vsel %vm1580, %v1566, -inf
  %1732 = vmax.xlane.f32.xlu0 %v1731
  %v1733 = vpop.xlane.xlu0 %1732
  %v1734 = vsel %vm1580, %v1567, -inf
  %1735 = vmax.xlane.f32.xlu0 %v1734
  %v1736 = vpop.xlane.xlu0 %1735
  %v1737 = vsel %vm1580, %v1568, -inf
  %1738 = vmax.xlane.f32.xlu0 %v1737
  %v1739 = vpop.xlane.xlu0 %1738
  %v1740 = vsel %vm1580, %v1569, -inf
  %1741 = vmax.xlane.f32.xlu0 %v1740
  %v1742 = vpop.xlane.xlu0 %1741
  %v1743 = vsel %vm1580, %v1570, -inf
  %1744 = vmax.xlane.f32.xlu0 %v1743
  %v1745 = vpop.xlane.xlu0 %1744
  %v1746 = vsel %vm1580, %v1571, -inf
  %1747 = vmax.xlane.f32.xlu0 %v1746
  %v1748 = vpop.xlane.xlu0 %1747
  %v1749 = vsel %vm1580, %v1572, -inf
  %1750 = vmax.xlane.f32.xlu0 %v1749
  %v1751 = vpop.xlane.xlu0 %1750
  %v1752 = vsel %vm1580, %v1573, -inf
  %1753 = vmax.xlane.f32.xlu0 %v1752
  %v1754 = vpop.xlane.xlu0 %1753
  %v1755 = vsel %vm1580, %v1574, -inf
  %1756 = vmax.xlane.f32.xlu0 %v1755
  %v1757 = vpop.xlane.xlu0 %1756
  %v1758 = vsel %vm1580, %v1575, -inf
  %1759 = vmax.xlane.f32.xlu0 %v1758
  %v1760 = vpop.xlane.xlu0 %1759
  %v1761 = vsel %vm1580, %v1576, -inf
  %1762 = vmax.xlane.f32.xlu0 %v1761
  %v1763 = vpop.xlane.xlu0 %1762
  %v1764 = vsel %vm1580, %v1577, -inf
  %1765 = vmax.xlane.f32.xlu0 %v1764
  %v1766 = vpop.xlane.xlu0 %1765
  %v1767 = vsel %vm1580, %v1578, -inf
  %1768 = vmax.xlane.f32.xlu0 %v1767
  %v1769 = vpop.xlane.xlu0 %1768
  %v1770 = vsel %vm1580, %v1579, -inf
  %1771 = vmax.xlane.f32.xlu0 %v1770
  %v1772 = vpop.xlane.xlu0 %1771
  %v1773 = vsub.f32 %v1516, %v1583
  %v1774 = vsub.f32 %v1517, %v1586
  %v1775 = vsub.f32 %v1518, %v1589
  %v1776 = vsub.f32 %v1519, %v1592
  %v1777 = vsub.f32 %v1520, %v1595
  %v1778 = vsub.f32 %v1521, %v1598
  %v1779 = vsub.f32 %v1522, %v1601
  %v1780 = vsub.f32 %v1523, %v1604
  %v1781 = vsub.f32 %v1524, %v1607
  %v1782 = vsub.f32 %v1525, %v1610
  %v1783 = vsub.f32 %v1526, %v1613
  %v1784 = vsub.f32 %v1527, %v1616
  %v1785 = vsub.f32 %v1528, %v1619
  %v1786 = vsub.f32 %v1529, %v1622
  %v1787 = vsub.f32 %v1530, %v1625
  %v1788 = vsub.f32 %v1531, %v1628
  %v1789 = vsub.f32 %v1532, %v1631
  %v1790 = vsub.f32 %v1533, %v1634
  %v1791 = vsub.f32 %v1534, %v1637
  %v1792 = vsub.f32 %v1535, %v1640
  %v1793 = vsub.f32 %v1536, %v1643
  %v1794 = vsub.f32 %v1537, %v1646
  %v1795 = vsub.f32 %v1538, %v1649
  %v1796 = vsub.f32 %v1539, %v1652
  %v1797 = vsub.f32 %v1540, %v1655
  %v1798 = vsub.f32 %v1541, %v1658
  %v1799 = vsub.f32 %v1542, %v1661
  %v1800 = vsub.f32 %v1543, %v1664
  %v1801 = vsub.f32 %v1544, %v1667
  %v1802 = vsub.f32 %v1545, %v1670
  %v1803 = vsub.f32 %v1546, %v1673
  %v1804 = vsub.f32 %v1547, %v1676
  %v1805 = vsub.f32 %v1548, %v1679
  %v1806 = vsub.f32 %v1549, %v1682
  %v1807 = vsub.f32 %v1550, %v1685
  %v1808 = vsub.f32 %v1551, %v1688
  %v1809 = vsub.f32 %v1552, %v1691
  %v1810 = vsub.f32 %v1553, %v1694
  %v1811 = vsub.f32 %v1554, %v1697
  %v1812 = vsub.f32 %v1555, %v1700
  %v1813 = vsub.f32 %v1556, %v1703
  %v1814 = vsub.f32 %v1557, %v1706
  %v1815 = vsub.f32 %v1558, %v1709
  %v1816 = vsub.f32 %v1559, %v1712
  %v1817 = vsub.f32 %v1560, %v1715
  %v1818 = vsub.f32 %v1561, %v1718
  %v1819 = vsub.f32 %v1562, %v1721
  %v1820 = vsub.f32 %v1563, %v1724
  %v1821 = vsub.f32 %v1564, %v1727
  %v1822 = vsub.f32 %v1565, %v1730
  %v1823 = vsub.f32 %v1566, %v1733
  %v1824 = vsub.f32 %v1567, %v1736
  %v1825 = vsub.f32 %v1568, %v1739
  %v1826 = vsub.f32 %v1569, %v1742
  %v1827 = vsub.f32 %v1570, %v1745
  %v1828 = vsub.f32 %v1571, %v1748
  %v1829 = vsub.f32 %v1572, %v1751
  %v1830 = vsub.f32 %v1573, %v1754
  %v1831 = vsub.f32 %v1574, %v1757
  %v1832 = vsub.f32 %v1575, %v1760
  %v1833 = vsub.f32 %v1576, %v1763
  %v1834 = vsub.f32 %v1577, %v1766
  %v1835 = vsub.f32 %v1578, %v1769
  %v1836 = vsub.f32 %v1579, %v1772
  %v1837 = vmul.f32 %v1773, 1.442695
  %v1838 = vpow.pop %v1837
  %v1839 = vmul.f32 %v1774, 1.442695
  %v1840 = vpow.pop %v1839
  %v1841 = vmul.f32 %v1775, 1.442695
  %v1842 = vpow.pop %v1841
  %v1843 = vmul.f32 %v1776, 1.442695
  %v1844 = vpow.pop %v1843
  %v1845 = vmul.f32 %v1777, 1.442695
  %v1846 = vpow.pop %v1845
  %v1847 = vmul.f32 %v1778, 1.442695
  %v1848 = vpow.pop %v1847
  %v1849 = vmul.f32 %v1779, 1.442695
  %v1850 = vpow.pop %v1849
  %v1851 = vmul.f32 %v1780, 1.442695
  %v1852 = vpow.pop %v1851
  %v1853 = vmul.f32 %v1781, 1.442695
  %v1854 = vpow.pop %v1853
  %v1855 = vmul.f32 %v1782, 1.442695
  %v1856 = vpow.pop %v1855
  %v1857 = vmul.f32 %v1783, 1.442695
  %v1858 = vpow.pop %v1857
  %v1859 = vmul.f32 %v1784, 1.442695
  %v1860 = vpow.pop %v1859
  %v1861 = vmul.f32 %v1785, 1.442695
  %v1862 = vpow.pop %v1861
  %v1863 = vmul.f32 %v1786, 1.442695
  %v1864 = vpow.pop %v1863
  %v1865 = vmul.f32 %v1787, 1.442695
  %v1866 = vpow.pop %v1865
  %v1867 = vmul.f32 %v1788, 1.442695
  %v1868 = vpow.pop %v1867
  %v1869 = vmul.f32 %v1789, 1.442695
  %v1870 = vpow.pop %v1869
  %v1871 = vmul.f32 %v1790, 1.442695
  %v1872 = vpow.pop %v1871
  %v1873 = vmul.f32 %v1791, 1.442695
  %v1874 = vpow.pop %v1873
  %v1875 = vmul.f32 %v1792, 1.442695
  %v1876 = vpow.pop %v1875
  %v1877 = vmul.f32 %v1793, 1.442695
  %v1878 = vpow.pop %v1877
  %v1879 = vmul.f32 %v1794, 1.442695
  %v1880 = vpow.pop %v1879
  %v1881 = vmul.f32 %v1795, 1.442695
  %v1882 = vpow.pop %v1881
  %v1883 = vmul.f32 %v1796, 1.442695
  %v1884 = vpow.pop %v1883
  %v1885 = vmul.f32 %v1797, 1.442695
  %v1886 = vpow.pop %v1885
  %v1887 = vmul.f32 %v1798, 1.442695
  %v1888 = vpow.pop %v1887
  %v1889 = vmul.f32 %v1799, 1.442695
  %v1890 = vpow.pop %v1889
  %v1891 = vmul.f32 %v1800, 1.442695
  %v1892 = vpow.pop %v1891
  %v1893 = vmul.f32 %v1801, 1.442695
  %v1894 = vpow.pop %v1893
  %v1895 = vmul.f32 %v1802, 1.442695
  %v1896 = vpow.pop %v1895
  %v1897 = vmul.f32 %v1803, 1.442695
  %v1898 = vpow.pop %v1897
  %v1899 = vmul.f32 %v1804, 1.442695
  %v1900 = vpow.pop %v1899
  %v1901 = vmul.f32 %v1805, 1.442695
  %v1902 = vpow.pop %v1901
  %v1903 = vmul.f32 %v1806, 1.442695
  %v1904 = vpow.pop %v1903
  %v1905 = vmul.f32 %v1807, 1.442695
  %v1906 = vpow.pop %v1905
  %v1907 = vmul.f32 %v1808, 1.442695
  %v1908 = vpow.pop %v1907
  %v1909 = vmul.f32 %v1809, 1.442695
  %v1910 = vpow.pop %v1909
  %v1911 = vmul.f32 %v1810, 1.442695
  %v1912 = vpow.pop %v1911
  %v1913 = vmul.f32 %v1811, 1.442695
  %v1914 = vpow.pop %v1913
  %v1915 = vmul.f32 %v1812, 1.442695
  %v1916 = vpow.pop %v1915
  %v1917 = vmul.f32 %v1813, 1.442695
  %v1918 = vpow.pop %v1917
  %v1919 = vmul.f32 %v1814, 1.442695
  %v1920 = vpow.pop %v1919
  %v1921 = vmul.f32 %v1815, 1.442695
  %v1922 = vpow.pop %v1921
  %v1923 = vmul.f32 %v1816, 1.442695
  %v1924 = vpow.pop %v1923
  %v1925 = vmul.f32 %v1817, 1.442695
  %v1926 = vpow.pop %v1925
  %v1927 = vmul.f32 %v1818, 1.442695
  %v1928 = vpow.pop %v1927
  %v1929 = vmul.f32 %v1819, 1.442695
  %v1930 = vpow.pop %v1929
  %v1931 = vmul.f32 %v1820, 1.442695
  %v1932 = vpow.pop %v1931
  %v1933 = vmul.f32 %v1821, 1.442695
  %v1934 = vpow.pop %v1933
  %v1935 = vmul.f32 %v1822, 1.442695
  %v1936 = vpow.pop %v1935
  %v1937 = vmul.f32 %v1823, 1.442695
  %v1938 = vpow.pop %v1937
  %v1939 = vmul.f32 %v1824, 1.442695
  %v1940 = vpow.pop %v1939
  %v1941 = vmul.f32 %v1825, 1.442695
  %v1942 = vpow.pop %v1941
  %v1943 = vmul.f32 %v1826, 1.442695
  %v1944 = vpow.pop %v1943
  %v1945 = vmul.f32 %v1827, 1.442695
  %v1946 = vpow.pop %v1945
  %v1947 = vmul.f32 %v1828, 1.442695
  %v1948 = vpow.pop %v1947
  %v1949 = vmul.f32 %v1829, 1.442695
  %v1950 = vpow.pop %v1949
  %v1951 = vmul.f32 %v1830, 1.442695
  %v1952 = vpow.pop %v1951
  %v1953 = vmul.f32 %v1831, 1.442695
  %v1954 = vpow.pop %v1953
  %v1955 = vmul.f32 %v1832, 1.442695
  %v1956 = vpow.pop %v1955
  %v1957 = vmul.f32 %v1833, 1.442695
  %v1958 = vpow.pop %v1957
  %v1959 = vmul.f32 %v1834, 1.442695
  %v1960 = vpow.pop %v1959
  %v1961 = vmul.f32 %v1835, 1.442695
  %v1962 = vpow.pop %v1961
  %v1963 = vmul.f32 %v1836, 1.442695
  %v1964 = vpow.pop %v1963
  %v1965 = vsel %vm1580, %v1838, 0.0
  %1966 = vadd.xlane.f32.xlu0 %v1965
  %v1967 = vpop.xlane.xlu0 %1966
  %v1968 = vsel %vm1580, %v1840, 0.0
  %1969 = vadd.xlane.f32.xlu0 %v1968
  %v1970 = vpop.xlane.xlu0 %1969
  %v1971 = vsel %vm1580, %v1842, 0.0
  %1972 = vadd.xlane.f32.xlu0 %v1971
  %v1973 = vpop.xlane.xlu0 %1972
  %v1974 = vsel %vm1580, %v1844, 0.0
  %1975 = vadd.xlane.f32.xlu0 %v1974
  %v1976 = vpop.xlane.xlu0 %1975
  %v1977 = vsel %vm1580, %v1846, 0.0
  %1978 = vadd.xlane.f32.xlu0 %v1977
  %v1979 = vpop.xlane.xlu0 %1978
  %v1980 = vsel %vm1580, %v1848, 0.0
  %1981 = vadd.xlane.f32.xlu0 %v1980
  %v1982 = vpop.xlane.xlu0 %1981
  %v1983 = vsel %vm1580, %v1850, 0.0
  %1984 = vadd.xlane.f32.xlu0 %v1983
  %v1985 = vpop.xlane.xlu0 %1984
  %v1986 = vsel %vm1580, %v1852, 0.0
  %1987 = vadd.xlane.f32.xlu0 %v1986
  %v1988 = vpop.xlane.xlu0 %1987
  %v1989 = vsel %vm1580, %v1854, 0.0
  %1990 = vadd.xlane.f32.xlu0 %v1989
  %v1991 = vpop.xlane.xlu0 %1990
  %v1992 = vsel %vm1580, %v1856, 0.0
  %1993 = vadd.xlane.f32.xlu0 %v1992
  %v1994 = vpop.xlane.xlu0 %1993
  %v1995 = vsel %vm1580, %v1858, 0.0
  %1996 = vadd.xlane.f32.xlu0 %v1995
  %v1997 = vpop.xlane.xlu0 %1996
  %v1998 = vsel %vm1580, %v1860, 0.0
  %1999 = vadd.xlane.f32.xlu0 %v1998
  %v2000 = vpop.xlane.xlu0 %1999
  %v2001 = vsel %vm1580, %v1862, 0.0
  %2002 = vadd.xlane.f32.xlu0 %v2001
  %v2003 = vpop.xlane.xlu0 %2002
  %v2004 = vsel %vm1580, %v1864, 0.0
  %2005 = vadd.xlane.f32.xlu0 %v2004
  %v2006 = vpop.xlane.xlu0 %2005
  %v2007 = vsel %vm1580, %v1866, 0.0
  %2008 = vadd.xlane.f32.xlu0 %v2007
  %v2009 = vpop.xlane.xlu0 %2008
  %v2010 = vsel %vm1580, %v1868, 0.0
  %2011 = vadd.xlane.f32.xlu0 %v2010
  %v2012 = vpop.xlane.xlu0 %2011
  %v2013 = vsel %vm1580, %v1870, 0.0
  %2014 = vadd.xlane.f32.xlu0 %v2013
  %v2015 = vpop.xlane.xlu0 %2014
  %v2016 = vsel %vm1580, %v1872, 0.0
  %2017 = vadd.xlane.f32.xlu0 %v2016
  %v2018 = vpop.xlane.xlu0 %2017
  %v2019 = vsel %vm1580, %v1874, 0.0
  %2020 = vadd.xlane.f32.xlu0 %v2019
  %v2021 = vpop.xlane.xlu0 %2020
  %v2022 = vsel %vm1580, %v1876, 0.0
  %2023 = vadd.xlane.f32.xlu0 %v2022
  %v2024 = vpop.xlane.xlu0 %2023
  %v2025 = vsel %vm1580, %v1878, 0.0
  %2026 = vadd.xlane.f32.xlu0 %v2025
  %v2027 = vpop.xlane.xlu0 %2026
  %v2028 = vsel %vm1580, %v1880, 0.0
  %2029 = vadd.xlane.f32.xlu0 %v2028
  %v2030 = vpop.xlane.xlu0 %2029
  %v2031 = vsel %vm1580, %v1882, 0.0
  %2032 = vadd.xlane.f32.xlu0 %v2031
  %v2033 = vpop.xlane.xlu0 %2032
  %v2034 = vsel %vm1580, %v1884, 0.0
  %2035 = vadd.xlane.f32.xlu0 %v2034
  %v2036 = vpop.xlane.xlu0 %2035
  %v2037 = vsel %vm1580, %v1886, 0.0
  %2038 = vadd.xlane.f32.xlu0 %v2037
  %v2039 = vpop.xlane.xlu0 %2038
  %v2040 = vsel %vm1580, %v1888, 0.0
  %2041 = vadd.xlane.f32.xlu0 %v2040
  %v2042 = vpop.xlane.xlu0 %2041
  %v2043 = vsel %vm1580, %v1890, 0.0
  %2044 = vadd.xlane.f32.xlu0 %v2043
  %v2045 = vpop.xlane.xlu0 %2044
  %v2046 = vsel %vm1580, %v1892, 0.0
  %2047 = vadd.xlane.f32.xlu0 %v2046
  %v2048 = vpop.xlane.xlu0 %2047
  %v2049 = vsel %vm1580, %v1894, 0.0
  %2050 = vadd.xlane.f32.xlu0 %v2049
  %v2051 = vpop.xlane.xlu0 %2050
  %v2052 = vsel %vm1580, %v1896, 0.0
  %2053 = vadd.xlane.f32.xlu0 %v2052
  %v2054 = vpop.xlane.xlu0 %2053
  %v2055 = vsel %vm1580, %v1898, 0.0
  %2056 = vadd.xlane.f32.xlu0 %v2055
  %v2057 = vpop.xlane.xlu0 %2056
  %v2058 = vsel %vm1580, %v1900, 0.0
  %2059 = vadd.xlane.f32.xlu0 %v2058
  %v2060 = vpop.xlane.xlu0 %2059
  %v2061 = vsel %vm1580, %v1902, 0.0
  %2062 = vadd.xlane.f32.xlu0 %v2061
  %v2063 = vpop.xlane.xlu0 %2062
  %v2064 = vsel %vm1580, %v1904, 0.0
  %2065 = vadd.xlane.f32.xlu0 %v2064
  %v2066 = vpop.xlane.xlu0 %2065
  %v2067 = vsel %vm1580, %v1906, 0.0
  %2068 = vadd.xlane.f32.xlu0 %v2067
  %v2069 = vpop.xlane.xlu0 %2068
  %v2070 = vsel %vm1580, %v1908, 0.0
  %2071 = vadd.xlane.f32.xlu0 %v2070
  %v2072 = vpop.xlane.xlu0 %2071
  %v2073 = vsel %vm1580, %v1910, 0.0
  %2074 = vadd.xlane.f32.xlu0 %v2073
  %v2075 = vpop.xlane.xlu0 %2074
  %v2076 = vsel %vm1580, %v1912, 0.0
  %2077 = vadd.xlane.f32.xlu0 %v2076
  %v2078 = vpop.xlane.xlu0 %2077
  %v2079 = vsel %vm1580, %v1914, 0.0
  %2080 = vadd.xlane.f32.xlu0 %v2079
  %v2081 = vpop.xlane.xlu0 %2080
  %v2082 = vsel %vm1580, %v1916, 0.0
  %2083 = vadd.xlane.f32.xlu0 %v2082
  %v2084 = vpop.xlane.xlu0 %2083
  %v2085 = vsel %vm1580, %v1918, 0.0
  %2086 = vadd.xlane.f32.xlu0 %v2085
  %v2087 = vpop.xlane.xlu0 %2086
  %v2088 = vsel %vm1580, %v1920, 0.0
  %2089 = vadd.xlane.f32.xlu0 %v2088
  %v2090 = vpop.xlane.xlu0 %2089
  %v2091 = vsel %vm1580, %v1922, 0.0
  %2092 = vadd.xlane.f32.xlu0 %v2091
  %v2093 = vpop.xlane.xlu0 %2092
  %v2094 = vsel %vm1580, %v1924, 0.0
  %2095 = vadd.xlane.f32.xlu0 %v2094
  %v2096 = vpop.xlane.xlu0 %2095
  %v2097 = vsel %vm1580, %v1926, 0.0
  %2098 = vadd.xlane.f32.xlu0 %v2097
  %v2099 = vpop.xlane.xlu0 %2098
  %v2100 = vsel %vm1580, %v1928, 0.0
  %2101 = vadd.xlane.f32.xlu0 %v2100
  %v2102 = vpop.xlane.xlu0 %2101
  %v2103 = vsel %vm1580, %v1930, 0.0
  %2104 = vadd.xlane.f32.xlu0 %v2103
  %v2105 = vpop.xlane.xlu0 %2104
  %v2106 = vsel %vm1580, %v1932, 0.0
  %2107 = vadd.xlane.f32.xlu0 %v2106
  %v2108 = vpop.xlane.xlu0 %2107
  %v2109 = vsel %vm1580, %v1934, 0.0
  %2110 = vadd.xlane.f32.xlu0 %v2109
  %v2111 = vpop.xlane.xlu0 %2110
  %v2112 = vsel %vm1580, %v1936, 0.0
  %2113 = vadd.xlane.f32.xlu0 %v2112
  %v2114 = vpop.xlane.xlu0 %2113
  %v2115 = vsel %vm1580, %v1938, 0.0
  %2116 = vadd.xlane.f32.xlu0 %v2115
  %v2117 = vpop.xlane.xlu0 %2116
  %v2118 = vsel %vm1580, %v1940, 0.0
  %2119 = vadd.xlane.f32.xlu0 %v2118
  %v2120 = vpop.xlane.xlu0 %2119
  %v2121 = vsel %vm1580, %v1942, 0.0
  %2122 = vadd.xlane.f32.xlu0 %v2121
  %v2123 = vpop.xlane.xlu0 %2122
  %v2124 = vsel %vm1580, %v1944, 0.0
  %2125 = vadd.xlane.f32.xlu0 %v2124
  %v2126 = vpop.xlane.xlu0 %2125
  %v2127 = vsel %vm1580, %v1946, 0.0
  %2128 = vadd.xlane.f32.xlu0 %v2127
  %v2129 = vpop.xlane.xlu0 %2128
  %v2130 = vsel %vm1580, %v1948, 0.0
  %2131 = vadd.xlane.f32.xlu0 %v2130
  %v2132 = vpop.xlane.xlu0 %2131
  %v2133 = vsel %vm1580, %v1950, 0.0
  %2134 = vadd.xlane.f32.xlu0 %v2133
  %v2135 = vpop.xlane.xlu0 %2134
  %v2136 = vsel %vm1580, %v1952, 0.0
  %2137 = vadd.xlane.f32.xlu0 %v2136
  %v2138 = vpop.xlane.xlu0 %2137
  %v2139 = vsel %vm1580, %v1954, 0.0
  %2140 = vadd.xlane.f32.xlu0 %v2139
  %v2141 = vpop.xlane.xlu0 %2140
  %v2142 = vsel %vm1580, %v1956, 0.0
  %2143 = vadd.xlane.f32.xlu0 %v2142
  %v2144 = vpop.xlane.xlu0 %2143
  %v2145 = vsel %vm1580, %v1958, 0.0
  %2146 = vadd.xlane.f32.xlu0 %v2145
  %v2147 = vpop.xlane.xlu0 %2146
  %v2148 = vsel %vm1580, %v1960, 0.0
  %2149 = vadd.xlane.f32.xlu0 %v2148
  %v2150 = vpop.xlane.xlu0 %2149
  %v2151 = vsel %vm1580, %v1962, 0.0
  %2152 = vadd.xlane.f32.xlu0 %v2151
  %v2153 = vpop.xlane.xlu0 %2152
  %v2154 = vsel %vm1580, %v1964, 0.0
  %2155 = vadd.xlane.f32.xlu0 %v2154
  %v2156 = vpop.xlane.xlu0 %2155
  %v2157 = vrcp.pop %v1967
  %v2158 = vrcp.pop %v1970
  %v2159 = vrcp.pop %v1973
  %v2160 = vrcp.pop %v1976
  %v2161 = vrcp.pop %v1979
  %v2162 = vrcp.pop %v1982
  %v2163 = vrcp.pop %v1985
  %v2164 = vrcp.pop %v1988
  %v2165 = vrcp.pop %v1991
  %v2166 = vrcp.pop %v1994
  %v2167 = vrcp.pop %v1997
  %v2168 = vrcp.pop %v2000
  %v2169 = vrcp.pop %v2003
  %v2170 = vrcp.pop %v2006
  %v2171 = vrcp.pop %v2009
  %v2172 = vrcp.pop %v2012
  %v2173 = vrcp.pop %v2015
  %v2174 = vrcp.pop %v2018
  %v2175 = vrcp.pop %v2021
  %v2176 = vrcp.pop %v2024
  %v2177 = vrcp.pop %v2027
  %v2178 = vrcp.pop %v2030
  %v2179 = vrcp.pop %v2033
  %v2180 = vrcp.pop %v2036
  %v2181 = vrcp.pop %v2039
  %v2182 = vrcp.pop %v2042
  %v2183 = vrcp.pop %v2045
  %v2184 = vrcp.pop %v2048
  %v2185 = vrcp.pop %v2051
  %v2186 = vrcp.pop %v2054
  %v2187 = vrcp.pop %v2057
  %v2188 = vrcp.pop %v2060
  %v2189 = vrcp.pop %v2063
  %v2190 = vrcp.pop %v2066
  %v2191 = vrcp.pop %v2069
  %v2192 = vrcp.pop %v2072
  %v2193 = vrcp.pop %v2075
  %v2194 = vrcp.pop %v2078
  %v2195 = vrcp.pop %v2081
  %v2196 = vrcp.pop %v2084
  %v2197 = vrcp.pop %v2087
  %v2198 = vrcp.pop %v2090
  %v2199 = vrcp.pop %v2093
  %v2200 = vrcp.pop %v2096
  %v2201 = vrcp.pop %v2099
  %v2202 = vrcp.pop %v2102
  %v2203 = vrcp.pop %v2105
  %v2204 = vrcp.pop %v2108
  %v2205 = vrcp.pop %v2111
  %v2206 = vrcp.pop %v2114
  %v2207 = vrcp.pop %v2117
  %v2208 = vrcp.pop %v2120
  %v2209 = vrcp.pop %v2123
  %v2210 = vrcp.pop %v2126
  %v2211 = vrcp.pop %v2129
  %v2212 = vrcp.pop %v2132
  %v2213 = vrcp.pop %v2135
  %v2214 = vrcp.pop %v2138
  %v2215 = vrcp.pop %v2141
  %v2216 = vrcp.pop %v2144
  %v2217 = vrcp.pop %v2147
  %v2218 = vrcp.pop %v2150
  %v2219 = vrcp.pop %v2153
  %v2220 = vrcp.pop %v2156
  %v2221 = vmul.f32 %v1838, %v2157
  %v2222 = vmul.f32 %v1840, %v2158
  %v2223 = vmul.f32 %v1842, %v2159
  %v2224 = vmul.f32 %v1844, %v2160
  %v2225 = vmul.f32 %v1846, %v2161
  %v2226 = vmul.f32 %v1848, %v2162
  %v2227 = vmul.f32 %v1850, %v2163
  %v2228 = vmul.f32 %v1852, %v2164
  %v2229 = vmul.f32 %v1854, %v2165
  %v2230 = vmul.f32 %v1856, %v2166
  %v2231 = vmul.f32 %v1858, %v2167
  %v2232 = vmul.f32 %v1860, %v2168
  %v2233 = vmul.f32 %v1862, %v2169
  %v2234 = vmul.f32 %v1864, %v2170
  %v2235 = vmul.f32 %v1866, %v2171
  %v2236 = vmul.f32 %v1868, %v2172
  %v2237 = vmul.f32 %v1870, %v2173
  %v2238 = vmul.f32 %v1872, %v2174
  %v2239 = vmul.f32 %v1874, %v2175
  %v2240 = vmul.f32 %v1876, %v2176
  %v2241 = vmul.f32 %v1878, %v2177
  %v2242 = vmul.f32 %v1880, %v2178
  %v2243 = vmul.f32 %v1882, %v2179
  %v2244 = vmul.f32 %v1884, %v2180
  %v2245 = vmul.f32 %v1886, %v2181
  %v2246 = vmul.f32 %v1888, %v2182
  %v2247 = vmul.f32 %v1890, %v2183
  %v2248 = vmul.f32 %v1892, %v2184
  %v2249 = vmul.f32 %v1894, %v2185
  %v2250 = vmul.f32 %v1896, %v2186
  %v2251 = vmul.f32 %v1898, %v2187
  %v2252 = vmul.f32 %v1900, %v2188
  %v2253 = vmul.f32 %v1902, %v2189
  %v2254 = vmul.f32 %v1904, %v2190
  %v2255 = vmul.f32 %v1906, %v2191
  %v2256 = vmul.f32 %v1908, %v2192
  %v2257 = vmul.f32 %v1910, %v2193
  %v2258 = vmul.f32 %v1912, %v2194
  %v2259 = vmul.f32 %v1914, %v2195
  %v2260 = vmul.f32 %v1916, %v2196
  %v2261 = vmul.f32 %v1918, %v2197
  %v2262 = vmul.f32 %v1920, %v2198
  %v2263 = vmul.f32 %v1922, %v2199
  %v2264 = vmul.f32 %v1924, %v2200
  %v2265 = vmul.f32 %v1926, %v2201
  %v2266 = vmul.f32 %v1928, %v2202
  %v2267 = vmul.f32 %v1930, %v2203
  %v2268 = vmul.f32 %v1932, %v2204
  %v2269 = vmul.f32 %v1934, %v2205
  %v2270 = vmul.f32 %v1936, %v2206
  %v2271 = vmul.f32 %v1938, %v2207
  %v2272 = vmul.f32 %v1940, %v2208
  %v2273 = vmul.f32 %v1942, %v2209
  %v2274 = vmul.f32 %v1944, %v2210
  %v2275 = vmul.f32 %v1946, %v2211
  %v2276 = vmul.f32 %v1948, %v2212
  %v2277 = vmul.f32 %v1950, %v2213
  %v2278 = vmul.f32 %v1952, %v2214
  %v2279 = vmul.f32 %v1954, %v2215
  %v2280 = vmul.f32 %v1956, %v2216
  %v2281 = vmul.f32 %v1958, %v2217
  %v2282 = vmul.f32 %v1960, %v2218
  %v2283 = vmul.f32 %v1962, %v2219
  %v2284 = vmul.f32 %v1964, %v2220
  %v2285 = vpack.c.bf16 %v2222, %v2221
  %v2286 = vpack.c.bf16 %v2224, %v2223
  %v2287 = vpack.c.bf16 %v2226, %v2225
  %v2288 = vpack.c.bf16 %v2228, %v2227
  %v2289 = vpack.c.bf16 %v2230, %v2229
  %v2290 = vpack.c.bf16 %v2232, %v2231
  %v2291 = vpack.c.bf16 %v2234, %v2233
  %v2292 = vpack.c.bf16 %v2236, %v2235
  %v2293 = vpack.c.bf16 %v2238, %v2237
  %v2294 = vpack.c.bf16 %v2240, %v2239
  %v2295 = vpack.c.bf16 %v2242, %v2241
  %v2296 = vpack.c.bf16 %v2244, %v2243
  %v2297 = vpack.c.bf16 %v2246, %v2245
  %v2298 = vpack.c.bf16 %v2248, %v2247
  %v2299 = vpack.c.bf16 %v2250, %v2249
  %v2300 = vpack.c.bf16 %v2252, %v2251
  %v2301 = vpack.c.bf16 %v2254, %v2253
  %v2302 = vpack.c.bf16 %v2256, %v2255
  %v2303 = vpack.c.bf16 %v2258, %v2257
  %v2304 = vpack.c.bf16 %v2260, %v2259
  %v2305 = vpack.c.bf16 %v2262, %v2261
  %v2306 = vpack.c.bf16 %v2264, %v2263
  %v2307 = vpack.c.bf16 %v2266, %v2265
  %v2308 = vpack.c.bf16 %v2268, %v2267
  %v2309 = vpack.c.bf16 %v2270, %v2269
  %v2310 = vpack.c.bf16 %v2272, %v2271
  %v2311 = vpack.c.bf16 %v2274, %v2273
  %v2312 = vpack.c.bf16 %v2276, %v2275
  %v2313 = vpack.c.bf16 %v2278, %v2277
  %v2314 = vpack.c.bf16 %v2280, %v2279
  %v2315 = vpack.c.bf16 %v2282, %v2281
  %v2316 = vpack.c.bf16 %v2284, %v2283
  %2317 = vrot.lane.b32.xlu0 %v675, 64
  %v2318 = vpop.permute.xlu0 %2317
  %2319 = vrot.lane.b32.xlu0 %v676, 64
  %v2320 = vpop.permute.xlu0 %2319
  %2321 = vrot.lane.b32.xlu0 %v677, 64
  %v2322 = vpop.permute.xlu0 %2321
  %2323 = vrot.lane.b32.xlu0 %v678, 64
  %v2324 = vpop.permute.xlu0 %2323
  %v2330 = vsel %vm1580, %v2285, 0
  %v2333 = vsel %vm1580, %v2286, 0
  %v2336 = vsel %vm1580, %v2287, 0
  %v2339 = vsel %vm1580, %v2288, 0
  %2341 = vmatprep.subr.bf16.mxu0 0
  %2342 = vmatpush1.bf16.msra.mxu0 %v2318
  %2343 = vmatprep.subr.bf16.mxu0 0
  %2344 = vmatpush1.bf16.msra.mxu0 %v2320
  %2345 = vmatprep.subr.bf16.mxu0 0
  %2346 = vmatpush1.bf16.msra.mxu0 %v2322
  %2347 = vmatprep.subr.bf16.mxu0 0
  %2348 = vmatpush1.bf16.msra.mxu0 %v2324
  %2349 = vmatprep.subr.bf16.mxu0 0
  %2350 = vmatpush1.bf16.msra.mxu0 0
  %2351 = vmatprep.subr.bf16.mxu0 0
  %2352 = vmatpush1.bf16.msra.mxu0 0
  %2353 = vmatprep.subr.bf16.mxu0 0
  %2354 = vmatpush1.bf16.msra.mxu0 0
  %2355 = vmatprep.subr.bf16.mxu0 0
  %2356 = vmatpush1.bf16.msra.mxu0 0
  %2357 = vmatprep.subr.bf16.mxu0 0
  %2358 = vmatpush1.bf16.msra.mxu0 0
  %2359 = vmatprep.subr.bf16.mxu0 0
  %2360 = vmatpush1.bf16.msra.mxu0 0
  %2361 = vmatprep.subr.bf16.mxu0 0
  %2362 = vmatpush1.bf16.msra.mxu0 0
  %2363 = vmatprep.subr.bf16.mxu0 0
  %2364 = vmatpush1.bf16.msra.mxu0 0
  %2365 = vmatprep.subr.bf16.mxu0 0
  %2366 = vmatpush1.bf16.msra.mxu0 0
  %2367 = vmatprep.subr.bf16.mxu0 0
  %2368 = vmatpush1.bf16.msra.mxu0 0
  %2369 = vmatprep.subr.bf16.mxu0 0
  %2370 = vmatpush1.bf16.msra.mxu0 0
  %2371 = vmatprep.subr.bf16.mxu0 0
  %2372 = vmatpush1.bf16.msra.mxu0 0
  %2373 = vmatprep.mubr.bf16.mxu0 0
  %2374 = vmatmul.mubr.bf16.gmra.mrb[0].mxu0 %v2330
  %v2375 = vpop.f32.mrb[0].mxu0
  %v2376 = vadd.f32 0.0, %v2375
  %v2377 = vpop.f32.mrb[0].mxu0
  %v2378 = vpop.f32.mrb[0].mxu0
  %v2379 = vadd.f32 0.0, %v2378
  %v2380 = vpop.f32.mrb[0].mxu0
  %2381 = vmatprep.mubr.bf16.mxu0 0
  %2382 = vmatmul.mubr.bf16.gmra.mrb[0].mxu0 %v2333
  %v2383 = vpop.f32.mrb[0].mxu0
  %v2384 = vadd.f32 0.0, %v2383
  %v2385 = vpop.f32.mrb[0].mxu0
  %v2386 = vpop.f32.mrb[0].mxu0
  %v2387 = vadd.f32 0.0, %v2386
  %v2388 = vpop.f32.mrb[0].mxu0
  %2389 = vmatprep.mubr.bf16.mxu0 0
  %2390 = vmatmul.mubr.bf16.gmra.mrb[0].mxu0 %v2336
  %v2391 = vpop.f32.mrb[0].mxu0
  %v2392 = vadd.f32 0.0, %v2391
  %v2393 = vpop.f32.mrb[0].mxu0
  %v2394 = vpop.f32.mrb[0].mxu0
  %v2395 = vadd.f32 0.0, %v2394
  %v2396 = vpop.f32.mrb[0].mxu0
  %2397 = vmatprep.mubr.bf16.mxu0 0
  %2398 = vmatmul.mubr.bf16.gmra.mrb[0].mxu0 %v2339
  %v2399 = vpop.f32.mrb[0].mxu0
  %v2400 = vadd.f32 0.0, %v2399
  %v2401 = vpop.f32.mrb[0].mxu0
  %v2402 = vpop.f32.mrb[0].mxu0
  %v2403 = vadd.f32 0.0, %v2402
  %v2404 = vpop.f32.mrb[0].mxu0
  %2405 = vdwg.mxu0
  %2406 = vrot.lane.b32.xlu0 %v688, 64
  %v2407 = vpop.permute.xlu0 %2406
  %2408 = vrot.lane.b32.xlu0 %v690, 64
  %v2409 = vpop.permute.xlu0 %2408
  %2410 = vrot.lane.b32.xlu0 %v692, 64
  %v2411 = vpop.permute.xlu0 %2410
  %2412 = vrot.lane.b32.xlu0 %v694, 64
  %v2413 = vpop.permute.xlu0 %2412
  %v2419 = vsel %vm1580, %v2289, 0
  %v2422 = vsel %vm1580, %v2290, 0
  %v2425 = vsel %vm1580, %v2291, 0
  %v2428 = vsel %vm1580, %v2292, 0
  %2430 = vmatprep.subr.bf16.mxu0 0
  %2431 = vmatpush1.bf16.msra.mxu0 %v2407
  %2432 = vmatprep.subr.bf16.mxu0 0
  %2433 = vmatpush1.bf16.msra.mxu0 %v2409
  %2434 = vmatprep.subr.bf16.mxu0 0
  %2435 = vmatpush1.bf16.msra.mxu0 %v2411
  %2436 = vmatprep.subr.bf16.mxu0 0
  %2437 = vmatpush1.bf16.msra.mxu0 %v2413
  %2438 = vmatprep.subr.bf16.mxu0 0
  %2439 = vmatpush1.bf16.msra.mxu0 0
  %2440 = vmatprep.subr.bf16.mxu0 0
  %2441 = vmatpush1.bf16.msra.mxu0 0
  %2442 = vmatprep.subr.bf16.mxu0 0
  %2443 = vmatpush1.bf16.msra.mxu0 0
  %2444 = vmatprep.subr.bf16.mxu0 0
  %2445 = vmatpush1.bf16.msra.mxu0 0
  %2446 = vmatprep.subr.bf16.mxu0 0
  %2447 = vmatpush1.bf16.msra.mxu0 0
  %2448 = vmatprep.subr.bf16.mxu0 0
  %2449 = vmatpush1.bf16.msra.mxu0 0
  %2450 = vmatprep.subr.bf16.mxu0 0
  %2451 = vmatpush1.bf16.msra.mxu0 0
  %2452 = vmatprep.subr.bf16.mxu0 0
  %2453 = vmatpush1.bf16.msra.mxu0 0
  %2454 = vmatprep.subr.bf16.mxu0 0
  %2455 = vmatpush1.bf16.msra.mxu0 0
  %2456 = vmatprep.subr.bf16.mxu0 0
  %2457 = vmatpush1.bf16.msra.mxu0 0
  %2458 = vmatprep.subr.bf16.mxu0 0
  %2459 = vmatpush1.bf16.msra.mxu0 0
  %2460 = vmatprep.subr.bf16.mxu0 0
  %2461 = vmatpush1.bf16.msra.mxu0 0
  %2462 = vmatprep.mubr.bf16.mxu0 0
  %2463 = vmatmul.mubr.bf16.gmra.mrb[0].mxu0 %v2419
  %v2464 = vpop.f32.mrb[0].mxu0
  %v2465 = vadd.f32 0.0, %v2464
  %v2466 = vpop.f32.mrb[0].mxu0
  %v2467 = vpop.f32.mrb[0].mxu0
  %v2468 = vadd.f32 0.0, %v2467
  %v2469 = vpop.f32.mrb[0].mxu0
  %2470 = vmatprep.mubr.bf16.mxu0 0
  %2471 = vmatmul.mubr.bf16.gmra.mrb[0].mxu0 %v2422
  %v2472 = vpop.f32.mrb[0].mxu0
  %v2473 = vadd.f32 0.0, %v2472
  %v2474 = vpop.f32.mrb[0].mxu0
  %v2475 = vpop.f32.mrb[0].mxu0
  %v2476 = vadd.f32 0.0, %v2475
  %v2477 = vpop.f32.mrb[0].mxu0
  %2478 = vmatprep.mubr.bf16.mxu0 0
  %2479 = vmatmul.mubr.bf16.gmra.mrb[0].mxu0 %v2425
  %v2480 = vpop.f32.mrb[0].mxu0
  %v2481 = vadd.f32 0.0, %v2480
  %v2482 = vpop.f32.mrb[0].mxu0
  %v2483 = vpop.f32.mrb[0].mxu0
  %v2484 = vadd.f32 0.0, %v2483
  %v2485 = vpop.f32.mrb[0].mxu0
  %2486 = vmatprep.mubr.bf16.mxu0 0
  %2487 = vmatmul.mubr.bf16.gmra.mrb[0].mxu0 %v2428
  %v2488 = vpop.f32.mrb[0].mxu0
  %v2489 = vadd.f32 0.0, %v2488
  %v2490 = vpop.f32.mrb[0].mxu0
  %v2491 = vpop.f32.mrb[0].mxu0
  %v2492 = vadd.f32 0.0, %v2491
  %v2493 = vpop.f32.mrb[0].mxu0
  %2494 = vdwg.mxu0
  %2495 = vrot.lane.b32.xlu0 %v696, 64
  %v2496 = vpop.permute.xlu0 %2495
  %2497 = vrot.lane.b32.xlu0 %v698, 64
  %v2498 = vpop.permute.xlu0 %2497
  %2499 = vrot.lane.b32.xlu0 %v700, 64
  %v2500 = vpop.permute.xlu0 %2499
  %2501 = vrot.lane.b32.xlu0 %v702, 64
  %v2502 = vpop.permute.xlu0 %2501
  %v2508 = vsel %vm1580, %v2293, 0
  %v2511 = vsel %vm1580, %v2294, 0
  %v2514 = vsel %vm1580, %v2295, 0
  %v2517 = vsel %vm1580, %v2296, 0
  %2519 = vmatprep.subr.bf16.mxu0 0
  %2520 = vmatpush1.bf16.msra.mxu0 %v2496
  %2521 = vmatprep.subr.bf16.mxu0 0
  %2522 = vmatpush1.bf16.msra.mxu0 %v2498
  %2523 = vmatprep.subr.bf16.mxu0 0
  %2524 = vmatpush1.bf16.msra.mxu0 %v2500
  %2525 = vmatprep.subr.bf16.mxu0 0
  %2526 = vmatpush1.bf16.msra.mxu0 %v2502
  %2527 = vmatprep.subr.bf16.mxu0 0
  %2528 = vmatpush1.bf16.msra.mxu0 0
  %2529 = vmatprep.subr.bf16.mxu0 0
  %2530 = vmatpush1.bf16.msra.mxu0 0
  %2531 = vmatprep.subr.bf16.mxu0 0
  %2532 = vmatpush1.bf16.msra.mxu0 0
  %2533 = vmatprep.subr.bf16.mxu0 0
  %2534 = vmatpush1.bf16.msra.mxu0 0
  %2535 = vmatprep.subr.bf16.mxu0 0
  %2536 = vmatpush1.bf16.msra.mxu0 0
  %2537 = vmatprep.subr.bf16.mxu0 0
  %2538 = vmatpush1.bf16.msra.mxu0 0
  %2539 = vmatprep.subr.bf16.mxu0 0
  %2540 = vmatpush1.bf16.msra.mxu0 0
  %2541 = vmatprep.subr.bf16.mxu0 0
  %2542 = vmatpush1.bf16.msra.mxu0 0
  %2543 = vmatprep.subr.bf16.mxu0 0
  %2544 = vmatpush1.bf16.msra.mxu0 0
  %2545 = vmatprep.subr.bf16.mxu0 0
  %2546 = vmatpush1.bf16.msra.mxu0 0
  %2547 = vmatprep.subr.bf16.mxu0 0
  %2548 = vmatpush1.bf16.msra.mxu0 0
  %2549 = vmatprep.subr.bf16.mxu0 0
  %2550 = vmatpush1.bf16.msra.mxu0 0
  %2551 = vmatprep.mubr.bf16.mxu0 0
  %2552 = vmatmul.mubr.bf16.gmra.mrb[0].mxu0 %v2508
  %v2553 = vpop.f32.mrb[0].mxu0
  %v2554 = vadd.f32 0.0, %v2553
  %v2555 = vpop.f32.mrb[0].mxu0
  %v2556 = vpop.f32.mrb[0].mxu0
  %v2557 = vadd.f32 0.0, %v2556
  %v2558 = vpop.f32.mrb[0].mxu0
  %2559 = vmatprep.mubr.bf16.mxu0 0
  %2560 = vmatmul.mubr.bf16.gmra.mrb[0].mxu0 %v2511
  %v2561 = vpop.f32.mrb[0].mxu0
  %v2562 = vadd.f32 0.0, %v2561
  %v2563 = vpop.f32.mrb[0].mxu0
  %v2564 = vpop.f32.mrb[0].mxu0
  %v2565 = vadd.f32 0.0, %v2564
  %v2566 = vpop.f32.mrb[0].mxu0
  %2567 = vmatprep.mubr.bf16.mxu0 0
  %2568 = vmatmul.mubr.bf16.gmra.mrb[0].mxu0 %v2514
  %v2569 = vpop.f32.mrb[0].mxu0
  %v2570 = vadd.f32 0.0, %v2569
  %v2571 = vpop.f32.mrb[0].mxu0
  %v2572 = vpop.f32.mrb[0].mxu0
  %v2573 = vadd.f32 0.0, %v2572
  %v2574 = vpop.f32.mrb[0].mxu0
  %2575 = vmatprep.mubr.bf16.mxu0 0
  %2576 = vmatmul.mubr.bf16.gmra.mrb[0].mxu0 %v2517
  %v2577 = vpop.f32.mrb[0].mxu0
  %v2578 = vadd.f32 0.0, %v2577
  %v2579 = vpop.f32.mrb[0].mxu0
  %v2580 = vpop.f32.mrb[0].mxu0
  %v2581 = vadd.f32 0.0, %v2580
  %v2582 = vpop.f32.mrb[0].mxu0
  %2583 = vdwg.mxu0
  %2584 = vrot.lane.b32.xlu0 %v704, 64
  %v2585 = vpop.permute.xlu0 %2584
  %2586 = vrot.lane.b32.xlu0 %v706, 64
  %v2587 = vpop.permute.xlu0 %2586
  %2588 = vrot.lane.b32.xlu0 %v708, 64
  %v2589 = vpop.permute.xlu0 %2588
  %2590 = vrot.lane.b32.xlu0 %v710, 64
  %v2591 = vpop.permute.xlu0 %2590
  %v2597 = vsel %vm1580, %v2297, 0
  %v2600 = vsel %vm1580, %v2298, 0
  %v2603 = vsel %vm1580, %v2299, 0
  %v2606 = vsel %vm1580, %v2300, 0
  %2608 = vmatprep.subr.bf16.mxu0 0
  %2609 = vmatpush1.bf16.msra.mxu0 %v2585
  %2610 = vmatprep.subr.bf16.mxu0 0
  %2611 = vmatpush1.bf16.msra.mxu0 %v2587
  %2612 = vmatprep.subr.bf16.mxu0 0
  %2613 = vmatpush1.bf16.msra.mxu0 %v2589
  %2614 = vmatprep.subr.bf16.mxu0 0
  %2615 = vmatpush1.bf16.msra.mxu0 %v2591
  %2616 = vmatprep.subr.bf16.mxu0 0
  %2617 = vmatpush1.bf16.msra.mxu0 0
  %2618 = vmatprep.subr.bf16.mxu0 0
  %2619 = vmatpush1.bf16.msra.mxu0 0
  %2620 = vmatprep.subr.bf16.mxu0 0
  %2621 = vmatpush1.bf16.msra.mxu0 0
  %2622 = vmatprep.subr.bf16.mxu0 0
  %2623 = vmatpush1.bf16.msra.mxu0 0
  %2624 = vmatprep.subr.bf16.mxu0 0
  %2625 = vmatpush1.bf16.msra.mxu0 0
  %2626 = vmatprep.subr.bf16.mxu0 0
  %2627 = vmatpush1.bf16.msra.mxu0 0
  %2628 = vmatprep.subr.bf16.mxu0 0
  %2629 = vmatpush1.bf16.msra.mxu0 0
  %2630 = vmatprep.subr.bf16.mxu0 0
  %2631 = vmatpush1.bf16.msra.mxu0 0
  %2632 = vmatprep.subr.bf16.mxu0 0
  %2633 = vmatpush1.bf16.msra.mxu0 0
  %2634 = vmatprep.subr.bf16.mxu0 0
  %2635 = vmatpush1.bf16.msra.mxu0 0
  %2636 = vmatprep.subr.bf16.mxu0 0
  %2637 = vmatpush1.bf16.msra.mxu0 0
  %2638 = vmatprep.subr.bf16.mxu0 0
  %2639 = vmatpush1.bf16.msra.mxu0 0
  %2640 = vmatprep.mubr.bf16.mxu0 0
  %2641 = vmatmul.mubr.bf16.gmra.mrb[0].mxu0 %v2597
  %v2642 = vpop.f32.mrb[0].mxu0
  %v2643 = vadd.f32 0.0, %v2642
  %v2644 = vpop.f32.mrb[0].mxu0
  %v2645 = vpop.f32.mrb[0].mxu0
  %v2646 = vadd.f32 0.0, %v2645
  %v2647 = vpop.f32.mrb[0].mxu0
  %2648 = vmatprep.mubr.bf16.mxu0 0
  %2649 = vmatmul.mubr.bf16.gmra.mrb[0].mxu0 %v2600
  %v2650 = vpop.f32.mrb[0].mxu0
  %v2651 = vadd.f32 0.0, %v2650
  %v2652 = vpop.f32.mrb[0].mxu0
  %v2653 = vpop.f32.mrb[0].mxu0
  %v2654 = vadd.f32 0.0, %v2653
  %v2655 = vpop.f32.mrb[0].mxu0
  %2656 = vmatprep.mubr.bf16.mxu0 0
  %2657 = vmatmul.mubr.bf16.gmra.mrb[0].mxu0 %v2603
  %v2658 = vpop.f32.mrb[0].mxu0
  %v2659 = vadd.f32 0.0, %v2658
  %v2660 = vpop.f32.mrb[0].mxu0
  %v2661 = vpop.f32.mrb[0].mxu0
  %v2662 = vadd.f32 0.0, %v2661
  %v2663 = vpop.f32.mrb[0].mxu0
  %2664 = vmatprep.mubr.bf16.mxu0 0
  %2665 = vmatmul.mubr.bf16.gmra.mrb[0].mxu0 %v2606
  %v2666 = vpop.f32.mrb[0].mxu0
  %v2667 = vadd.f32 0.0, %v2666
  %v2668 = vpop.f32.mrb[0].mxu0
  %v2669 = vpop.f32.mrb[0].mxu0
  %v2670 = vadd.f32 0.0, %v2669
  %v2671 = vpop.f32.mrb[0].mxu0
  %2672 = vdwg.mxu0
  %2673 = vrot.lane.b32.xlu0 %v679, 64
  %v2674 = vpop.permute.xlu0 %2673
  %2675 = vrot.lane.b32.xlu0 %v680, 64
  %v2676 = vpop.permute.xlu0 %2675
  %2677 = vrot.lane.b32.xlu0 %v681, 64
  %v2678 = vpop.permute.xlu0 %2677
  %2679 = vrot.lane.b32.xlu0 %v682, 64
  %v2680 = vpop.permute.xlu0 %2679
  %v2686 = vsel %vm1580, %v2301, 0
  %v2689 = vsel %vm1580, %v2302, 0
  %v2692 = vsel %vm1580, %v2303, 0
  %v2695 = vsel %vm1580, %v2304, 0
  %2697 = vmatprep.subr.bf16.mxu0 0
  %2698 = vmatpush1.bf16.msra.mxu0 %v2674
  %2699 = vmatprep.subr.bf16.mxu0 0
  %2700 = vmatpush1.bf16.msra.mxu0 %v2676
  %2701 = vmatprep.subr.bf16.mxu0 0
  %2702 = vmatpush1.bf16.msra.mxu0 %v2678
  %2703 = vmatprep.subr.bf16.mxu0 0
  %2704 = vmatpush1.bf16.msra.mxu0 %v2680
  %2705 = vmatprep.subr.bf16.mxu0 0
  %2706 = vmatpush1.bf16.msra.mxu0 0
  %2707 = vmatprep.subr.bf16.mxu0 0
  %2708 = vmatpush1.bf16.msra.mxu0 0
  %2709 = vmatprep.subr.bf16.mxu0 0
  %2710 = vmatpush1.bf16.msra.mxu0 0
  %2711 = vmatprep.subr.bf16.mxu0 0
  %2712 = vmatpush1.bf16.msra.mxu0 0
  %2713 = vmatprep.subr.bf16.mxu0 0
  %2714 = vmatpush1.bf16.msra.mxu0 0
  %2715 = vmatprep.subr.bf16.mxu0 0
  %2716 = vmatpush1.bf16.msra.mxu0 0
  %2717 = vmatprep.subr.bf16.mxu0 0
  %2718 = vmatpush1.bf16.msra.mxu0 0
  %2719 = vmatprep.subr.bf16.mxu0 0
  %2720 = vmatpush1.bf16.msra.mxu0 0
  %2721 = vmatprep.subr.bf16.mxu0 0
  %2722 = vmatpush1.bf16.msra.mxu0 0
  %2723 = vmatprep.subr.bf16.mxu0 0
  %2724 = vmatpush1.bf16.msra.mxu0 0
  %2725 = vmatprep.subr.bf16.mxu0 0
  %2726 = vmatpush1.bf16.msra.mxu0 0
  %2727 = vmatprep.subr.bf16.mxu0 0
  %2728 = vmatpush1.bf16.msra.mxu0 0
  %2729 = vmatprep.mubr.bf16.mxu0 0
  %2730 = vmatmul.mubr.bf16.gmra.mrb[0].mxu0 %v2686
  %v2731 = vpop.f32.mrb[0].mxu0
  %v2732 = vadd.f32 0.0, %v2731
  %v2733 = vpop.f32.mrb[0].mxu0
  %v2734 = vpop.f32.mrb[0].mxu0
  %v2735 = vadd.f32 0.0, %v2734
  %v2736 = vpop.f32.mrb[0].mxu0
  %2737 = vmatprep.mubr.bf16.mxu0 0
  %2738 = vmatmul.mubr.bf16.gmra.mrb[0].mxu0 %v2689
  %v2739 = vpop.f32.mrb[0].mxu0
  %v2740 = vadd.f32 0.0, %v2739
  %v2741 = vpop.f32.mrb[0].mxu0
  %v2742 = vpop.f32.mrb[0].mxu0
  %v2743 = vadd.f32 0.0, %v2742
  %v2744 = vpop.f32.mrb[0].mxu0
  %2745 = vmatprep.mubr.bf16.mxu0 0
  %2746 = vmatmul.mubr.bf16.gmra.mrb[0].mxu0 %v2692
  %v2747 = vpop.f32.mrb[0].mxu0
  %v2748 = vadd.f32 0.0, %v2747
  %v2749 = vpop.f32.mrb[0].mxu0
  %v2750 = vpop.f32.mrb[0].mxu0
  %v2751 = vadd.f32 0.0, %v2750
  %v2752 = vpop.f32.mrb[0].mxu0
  %2753 = vmatprep.mubr.bf16.mxu0 0
  %2754 = vmatmul.mubr.bf16.gmra.mrb[0].mxu0 %v2695
  %v2755 = vpop.f32.mrb[0].mxu0
  %v2756 = vadd.f32 0.0, %v2755
  %v2757 = vpop.f32.mrb[0].mxu0
  %v2758 = vpop.f32.mrb[0].mxu0
  %v2759 = vadd.f32 0.0, %v2758
  %v2760 = vpop.f32.mrb[0].mxu0
  %2761 = vdwg.mxu0
  %2762 = vrot.lane.b32.xlu0 %v716, 64
  %v2763 = vpop.permute.xlu0 %2762
  %2764 = vrot.lane.b32.xlu0 %v718, 64
  %v2765 = vpop.permute.xlu0 %2764
  %2766 = vrot.lane.b32.xlu0 %v720, 64
  %v2767 = vpop.permute.xlu0 %2766
  %2768 = vrot.lane.b32.xlu0 %v722, 64
  %v2769 = vpop.permute.xlu0 %2768
  %v2775 = vsel %vm1580, %v2305, 0
  %v2778 = vsel %vm1580, %v2306, 0
  %v2781 = vsel %vm1580, %v2307, 0
  %v2784 = vsel %vm1580, %v2308, 0
  %2786 = vmatprep.subr.bf16.mxu0 0
  %2787 = vmatpush1.bf16.msra.mxu0 %v2763
  %2788 = vmatprep.subr.bf16.mxu0 0
  %2789 = vmatpush1.bf16.msra.mxu0 %v2765
  %2790 = vmatprep.subr.bf16.mxu0 0
  %2791 = vmatpush1.bf16.msra.mxu0 %v2767
  %2792 = vmatprep.subr.bf16.mxu0 0
  %2793 = vmatpush1.bf16.msra.mxu0 %v2769
  %2794 = vmatprep.subr.bf16.mxu0 0
  %2795 = vmatpush1.bf16.msra.mxu0 0
  %2796 = vmatprep.subr.bf16.mxu0 0
  %2797 = vmatpush1.bf16.msra.mxu0 0
  %2798 = vmatprep.subr.bf16.mxu0 0
  %2799 = vmatpush1.bf16.msra.mxu0 0
  %2800 = vmatprep.subr.bf16.mxu0 0
  %2801 = vmatpush1.bf16.msra.mxu0 0
  %2802 = vmatprep.subr.bf16.mxu0 0
  %2803 = vmatpush1.bf16.msra.mxu0 0
  %2804 = vmatprep.subr.bf16.mxu0 0
  %2805 = vmatpush1.bf16.msra.mxu0 0
  %2806 = vmatprep.subr.bf16.mxu0 0
  %2807 = vmatpush1.bf16.msra.mxu0 0
  %2808 = vmatprep.subr.bf16.mxu0 0
  %2809 = vmatpush1.bf16.msra.mxu0 0
  %2810 = vmatprep.subr.bf16.mxu0 0
  %2811 = vmatpush1.bf16.msra.mxu0 0
  %2812 = vmatprep.subr.bf16.mxu0 0
  %2813 = vmatpush1.bf16.msra.mxu0 0
  %2814 = vmatprep.subr.bf16.mxu0 0
  %2815 = vmatpush1.bf16.msra.mxu0 0
  %2816 = vmatprep.subr.bf16.mxu0 0
  %2817 = vmatpush1.bf16.msra.mxu0 0
  %2818 = vmatprep.mubr.bf16.mxu0 0
  %2819 = vmatmul.mubr.bf16.gmra.mrb[0].mxu0 %v2775
  %v2820 = vpop.f32.mrb[0].mxu0
  %v2821 = vadd.f32 0.0, %v2820
  %v2822 = vpop.f32.mrb[0].mxu0
  %v2823 = vpop.f32.mrb[0].mxu0
  %v2824 = vadd.f32 0.0, %v2823
  %v2825 = vpop.f32.mrb[0].mxu0
  %2826 = vmatprep.mubr.bf16.mxu0 0
  %2827 = vmatmul.mubr.bf16.gmra.mrb[0].mxu0 %v2778
  %v2828 = vpop.f32.mrb[0].mxu0
  %v2829 = vadd.f32 0.0, %v2828
  %v2830 = vpop.f32.mrb[0].mxu0
  %v2831 = vpop.f32.mrb[0].mxu0
  %v2832 = vadd.f32 0.0, %v2831
  %v2833 = vpop.f32.mrb[0].mxu0
  %2834 = vmatprep.mubr.bf16.mxu0 0
  %2835 = vmatmul.mubr.bf16.gmra.mrb[0].mxu0 %v2781
  %v2836 = vpop.f32.mrb[0].mxu0
  %v2837 = vadd.f32 0.0, %v2836
  %v2838 = vpop.f32.mrb[0].mxu0
  %v2839 = vpop.f32.mrb[0].mxu0
  %v2840 = vadd.f32 0.0, %v2839
  %v2841 = vpop.f32.mrb[0].mxu0
  %2842 = vmatprep.mubr.bf16.mxu0 0
  %2843 = vmatmul.mubr.bf16.gmra.mrb[0].mxu0 %v2784
  %v2844 = vpop.f32.mrb[0].mxu0
  %v2845 = vadd.f32 0.0, %v2844
  %v2846 = vpop.f32.mrb[0].mxu0
  %v2847 = vpop.f32.mrb[0].mxu0
  %v2848 = vadd.f32 0.0, %v2847
  %v2849 = vpop.f32.mrb[0].mxu0
  %2850 = vdwg.mxu0
  %2851 = vrot.lane.b32.xlu0 %v724, 64
  %v2852 = vpop.permute.xlu0 %2851
  %2853 = vrot.lane.b32.xlu0 %v726, 64
  %v2854 = vpop.permute.xlu0 %2853
  %2855 = vrot.lane.b32.xlu0 %v728, 64
  %v2856 = vpop.permute.xlu0 %2855
  %2857 = vrot.lane.b32.xlu0 %v730, 64
  %v2858 = vpop.permute.xlu0 %2857
  %v2864 = vsel %vm1580, %v2309, 0
  %v2867 = vsel %vm1580, %v2310, 0
  %v2870 = vsel %vm1580, %v2311, 0
  %v2873 = vsel %vm1580, %v2312, 0
  %2875 = vmatprep.subr.bf16.mxu0 0
  %2876 = vmatpush1.bf16.msra.mxu0 %v2852
  %2877 = vmatprep.subr.bf16.mxu0 0
  %2878 = vmatpush1.bf16.msra.mxu0 %v2854
  %2879 = vmatprep.subr.bf16.mxu0 0
  %2880 = vmatpush1.bf16.msra.mxu0 %v2856
  %2881 = vmatprep.subr.bf16.mxu0 0
  %2882 = vmatpush1.bf16.msra.mxu0 %v2858
  %2883 = vmatprep.subr.bf16.mxu0 0
  %2884 = vmatpush1.bf16.msra.mxu0 0
  %2885 = vmatprep.subr.bf16.mxu0 0
  %2886 = vmatpush1.bf16.msra.mxu0 0
  %2887 = vmatprep.subr.bf16.mxu0 0
  %2888 = vmatpush1.bf16.msra.mxu0 0
  %2889 = vmatprep.subr.bf16.mxu0 0
  %2890 = vmatpush1.bf16.msra.mxu0 0
  %2891 = vmatprep.subr.bf16.mxu0 0
  %2892 = vmatpush1.bf16.msra.mxu0 0
  %2893 = vmatprep.subr.bf16.mxu0 0
  %2894 = vmatpush1.bf16.msra.mxu0 0
  %2895 = vmatprep.subr.bf16.mxu0 0
  %2896 = vmatpush1.bf16.msra.mxu0 0
  %2897 = vmatprep.subr.bf16.mxu0 0
  %2898 = vmatpush1.bf16.msra.mxu0 0
  %2899 = vmatprep.subr.bf16.mxu0 0
  %2900 = vmatpush1.bf16.msra.mxu0 0
  %2901 = vmatprep.subr.bf16.mxu0 0
  %2902 = vmatpush1.bf16.msra.mxu0 0
  %2903 = vmatprep.subr.bf16.mxu0 0
  %2904 = vmatpush1.bf16.msra.mxu0 0
  %2905 = vmatprep.subr.bf16.mxu0 0
  %2906 = vmatpush1.bf16.msra.mxu0 0
  %2907 = vmatprep.mubr.bf16.mxu0 0
  %2908 = vmatmul.mubr.bf16.gmra.mrb[0].mxu0 %v2864
  %v2909 = vpop.f32.mrb[0].mxu0
  %v2910 = vadd.f32 0.0, %v2909
  %v2911 = vpop.f32.mrb[0].mxu0
  %v2912 = vpop.f32.mrb[0].mxu0
  %v2913 = vadd.f32 0.0, %v2912
  %v2914 = vpop.f32.mrb[0].mxu0
  %2915 = vmatprep.mubr.bf16.mxu0 0
  %2916 = vmatmul.mubr.bf16.gmra.mrb[0].mxu0 %v2867
  %v2917 = vpop.f32.mrb[0].mxu0
  %v2918 = vadd.f32 0.0, %v2917
  %v2919 = vpop.f32.mrb[0].mxu0
  %v2920 = vpop.f32.mrb[0].mxu0
  %v2921 = vadd.f32 0.0, %v2920
  %v2922 = vpop.f32.mrb[0].mxu0
  %2923 = vmatprep.mubr.bf16.mxu0 0
  %2924 = vmatmul.mubr.bf16.gmra.mrb[0].mxu0 %v2870
  %v2925 = vpop.f32.mrb[0].mxu0
  %v2926 = vadd.f32 0.0, %v2925
  %v2927 = vpop.f32.mrb[0].mxu0
  %v2928 = vpop.f32.mrb[0].mxu0
  %v2929 = vadd.f32 0.0, %v2928
  %v2930 = vpop.f32.mrb[0].mxu0
  %2931 = vmatprep.mubr.bf16.mxu0 0
  %2932 = vmatmul.mubr.bf16.gmra.mrb[0].mxu0 %v2873
  %v2933 = vpop.f32.mrb[0].mxu0
  %v2934 = vadd.f32 0.0, %v2933
  %v2935 = vpop.f32.mrb[0].mxu0
  %v2936 = vpop.f32.mrb[0].mxu0
  %v2937 = vadd.f32 0.0, %v2936
  %v2938 = vpop.f32.mrb[0].mxu0
  %2939 = vdwg.mxu0
  %2940 = vrot.lane.b32.xlu0 %v732, 64
  %v2941 = vpop.permute.xlu0 %2940
  %2942 = vrot.lane.b32.xlu0 %v734, 64
  %v2943 = vpop.permute.xlu0 %2942
  %2944 = vrot.lane.b32.xlu0 %v736, 64
  %v2945 = vpop.permute.xlu0 %2944
  %2946 = vrot.lane.b32.xlu0 %v738, 64
  %v2947 = vpop.permute.xlu0 %2946
  %v2953 = vsel %vm1580, %v2313, 0
  %v2956 = vsel %vm1580, %v2314, 0
  %v2959 = vsel %vm1580, %v2315, 0
  %v2962 = vsel %vm1580, %v2316, 0
  %2964 = vmatprep.subr.bf16.mxu0 0
  %2965 = vmatpush1.bf16.msra.mxu0 %v2941
  %2966 = vmatprep.subr.bf16.mxu0 0
  %2967 = vmatpush1.bf16.msra.mxu0 %v2943
  %2968 = vmatprep.subr.bf16.mxu0 0
  %2969 = vmatpush1.bf16.msra.mxu0 %v2945
  %2970 = vmatprep.subr.bf16.mxu0 0
  %2971 = vmatpush1.bf16.msra.mxu0 %v2947
  %2972 = vmatprep.subr.bf16.mxu0 0
  %2973 = vmatpush1.bf16.msra.mxu0 0
  %2974 = vmatprep.subr.bf16.mxu0 0
  %2975 = vmatpush1.bf16.msra.mxu0 0
  %2976 = vmatprep.subr.bf16.mxu0 0
  %2977 = vmatpush1.bf16.msra.mxu0 0
  %2978 = vmatprep.subr.bf16.mxu0 0
  %2979 = vmatpush1.bf16.msra.mxu0 0
  %2980 = vmatprep.subr.bf16.mxu0 0
  %2981 = vmatpush1.bf16.msra.mxu0 0
  %2982 = vmatprep.subr.bf16.mxu0 0
  %2983 = vmatpush1.bf16.msra.mxu0 0
  %2984 = vmatprep.subr.bf16.mxu0 0
  %2985 = vmatpush1.bf16.msra.mxu0 0
  %2986 = vmatprep.subr.bf16.mxu0 0
  %2987 = vmatpush1.bf16.msra.mxu0 0
  %2988 = vmatprep.subr.bf16.mxu0 0
  %2989 = vmatpush1.bf16.msra.mxu0 0
  %2990 = vmatprep.subr.bf16.mxu0 0
  %2991 = vmatpush1.bf16.msra.mxu0 0
  %2992 = vmatprep.subr.bf16.mxu0 0
  %2993 = vmatpush1.bf16.msra.mxu0 0
  %2994 = vmatprep.subr.bf16.mxu0 0
  %2995 = vmatpush1.bf16.msra.mxu0 0
  %2996 = vmatprep.mubr.bf16.mxu0 0
  %2997 = vmatmul.mubr.bf16.gmra.mrb[0].mxu0 %v2953
  %v2998 = vpop.f32.mrb[0].mxu0
  %v2999 = vadd.f32 0.0, %v2998
  %v3000 = vpop.f32.mrb[0].mxu0
  %v3001 = vpop.f32.mrb[0].mxu0
  %v3002 = vadd.f32 0.0, %v3001
  %v3003 = vpop.f32.mrb[0].mxu0
  %3004 = vmatprep.mubr.bf16.mxu0 0
  %3005 = vmatmul.mubr.bf16.gmra.mrb[0].mxu0 %v2956
  %v3006 = vpop.f32.mrb[0].mxu0
  %v3007 = vadd.f32 0.0, %v3006
  %v3008 = vpop.f32.mrb[0].mxu0
  %v3009 = vpop.f32.mrb[0].mxu0
  %v3010 = vadd.f32 0.0, %v3009
  %v3011 = vpop.f32.mrb[0].mxu0
  %3012 = vmatprep.mubr.bf16.mxu0 0
  %3013 = vmatmul.mubr.bf16.gmra.mrb[0].mxu0 %v2959
  %v3014 = vpop.f32.mrb[0].mxu0
  %v3015 = vadd.f32 0.0, %v3014
  %v3016 = vpop.f32.mrb[0].mxu0
  %v3017 = vpop.f32.mrb[0].mxu0
  %v3018 = vadd.f32 0.0, %v3017
  %v3019 = vpop.f32.mrb[0].mxu0
  %3020 = vmatprep.mubr.bf16.mxu0 0
  %3021 = vmatmul.mubr.bf16.gmra.mrb[0].mxu0 %v2962
  %v3022 = vpop.f32.mrb[0].mxu0
  %v3023 = vadd.f32 0.0, %v3022
  %v3024 = vpop.f32.mrb[0].mxu0
  %v3025 = vpop.f32.mrb[0].mxu0
  %v3026 = vadd.f32 0.0, %v3025
  %v3027 = vpop.f32.mrb[0].mxu0
  %3028 = vdwg.mxu0
  %3037 = vrot.lane.b32.xlu0 %v2465, 8
  %v3038 = vpop.permute.xlu0 %3037
  %3039 = vrot.lane.b32.xlu0 %v2468, 8
  %v3040 = vpop.permute.xlu0 %3039
  %3041 = vrot.lane.b32.xlu0 %v2473, 8
  %v3042 = vpop.permute.xlu0 %3041
  %3043 = vrot.lane.b32.xlu0 %v2476, 8
  %v3044 = vpop.permute.xlu0 %3043
  %3045 = vrot.lane.b32.xlu0 %v2481, 8
  %v3046 = vpop.permute.xlu0 %3045
  %3047 = vrot.lane.b32.xlu0 %v2484, 8
  %v3048 = vpop.permute.xlu0 %3047
  %3049 = vrot.lane.b32.xlu0 %v2489, 8
  %v3050 = vpop.permute.xlu0 %3049
  %3051 = vrot.lane.b32.xlu0 %v2492, 8
  %v3052 = vpop.permute.xlu0 %3051
  %3069 = vrot.lane.b32.xlu0 %v2554, 16
  %v3070 = vpop.permute.xlu0 %3069
  %3071 = vrot.lane.b32.xlu0 %v2557, 16
  %v3072 = vpop.permute.xlu0 %3071
  %3073 = vrot.lane.b32.xlu0 %v2562, 16
  %v3074 = vpop.permute.xlu0 %3073
  %3075 = vrot.lane.b32.xlu0 %v2565, 16
  %v3076 = vpop.permute.xlu0 %3075
  %3077 = vrot.lane.b32.xlu0 %v2570, 16
  %v3078 = vpop.permute.xlu0 %3077
  %3079 = vrot.lane.b32.xlu0 %v2573, 16
  %v3080 = vpop.permute.xlu0 %3079
  %3081 = vrot.lane.b32.xlu0 %v2578, 16
  %v3082 = vpop.permute.xlu0 %3081
  %3083 = vrot.lane.b32.xlu0 %v2581, 16
  %v3084 = vpop.permute.xlu0 %3083
  %3101 = vrot.lane.b32.xlu0 %v2643, 24
  %v3102 = vpop.permute.xlu0 %3101
  %3103 = vrot.lane.b32.xlu0 %v2646, 24
  %v3104 = vpop.permute.xlu0 %3103
  %3105 = vrot.lane.b32.xlu0 %v2651, 24
  %v3106 = vpop.permute.xlu0 %3105
  %3107 = vrot.lane.b32.xlu0 %v2654, 24
  %v3108 = vpop.permute.xlu0 %3107
  %3109 = vrot.lane.b32.xlu0 %v2659, 24
  %v3110 = vpop.permute.xlu0 %3109
  %3111 = vrot.lane.b32.xlu0 %v2662, 24
  %v3112 = vpop.permute.xlu0 %3111
  %3113 = vrot.lane.b32.xlu0 %v2667, 24
  %v3114 = vpop.permute.xlu0 %3113
  %3115 = vrot.lane.b32.xlu0 %v2670, 24
  %v3116 = vpop.permute.xlu0 %3115
  %v3125 = vsel %vm747, %v2376, %v3038
  %v3126 = vsel %vm747, %v2379, %v3040
  %v3127 = vsel %vm747, %v2384, %v3042
  %v3128 = vsel %vm747, %v2387, %v3044
  %v3129 = vsel %vm747, %v2392, %v3046
  %v3130 = vsel %vm747, %v2395, %v3048
  %v3131 = vsel %vm747, %v2400, %v3050
  %v3132 = vsel %vm747, %v2403, %v3052
  %v3133 = vsel %vm401, %v3125, %v3070
  %v3134 = vsel %vm401, %v3126, %v3072
  %v3135 = vsel %vm401, %v3127, %v3074
  %v3136 = vsel %vm401, %v3128, %v3076
  %v3137 = vsel %vm401, %v3129, %v3078
  %v3138 = vsel %vm401, %v3130, %v3080
  %v3139 = vsel %vm401, %v3131, %v3082
  %v3140 = vsel %vm401, %v3132, %v3084
  %vm3141 = vcmask 195584
  %v3142 = vsel %vm3141, %v3133, %v3102
  %v3143 = vsel %vm3141, %v3134, %v3104
  %v3144 = vsel %vm3141, %v3135, %v3106
  %v3145 = vsel %vm3141, %v3136, %v3108
  %v3146 = vsel %vm3141, %v3137, %v3110
  %v3147 = vsel %vm3141, %v3138, %v3112
  %v3148 = vsel %vm3141, %v3139, %v3114
  %v3149 = vsel %vm3141, %v3140, %v3116
  %3158 = vrot.lane.b32.xlu0 %v2821, 8
  %v3159 = vpop.permute.xlu0 %3158
  %3160 = vrot.lane.b32.xlu0 %v2824, 8
  %v3161 = vpop.permute.xlu0 %3160
  %3162 = vrot.lane.b32.xlu0 %v2829, 8
  %v3163 = vpop.permute.xlu0 %3162
  %3164 = vrot.lane.b32.xlu0 %v2832, 8
  %v3165 = vpop.permute.xlu0 %3164
  %3166 = vrot.lane.b32.xlu0 %v2837, 8
  %v3167 = vpop.permute.xlu0 %3166
  %3168 = vrot.lane.b32.xlu0 %v2840, 8
  %v3169 = vpop.permute.xlu0 %3168
  %3170 = vrot.lane.b32.xlu0 %v2845, 8
  %v3171 = vpop.permute.xlu0 %3170
  %3172 = vrot.lane.b32.xlu0 %v2848, 8
  %v3173 = vpop.permute.xlu0 %3172
  %3190 = vrot.lane.b32.xlu0 %v2910, 16
  %v3191 = vpop.permute.xlu0 %3190
  %3192 = vrot.lane.b32.xlu0 %v2913, 16
  %v3193 = vpop.permute.xlu0 %3192
  %3194 = vrot.lane.b32.xlu0 %v2918, 16
  %v3195 = vpop.permute.xlu0 %3194
  %3196 = vrot.lane.b32.xlu0 %v2921, 16
  %v3197 = vpop.permute.xlu0 %3196
  %3198 = vrot.lane.b32.xlu0 %v2926, 16
  %v3199 = vpop.permute.xlu0 %3198
  %3200 = vrot.lane.b32.xlu0 %v2929, 16
  %v3201 = vpop.permute.xlu0 %3200
  %3202 = vrot.lane.b32.xlu0 %v2934, 16
  %v3203 = vpop.permute.xlu0 %3202
  %3204 = vrot.lane.b32.xlu0 %v2937, 16
  %v3205 = vpop.permute.xlu0 %3204
  %3222 = vrot.lane.b32.xlu0 %v2999, 24
  %v3223 = vpop.permute.xlu0 %3222
  %3224 = vrot.lane.b32.xlu0 %v3002, 24
  %v3225 = vpop.permute.xlu0 %3224
  %3226 = vrot.lane.b32.xlu0 %v3007, 24
  %v3227 = vpop.permute.xlu0 %3226
  %3228 = vrot.lane.b32.xlu0 %v3010, 24
  %v3229 = vpop.permute.xlu0 %3228
  %3230 = vrot.lane.b32.xlu0 %v3015, 24
  %v3231 = vpop.permute.xlu0 %3230
  %3232 = vrot.lane.b32.xlu0 %v3018, 24
  %v3233 = vpop.permute.xlu0 %3232
  %3234 = vrot.lane.b32.xlu0 %v3023, 24
  %v3235 = vpop.permute.xlu0 %3234
  %3236 = vrot.lane.b32.xlu0 %v3026, 24
  %v3237 = vpop.permute.xlu0 %3236
  %v3246 = vsel %vm747, %v2732, %v3159
  %v3247 = vsel %vm747, %v2735, %v3161
  %v3248 = vsel %vm747, %v2740, %v3163
  %v3249 = vsel %vm747, %v2743, %v3165
  %v3250 = vsel %vm747, %v2748, %v3167
  %v3251 = vsel %vm747, %v2751, %v3169
  %v3252 = vsel %vm747, %v2756, %v3171
  %v3253 = vsel %vm747, %v2759, %v3173
  %v3254 = vsel %vm401, %v3246, %v3191
  %v3255 = vsel %vm401, %v3247, %v3193
  %v3256 = vsel %vm401, %v3248, %v3195
  %v3257 = vsel %vm401, %v3249, %v3197
  %v3258 = vsel %vm401, %v3250, %v3199
  %v3259 = vsel %vm401, %v3251, %v3201
  %v3260 = vsel %vm401, %v3252, %v3203
  %v3261 = vsel %vm401, %v3253, %v3205
  %v3262 = vsel %vm3141, %v3254, %v3223
  %v3263 = vsel %vm3141, %v3255, %v3225
  %v3264 = vsel %vm3141, %v3256, %v3227
  %v3265 = vsel %vm3141, %v3257, %v3229
  %v3266 = vsel %vm3141, %v3258, %v3231
  %v3267 = vsel %vm3141, %v3259, %v3233
  %v3268 = vsel %vm3141, %v3260, %v3235
  %v3269 = vsel %vm3141, %v3261, %v3237
  %v3270 = vpack.c.bf16 %v3143, %v3142
  %v3271 = vpack.c.bf16 %v3145, %v3144
  %v3272 = vpack.c.bf16 %v3147, %v3146
  %v3273 = vpack.c.bf16 %v3149, %v3148
  %v3274 = vpack.c.bf16 %v3263, %v3262
  %v3275 = vpack.c.bf16 %v3265, %v3264
  %v3276 = vpack.c.bf16 %v3267, %v3266
  %v3277 = vpack.c.bf16 %v3269, %v3268
  %v3278 = vld [vmem:[%s9] sm:$0xf]
  %v3279 = vld [vmem:[%s9 + $0x4] sm:$0xf]
  %v3280 = vld [vmem:[%s9 + $0x8] sm:$0xf]
  %v3281 = vld [vmem:[%s9 + $0xc] sm:$0xf]
  %v3282 = vld [vmem:[%s4 + $0x5] sm:$0x1]
  %v3283 = vlaneseq
  %v3284 = vshrl.u32 %v3283, 7
  %v3285 = vsub.s32 0, %v3284
  %v3286 = vrot.slane %v3282, %v3285
  %v3291 = vunpack.c.l.b16 %v3278
  %v3292 = vunpack.c.l.b16 %v3279
  %v3293 = vunpack.c.l.b16 %v3280
  %v3294 = vunpack.c.l.b16 %v3281
  %v3295 = vpack.c.b16 %v3292, %v3291
  %v3296 = vpack.c.b16 %v3294, %v3293
  %v3300 = vsel %vm143, %v3270, 0
  %v3303 = vsel %vm143, %v3271, 0
  %v3306 = vsel %vm143, %v3272, 0
  %v3309 = vsel %vm143, %v3273, 0
  %v3312 = vsel %vm143, %v3274, 0
  %v3315 = vsel %vm143, %v3275, 0
  %v3318 = vsel %vm143, %v3276, 0
  %v3321 = vsel %vm143, %v3277, 0
  %3323 = vmatprep.subr.bf16.mxu0 0
  %3324 = vmatpush1.bf16.msra.mxu0 %v3295
  %3325 = vmatprep.subr.bf16.mxu0 0
  %3326 = vmatpush1.bf16.msra.mxu0 %v3296
  %3327 = vmatprep.subr.bf16.mxu0 0
  %3328 = vmatpush1.bf16.msra.mxu0 0
  %3329 = vmatprep.subr.bf16.mxu0 0
  %3330 = vmatpush1.bf16.msra.mxu0 0
  %3331 = vmatprep.subr.bf16.mxu0 0
  %3332 = vmatpush1.bf16.msra.mxu0 0
  %3333 = vmatprep.subr.bf16.mxu0 0
  %3334 = vmatpush1.bf16.msra.mxu0 0
  %3335 = vmatprep.subr.bf16.mxu0 0
  %3336 = vmatpush1.bf16.msra.mxu0 0
  %3337 = vmatprep.subr.bf16.mxu0 0
  %3338 = vmatpush1.bf16.msra.mxu0 0
  %3339 = vmatprep.subr.bf16.mxu0 0
  %3340 = vmatpush1.bf16.msra.mxu0 0
  %3341 = vmatprep.subr.bf16.mxu0 0
  %3342 = vmatpush1.bf16.msra.mxu0 0
  %3343 = vmatprep.subr.bf16.mxu0 0
  %3344 = vmatpush1.bf16.msra.mxu0 0
  %3345 = vmatprep.subr.bf16.mxu0 0
  %3346 = vmatpush1.bf16.msra.mxu0 0
  %3347 = vmatprep.subr.bf16.mxu0 0
  %3348 = vmatpush1.bf16.msra.mxu0 0
  %3349 = vmatprep.subr.bf16.mxu0 0
  %3350 = vmatpush1.bf16.msra.mxu0 0
  %3351 = vmatprep.subr.bf16.mxu0 0
  %3352 = vmatpush1.bf16.msra.mxu0 0
  %3353 = vmatprep.subr.bf16.mxu0 0
  %3354 = vmatpush1.bf16.msra.mxu0 0
  %3355 = vmatprep.mubr.bf16.mxu0 0
  %3356 = vmatmul.mubr.bf16.gmra.mrb[0].mxu0 %v3300
  %v3357 = vpop.f32.mrb[0].mxu0
  %v3358 = vadd.f32 %v3286, %v3357
  %v3359 = vpop.f32.mrb[0].mxu0
  %v3360 = vpop.f32.mrb[0].mxu0
  %v3361 = vadd.f32 %v3286, %v3360
  %v3362 = vpop.f32.mrb[0].mxu0
  %3363 = vmatprep.mubr.bf16.mxu0 0
  %3364 = vmatmul.mubr.bf16.gmra.mrb[0].mxu0 %v3303
  %v3365 = vpop.f32.mrb[0].mxu0
  %v3366 = vadd.f32 %v3286, %v3365
  %v3367 = vpop.f32.mrb[0].mxu0
  %v3368 = vpop.f32.mrb[0].mxu0
  %v3369 = vadd.f32 %v3286, %v3368
  %v3370 = vpop.f32.mrb[0].mxu0
  %3371 = vmatprep.mubr.bf16.mxu0 0
  %3372 = vmatmul.mubr.bf16.gmra.mrb[0].mxu0 %v3306
  %v3373 = vpop.f32.mrb[0].mxu0
  %v3374 = vadd.f32 %v3286, %v3373
  %v3375 = vpop.f32.mrb[0].mxu0
  %v3376 = vpop.f32.mrb[0].mxu0
  %v3377 = vadd.f32 %v3286, %v3376
  %v3378 = vpop.f32.mrb[0].mxu0
  %3379 = vmatprep.mubr.bf16.mxu0 0
  %3380 = vmatmul.mubr.bf16.gmra.mrb[0].mxu0 %v3309
  %v3381 = vpop.f32.mrb[0].mxu0
  %v3382 = vadd.f32 %v3286, %v3381
  %v3383 = vpop.f32.mrb[0].mxu0
  %v3384 = vpop.f32.mrb[0].mxu0
  %v3385 = vadd.f32 %v3286, %v3384
  %v3386 = vpop.f32.mrb[0].mxu0
  %3387 = vmatprep.mubr.bf16.mxu0 0
  %3388 = vmatmul.mubr.bf16.gmra.mrb[0].mxu0 %v3312
  %v3389 = vpop.f32.mrb[0].mxu0
  %v3390 = vadd.f32 %v3286, %v3389
  %v3391 = vpop.f32.mrb[0].mxu0
  %v3392 = vpop.f32.mrb[0].mxu0
  %v3393 = vadd.f32 %v3286, %v3392
  %v3394 = vpop.f32.mrb[0].mxu0
  %3395 = vmatprep.mubr.bf16.mxu0 0
  %3396 = vmatmul.mubr.bf16.gmra.mrb[0].mxu0 %v3315
  %v3397 = vpop.f32.mrb[0].mxu0
  %v3398 = vadd.f32 %v3286, %v3397
  %v3399 = vpop.f32.mrb[0].mxu0
  %v3400 = vpop.f32.mrb[0].mxu0
  %v3401 = vadd.f32 %v3286, %v3400
  %v3402 = vpop.f32.mrb[0].mxu0
  %3403 = vmatprep.mubr.bf16.mxu0 0
  %3404 = vmatmul.mubr.bf16.gmra.mrb[0].mxu0 %v3318
  %v3405 = vpop.f32.mrb[0].mxu0
  %v3406 = vadd.f32 %v3286, %v3405
  %v3407 = vpop.f32.mrb[0].mxu0
  %v3408 = vpop.f32.mrb[0].mxu0
  %v3409 = vadd.f32 %v3286, %v3408
  %v3410 = vpop.f32.mrb[0].mxu0
  %3411 = vmatprep.mubr.bf16.mxu0 0
  %3412 = vmatmul.mubr.bf16.gmra.mrb[0].mxu0 %v3321
  %v3413 = vpop.f32.mrb[0].mxu0
  %v3414 = vadd.f32 %v3286, %v3413
  %v3415 = vpop.f32.mrb[0].mxu0
  %v3416 = vpop.f32.mrb[0].mxu0
  %v3417 = vadd.f32 %v3286, %v3416
  %v3418 = vpop.f32.mrb[0].mxu0
  %3419 = vdwg.mxu0
  %v3420 = vadd.f32 %v461, %v3358
  %v3421 = vadd.f32 %v464, %v3361
  %v3422 = vadd.f32 %v469, %v3366
  %v3423 = vadd.f32 %v472, %v3369
  %v3424 = vadd.f32 %v477, %v3374
  %v3425 = vadd.f32 %v480, %v3377
  %v3426 = vadd.f32 %v485, %v3382
  %v3427 = vadd.f32 %v488, %v3385
  %v3428 = vadd.f32 %v493, %v3390
  %v3429 = vadd.f32 %v496, %v3393
  %v3430 = vadd.f32 %v501, %v3398
  %v3431 = vadd.f32 %v504, %v3401
  %v3432 = vadd.f32 %v509, %v3406
  %v3433 = vadd.f32 %v512, %v3409
  %v3434 = vadd.f32 %v517, %v3414
  %v3435 = vadd.f32 %v520, %v3417
  %v3436 = vld [vmem:[%s4 + $0x8] sm:$0x1]
  %v3437 = vld [vmem:[%s4 + $0x9] sm:$0x1]
  %v3438 = vsel %vm143, %v3420, 0.0
  %3439 = vadd.xlane.f32.xlu0 %v3438
  %v3440 = vpop.xlane.xlu0 %3439
  %v3441 = vsel %vm143, %v3421, 0.0
  %3442 = vadd.xlane.f32.xlu0 %v3441
  %v3443 = vpop.xlane.xlu0 %3442
  %v3444 = vsel %vm143, %v3422, 0.0
  %3445 = vadd.xlane.f32.xlu0 %v3444
  %v3446 = vpop.xlane.xlu0 %3445
  %v3447 = vsel %vm143, %v3423, 0.0
  %3448 = vadd.xlane.f32.xlu0 %v3447
  %v3449 = vpop.xlane.xlu0 %3448
  %v3450 = vsel %vm143, %v3424, 0.0
  %3451 = vadd.xlane.f32.xlu0 %v3450
  %v3452 = vpop.xlane.xlu0 %3451
  %v3453 = vsel %vm143, %v3425, 0.0
  %3454 = vadd.xlane.f32.xlu0 %v3453
  %v3455 = vpop.xlane.xlu0 %3454
  %v3456 = vsel %vm143, %v3426, 0.0
  %3457 = vadd.xlane.f32.xlu0 %v3456
  %v3458 = vpop.xlane.xlu0 %3457
  %v3459 = vsel %vm143, %v3427, 0.0
  %3460 = vadd.xlane.f32.xlu0 %v3459
  %v3461 = vpop.xlane.xlu0 %3460
  %v3462 = vsel %vm143, %v3428, 0.0
  %3463 = vadd.xlane.f32.xlu0 %v3462
  %v3464 = vpop.xlane.xlu0 %3463
  %v3465 = vsel %vm143, %v3429, 0.0
  %3466 = vadd.xlane.f32.xlu0 %v3465
  %v3467 = vpop.xlane.xlu0 %3466
  %v3468 = vsel %vm143, %v3430, 0.0
  %3469 = vadd.xlane.f32.xlu0 %v3468
  %v3470 = vpop.xlane.xlu0 %3469
  %v3471 = vsel %vm143, %v3431, 0.0
  %3472 = vadd.xlane.f32.xlu0 %v3471
  %v3473 = vpop.xlane.xlu0 %3472
  %v3474 = vsel %vm143, %v3432, 0.0
  %3475 = vadd.xlane.f32.xlu0 %v3474
  %v3476 = vpop.xlane.xlu0 %3475
  %v3477 = vsel %vm143, %v3433, 0.0
  %3478 = vadd.xlane.f32.xlu0 %v3477
  %v3479 = vpop.xlane.xlu0 %3478
  %v3480 = vsel %vm143, %v3434, 0.0
  %3481 = vadd.xlane.f32.xlu0 %v3480
  %v3482 = vpop.xlane.xlu0 %3481
  %v3483 = vsel %vm143, %v3435, 0.0
  %3484 = vadd.xlane.f32.xlu0 %v3483
  %v3485 = vpop.xlane.xlu0 %3484
  %v3486 = vrcp.pop 32.0
  %v3487 = vmul.f32 %v3440, %v3486
  %v3488 = vmul.f32 %v3443, %v3486
  %v3489 = vmul.f32 %v3446, %v3486
  %v3490 = vmul.f32 %v3449, %v3486
  %v3491 = vmul.f32 %v3452, %v3486
  %v3492 = vmul.f32 %v3455, %v3486
  %v3493 = vmul.f32 %v3458, %v3486
  %v3494 = vmul.f32 %v3461, %v3486
  %v3495 = vmul.f32 %v3464, %v3486
  %v3496 = vmul.f32 %v3467, %v3486
  %v3497 = vmul.f32 %v3470, %v3486
  %v3498 = vmul.f32 %v3473, %v3486
  %v3499 = vmul.f32 %v3476, %v3486
  %v3500 = vmul.f32 %v3479, %v3486
  %v3501 = vmul.f32 %v3482, %v3486
  %v3502 = vmul.f32 %v3485, %v3486
  %v3503 = vsub.f32 %v3420, %v3487
  %v3504 = vsub.f32 %v3421, %v3488
  %v3505 = vsub.f32 %v3422, %v3489
  %v3506 = vsub.f32 %v3423, %v3490
  %v3507 = vsub.f32 %v3424, %v3491
  %v3508 = vsub.f32 %v3425, %v3492
  %v3509 = vsub.f32 %v3426, %v3493
  %v3510 = vsub.f32 %v3427, %v3494
  %v3511 = vsub.f32 %v3428, %v3495
  %v3512 = vsub.f32 %v3429, %v3496
  %v3513 = vsub.f32 %v3430, %v3497
  %v3514 = vsub.f32 %v3431, %v3498
  %v3515 = vsub.f32 %v3432, %v3499
  %v3516 = vsub.f32 %v3433, %v3500
  %v3517 = vsub.f32 %v3434, %v3501
  %v3518 = vsub.f32 %v3435, %v3502
  %v3519 = vmul.f32 %v3503, %v3503
  %v3520 = vmul.f32 %v3504, %v3504
  %v3521 = vmul.f32 %v3505, %v3505
  %v3522 = vmul.f32 %v3506, %v3506
  %v3523 = vmul.f32 %v3507, %v3507
  %v3524 = vmul.f32 %v3508, %v3508
  %v3525 = vmul.f32 %v3509, %v3509
  %v3526 = vmul.f32 %v3510, %v3510
  %v3527 = vmul.f32 %v3511, %v3511
  %v3528 = vmul.f32 %v3512, %v3512
  %v3529 = vmul.f32 %v3513, %v3513
  %v3530 = vmul.f32 %v3514, %v3514
  %v3531 = vmul.f32 %v3515, %v3515
  %v3532 = vmul.f32 %v3516, %v3516
  %v3533 = vmul.f32 %v3517, %v3517
  %v3534 = vmul.f32 %v3518, %v3518
  %v3535 = vsel %vm143, %v3519, 0.0
  %3536 = vadd.xlane.f32.xlu0 %v3535
  %v3537 = vpop.xlane.xlu0 %3536
  %v3538 = vsel %vm143, %v3520, 0.0
  %3539 = vadd.xlane.f32.xlu0 %v3538
  %v3540 = vpop.xlane.xlu0 %3539
  %v3541 = vsel %vm143, %v3521, 0.0
  %3542 = vadd.xlane.f32.xlu0 %v3541
  %v3543 = vpop.xlane.xlu0 %3542
  %v3544 = vsel %vm143, %v3522, 0.0
  %3545 = vadd.xlane.f32.xlu0 %v3544
  %v3546 = vpop.xlane.xlu0 %3545
  %v3547 = vsel %vm143, %v3523, 0.0
  %3548 = vadd.xlane.f32.xlu0 %v3547
  %v3549 = vpop.xlane.xlu0 %3548
  %v3550 = vsel %vm143, %v3524, 0.0
  %3551 = vadd.xlane.f32.xlu0 %v3550
  %v3552 = vpop.xlane.xlu0 %3551
  %v3553 = vsel %vm143, %v3525, 0.0
  %3554 = vadd.xlane.f32.xlu0 %v3553
  %v3555 = vpop.xlane.xlu0 %3554
  %v3556 = vsel %vm143, %v3526, 0.0
  %3557 = vadd.xlane.f32.xlu0 %v3556
  %v3558 = vpop.xlane.xlu0 %3557
  %v3559 = vsel %vm143, %v3527, 0.0
  %3560 = vadd.xlane.f32.xlu0 %v3559
  %v3561 = vpop.xlane.xlu0 %3560
  %v3562 = vsel %vm143, %v3528, 0.0
  %3563 = vadd.xlane.f32.xlu0 %v3562
  %v3564 = vpop.xlane.xlu0 %3563
  %v3565 = vsel %vm143, %v3529, 0.0
  %3566 = vadd.xlane.f32.xlu0 %v3565
  %v3567 = vpop.xlane.xlu0 %3566
  %v3568 = vsel %vm143, %v3530, 0.0
  %3569 = vadd.xlane.f32.xlu0 %v3568
  %v3570 = vpop.xlane.xlu0 %3569
  %v3571 = vsel %vm143, %v3531, 0.0
  %3572 = vadd.xlane.f32.xlu0 %v3571
  %v3573 = vpop.xlane.xlu0 %3572
  %v3574 = vsel %vm143, %v3532, 0.0
  %3575 = vadd.xlane.f32.xlu0 %v3574
  %v3576 = vpop.xlane.xlu0 %3575
  %v3577 = vsel %vm143, %v3533, 0.0
  %3578 = vadd.xlane.f32.xlu0 %v3577
  %v3579 = vpop.xlane.xlu0 %3578
  %v3580 = vsel %vm143, %v3534, 0.0
  %3581 = vadd.xlane.f32.xlu0 %v3580
  %v3582 = vpop.xlane.xlu0 %3581
  %v3583 = vmul.f32 %v3537, %v3486
  %v3584 = vmul.f32 %v3540, %v3486
  %v3585 = vmul.f32 %v3543, %v3486
  %v3586 = vmul.f32 %v3546, %v3486
  %v3587 = vmul.f32 %v3549, %v3486
  %v3588 = vmul.f32 %v3552, %v3486
  %v3589 = vmul.f32 %v3555, %v3486
  %v3590 = vmul.f32 %v3558, %v3486
  %v3591 = vmul.f32 %v3561, %v3486
  %v3592 = vmul.f32 %v3564, %v3486
  %v3593 = vmul.f32 %v3567, %v3486
  %v3594 = vmul.f32 %v3570, %v3486
  %v3595 = vmul.f32 %v3573, %v3486
  %v3596 = vmul.f32 %v3576, %v3486
  %v3597 = vmul.f32 %v3579, %v3486
  %v3598 = vmul.f32 %v3582, %v3486
  %v3599 = vadd.f32 %v3583, 1e-05
  %v3600 = vadd.f32 %v3584, 1e-05
  %v3601 = vadd.f32 %v3585, 1e-05
  %v3602 = vadd.f32 %v3586, 1e-05
  %v3603 = vadd.f32 %v3587, 1e-05
  %v3604 = vadd.f32 %v3588, 1e-05
  %v3605 = vadd.f32 %v3589, 1e-05
  %v3606 = vadd.f32 %v3590, 1e-05
  %v3607 = vadd.f32 %v3591, 1e-05
  %v3608 = vadd.f32 %v3592, 1e-05
  %v3609 = vadd.f32 %v3593, 1e-05
  %v3610 = vadd.f32 %v3594, 1e-05
  %v3611 = vadd.f32 %v3595, 1e-05
  %v3612 = vadd.f32 %v3596, 1e-05
  %v3613 = vadd.f32 %v3597, 1e-05
  %v3614 = vadd.f32 %v3598, 1e-05
  %v3615 = vrsqrt.pop %v3599
  %v3616 = vrsqrt.pop %v3600
  %v3617 = vrsqrt.pop %v3601
  %v3618 = vrsqrt.pop %v3602
  %v3619 = vrsqrt.pop %v3603
  %v3620 = vrsqrt.pop %v3604
  %v3621 = vrsqrt.pop %v3605
  %v3622 = vrsqrt.pop %v3606
  %v3623 = vrsqrt.pop %v3607
  %v3624 = vrsqrt.pop %v3608
  %v3625 = vrsqrt.pop %v3609
  %v3626 = vrsqrt.pop %v3610
  %v3627 = vrsqrt.pop %v3611
  %v3628 = vrsqrt.pop %v3612
  %v3629 = vrsqrt.pop %v3613
  %v3630 = vrsqrt.pop %v3614
  %v3631 = vmul.f32 %v3503, %v3615
  %v3632 = vmul.f32 %v3504, %v3616
  %v3633 = vmul.f32 %v3505, %v3617
  %v3634 = vmul.f32 %v3506, %v3618
  %v3635 = vmul.f32 %v3507, %v3619
  %v3636 = vmul.f32 %v3508, %v3620
  %v3637 = vmul.f32 %v3509, %v3621
  %v3638 = vmul.f32 %v3510, %v3622
  %v3639 = vmul.f32 %v3511, %v3623
  %v3640 = vmul.f32 %v3512, %v3624
  %v3641 = vmul.f32 %v3513, %v3625
  %v3642 = vmul.f32 %v3514, %v3626
  %v3643 = vmul.f32 %v3515, %v3627
  %v3644 = vmul.f32 %v3516, %v3628
  %v3645 = vmul.f32 %v3517, %v3629
  %v3646 = vmul.f32 %v3518, %v3630
  %v3647 = vlaneseq
  %v3648 = vshrl.u32 %v3647, 7
  %v3649 = vsub.s32 0, %v3648
  %v3650 = vrot.slane %v3436, %v3649
  %v3651 = vmul.f32 %v3631, %v3650
  %v3652 = vmul.f32 %v3632, %v3650
  %v3653 = vmul.f32 %v3633, %v3650
  %v3654 = vmul.f32 %v3634, %v3650
  %v3655 = vmul.f32 %v3635, %v3650
  %v3656 = vmul.f32 %v3636, %v3650
  %v3657 = vmul.f32 %v3637, %v3650
  %v3658 = vmul.f32 %v3638, %v3650
  %v3659 = vmul.f32 %v3639, %v3650
  %v3660 = vmul.f32 %v3640, %v3650
  %v3661 = vmul.f32 %v3641, %v3650
  %v3662 = vmul.f32 %v3642, %v3650
  %v3663 = vmul.f32 %v3643, %v3650
  %v3664 = vmul.f32 %v3644, %v3650
  %v3665 = vmul.f32 %v3645, %v3650
  %v3666 = vmul.f32 %v3646, %v3650
  %v3667 = vlaneseq
  %v3668 = vshrl.u32 %v3667, 7
  %v3669 = vsub.s32 0, %v3668
  %v3670 = vrot.slane %v3437, %v3669
  %v3671 = vadd.f32 %v3651, %v3670
  %v3672 = vadd.f32 %v3652, %v3670
  %v3673 = vadd.f32 %v3653, %v3670
  %v3674 = vadd.f32 %v3654, %v3670
  %v3675 = vadd.f32 %v3655, %v3670
  %v3676 = vadd.f32 %v3656, %v3670
  %v3677 = vadd.f32 %v3657, %v3670
  %v3678 = vadd.f32 %v3658, %v3670
  %v3679 = vadd.f32 %v3659, %v3670
  %v3680 = vadd.f32 %v3660, %v3670
  %v3681 = vadd.f32 %v3661, %v3670
  %v3682 = vadd.f32 %v3662, %v3670
  %v3683 = vadd.f32 %v3663, %v3670
  %v3684 = vadd.f32 %v3664, %v3670
  %v3685 = vadd.f32 %v3665, %v3670
  %v3686 = vadd.f32 %v3666, %v3670
  %v3687 = vpack.c.bf16 %v359, %v359
  %v3688 = vld [vmem:[%s3 + $0x80] sm:$0xf]
  %v3689 = vld [vmem:[%s3 + $0x84] sm:$0xf]
  %v3690 = vld [vmem:[%s3 + $0x88] sm:$0xf]
  %v3691 = vld [vmem:[%s3 + $0x8c] sm:$0xf]
  %v3692 = vld [vmem:[%s4 + $0x6] sm:$0x1]
  %v3693 = vlaneseq
  %v3694 = vshrl.u32 %v3693, 7
  %v3695 = vsub.s32 0, %v3694
  %v3696 = vrot.slane %v3692, %v3695
  %v3701 = vunpack.c.l.b16 %v3688
  %v3702 = vunpack.c.l.b16 %v3689
  %v3703 = vunpack.c.l.b16 %v3690
  %v3704 = vunpack.c.l.b16 %v3691
  %v3705 = vpack.c.b16 %v3702, %v3701
  %v3706 = vpack.c.b16 %v3704, %v3703
  %v3710 = vsel %vm143, %v3687, 0
  %3712 = vmatprep.subr.bf16.mxu0 0
  %3713 = vmatpush1.bf16.msra.mxu0 %v3705
  %3714 = vmatprep.subr.bf16.mxu0 0
  %3715 = vmatpush1.bf16.msra.mxu0 %v3706
  %3716 = vmatprep.subr.bf16.mxu0 0
  %3717 = vmatpush1.bf16.msra.mxu0 0
  %3718 = vmatprep.subr.bf16.mxu0 0
  %3719 = vmatpush1.bf16.msra.mxu0 0
  %3720 = vmatprep.subr.bf16.mxu0 0
  %3721 = vmatpush1.bf16.msra.mxu0 0
  %3722 = vmatprep.subr.bf16.mxu0 0
  %3723 = vmatpush1.bf16.msra.mxu0 0
  %3724 = vmatprep.subr.bf16.mxu0 0
  %3725 = vmatpush1.bf16.msra.mxu0 0
  %3726 = vmatprep.subr.bf16.mxu0 0
  %3727 = vmatpush1.bf16.msra.mxu0 0
  %3728 = vmatprep.subr.bf16.mxu0 0
  %3729 = vmatpush1.bf16.msra.mxu0 0
  %3730 = vmatprep.subr.bf16.mxu0 0
  %3731 = vmatpush1.bf16.msra.mxu0 0
  %3732 = vmatprep.subr.bf16.mxu0 0
  %3733 = vmatpush1.bf16.msra.mxu0 0
  %3734 = vmatprep.subr.bf16.mxu0 0
  %3735 = vmatpush1.bf16.msra.mxu0 0
  %3736 = vmatprep.subr.bf16.mxu0 0
  %3737 = vmatpush1.bf16.msra.mxu0 0
  %3738 = vmatprep.subr.bf16.mxu0 0
  %3739 = vmatpush1.bf16.msra.mxu0 0
  %3740 = vmatprep.subr.bf16.mxu0 0
  %3741 = vmatpush1.bf16.msra.mxu0 0
  %3742 = vmatprep.subr.bf16.mxu0 0
  %3743 = vmatpush1.bf16.msra.mxu0 0
  %3744 = vmatprep.mubr.bf16.mxu0 0
  %3745 = vmatmul.mubr.bf16.gmra.mrb[0].mxu0 %v3710
  %v3746 = vpop.f32.mrb[0].mxu0
  %v3747 = vadd.f32 %v3696, %v3746
  %v3748 = vpop.f32.mrb[0].mxu0
  %v3749 = vpop.f32.mrb[0].mxu0
  %v3750 = vpop.f32.mrb[0].mxu0
  %3751 = vdwg.mxu0
  %v3752 = vpack.c.bf16 %v3747, %v3747
  %v3753 = vld [vmem:[%s3 + $0x90] sm:$0xf]
  %v3754 = vld [vmem:[%s3 + $0x94] sm:$0xf]
  %v3755 = vld [vmem:[%s3 + $0x98] sm:$0xf]
  %v3756 = vld [vmem:[%s3 + $0x9c] sm:$0xf]
  %v3757 = vld [vmem:[%s4 + $0x7] sm:$0x1]
  %v3758 = vlaneseq
  %v3759 = vshrl.u32 %v3758, 7
  %v3760 = vsub.s32 0, %v3759
  %v3761 = vrot.slane %v3757, %v3760
  %v3766 = vunpack.c.l.b16 %v3753
  %v3767 = vunpack.c.l.b16 %v3754
  %v3768 = vunpack.c.l.b16 %v3755
  %v3769 = vunpack.c.l.b16 %v3756
  %v3770 = vpack.c.b16 %v3767, %v3766
  %v3771 = vpack.c.b16 %v3769, %v3768
  %v3775 = vsel %vm143, %v3752, 0
  %3777 = vmatprep.subr.bf16.mxu0 0
  %3778 = vmatpush1.bf16.msra.mxu0 %v3770
  %3779 = vmatprep.subr.bf16.mxu0 0
  %3780 = vmatpush1.bf16.msra.mxu0 %v3771
  %3781 = vmatprep.subr.bf16.mxu0 0
  %3782 = vmatpush1.bf16.msra.mxu0 0
  %3783 = vmatprep.subr.bf16.mxu0 0
  %3784 = vmatpush1.bf16.msra.mxu0 0
  %3785 = vmatprep.subr.bf16.mxu0 0
  %3786 = vmatpush1.bf16.msra.mxu0 0
  %3787 = vmatprep.subr.bf16.mxu0 0
  %3788 = vmatpush1.bf16.msra.mxu0 0
  %3789 = vmatprep.subr.bf16.mxu0 0
  %3790 = vmatpush1.bf16.msra.mxu0 0
  %3791 = vmatprep.subr.bf16.mxu0 0
  %3792 = vmatpush1.bf16.msra.mxu0 0
  %3793 = vmatprep.subr.bf16.mxu0 0
  %3794 = vmatpush1.bf16.msra.mxu0 0
  %3795 = vmatprep.subr.bf16.mxu0 0
  %3796 = vmatpush1.bf16.msra.mxu0 0
  %3797 = vmatprep.subr.bf16.mxu0 0
  %3798 = vmatpush1.bf16.msra.mxu0 0
  %3799 = vmatprep.subr.bf16.mxu0 0
  %3800 = vmatpush1.bf16.msra.mxu0 0
  %3801 = vmatprep.subr.bf16.mxu0 0
  %3802 = vmatpush1.bf16.msra.mxu0 0
  %3803 = vmatprep.subr.bf16.mxu0 0
  %3804 = vmatpush1.bf16.msra.mxu0 0
  %3805 = vmatprep.subr.bf16.mxu0 0
  %3806 = vmatpush1.bf16.msra.mxu0 0
  %3807 = vmatprep.subr.bf16.mxu0 0
  %3808 = vmatpush1.bf16.msra.mxu0 0
  %3809 = vmatprep.mubr.bf16.mxu0 0
  %3810 = vmatmul.mubr.bf16.gmra.mrb[0].mxu0 %v3775
  %v3811 = vpop.f32.mrb[0].mxu0
  %v3812 = vadd.f32 %v3761, %v3811
  %v3813 = vpop.f32.mrb[0].mxu0
  %v3814 = vpop.f32.mrb[0].mxu0
  %v3815 = vpop.f32.mrb[0].mxu0
  %3816 = vdwg.mxu0
  %v3819 = vunpack.c.l.s4 1966171168
  %v3820 = vunpack.c.0.s8 %v3819
  %v3821 = vlaneseq
  %v3822 = vshrl.u32 %v3821, 7
  %v3823 = vsub.s32 %v3820, %v3822
  %v3824 = vrot.slane %v3812, %v3823
  %v3825 = vcombine.high %v3824, %v3824
  %v3827 = vunpack.c.l.s4 1966171168
  %v3828 = vunpack.c.0.s8 %v3827
  %v3829 = vlaneseq
  %v3830 = vshrl.u32 %v3829, 7
  %v3831 = vsub.s32 %v3828, %v3830
  %v3832 = vrot.slane %v3824, %v3831
  %v3834 = vunpack.c.l.s4 1966171168
  %v3835 = vunpack.c.0.s8 %v3834
  %v3836 = vlaneseq
  %v3837 = vshrl.u32 %v3836, 7
  %v3838 = vsub.s32 %v3835, %v3837
  %v3839 = vrot.slane %v3825, %v3838
  %v3840 = vlaneseq
  %v3841 = vshrl.u32 %v3840, 7
  %v3842 = vsub.s32 0, %v3841
  %v3843 = vrot.slane %v3832, %v3842
  %v3844 = vlaneseq
  %v3845 = vshrl.u32 %v3844, 7
  %v3846 = vsub.s32 0, %v3845
  %v3847 = vrot.slane %v3839, %v3846
  %v3850 = vadd.f32 %v3671, %v3843
  %v3851 = vadd.f32 %v3672, %v3843
  %v3852 = vadd.f32 %v3673, %v3843
  %v3853 = vadd.f32 %v3674, %v3843
  %v3854 = vadd.f32 %v3675, %v3843
  %v3855 = vadd.f32 %v3676, %v3843
  %v3856 = vadd.f32 %v3677, %v3843
  %v3857 = vadd.f32 %v3678, %v3843
  %v3858 = vadd.f32 %v3679, %v3847
  %v3859 = vadd.f32 %v3680, %v3847
  %v3860 = vadd.f32 %v3681, %v3847
  %v3861 = vadd.f32 %v3682, %v3847
  %v3862 = vadd.f32 %v3683, %v3847
  %v3863 = vadd.f32 %v3684, %v3847
  %v3864 = vadd.f32 %v3685, %v3847
  %v3865 = vadd.f32 %v3686, %v3847
  %v3866 = vld [vmem:[%s4 + $0xa] sm:$0x1]
  %v3867 = vld [vmem:[%s4 + $0xb] sm:$0x1]
  %v3868 = vsel %vm143, %v3850, 0.0
  %3869 = vadd.xlane.f32.xlu0 %v3868
  %v3870 = vpop.xlane.xlu0 %3869
  %v3871 = vsel %vm143, %v3851, 0.0
  %3872 = vadd.xlane.f32.xlu0 %v3871
  %v3873 = vpop.xlane.xlu0 %3872
  %v3874 = vsel %vm143, %v3852, 0.0
  %3875 = vadd.xlane.f32.xlu0 %v3874
  %v3876 = vpop.xlane.xlu0 %3875
  %v3877 = vsel %vm143, %v3853, 0.0
  %3878 = vadd.xlane.f32.xlu0 %v3877
  %v3879 = vpop.xlane.xlu0 %3878
  %v3880 = vsel %vm143, %v3854, 0.0
  %3881 = vadd.xlane.f32.xlu0 %v3880
  %v3882 = vpop.xlane.xlu0 %3881
  %v3883 = vsel %vm143, %v3855, 0.0
  %3884 = vadd.xlane.f32.xlu0 %v3883
  %v3885 = vpop.xlane.xlu0 %3884
  %v3886 = vsel %vm143, %v3856, 0.0
  %3887 = vadd.xlane.f32.xlu0 %v3886
  %v3888 = vpop.xlane.xlu0 %3887
  %v3889 = vsel %vm143, %v3857, 0.0
  %3890 = vadd.xlane.f32.xlu0 %v3889
  %v3891 = vpop.xlane.xlu0 %3890
  %v3892 = vsel %vm143, %v3858, 0.0
  %3893 = vadd.xlane.f32.xlu0 %v3892
  %v3894 = vpop.xlane.xlu0 %3893
  %v3895 = vsel %vm143, %v3859, 0.0
  %3896 = vadd.xlane.f32.xlu0 %v3895
  %v3897 = vpop.xlane.xlu0 %3896
  %v3898 = vsel %vm143, %v3860, 0.0
  %3899 = vadd.xlane.f32.xlu0 %v3898
  %v3900 = vpop.xlane.xlu0 %3899
  %v3901 = vsel %vm143, %v3861, 0.0
  %3902 = vadd.xlane.f32.xlu0 %v3901
  %v3903 = vpop.xlane.xlu0 %3902
  %v3904 = vsel %vm143, %v3862, 0.0
  %3905 = vadd.xlane.f32.xlu0 %v3904
  %v3906 = vpop.xlane.xlu0 %3905
  %v3907 = vsel %vm143, %v3863, 0.0
  %3908 = vadd.xlane.f32.xlu0 %v3907
  %v3909 = vpop.xlane.xlu0 %3908
  %v3910 = vsel %vm143, %v3864, 0.0
  %3911 = vadd.xlane.f32.xlu0 %v3910
  %v3912 = vpop.xlane.xlu0 %3911
  %v3913 = vsel %vm143, %v3865, 0.0
  %3914 = vadd.xlane.f32.xlu0 %v3913
  %v3915 = vpop.xlane.xlu0 %3914
  %v3916 = vmul.f32 %v3870, %v3486
  %v3917 = vmul.f32 %v3873, %v3486
  %v3918 = vmul.f32 %v3876, %v3486
  %v3919 = vmul.f32 %v3879, %v3486
  %v3920 = vmul.f32 %v3882, %v3486
  %v3921 = vmul.f32 %v3885, %v3486
  %v3922 = vmul.f32 %v3888, %v3486
  %v3923 = vmul.f32 %v3891, %v3486
  %v3924 = vmul.f32 %v3894, %v3486
  %v3925 = vmul.f32 %v3897, %v3486
  %v3926 = vmul.f32 %v3900, %v3486
  %v3927 = vmul.f32 %v3903, %v3486
  %v3928 = vmul.f32 %v3906, %v3486
  %v3929 = vmul.f32 %v3909, %v3486
  %v3930 = vmul.f32 %v3912, %v3486
  %v3931 = vmul.f32 %v3915, %v3486
  %v3932 = vsub.f32 %v3850, %v3916
  %v3933 = vsub.f32 %v3851, %v3917
  %v3934 = vsub.f32 %v3852, %v3918
  %v3935 = vsub.f32 %v3853, %v3919
  %v3936 = vsub.f32 %v3854, %v3920
  %v3937 = vsub.f32 %v3855, %v3921
  %v3938 = vsub.f32 %v3856, %v3922
  %v3939 = vsub.f32 %v3857, %v3923
  %v3940 = vsub.f32 %v3858, %v3924
  %v3941 = vsub.f32 %v3859, %v3925
  %v3942 = vsub.f32 %v3860, %v3926
  %v3943 = vsub.f32 %v3861, %v3927
  %v3944 = vsub.f32 %v3862, %v3928
  %v3945 = vsub.f32 %v3863, %v3929
  %v3946 = vsub.f32 %v3864, %v3930
  %v3947 = vsub.f32 %v3865, %v3931
  %v3948 = vmul.f32 %v3932, %v3932
  %v3949 = vmul.f32 %v3933, %v3933
  %v3950 = vmul.f32 %v3934, %v3934
  %v3951 = vmul.f32 %v3935, %v3935
  %v3952 = vmul.f32 %v3936, %v3936
  %v3953 = vmul.f32 %v3937, %v3937
  %v3954 = vmul.f32 %v3938, %v3938
  %v3955 = vmul.f32 %v3939, %v3939
  %v3956 = vmul.f32 %v3940, %v3940
  %v3957 = vmul.f32 %v3941, %v3941
  %v3958 = vmul.f32 %v3942, %v3942
  %v3959 = vmul.f32 %v3943, %v3943
  %v3960 = vmul.f32 %v3944, %v3944
  %v3961 = vmul.f32 %v3945, %v3945
  %v3962 = vmul.f32 %v3946, %v3946
  %v3963 = vmul.f32 %v3947, %v3947
  %v3964 = vsel %vm143, %v3948, 0.0
  %3965 = vadd.xlane.f32.xlu0 %v3964
  %v3966 = vpop.xlane.xlu0 %3965
  %v3967 = vsel %vm143, %v3949, 0.0
  %3968 = vadd.xlane.f32.xlu0 %v3967
  %v3969 = vpop.xlane.xlu0 %3968
  %v3970 = vsel %vm143, %v3950, 0.0
  %3971 = vadd.xlane.f32.xlu0 %v3970
  %v3972 = vpop.xlane.xlu0 %3971
  %v3973 = vsel %vm143, %v3951, 0.0
  %3974 = vadd.xlane.f32.xlu0 %v3973
  %v3975 = vpop.xlane.xlu0 %3974
  %v3976 = vsel %vm143, %v3952, 0.0
  %3977 = vadd.xlane.f32.xlu0 %v3976
  %v3978 = vpop.xlane.xlu0 %3977
  %v3979 = vsel %vm143, %v3953, 0.0
  %3980 = vadd.xlane.f32.xlu0 %v3979
  %v3981 = vpop.xlane.xlu0 %3980
  %v3982 = vsel %vm143, %v3954, 0.0
  %3983 = vadd.xlane.f32.xlu0 %v3982
  %v3984 = vpop.xlane.xlu0 %3983
  %v3985 = vsel %vm143, %v3955, 0.0
  %3986 = vadd.xlane.f32.xlu0 %v3985
  %v3987 = vpop.xlane.xlu0 %3986
  %v3988 = vsel %vm143, %v3956, 0.0
  %3989 = vadd.xlane.f32.xlu0 %v3988
  %v3990 = vpop.xlane.xlu0 %3989
  %v3991 = vsel %vm143, %v3957, 0.0
  %3992 = vadd.xlane.f32.xlu0 %v3991
  %v3993 = vpop.xlane.xlu0 %3992
  %v3994 = vsel %vm143, %v3958, 0.0
  %3995 = vadd.xlane.f32.xlu0 %v3994
  %v3996 = vpop.xlane.xlu0 %3995
  %v3997 = vsel %vm143, %v3959, 0.0
  %3998 = vadd.xlane.f32.xlu0 %v3997
  %v3999 = vpop.xlane.xlu0 %3998
  %v4000 = vsel %vm143, %v3960, 0.0
  %4001 = vadd.xlane.f32.xlu0 %v4000
  %v4002 = vpop.xlane.xlu0 %4001
  %v4003 = vsel %vm143, %v3961, 0.0
  %4004 = vadd.xlane.f32.xlu0 %v4003
  %v4005 = vpop.xlane.xlu0 %4004
  %v4006 = vsel %vm143, %v3962, 0.0
  %4007 = vadd.xlane.f32.xlu0 %v4006
  %v4008 = vpop.xlane.xlu0 %4007
  %v4009 = vsel %vm143, %v3963, 0.0
  %4010 = vadd.xlane.f32.xlu0 %v4009
  %v4011 = vpop.xlane.xlu0 %4010
  %v4012 = vmul.f32 %v3966, %v3486
  %v4013 = vmul.f32 %v3969, %v3486
  %v4014 = vmul.f32 %v3972, %v3486
  %v4015 = vmul.f32 %v3975, %v3486
  %v4016 = vmul.f32 %v3978, %v3486
  %v4017 = vmul.f32 %v3981, %v3486
  %v4018 = vmul.f32 %v3984, %v3486
  %v4019 = vmul.f32 %v3987, %v3486
  %v4020 = vmul.f32 %v3990, %v3486
  %v4021 = vmul.f32 %v3993, %v3486
  %v4022 = vmul.f32 %v3996, %v3486
  %v4023 = vmul.f32 %v3999, %v3486
  %v4024 = vmul.f32 %v4002, %v3486
  %v4025 = vmul.f32 %v4005, %v3486
  %v4026 = vmul.f32 %v4008, %v3486
  %v4027 = vmul.f32 %v4011, %v3486
  %v4028 = vadd.f32 %v4012, 1e-05
  %v4029 = vadd.f32 %v4013, 1e-05
  %v4030 = vadd.f32 %v4014, 1e-05
  %v4031 = vadd.f32 %v4015, 1e-05
  %v4032 = vadd.f32 %v4016, 1e-05
  %v4033 = vadd.f32 %v4017, 1e-05
  %v4034 = vadd.f32 %v4018, 1e-05
  %v4035 = vadd.f32 %v4019, 1e-05
  %v4036 = vadd.f32 %v4020, 1e-05
  %v4037 = vadd.f32 %v4021, 1e-05
  %v4038 = vadd.f32 %v4022, 1e-05
  %v4039 = vadd.f32 %v4023, 1e-05
  %v4040 = vadd.f32 %v4024, 1e-05
  %v4041 = vadd.f32 %v4025, 1e-05
  %v4042 = vadd.f32 %v4026, 1e-05
  %v4043 = vadd.f32 %v4027, 1e-05
  %v4044 = vrsqrt.pop %v4028
  %v4045 = vrsqrt.pop %v4029
  %v4046 = vrsqrt.pop %v4030
  %v4047 = vrsqrt.pop %v4031
  %v4048 = vrsqrt.pop %v4032
  %v4049 = vrsqrt.pop %v4033
  %v4050 = vrsqrt.pop %v4034
  %v4051 = vrsqrt.pop %v4035
  %v4052 = vrsqrt.pop %v4036
  %v4053 = vrsqrt.pop %v4037
  %v4054 = vrsqrt.pop %v4038
  %v4055 = vrsqrt.pop %v4039
  %v4056 = vrsqrt.pop %v4040
  %v4057 = vrsqrt.pop %v4041
  %v4058 = vrsqrt.pop %v4042
  %v4059 = vrsqrt.pop %v4043
  %v4060 = vmul.f32 %v3932, %v4044
  %v4061 = vmul.f32 %v3933, %v4045
  %v4062 = vmul.f32 %v3934, %v4046
  %v4063 = vmul.f32 %v3935, %v4047
  %v4064 = vmul.f32 %v3936, %v4048
  %v4065 = vmul.f32 %v3937, %v4049
  %v4066 = vmul.f32 %v3938, %v4050
  %v4067 = vmul.f32 %v3939, %v4051
  %v4068 = vmul.f32 %v3940, %v4052
  %v4069 = vmul.f32 %v3941, %v4053
  %v4070 = vmul.f32 %v3942, %v4054
  %v4071 = vmul.f32 %v3943, %v4055
  %v4072 = vmul.f32 %v3944, %v4056
  %v4073 = vmul.f32 %v3945, %v4057
  %v4074 = vmul.f32 %v3946, %v4058
  %v4075 = vmul.f32 %v3947, %v4059
  %v4076 = vlaneseq
  %v4077 = vshrl.u32 %v4076, 7
  %v4078 = vsub.s32 0, %v4077
  %v4079 = vrot.slane %v3866, %v4078
  %v4080 = vmul.f32 %v4060, %v4079
  %v4081 = vmul.f32 %v4061, %v4079
  %v4082 = vmul.f32 %v4062, %v4079
  %v4083 = vmul.f32 %v4063, %v4079
  %v4084 = vmul.f32 %v4064, %v4079
  %v4085 = vmul.f32 %v4065, %v4079
  %v4086 = vmul.f32 %v4066, %v4079
  %v4087 = vmul.f32 %v4067, %v4079
  %v4088 = vmul.f32 %v4068, %v4079
  %v4089 = vmul.f32 %v4069, %v4079
  %v4090 = vmul.f32 %v4070, %v4079
  %v4091 = vmul.f32 %v4071, %v4079
  %v4092 = vmul.f32 %v4072, %v4079
  %v4093 = vmul.f32 %v4073, %v4079
  %v4094 = vmul.f32 %v4074, %v4079
  %v4095 = vmul.f32 %v4075, %v4079
  %v4096 = vlaneseq
  %v4097 = vshrl.u32 %v4096, 7
  %v4098 = vsub.s32 0, %v4097
  %v4099 = vrot.slane %v3867, %v4098
  %v4100 = vadd.f32 %v4080, %v4099
  %v4101 = vadd.f32 %v4081, %v4099
  %v4102 = vadd.f32 %v4082, %v4099
  %v4103 = vadd.f32 %v4083, %v4099
  %v4104 = vadd.f32 %v4084, %v4099
  %v4105 = vadd.f32 %v4085, %v4099
  %v4106 = vadd.f32 %v4086, %v4099
  %v4107 = vadd.f32 %v4087, %v4099
  %v4108 = vadd.f32 %v4088, %v4099
  %v4109 = vadd.f32 %v4089, %v4099
  %v4110 = vadd.f32 %v4090, %v4099
  %v4111 = vadd.f32 %v4091, %v4099
  %v4112 = vadd.f32 %v4092, %v4099
  %v4113 = vadd.f32 %v4093, %v4099
  %v4114 = vadd.f32 %v4094, %v4099
  %v4115 = vadd.f32 %v4095, %v4099
  %v4116 = vpack.c.bf16 %v4101, %v4100
  %v4117 = vpack.c.bf16 %v4103, %v4102
  %v4118 = vpack.c.bf16 %v4105, %v4104
  %v4119 = vpack.c.bf16 %v4107, %v4106
  %v4120 = vpack.c.bf16 %v4109, %v4108
  %v4121 = vpack.c.bf16 %v4111, %v4110
  %v4122 = vpack.c.bf16 %v4113, %v4112
  %v4123 = vpack.c.bf16 %v4115, %v4114
  %v4124 = vld [vmem:[%s10] sm:$0xff]
  %v4125 = vld [vmem:[%s10 + $0x8] sm:$0xff]
  %v4126 = vld [vmem:[%s10 + $0x10] sm:$0xff]
  %v4127 = vld [vmem:[%s10 + $0x18] sm:$0xff]
  %v4128 = vld [vmem:[%s10 + $0x20] sm:$0xff]
  %v4129 = vld [vmem:[%s10 + $0x28] sm:$0xff]
  %v4130 = vld [vmem:[%s10 + $0x30] sm:$0xff]
  %v4131 = vld [vmem:[%s10 + $0x38] sm:$0xff]
  %v4132 = vld [vmem:[%s11] sm:$0xf]
  %v4134 = vlaneseq
  %v4135 = vshrl.u32 %v4134, 7
  %v4136 = vsub.s32 0, %v4135
  %v4137 = vrot.slane %v4132, %v4136
  %v4138 = vlaneseq
  %v4139 = vshrl.u32 %v4138, 7
  %v4140 = vsub.s32 1, %v4139
  %v4141 = vrot.slane %v4132, %v4140
  %v4142 = vlaneseq
  %v4143 = vshrl.u32 %v4142, 7
  %v4144 = vsub.s32 2, %v4143
  %v4145 = vrot.slane %v4132, %v4144
  %v4146 = vlaneseq
  %v4147 = vshrl.u32 %v4146, 7
  %v4148 = vsub.s32 3, %v4147
  %v4149 = vrot.slane %v4132, %v4148
  %v4162 = vunpack.c.l.b16 %v4124
  %v4163 = vunpack.c.h.b16 %v4124
  %v4164 = vunpack.c.l.b16 %v4125
  %v4165 = vunpack.c.h.b16 %v4125
  %v4166 = vunpack.c.l.b16 %v4126
  %v4167 = vunpack.c.h.b16 %v4126
  %v4168 = vunpack.c.l.b16 %v4127
  %v4169 = vunpack.c.h.b16 %v4127
  %v4170 = vunpack.c.l.b16 %v4128
  %v4171 = vunpack.c.h.b16 %v4128
  %v4172 = vunpack.c.l.b16 %v4129
  %v4173 = vunpack.c.h.b16 %v4129
  %v4174 = vunpack.c.l.b16 %v4130
  %v4175 = vunpack.c.h.b16 %v4130
  %v4176 = vunpack.c.l.b16 %v4131
  %v4177 = vunpack.c.h.b16 %v4131
  %v4178 = vpack.c.b16 %v4166, %v4162
  %v4179 = vpack.c.b16 %v4167, %v4163
  %v4180 = vpack.c.b16 %v4168, %v4164
  %v4181 = vpack.c.b16 %v4169, %v4165
  %v4182 = vpack.c.b16 %v4174, %v4170
  %v4183 = vpack.c.b16 %v4175, %v4171
  %v4184 = vpack.c.b16 %v4176, %v4172
  %v4185 = vpack.c.b16 %v4177, %v4173
  %v4195 = vsel %vm143, %v4116, 0
  %v4198 = vsel %vm143, %v4117, 0
  %v4201 = vsel %vm143, %v4118, 0
  %v4204 = vsel %vm143, %v4119, 0
  %v4207 = vsel %vm143, %v4120, 0
  %v4210 = vsel %vm143, %v4121, 0
  %v4213 = vsel %vm143, %v4122, 0
  %v4216 = vsel %vm143, %v4123, 0
  %4218 = vmatprep.subr.bf16.mxu0 %v4179
  %4219 = vmatpush1.bf16.msra.mxu0 %v4178
  %4220 = vmatprep.subr.bf16.mxu0 %v4183
  %4221 = vmatpush1.bf16.msra.mxu0 %v4182
  %4222 = vmatprep.subr.bf16.mxu0 0
  %4223 = vmatpush1.bf16.msra.mxu0 0
  %4224 = vmatprep.subr.bf16.mxu0 0
  %4225 = vmatpush1.bf16.msra.mxu0 0
  %4226 = vmatprep.subr.bf16.mxu0 0
  %4227 = vmatpush1.bf16.msra.mxu0 0
  %4228 = vmatprep.subr.bf16.mxu0 0
  %4229 = vmatpush1.bf16.msra.mxu0 0
  %4230 = vmatprep.subr.bf16.mxu0 0
  %4231 = vmatpush1.bf16.msra.mxu0 0
  %4232 = vmatprep.subr.bf16.mxu0 0
  %4233 = vmatpush1.bf16.msra.mxu0 0
  %4234 = vmatprep.subr.bf16.mxu0 0
  %4235 = vmatpush1.bf16.msra.mxu0 0
  %4236 = vmatprep.subr.bf16.mxu0 0
  %4237 = vmatpush1.bf16.msra.mxu0 0
  %4238 = vmatprep.subr.bf16.mxu0 0
  %4239 = vmatpush1.bf16.msra.mxu0 0
  %4240 = vmatprep.subr.bf16.mxu0 0
  %4241 = vmatpush1.bf16.msra.mxu0 0
  %4242 = vmatprep.subr.bf16.mxu0 0
  %4243 = vmatpush1.bf16.msra.mxu0 0
  %4244 = vmatprep.subr.bf16.mxu0 0
  %4245 = vmatpush1.bf16.msra.mxu0 0
  %4246 = vmatprep.subr.bf16.mxu0 0
  %4247 = vmatpush1.bf16.msra.mxu0 0
  %4248 = vmatprep.subr.bf16.mxu0 0
  %4249 = vmatpush1.bf16.msra.mxu0 0
  %4250 = vmatprep.mubr.bf16.mxu0 0
  %4251 = vmatmul.mubr.bf16.gmra.mrb[0].mxu0 %v4195
  %v4252 = vpop.f32.mrb[0].mxu0
  %v4253 = vadd.f32 %v4137, %v4252
  %v4254 = vpop.f32.mrb[0].mxu0
  %v4255 = vadd.f32 %v4141, %v4254
  %v4256 = vpop.f32.mrb[0].mxu0
  %v4257 = vadd.f32 %v4137, %v4256
  %v4258 = vpop.f32.mrb[0].mxu0
  %v4259 = vadd.f32 %v4141, %v4258
  %4260 = vmatprep.mubr.bf16.mxu0 0
  %4261 = vmatmul.mubr.bf16.gmra.mrb[0].mxu0 %v4198
  %v4262 = vpop.f32.mrb[0].mxu0
  %v4263 = vadd.f32 %v4137, %v4262
  %v4264 = vpop.f32.mrb[0].mxu0
  %v4265 = vadd.f32 %v4141, %v4264
  %v4266 = vpop.f32.mrb[0].mxu0
  %v4267 = vadd.f32 %v4137, %v4266
  %v4268 = vpop.f32.mrb[0].mxu0
  %v4269 = vadd.f32 %v4141, %v4268
  %4270 = vmatprep.mubr.bf16.mxu0 0
  %4271 = vmatmul.mubr.bf16.gmra.mrb[0].mxu0 %v4201
  %v4272 = vpop.f32.mrb[0].mxu0
  %v4273 = vadd.f32 %v4137, %v4272
  %v4274 = vpop.f32.mrb[0].mxu0
  %v4275 = vadd.f32 %v4141, %v4274
  %v4276 = vpop.f32.mrb[0].mxu0
  %v4277 = vadd.f32 %v4137, %v4276
  %v4278 = vpop.f32.mrb[0].mxu0
  %v4279 = vadd.f32 %v4141, %v4278
  %4280 = vmatprep.mubr.bf16.mxu0 0
  %4281 = vmatmul.mubr.bf16.gmra.mrb[0].mxu0 %v4204
  %v4282 = vpop.f32.mrb[0].mxu0
  %v4283 = vadd.f32 %v4137, %v4282
  %v4284 = vpop.f32.mrb[0].mxu0
  %v4285 = vadd.f32 %v4141, %v4284
  %v4286 = vpop.f32.mrb[0].mxu0
  %v4287 = vadd.f32 %v4137, %v4286
  %v4288 = vpop.f32.mrb[0].mxu0
  %v4289 = vadd.f32 %v4141, %v4288
  %4290 = vmatprep.mubr.bf16.mxu0 0
  %4291 = vmatmul.mubr.bf16.gmra.mrb[0].mxu0 %v4207
  %v4292 = vpop.f32.mrb[0].mxu0
  %v4293 = vadd.f32 %v4137, %v4292
  %v4294 = vpop.f32.mrb[0].mxu0
  %v4295 = vadd.f32 %v4141, %v4294
  %v4296 = vpop.f32.mrb[0].mxu0
  %v4297 = vadd.f32 %v4137, %v4296
  %v4298 = vpop.f32.mrb[0].mxu0
  %v4299 = vadd.f32 %v4141, %v4298
  %4300 = vmatprep.mubr.bf16.mxu0 0
  %4301 = vmatmul.mubr.bf16.gmra.mrb[0].mxu0 %v4210
  %v4302 = vpop.f32.mrb[0].mxu0
  %v4303 = vadd.f32 %v4137, %v4302
  %v4304 = vpop.f32.mrb[0].mxu0
  %v4305 = vadd.f32 %v4141, %v4304
  %v4306 = vpop.f32.mrb[0].mxu0
  %v4307 = vadd.f32 %v4137, %v4306
  %v4308 = vpop.f32.mrb[0].mxu0
  %v4309 = vadd.f32 %v4141, %v4308
  %4310 = vmatprep.mubr.bf16.mxu0 0
  %4311 = vmatmul.mubr.bf16.gmra.mrb[0].mxu0 %v4213
  %v4312 = vpop.f32.mrb[0].mxu0
  %v4313 = vadd.f32 %v4137, %v4312
  %v4314 = vpop.f32.mrb[0].mxu0
  %v4315 = vadd.f32 %v4141, %v4314
  %v4316 = vpop.f32.mrb[0].mxu0
  %v4317 = vadd.f32 %v4137, %v4316
  %v4318 = vpop.f32.mrb[0].mxu0
  %v4319 = vadd.f32 %v4141, %v4318
  %4320 = vmatprep.mubr.bf16.mxu0 0
  %4321 = vmatmul.mubr.bf16.gmra.mrb[0].mxu0 %v4216
  %v4322 = vpop.f32.mrb[0].mxu0
  %v4323 = vadd.f32 %v4137, %v4322
  %v4324 = vpop.f32.mrb[0].mxu0
  %v4325 = vadd.f32 %v4141, %v4324
  %v4326 = vpop.f32.mrb[0].mxu0
  %v4327 = vadd.f32 %v4137, %v4326
  %v4328 = vpop.f32.mrb[0].mxu0
  %v4329 = vadd.f32 %v4141, %v4328
  %4330 = vdwg.mxu0
  %4331 = vmatprep.subr.bf16.mxu0 %v4181
  %4332 = vmatpush1.bf16.msra.mxu0 %v4180
  %4333 = vmatprep.subr.bf16.mxu0 %v4185
  %4334 = vmatpush1.bf16.msra.mxu0 %v4184
  %4335 = vmatprep.subr.bf16.mxu0 0
  %4336 = vmatpush1.bf16.msra.mxu0 0
  %4337 = vmatprep.subr.bf16.mxu0 0
  %4338 = vmatpush1.bf16.msra.mxu0 0
  %4339 = vmatprep.subr.bf16.mxu0 0
  %4340 = vmatpush1.bf16.msra.mxu0 0
  %4341 = vmatprep.subr.bf16.mxu0 0
  %4342 = vmatpush1.bf16.msra.mxu0 0
  %4343 = vmatprep.subr.bf16.mxu0 0
  %4344 = vmatpush1.bf16.msra.mxu0 0
  %4345 = vmatprep.subr.bf16.mxu0 0
  %4346 = vmatpush1.bf16.msra.mxu0 0
  %4347 = vmatprep.subr.bf16.mxu0 0
  %4348 = vmatpush1.bf16.msra.mxu0 0
  %4349 = vmatprep.subr.bf16.mxu0 0
  %4350 = vmatpush1.bf16.msra.mxu0 0
  %4351 = vmatprep.subr.bf16.mxu0 0
  %4352 = vmatpush1.bf16.msra.mxu0 0
  %4353 = vmatprep.subr.bf16.mxu0 0
  %4354 = vmatpush1.bf16.msra.mxu0 0
  %4355 = vmatprep.subr.bf16.mxu0 0
  %4356 = vmatpush1.bf16.msra.mxu0 0
  %4357 = vmatprep.subr.bf16.mxu0 0
  %4358 = vmatpush1.bf16.msra.mxu0 0
  %4359 = vmatprep.subr.bf16.mxu0 0
  %4360 = vmatpush1.bf16.msra.mxu0 0
  %4361 = vmatprep.subr.bf16.mxu0 0
  %4362 = vmatpush1.bf16.msra.mxu0 0
  %4363 = vmatprep.mubr.bf16.mxu0 0
  %4364 = vmatmul.mubr.bf16.gmra.mrb[0].mxu0 %v4195
  %v4365 = vpop.f32.mrb[0].mxu0
  %v4366 = vadd.f32 %v4145, %v4365
  %v4367 = vpop.f32.mrb[0].mxu0
  %v4368 = vadd.f32 %v4149, %v4367
  %v4369 = vpop.f32.mrb[0].mxu0
  %v4370 = vadd.f32 %v4145, %v4369
  %v4371 = vpop.f32.mrb[0].mxu0
  %v4372 = vadd.f32 %v4149, %v4371
  %4373 = vmatprep.mubr.bf16.mxu0 0
  %4374 = vmatmul.mubr.bf16.gmra.mrb[0].mxu0 %v4198
  %v4375 = vpop.f32.mrb[0].mxu0
  %v4376 = vadd.f32 %v4145, %v4375
  %v4377 = vpop.f32.mrb[0].mxu0
  %v4378 = vadd.f32 %v4149, %v4377
  %v4379 = vpop.f32.mrb[0].mxu0
  %v4380 = vadd.f32 %v4145, %v4379
  %v4381 = vpop.f32.mrb[0].mxu0
  %v4382 = vadd.f32 %v4149, %v4381
  %4383 = vmatprep.mubr.bf16.mxu0 0
  %4384 = vmatmul.mubr.bf16.gmra.mrb[0].mxu0 %v4201
  %v4385 = vpop.f32.mrb[0].mxu0
  %v4386 = vadd.f32 %v4145, %v4385
  %v4387 = vpop.f32.mrb[0].mxu0
  %v4388 = vadd.f32 %v4149, %v4387
  %v4389 = vpop.f32.mrb[0].mxu0
  %v4390 = vadd.f32 %v4145, %v4389
  %v4391 = vpop.f32.mrb[0].mxu0
  %v4392 = vadd.f32 %v4149, %v4391
  %4393 = vmatprep.mubr.bf16.mxu0 0
  %4394 = vmatmul.mubr.bf16.gmra.mrb[0].mxu0 %v4204
  %v4395 = vpop.f32.mrb[0].mxu0
  %v4396 = vadd.f32 %v4145, %v4395
  %v4397 = vpop.f32.mrb[0].mxu0
  %v4398 = vadd.f32 %v4149, %v4397
  %v4399 = vpop.f32.mrb[0].mxu0
  %v4400 = vadd.f32 %v4145, %v4399
  %v4401 = vpop.f32.mrb[0].mxu0
  %v4402 = vadd.f32 %v4149, %v4401
  %4403 = vmatprep.mubr.bf16.mxu0 0
  %4404 = vmatmul.mubr.bf16.gmra.mrb[0].mxu0 %v4207
  %v4405 = vpop.f32.mrb[0].mxu0
  %v4406 = vadd.f32 %v4145, %v4405
  %v4407 = vpop.f32.mrb[0].mxu0
  %v4408 = vadd.f32 %v4149, %v4407
  %v4409 = vpop.f32.mrb[0].mxu0
  %v4410 = vadd.f32 %v4145, %v4409
  %v4411 = vpop.f32.mrb[0].mxu0
  %v4412 = vadd.f32 %v4149, %v4411
  %4413 = vmatprep.mubr.bf16.mxu0 0
  %4414 = vmatmul.mubr.bf16.gmra.mrb[0].mxu0 %v4210
  %v4415 = vpop.f32.mrb[0].mxu0
  %v4416 = vadd.f32 %v4145, %v4415
  %v4417 = vpop.f32.mrb[0].mxu0
  %v4418 = vadd.f32 %v4149, %v4417
  %v4419 = vpop.f32.mrb[0].mxu0
  %v4420 = vadd.f32 %v4145, %v4419
  %v4421 = vpop.f32.mrb[0].mxu0
  %v4422 = vadd.f32 %v4149, %v4421
  %4423 = vmatprep.mubr.bf16.mxu0 0
  %4424 = vmatmul.mubr.bf16.gmra.mrb[0].mxu0 %v4213
  %v4425 = vpop.f32.mrb[0].mxu0
  %v4426 = vadd.f32 %v4145, %v4425
  %v4427 = vpop.f32.mrb[0].mxu0
  %v4428 = vadd.f32 %v4149, %v4427
  %v4429 = vpop.f32.mrb[0].mxu0
  %v4430 = vadd.f32 %v4145, %v4429
  %v4431 = vpop.f32.mrb[0].mxu0
  %v4432 = vadd.f32 %v4149, %v4431
  %4433 = vmatprep.mubr.bf16.mxu0 0
  %4434 = vmatmul.mubr.bf16.gmra.mrb[0].mxu0 %v4216
  %v4435 = vpop.f32.mrb[0].mxu0
  %v4436 = vadd.f32 %v4145, %v4435
  %v4437 = vpop.f32.mrb[0].mxu0
  %v4438 = vadd.f32 %v4149, %v4437
  %v4439 = vpop.f32.mrb[0].mxu0
  %v4440 = vadd.f32 %v4145, %v4439
  %v4441 = vpop.f32.mrb[0].mxu0
  %v4442 = vadd.f32 %v4149, %v4441
  %4443 = vdwg.mxu0
  %v4444 = vmax.f32 %v4253, 0.0
  %v4445 = vmax.f32 %v4255, 0.0
  %v4446 = vmax.f32 %v4366, 0.0
  %v4447 = vmax.f32 %v4368, 0.0
  %v4448 = vmax.f32 %v4257, 0.0
  %v4449 = vmax.f32 %v4259, 0.0
  %v4450 = vmax.f32 %v4370, 0.0
  %v4451 = vmax.f32 %v4372, 0.0
  %v4452 = vmax.f32 %v4263, 0.0
  %v4453 = vmax.f32 %v4265, 0.0
  %v4454 = vmax.f32 %v4376, 0.0
  %v4455 = vmax.f32 %v4378, 0.0
  %v4456 = vmax.f32 %v4267, 0.0
  %v4457 = vmax.f32 %v4269, 0.0
  %v4458 = vmax.f32 %v4380, 0.0
  %v4459 = vmax.f32 %v4382, 0.0
  %v4460 = vmax.f32 %v4273, 0.0
  %v4461 = vmax.f32 %v4275, 0.0
  %v4462 = vmax.f32 %v4386, 0.0
  %v4463 = vmax.f32 %v4388, 0.0
  %v4464 = vmax.f32 %v4277, 0.0
  %v4465 = vmax.f32 %v4279, 0.0
  %v4466 = vmax.f32 %v4390, 0.0
  %v4467 = vmax.f32 %v4392, 0.0
  %v4468 = vmax.f32 %v4283, 0.0
  %v4469 = vmax.f32 %v4285, 0.0
  %v4470 = vmax.f32 %v4396, 0.0
  %v4471 = vmax.f32 %v4398, 0.0
  %v4472 = vmax.f32 %v4287, 0.0
  %v4473 = vmax.f32 %v4289, 0.0
  %v4474 = vmax.f32 %v4400, 0.0
  %v4475 = vmax.f32 %v4402, 0.0
  %v4476 = vmax.f32 %v4293, 0.0
  %v4477 = vmax.f32 %v4295, 0.0
  %v4478 = vmax.f32 %v4406, 0.0
  %v4479 = vmax.f32 %v4408, 0.0
  %v4480 = vmax.f32 %v4297, 0.0
  %v4481 = vmax.f32 %v4299, 0.0
  %v4482 = vmax.f32 %v4410, 0.0
  %v4483 = vmax.f32 %v4412, 0.0
  %v4484 = vmax.f32 %v4303, 0.0
  %v4485 = vmax.f32 %v4305, 0.0
  %v4486 = vmax.f32 %v4416, 0.0
  %v4487 = vmax.f32 %v4418, 0.0
  %v4488 = vmax.f32 %v4307, 0.0
  %v4489 = vmax.f32 %v4309, 0.0
  %v4490 = vmax.f32 %v4420, 0.0
  %v4491 = vmax.f32 %v4422, 0.0
  %v4492 = vmax.f32 %v4313, 0.0
  %v4493 = vmax.f32 %v4315, 0.0
  %v4494 = vmax.f32 %v4426, 0.0
  %v4495 = vmax.f32 %v4428, 0.0
  %v4496 = vmax.f32 %v4317, 0.0
  %v4497 = vmax.f32 %v4319, 0.0
  %v4498 = vmax.f32 %v4430, 0.0
  %v4499 = vmax.f32 %v4432, 0.0
  %v4500 = vmax.f32 %v4323, 0.0
  %v4501 = vmax.f32 %v4325, 0.0
  %v4502 = vmax.f32 %v4436, 0.0
  %v4503 = vmax.f32 %v4438, 0.0
  %v4504 = vmax.f32 %v4327, 0.0
  %v4505 = vmax.f32 %v4329, 0.0
  %v4506 = vmax.f32 %v4440, 0.0
  %v4507 = vmax.f32 %v4442, 0.0
  %v4508 = vpack.c.bf16 %v4448, %v4444
  %v4509 = vpack.c.bf16 %v4449, %v4445
  %v4510 = vpack.c.bf16 %v4450, %v4446
  %v4511 = vpack.c.bf16 %v4451, %v4447
  %v4512 = vpack.c.bf16 %v4456, %v4452
  %v4513 = vpack.c.bf16 %v4457, %v4453
  %v4514 = vpack.c.bf16 %v4458, %v4454
  %v4515 = vpack.c.bf16 %v4459, %v4455
  %v4516 = vpack.c.bf16 %v4464, %v4460
  %v4517 = vpack.c.bf16 %v4465, %v4461
  %v4518 = vpack.c.bf16 %v4466, %v4462
  %v4519 = vpack.c.bf16 %v4467, %v4463
  %v4520 = vpack.c.bf16 %v4472, %v4468
  %v4521 = vpack.c.bf16 %v4473, %v4469
  %v4522 = vpack.c.bf16 %v4474, %v4470
  %v4523 = vpack.c.bf16 %v4475, %v4471
  %v4524 = vpack.c.bf16 %v4480, %v4476
  %v4525 = vpack.c.bf16 %v4481, %v4477
  %v4526 = vpack.c.bf16 %v4482, %v4478
  %v4527 = vpack.c.bf16 %v4483, %v4479
  %v4528 = vpack.c.bf16 %v4488, %v4484
  %v4529 = vpack.c.bf16 %v4489, %v4485
  %v4530 = vpack.c.bf16 %v4490, %v4486
  %v4531 = vpack.c.bf16 %v4491, %v4487
  %v4532 = vpack.c.bf16 %v4496, %v4492
  %v4533 = vpack.c.bf16 %v4497, %v4493
  %v4534 = vpack.c.bf16 %v4498, %v4494
  %v4535 = vpack.c.bf16 %v4499, %v4495
  %v4536 = vpack.c.bf16 %v4504, %v4500
  %v4537 = vpack.c.bf16 %v4505, %v4501
  %v4538 = vpack.c.bf16 %v4506, %v4502
  %v4539 = vpack.c.bf16 %v4507, %v4503
  %v4540 = vld [vmem:[%s12] sm:$0xf]
  %v4541 = vld [vmem:[%s12 + $0x4] sm:$0xf]
  %v4542 = vld [vmem:[%s12 + $0x8] sm:$0xf]
  %v4543 = vld [vmem:[%s12 + $0xc] sm:$0xf]
  %v4544 = vld [vmem:[%s12 + $0x10] sm:$0xf]
  %v4545 = vld [vmem:[%s12 + $0x14] sm:$0xf]
  %v4546 = vld [vmem:[%s12 + $0x18] sm:$0xf]
  %v4547 = vld [vmem:[%s12 + $0x1c] sm:$0xf]
  %v4548 = vld [vmem:[%s12 + $0x20] sm:$0xf]
  %v4549 = vld [vmem:[%s12 + $0x24] sm:$0xf]
  %v4550 = vld [vmem:[%s12 + $0x28] sm:$0xf]
  %v4551 = vld [vmem:[%s12 + $0x2c] sm:$0xf]
  %v4552 = vld [vmem:[%s12 + $0x30] sm:$0xf]
  %v4553 = vld [vmem:[%s12 + $0x34] sm:$0xf]
  %v4554 = vld [vmem:[%s12 + $0x38] sm:$0xf]
  %v4555 = vld [vmem:[%s12 + $0x3c] sm:$0xf]
  %v4556 = vld [vmem:[%s12 + $0x40] sm:$0xf]
  %v4557 = vld [vmem:[%s12 + $0x44] sm:$0xf]
  %v4558 = vld [vmem:[%s12 + $0x48] sm:$0xf]
  %v4559 = vld [vmem:[%s12 + $0x4c] sm:$0xf]
  %v4560 = vld [vmem:[%s12 + $0x50] sm:$0xf]
  %v4561 = vld [vmem:[%s12 + $0x54] sm:$0xf]
  %v4562 = vld [vmem:[%s12 + $0x58] sm:$0xf]
  %v4563 = vld [vmem:[%s12 + $0x5c] sm:$0xf]
  %v4564 = vld [vmem:[%s12 + $0x60] sm:$0xf]
  %v4565 = vld [vmem:[%s12 + $0x64] sm:$0xf]
  %v4566 = vld [vmem:[%s12 + $0x68] sm:$0xf]
  %v4567 = vld [vmem:[%s12 + $0x6c] sm:$0xf]
  %v4568 = vld [vmem:[%s12 + $0x70] sm:$0xf]
  %v4569 = vld [vmem:[%s12 + $0x74] sm:$0xf]
  %v4570 = vld [vmem:[%s12 + $0x78] sm:$0xf]
  %v4571 = vld [vmem:[%s12 + $0x7c] sm:$0xf]
  %v4572 = vld [vmem:[%s12 + $0x80] sm:$0xf]
  %v4573 = vld [vmem:[%s12 + $0x84] sm:$0xf]
  %v4574 = vld [vmem:[%s12 + $0x88] sm:$0xf]
  %v4575 = vld [vmem:[%s12 + $0x8c] sm:$0xf]
  %v4576 = vld [vmem:[%s12 + $0x90] sm:$0xf]
  %v4577 = vld [vmem:[%s12 + $0x94] sm:$0xf]
  %v4578 = vld [vmem:[%s12 + $0x98] sm:$0xf]
  %v4579 = vld [vmem:[%s12 + $0x9c] sm:$0xf]
  %v4580 = vld [vmem:[%s12 + $0xa0] sm:$0xf]
  %v4581 = vld [vmem:[%s12 + $0xa4] sm:$0xf]
  %v4582 = vld [vmem:[%s12 + $0xa8] sm:$0xf]
  %v4583 = vld [vmem:[%s12 + $0xac] sm:$0xf]
  %v4584 = vld [vmem:[%s12 + $0xb0] sm:$0xf]
  %v4585 = vld [vmem:[%s12 + $0xb4] sm:$0xf]
  %v4586 = vld [vmem:[%s12 + $0xb8] sm:$0xf]
  %v4587 = vld [vmem:[%s12 + $0xbc] sm:$0xf]
  %v4588 = vld [vmem:[%s12 + $0xc0] sm:$0xf]
  %v4589 = vld [vmem:[%s12 + $0xc4] sm:$0xf]
  %v4590 = vld [vmem:[%s12 + $0xc8] sm:$0xf]
  %v4591 = vld [vmem:[%s12 + $0xcc] sm:$0xf]
  %v4592 = vld [vmem:[%s12 + $0xd0] sm:$0xf]
  %v4593 = vld [vmem:[%s12 + $0xd4] sm:$0xf]
  %v4594 = vld [vmem:[%s12 + $0xd8] sm:$0xf]
  %v4595 = vld [vmem:[%s12 + $0xdc] sm:$0xf]
  %v4596 = vld [vmem:[%s12 + $0xe0] sm:$0xf]
  %v4597 = vld [vmem:[%s12 + $0xe4] sm:$0xf]
  %v4598 = vld [vmem:[%s12 + $0xe8] sm:$0xf]
  %v4599 = vld [vmem:[%s12 + $0xec] sm:$0xf]
  %v4600 = vld [vmem:[%s12 + $0xf0] sm:$0xf]
  %v4601 = vld [vmem:[%s12 + $0xf4] sm:$0xf]
  %v4602 = vld [vmem:[%s12 + $0xf8] sm:$0xf]
  %v4603 = vld [vmem:[%s12 + $0xfc] sm:$0xf]
  %v4604 = vld [vmem:[%s4 + $0xe] sm:$0x1]
  %v4605 = vlaneseq
  %v4606 = vshrl.u32 %v4605, 7
  %v4607 = vsub.s32 0, %v4606
  %v4608 = vrot.slane %v4604, %v4607
  %v4673 = vunpack.c.l.b16 %v4540
  %v4674 = vunpack.c.l.b16 %v4541
  %v4675 = vunpack.c.l.b16 %v4542
  %v4676 = vunpack.c.l.b16 %v4543
  %v4677 = vunpack.c.l.b16 %v4544
  %v4678 = vunpack.c.l.b16 %v4545
  %v4679 = vunpack.c.l.b16 %v4546
  %v4680 = vunpack.c.l.b16 %v4547
  %v4681 = vunpack.c.l.b16 %v4548
  %v4682 = vunpack.c.l.b16 %v4549
  %v4683 = vunpack.c.l.b16 %v4550
  %v4684 = vunpack.c.l.b16 %v4551
  %v4685 = vunpack.c.l.b16 %v4552
  %v4686 = vunpack.c.l.b16 %v4553
  %v4687 = vunpack.c.l.b16 %v4554
  %v4688 = vunpack.c.l.b16 %v4555
  %v4689 = vunpack.c.l.b16 %v4556
  %v4690 = vunpack.c.l.b16 %v4557
  %v4691 = vunpack.c.l.b16 %v4558
  %v4692 = vunpack.c.l.b16 %v4559
  %v4693 = vunpack.c.l.b16 %v4560
  %v4694 = vunpack.c.l.b16 %v4561
  %v4695 = vunpack.c.l.b16 %v4562
  %v4696 = vunpack.c.l.b16 %v4563
  %v4697 = vunpack.c.l.b16 %v4564
  %v4698 = vunpack.c.l.b16 %v4565
  %v4699 = vunpack.c.l.b16 %v4566
  %v4700 = vunpack.c.l.b16 %v4567
  %v4701 = vunpack.c.l.b16 %v4568
  %v4702 = vunpack.c.l.b16 %v4569
  %v4703 = vunpack.c.l.b16 %v4570
  %v4704 = vunpack.c.l.b16 %v4571
  %v4705 = vunpack.c.l.b16 %v4572
  %v4706 = vunpack.c.l.b16 %v4573
  %v4707 = vunpack.c.l.b16 %v4574
  %v4708 = vunpack.c.l.b16 %v4575
  %v4709 = vunpack.c.l.b16 %v4576
  %v4710 = vunpack.c.l.b16 %v4577
  %v4711 = vunpack.c.l.b16 %v4578
  %v4712 = vunpack.c.l.b16 %v4579
  %v4713 = vunpack.c.l.b16 %v4580
  %v4714 = vunpack.c.l.b16 %v4581
  %v4715 = vunpack.c.l.b16 %v4582
  %v4716 = vunpack.c.l.b16 %v4583
  %v4717 = vunpack.c.l.b16 %v4584
  %v4718 = vunpack.c.l.b16 %v4585
  %v4719 = vunpack.c.l.b16 %v4586
  %v4720 = vunpack.c.l.b16 %v4587
  %v4721 = vunpack.c.l.b16 %v4588
  %v4722 = vunpack.c.l.b16 %v4589
  %v4723 = vunpack.c.l.b16 %v4590
  %v4724 = vunpack.c.l.b16 %v4591
  %v4725 = vunpack.c.l.b16 %v4592
  %v4726 = vunpack.c.l.b16 %v4593
  %v4727 = vunpack.c.l.b16 %v4594
  %v4728 = vunpack.c.l.b16 %v4595
  %v4729 = vunpack.c.l.b16 %v4596
  %v4730 = vunpack.c.l.b16 %v4597
  %v4731 = vunpack.c.l.b16 %v4598
  %v4732 = vunpack.c.l.b16 %v4599
  %v4733 = vunpack.c.l.b16 %v4600
  %v4734 = vunpack.c.l.b16 %v4601
  %v4735 = vunpack.c.l.b16 %v4602
  %v4736 = vunpack.c.l.b16 %v4603
  %v4737 = vpack.c.b16 %v4674, %v4673
  %v4738 = vpack.c.b16 %v4676, %v4675
  %v4739 = vpack.c.b16 %v4678, %v4677
  %v4740 = vpack.c.b16 %v4680, %v4679
  %v4741 = vpack.c.b16 %v4682, %v4681
  %v4742 = vpack.c.b16 %v4684, %v4683
  %v4743 = vpack.c.b16 %v4686, %v4685
  %v4744 = vpack.c.b16 %v4688, %v4687
  %v4745 = vpack.c.b16 %v4690, %v4689
  %v4746 = vpack.c.b16 %v4692, %v4691
  %v4747 = vpack.c.b16 %v4694, %v4693
  %v4748 = vpack.c.b16 %v4696, %v4695
  %v4749 = vpack.c.b16 %v4698, %v4697
  %v4750 = vpack.c.b16 %v4700, %v4699
  %v4751 = vpack.c.b16 %v4702, %v4701
  %v4752 = vpack.c.b16 %v4704, %v4703
  %v4753 = vpack.c.b16 %v4706, %v4705
  %v4754 = vpack.c.b16 %v4708, %v4707
  %v4755 = vpack.c.b16 %v4710, %v4709
  %v4756 = vpack.c.b16 %v4712, %v4711
  %v4757 = vpack.c.b16 %v4714, %v4713
  %v4758 = vpack.c.b16 %v4716, %v4715
  %v4759 = vpack.c.b16 %v4718, %v4717
  %v4760 = vpack.c.b16 %v4720, %v4719
  %v4761 = vpack.c.b16 %v4722, %v4721
  %v4762 = vpack.c.b16 %v4724, %v4723
  %v4763 = vpack.c.b16 %v4726, %v4725
  %v4764 = vpack.c.b16 %v4728, %v4727
  %v4765 = vpack.c.b16 %v4730, %v4729
  %v4766 = vpack.c.b16 %v4732, %v4731
  %v4767 = vpack.c.b16 %v4734, %v4733
  %v4768 = vpack.c.b16 %v4736, %v4735
  %4801 = vmatprep.subr.bf16.mxu0 0
  %4802 = vmatpush1.bf16.msra.mxu0 %v4737
  %4803 = vmatprep.subr.bf16.mxu0 0
  %4804 = vmatpush1.bf16.msra.mxu0 %v4738
  %4805 = vmatprep.subr.bf16.mxu0 0
  %4806 = vmatpush1.bf16.msra.mxu0 %v4739
  %4807 = vmatprep.subr.bf16.mxu0 0
  %4808 = vmatpush1.bf16.msra.mxu0 %v4740
  %4809 = vmatprep.subr.bf16.mxu0 0
  %4810 = vmatpush1.bf16.msra.mxu0 %v4741
  %4811 = vmatprep.subr.bf16.mxu0 0
  %4812 = vmatpush1.bf16.msra.mxu0 %v4742
  %4813 = vmatprep.subr.bf16.mxu0 0
  %4814 = vmatpush1.bf16.msra.mxu0 %v4743
  %4815 = vmatprep.subr.bf16.mxu0 0
  %4816 = vmatpush1.bf16.msra.mxu0 %v4744
  %4817 = vmatprep.subr.bf16.mxu0 0
  %4818 = vmatpush1.bf16.msra.mxu0 %v4745
  %4819 = vmatprep.subr.bf16.mxu0 0
  %4820 = vmatpush1.bf16.msra.mxu0 %v4746
  %4821 = vmatprep.subr.bf16.mxu0 0
  %4822 = vmatpush1.bf16.msra.mxu0 %v4747
  %4823 = vmatprep.subr.bf16.mxu0 0
  %4824 = vmatpush1.bf16.msra.mxu0 %v4748
  %4825 = vmatprep.subr.bf16.mxu0 0
  %4826 = vmatpush1.bf16.msra.mxu0 %v4749
  %4827 = vmatprep.subr.bf16.mxu0 0
  %4828 = vmatpush1.bf16.msra.mxu0 %v4750
  %4829 = vmatprep.subr.bf16.mxu0 0
  %4830 = vmatpush1.bf16.msra.mxu0 %v4751
  %4831 = vmatprep.subr.bf16.mxu0 0
  %4832 = vmatpush1.bf16.msra.mxu0 %v4752
  %4833 = vmatprep.mubr.bf16.mxu0 %v4509
  %4834 = vmatmul.mubr.bf16.gmra.mrb[0].mxu0 %v4508
  %v4835 = vpop.f32.mrb[0].mxu0
  %v4836 = vadd.f32 %v4608, %v4835
  %v4837 = vpop.f32.mrb[0].mxu0
  %v4838 = vpop.f32.mrb[0].mxu0
  %v4839 = vadd.f32 %v4608, %v4838
  %v4840 = vpop.f32.mrb[0].mxu0
  %4841 = vmatprep.mubr.bf16.mxu0 %v4513
  %4842 = vmatmul.mubr.bf16.gmra.mrb[0].mxu0 %v4512
  %v4843 = vpop.f32.mrb[0].mxu0
  %v4844 = vadd.f32 %v4608, %v4843
  %v4845 = vpop.f32.mrb[0].mxu0
  %v4846 = vpop.f32.mrb[0].mxu0
  %v4847 = vadd.f32 %v4608, %v4846
  %v4848 = vpop.f32.mrb[0].mxu0
  %4849 = vmatprep.mubr.bf16.mxu0 %v4517
  %4850 = vmatmul.mubr.bf16.gmra.mrb[0].mxu0 %v4516
  %v4851 = vpop.f32.mrb[0].mxu0
  %v4852 = vadd.f32 %v4608, %v4851
  %v4853 = vpop.f32.mrb[0].mxu0
  %v4854 = vpop.f32.mrb[0].mxu0
  %v4855 = vadd.f32 %v4608, %v4854
  %v4856 = vpop.f32.mrb[0].mxu0
  %4857 = vmatprep.mubr.bf16.mxu0 %v4521
  %4858 = vmatmul.mubr.bf16.gmra.mrb[0].mxu0 %v4520
  %v4859 = vpop.f32.mrb[0].mxu0
  %v4860 = vadd.f32 %v4608, %v4859
  %v4861 = vpop.f32.mrb[0].mxu0
  %v4862 = vpop.f32.mrb[0].mxu0
  %v4863 = vadd.f32 %v4608, %v4862
  %v4864 = vpop.f32.mrb[0].mxu0
  %4865 = vmatprep.mubr.bf16.mxu0 %v4525
  %4866 = vmatmul.mubr.bf16.gmra.mrb[0].mxu0 %v4524
  %v4867 = vpop.f32.mrb[0].mxu0
  %v4868 = vadd.f32 %v4608, %v4867
  %v4869 = vpop.f32.mrb[0].mxu0
  %v4870 = vpop.f32.mrb[0].mxu0
  %v4871 = vadd.f32 %v4608, %v4870
  %v4872 = vpop.f32.mrb[0].mxu0
  %4873 = vmatprep.mubr.bf16.mxu0 %v4529
  %4874 = vmatmul.mubr.bf16.gmra.mrb[0].mxu0 %v4528
  %v4875 = vpop.f32.mrb[0].mxu0
  %v4876 = vadd.f32 %v4608, %v4875
  %v4877 = vpop.f32.mrb[0].mxu0
  %v4878 = vpop.f32.mrb[0].mxu0
  %v4879 = vadd.f32 %v4608, %v4878
  %v4880 = vpop.f32.mrb[0].mxu0
  %4881 = vmatprep.mubr.bf16.mxu0 %v4533
  %4882 = vmatmul.mubr.bf16.gmra.mrb[0].mxu0 %v4532
  %v4883 = vpop.f32.mrb[0].mxu0
  %v4884 = vadd.f32 %v4608, %v4883
  %v4885 = vpop.f32.mrb[0].mxu0
  %v4886 = vpop.f32.mrb[0].mxu0
  %v4887 = vadd.f32 %v4608, %v4886
  %v4888 = vpop.f32.mrb[0].mxu0
  %4889 = vmatprep.mubr.bf16.mxu0 %v4537
  %4890 = vmatmul.mubr.bf16.gmra.mrb[0].mxu0 %v4536
  %v4891 = vpop.f32.mrb[0].mxu0
  %v4892 = vadd.f32 %v4608, %v4891
  %v4893 = vpop.f32.mrb[0].mxu0
  %v4894 = vpop.f32.mrb[0].mxu0
  %v4895 = vadd.f32 %v4608, %v4894
  %v4896 = vpop.f32.mrb[0].mxu0
  %4897 = vdwg.mxu0
  %4898 = vmatprep.subr.bf16.mxu0 0
  %4899 = vmatpush1.bf16.msra.mxu0 %v4753
  %4900 = vmatprep.subr.bf16.mxu0 0
  %4901 = vmatpush1.bf16.msra.mxu0 %v4754
  %4902 = vmatprep.subr.bf16.mxu0 0
  %4903 = vmatpush1.bf16.msra.mxu0 %v4755
  %4904 = vmatprep.subr.bf16.mxu0 0
  %4905 = vmatpush1.bf16.msra.mxu0 %v4756
  %4906 = vmatprep.subr.bf16.mxu0 0
  %4907 = vmatpush1.bf16.msra.mxu0 %v4757
  %4908 = vmatprep.subr.bf16.mxu0 0
  %4909 = vmatpush1.bf16.msra.mxu0 %v4758
  %4910 = vmatprep.subr.bf16.mxu0 0
  %4911 = vmatpush1.bf16.msra.mxu0 %v4759
  %4912 = vmatprep.subr.bf16.mxu0 0
  %4913 = vmatpush1.bf16.msra.mxu0 %v4760
  %4914 = vmatprep.subr.bf16.mxu0 0
  %4915 = vmatpush1.bf16.msra.mxu0 %v4761
  %4916 = vmatprep.subr.bf16.mxu0 0
  %4917 = vmatpush1.bf16.msra.mxu0 %v4762
  %4918 = vmatprep.subr.bf16.mxu0 0
  %4919 = vmatpush1.bf16.msra.mxu0 %v4763
  %4920 = vmatprep.subr.bf16.mxu0 0
  %4921 = vmatpush1.bf16.msra.mxu0 %v4764
  %4922 = vmatprep.subr.bf16.mxu0 0
  %4923 = vmatpush1.bf16.msra.mxu0 %v4765
  %4924 = vmatprep.subr.bf16.mxu0 0
  %4925 = vmatpush1.bf16.msra.mxu0 %v4766
  %4926 = vmatprep.subr.bf16.mxu0 0
  %4927 = vmatpush1.bf16.msra.mxu0 %v4767
  %4928 = vmatprep.subr.bf16.mxu0 0
  %4929 = vmatpush1.bf16.msra.mxu0 %v4768
  %4930 = vmatprep.mubr.bf16.mxu0 %v4511
  %4931 = vmatmul.mubr.bf16.gmra.mrb[0].mxu0 %v4510
  %v4932 = vpop.f32.mrb[0].mxu0
  %v4933 = vadd.f32 %v4836, %v4932
  %v4934 = vpop.f32.mrb[0].mxu0
  %v4935 = vpop.f32.mrb[0].mxu0
  %v4936 = vadd.f32 %v4839, %v4935
  %v4937 = vpop.f32.mrb[0].mxu0
  %4938 = vmatprep.mubr.bf16.mxu0 %v4515
  %4939 = vmatmul.mubr.bf16.gmra.mrb[0].mxu0 %v4514
  %v4940 = vpop.f32.mrb[0].mxu0
  %v4941 = vadd.f32 %v4844, %v4940
  %v4942 = vpop.f32.mrb[0].mxu0
  %v4943 = vpop.f32.mrb[0].mxu0
  %v4944 = vadd.f32 %v4847, %v4943
  %v4945 = vpop.f32.mrb[0].mxu0
  %4946 = vmatprep.mubr.bf16.mxu0 %v4519
  %4947 = vmatmul.mubr.bf16.gmra.mrb[0].mxu0 %v4518
  %v4948 = vpop.f32.mrb[0].mxu0
  %v4949 = vadd.f32 %v4852, %v4948
  %v4950 = vpop.f32.mrb[0].mxu0
  %v4951 = vpop.f32.mrb[0].mxu0
  %v4952 = vadd.f32 %v4855, %v4951
  %v4953 = vpop.f32.mrb[0].mxu0
  %4954 = vmatprep.mubr.bf16.mxu0 %v4523
  %4955 = vmatmul.mubr.bf16.gmra.mrb[0].mxu0 %v4522
  %v4956 = vpop.f32.mrb[0].mxu0
  %v4957 = vadd.f32 %v4860, %v4956
  %v4958 = vpop.f32.mrb[0].mxu0
  %v4959 = vpop.f32.mrb[0].mxu0
  %v4960 = vadd.f32 %v4863, %v4959
  %v4961 = vpop.f32.mrb[0].mxu0
  %4962 = vmatprep.mubr.bf16.mxu0 %v4527
  %4963 = vmatmul.mubr.bf16.gmra.mrb[0].mxu0 %v4526
  %v4964 = vpop.f32.mrb[0].mxu0
  %v4965 = vadd.f32 %v4868, %v4964
  %v4966 = vpop.f32.mrb[0].mxu0
  %v4967 = vpop.f32.mrb[0].mxu0
  %v4968 = vadd.f32 %v4871, %v4967
  %v4969 = vpop.f32.mrb[0].mxu0
  %4970 = vmatprep.mubr.bf16.mxu0 %v4531
  %4971 = vmatmul.mubr.bf16.gmra.mrb[0].mxu0 %v4530
  %v4972 = vpop.f32.mrb[0].mxu0
  %v4973 = vadd.f32 %v4876, %v4972
  %v4974 = vpop.f32.mrb[0].mxu0
  %v4975 = vpop.f32.mrb[0].mxu0
  %v4976 = vadd.f32 %v4879, %v4975
  %v4977 = vpop.f32.mrb[0].mxu0
  %4978 = vmatprep.mubr.bf16.mxu0 %v4535
  %4979 = vmatmul.mubr.bf16.gmra.mrb[0].mxu0 %v4534
  %v4980 = vpop.f32.mrb[0].mxu0
  %v4981 = vadd.f32 %v4884, %v4980
  %v4982 = vpop.f32.mrb[0].mxu0
  %v4983 = vpop.f32.mrb[0].mxu0
  %v4984 = vadd.f32 %v4887, %v4983
  %v4985 = vpop.f32.mrb[0].mxu0
  %4986 = vmatprep.mubr.bf16.mxu0 %v4539
  %4987 = vmatmul.mubr.bf16.gmra.mrb[0].mxu0 %v4538
  %v4988 = vpop.f32.mrb[0].mxu0
  %v4989 = vadd.f32 %v4892, %v4988
  %v4990 = vpop.f32.mrb[0].mxu0
  %v4991 = vpop.f32.mrb[0].mxu0
  %v4992 = vadd.f32 %v4895, %v4991
  %v4993 = vpop.f32.mrb[0].mxu0
  %4994 = vdwg.mxu0
  %v4995 = vadd.f32 %v4100, %v4933
  %v4996 = vadd.f32 %v4101, %v4936
  %v4997 = vadd.f32 %v4102, %v4941
  %v4998 = vadd.f32 %v4103, %v4944
  %v4999 = vadd.f32 %v4104, %v4949
  %v5000 = vadd.f32 %v4105, %v4952
  %v5001 = vadd.f32 %v4106, %v4957
  %v5002 = vadd.f32 %v4107, %v4960
  %v5003 = vadd.f32 %v4108, %v4965
  %v5004 = vadd.f32 %v4109, %v4968
  %v5005 = vadd.f32 %v4110, %v4973
  %v5006 = vadd.f32 %v4111, %v4976
  %v5007 = vadd.f32 %v4112, %v4981
  %v5008 = vadd.f32 %v4113, %v4984
  %v5009 = vadd.f32 %v4114, %v4989
  %v5010 = vadd.f32 %v4115, %v4992
  %v5011 = vld [vmem:[%s4 + $0xc] sm:$0x1]
  %v5012 = vld [vmem:[%s4 + $0xd] sm:$0x1]
  %v5013 = vsel %vm143, %v4995, 0.0
  %5014 = vadd.xlane.f32.xlu0 %v5013
  %v5015 = vpop.xlane.xlu0 %5014
  %v5016 = vsel %vm143, %v4996, 0.0
  %5017 = vadd.xlane.f32.xlu0 %v5016
  %v5018 = vpop.xlane.xlu0 %5017
  %v5019 = vsel %vm143, %v4997, 0.0
  %5020 = vadd.xlane.f32.xlu0 %v5019
  %v5021 = vpop.xlane.xlu0 %5020
  %v5022 = vsel %vm143, %v4998, 0.0
  %5023 = vadd.xlane.f32.xlu0 %v5022
  %v5024 = vpop.xlane.xlu0 %5023
  %v5025 = vsel %vm143, %v4999, 0.0
  %5026 = vadd.xlane.f32.xlu0 %v5025
  %v5027 = vpop.xlane.xlu0 %5026
  %v5028 = vsel %vm143, %v5000, 0.0
  %5029 = vadd.xlane.f32.xlu0 %v5028
  %v5030 = vpop.xlane.xlu0 %5029
  %v5031 = vsel %vm143, %v5001, 0.0
  %5032 = vadd.xlane.f32.xlu0 %v5031
  %v5033 = vpop.xlane.xlu0 %5032
  %v5034 = vsel %vm143, %v5002, 0.0
  %5035 = vadd.xlane.f32.xlu0 %v5034
  %v5036 = vpop.xlane.xlu0 %5035
  %v5037 = vsel %vm143, %v5003, 0.0
  %5038 = vadd.xlane.f32.xlu0 %v5037
  %v5039 = vpop.xlane.xlu0 %5038
  %v5040 = vsel %vm143, %v5004, 0.0
  %5041 = vadd.xlane.f32.xlu0 %v5040
  %v5042 = vpop.xlane.xlu0 %5041
  %v5043 = vsel %vm143, %v5005, 0.0
  %5044 = vadd.xlane.f32.xlu0 %v5043
  %v5045 = vpop.xlane.xlu0 %5044
  %v5046 = vsel %vm143, %v5006, 0.0
  %5047 = vadd.xlane.f32.xlu0 %v5046
  %v5048 = vpop.xlane.xlu0 %5047
  %v5049 = vsel %vm143, %v5007, 0.0
  %5050 = vadd.xlane.f32.xlu0 %v5049
  %v5051 = vpop.xlane.xlu0 %5050
  %v5052 = vsel %vm143, %v5008, 0.0
  %5053 = vadd.xlane.f32.xlu0 %v5052
  %v5054 = vpop.xlane.xlu0 %5053
  %v5055 = vsel %vm143, %v5009, 0.0
  %5056 = vadd.xlane.f32.xlu0 %v5055
  %v5057 = vpop.xlane.xlu0 %5056
  %v5058 = vsel %vm143, %v5010, 0.0
  %5059 = vadd.xlane.f32.xlu0 %v5058
  %v5060 = vpop.xlane.xlu0 %5059
  %v5061 = vmul.f32 %v5015, %v3486
  %v5062 = vmul.f32 %v5018, %v3486
  %v5063 = vmul.f32 %v5021, %v3486
  %v5064 = vmul.f32 %v5024, %v3486
  %v5065 = vmul.f32 %v5027, %v3486
  %v5066 = vmul.f32 %v5030, %v3486
  %v5067 = vmul.f32 %v5033, %v3486
  %v5068 = vmul.f32 %v5036, %v3486
  %v5069 = vmul.f32 %v5039, %v3486
  %v5070 = vmul.f32 %v5042, %v3486
  %v5071 = vmul.f32 %v5045, %v3486
  %v5072 = vmul.f32 %v5048, %v3486
  %v5073 = vmul.f32 %v5051, %v3486
  %v5074 = vmul.f32 %v5054, %v3486
  %v5075 = vmul.f32 %v5057, %v3486
  %v5076 = vmul.f32 %v5060, %v3486
  %v5077 = vsub.f32 %v4995, %v5061
  %v5078 = vsub.f32 %v4996, %v5062
  %v5079 = vsub.f32 %v4997, %v5063
  %v5080 = vsub.f32 %v4998, %v5064
  %v5081 = vsub.f32 %v4999, %v5065
  %v5082 = vsub.f32 %v5000, %v5066
  %v5083 = vsub.f32 %v5001, %v5067
  %v5084 = vsub.f32 %v5002, %v5068
  %v5085 = vsub.f32 %v5003, %v5069
  %v5086 = vsub.f32 %v5004, %v5070
  %v5087 = vsub.f32 %v5005, %v5071
  %v5088 = vsub.f32 %v5006, %v5072
  %v5089 = vsub.f32 %v5007, %v5073
  %v5090 = vsub.f32 %v5008, %v5074
  %v5091 = vsub.f32 %v5009, %v5075
  %v5092 = vsub.f32 %v5010, %v5076
  %v5093 = vmul.f32 %v5077, %v5077
  %v5094 = vmul.f32 %v5078, %v5078
  %v5095 = vmul.f32 %v5079, %v5079
  %v5096 = vmul.f32 %v5080, %v5080
  %v5097 = vmul.f32 %v5081, %v5081
  %v5098 = vmul.f32 %v5082, %v5082
  %v5099 = vmul.f32 %v5083, %v5083
  %v5100 = vmul.f32 %v5084, %v5084
  %v5101 = vmul.f32 %v5085, %v5085
  %v5102 = vmul.f32 %v5086, %v5086
  %v5103 = vmul.f32 %v5087, %v5087
  %v5104 = vmul.f32 %v5088, %v5088
  %v5105 = vmul.f32 %v5089, %v5089
  %v5106 = vmul.f32 %v5090, %v5090
  %v5107 = vmul.f32 %v5091, %v5091
  %v5108 = vmul.f32 %v5092, %v5092
  %v5109 = vsel %vm143, %v5093, 0.0
  %5110 = vadd.xlane.f32.xlu0 %v5109
  %v5111 = vpop.xlane.xlu0 %5110
  %v5112 = vsel %vm143, %v5094, 0.0
  %5113 = vadd.xlane.f32.xlu0 %v5112
  %v5114 = vpop.xlane.xlu0 %5113
  %v5115 = vsel %vm143, %v5095, 0.0
  %5116 = vadd.xlane.f32.xlu0 %v5115
  %v5117 = vpop.xlane.xlu0 %5116
  %v5118 = vsel %vm143, %v5096, 0.0
  %5119 = vadd.xlane.f32.xlu0 %v5118
  %v5120 = vpop.xlane.xlu0 %5119
  %v5121 = vsel %vm143, %v5097, 0.0
  %5122 = vadd.xlane.f32.xlu0 %v5121
  %v5123 = vpop.xlane.xlu0 %5122
  %v5124 = vsel %vm143, %v5098, 0.0
  %5125 = vadd.xlane.f32.xlu0 %v5124
  %v5126 = vpop.xlane.xlu0 %5125
  %v5127 = vsel %vm143, %v5099, 0.0
  %5128 = vadd.xlane.f32.xlu0 %v5127
  %v5129 = vpop.xlane.xlu0 %5128
  %v5130 = vsel %vm143, %v5100, 0.0
  %5131 = vadd.xlane.f32.xlu0 %v5130
  %v5132 = vpop.xlane.xlu0 %5131
  %v5133 = vsel %vm143, %v5101, 0.0
  %5134 = vadd.xlane.f32.xlu0 %v5133
  %v5135 = vpop.xlane.xlu0 %5134
  %v5136 = vsel %vm143, %v5102, 0.0
  %5137 = vadd.xlane.f32.xlu0 %v5136
  %v5138 = vpop.xlane.xlu0 %5137
  %v5139 = vsel %vm143, %v5103, 0.0
  %5140 = vadd.xlane.f32.xlu0 %v5139
  %v5141 = vpop.xlane.xlu0 %5140
  %v5142 = vsel %vm143, %v5104, 0.0
  %5143 = vadd.xlane.f32.xlu0 %v5142
  %v5144 = vpop.xlane.xlu0 %5143
  %v5145 = vsel %vm143, %v5105, 0.0
  %5146 = vadd.xlane.f32.xlu0 %v5145
  %v5147 = vpop.xlane.xlu0 %5146
  %v5148 = vsel %vm143, %v5106, 0.0
  %5149 = vadd.xlane.f32.xlu0 %v5148
  %v5150 = vpop.xlane.xlu0 %5149
  %v5151 = vsel %vm143, %v5107, 0.0
  %5152 = vadd.xlane.f32.xlu0 %v5151
  %v5153 = vpop.xlane.xlu0 %5152
  %v5154 = vsel %vm143, %v5108, 0.0
  %5155 = vadd.xlane.f32.xlu0 %v5154
  %v5156 = vpop.xlane.xlu0 %5155
  %v5157 = vmul.f32 %v5111, %v3486
  %v5158 = vmul.f32 %v5114, %v3486
  %v5159 = vmul.f32 %v5117, %v3486
  %v5160 = vmul.f32 %v5120, %v3486
  %v5161 = vmul.f32 %v5123, %v3486
  %v5162 = vmul.f32 %v5126, %v3486
  %v5163 = vmul.f32 %v5129, %v3486
  %v5164 = vmul.f32 %v5132, %v3486
  %v5165 = vmul.f32 %v5135, %v3486
  %v5166 = vmul.f32 %v5138, %v3486
  %v5167 = vmul.f32 %v5141, %v3486
  %v5168 = vmul.f32 %v5144, %v3486
  %v5169 = vmul.f32 %v5147, %v3486
  %v5170 = vmul.f32 %v5150, %v3486
  %v5171 = vmul.f32 %v5153, %v3486
  %v5172 = vmul.f32 %v5156, %v3486
  %v5173 = vadd.f32 %v5157, 1e-05
  %v5174 = vadd.f32 %v5158, 1e-05
  %v5175 = vadd.f32 %v5159, 1e-05
  %v5176 = vadd.f32 %v5160, 1e-05
  %v5177 = vadd.f32 %v5161, 1e-05
  %v5178 = vadd.f32 %v5162, 1e-05
  %v5179 = vadd.f32 %v5163, 1e-05
  %v5180 = vadd.f32 %v5164, 1e-05
  %v5181 = vadd.f32 %v5165, 1e-05
  %v5182 = vadd.f32 %v5166, 1e-05
  %v5183 = vadd.f32 %v5167, 1e-05
  %v5184 = vadd.f32 %v5168, 1e-05
  %v5185 = vadd.f32 %v5169, 1e-05
  %v5186 = vadd.f32 %v5170, 1e-05
  %v5187 = vadd.f32 %v5171, 1e-05
  %v5188 = vadd.f32 %v5172, 1e-05
  %v5189 = vrsqrt.pop %v5173
  %v5190 = vrsqrt.pop %v5174
  %v5191 = vrsqrt.pop %v5175
  %v5192 = vrsqrt.pop %v5176
  %v5193 = vrsqrt.pop %v5177
  %v5194 = vrsqrt.pop %v5178
  %v5195 = vrsqrt.pop %v5179
  %v5196 = vrsqrt.pop %v5180
  %v5197 = vrsqrt.pop %v5181
  %v5198 = vrsqrt.pop %v5182
  %v5199 = vrsqrt.pop %v5183
  %v5200 = vrsqrt.pop %v5184
  %v5201 = vrsqrt.pop %v5185
  %v5202 = vrsqrt.pop %v5186
  %v5203 = vrsqrt.pop %v5187
  %v5204 = vrsqrt.pop %v5188
  %v5205 = vmul.f32 %v5077, %v5189
  %v5206 = vmul.f32 %v5078, %v5190
  %v5207 = vmul.f32 %v5079, %v5191
  %v5208 = vmul.f32 %v5080, %v5192
  %v5209 = vmul.f32 %v5081, %v5193
  %v5210 = vmul.f32 %v5082, %v5194
  %v5211 = vmul.f32 %v5083, %v5195
  %v5212 = vmul.f32 %v5084, %v5196
  %v5213 = vmul.f32 %v5085, %v5197
  %v5214 = vmul.f32 %v5086, %v5198
  %v5215 = vmul.f32 %v5087, %v5199
  %v5216 = vmul.f32 %v5088, %v5200
  %v5217 = vmul.f32 %v5089, %v5201
  %v5218 = vmul.f32 %v5090, %v5202
  %v5219 = vmul.f32 %v5091, %v5203
  %v5220 = vmul.f32 %v5092, %v5204
  %v5221 = vlaneseq
  %v5222 = vshrl.u32 %v5221, 7
  %v5223 = vsub.s32 0, %v5222
  %v5224 = vrot.slane %v5011, %v5223
  %v5225 = vmul.f32 %v5205, %v5224
  %v5226 = vmul.f32 %v5206, %v5224
  %v5227 = vmul.f32 %v5207, %v5224
  %v5228 = vmul.f32 %v5208, %v5224
  %v5229 = vmul.f32 %v5209, %v5224
  %v5230 = vmul.f32 %v5210, %v5224
  %v5231 = vmul.f32 %v5211, %v5224
  %v5232 = vmul.f32 %v5212, %v5224
  %v5233 = vmul.f32 %v5213, %v5224
  %v5234 = vmul.f32 %v5214, %v5224
  %v5235 = vmul.f32 %v5215, %v5224
  %v5236 = vmul.f32 %v5216, %v5224
  %v5237 = vmul.f32 %v5217, %v5224
  %v5238 = vmul.f32 %v5218, %v5224
  %v5239 = vmul.f32 %v5219, %v5224
  %v5240 = vmul.f32 %v5220, %v5224
  %v5241 = vlaneseq
  %v5242 = vshrl.u32 %v5241, 7
  %v5243 = vsub.s32 0, %v5242
  %v5244 = vrot.slane %v5012, %v5243
  %v5245 = vadd.f32 %v5225, %v5244
  %v5246 = vadd.f32 %v5226, %v5244
  %v5247 = vadd.f32 %v5227, %v5244
  %v5248 = vadd.f32 %v5228, %v5244
  %v5249 = vadd.f32 %v5229, %v5244
  %v5250 = vadd.f32 %v5230, %v5244
  %v5251 = vadd.f32 %v5231, %v5244
  %v5252 = vadd.f32 %v5232, %v5244
  %v5253 = vadd.f32 %v5233, %v5244
  %v5254 = vadd.f32 %v5234, %v5244
  %v5255 = vadd.f32 %v5235, %v5244
  %v5256 = vadd.f32 %v5236, %v5244
  %v5257 = vadd.f32 %v5237, %v5244
  %v5258 = vadd.f32 %v5238, %v5244
  %v5259 = vadd.f32 %v5239, %v5244
  %v5260 = vadd.f32 %v5240, %v5244
  %v5261 = vpack.c.bf16 %v5246, %v5245
  %v5262 = vpack.c.bf16 %v5248, %v5247
  %v5263 = vpack.c.bf16 %v5250, %v5249
  %v5264 = vpack.c.bf16 %v5252, %v5251
  %v5265 = vpack.c.bf16 %v5254, %v5253
  %v5266 = vpack.c.bf16 %v5256, %v5255
  %v5267 = vpack.c.bf16 %v5258, %v5257
  %v5268 = vpack.c.bf16 %v5260, %v5259
  %s5269 = scalar_lea.vmem %s7, 16
  %v5270 = vld [vmem:[%s5269] sm:$0xf]
  %v5271 = vld [vmem:[%s5269 + $0x4] sm:$0xf]
  %v5272 = vld [vmem:[%s5269 + $0x8] sm:$0xf]
  %v5273 = vld [vmem:[%s5269 + $0xc] sm:$0xf]
  %s5274 = scalar_lea.vmem %s8, 1
  %v5275 = vld [vmem:[%s5274] sm:$0x1]
  %v5277 = vlaneseq
  %v5278 = vshrl.u32 %v5277, 7
  %v5279 = vsub.s32 0, %v5278
  %v5280 = vrot.slane %v5275, %v5279
  %v5286 = vunpack.c.l.b16 %v5270
  %v5287 = vunpack.c.l.b16 %v5271
  %v5288 = vunpack.c.l.b16 %v5272
  %v5289 = vunpack.c.l.b16 %v5273
  %v5290 = vpack.c.b16 %v5287, %v5286
  %v5291 = vpack.c.b16 %v5289, %v5288
  %v5295 = vsel %vm143, %v5261, 0
  %v5298 = vsel %vm143, %v5262, 0
  %v5301 = vsel %vm143, %v5263, 0
  %v5304 = vsel %vm143, %v5264, 0
  %v5307 = vsel %vm143, %v5265, 0
  %v5310 = vsel %vm143, %v5266, 0
  %v5313 = vsel %vm143, %v5267, 0
  %v5316 = vsel %vm143, %v5268, 0
  %5318 = vmatprep.subr.bf16.mxu0 0
  %5319 = vmatpush1.bf16.msra.mxu0 %v5290
  %5320 = vmatprep.subr.bf16.mxu0 0
  %5321 = vmatpush1.bf16.msra.mxu0 %v5291
  %5322 = vmatprep.subr.bf16.mxu0 0
  %5323 = vmatpush1.bf16.msra.mxu0 0
  %5324 = vmatprep.subr.bf16.mxu0 0
  %5325 = vmatpush1.bf16.msra.mxu0 0
  %5326 = vmatprep.subr.bf16.mxu0 0
  %5327 = vmatpush1.bf16.msra.mxu0 0
  %5328 = vmatprep.subr.bf16.mxu0 0
  %5329 = vmatpush1.bf16.msra.mxu0 0
  %5330 = vmatprep.subr.bf16.mxu0 0
  %5331 = vmatpush1.bf16.msra.mxu0 0
  %5332 = vmatprep.subr.bf16.mxu0 0
  %5333 = vmatpush1.bf16.msra.mxu0 0
  %5334 = vmatprep.subr.bf16.mxu0 0
  %5335 = vmatpush1.bf16.msra.mxu0 0
  %5336 = vmatprep.subr.bf16.mxu0 0
  %5337 = vmatpush1.bf16.msra.mxu0 0
  %5338 = vmatprep.subr.bf16.mxu0 0
  %5339 = vmatpush1.bf16.msra.mxu0 0
  %5340 = vmatprep.subr.bf16.mxu0 0
  %5341 = vmatpush1.bf16.msra.mxu0 0
  %5342 = vmatprep.subr.bf16.mxu0 0
  %5343 = vmatpush1.bf16.msra.mxu0 0
  %5344 = vmatprep.subr.bf16.mxu0 0
  %5345 = vmatpush1.bf16.msra.mxu0 0
  %5346 = vmatprep.subr.bf16.mxu0 0
  %5347 = vmatpush1.bf16.msra.mxu0 0
  %5348 = vmatprep.subr.bf16.mxu0 0
  %5349 = vmatpush1.bf16.msra.mxu0 0
  %5350 = vmatprep.mubr.bf16.mxu0 0
  %5351 = vmatmul.mubr.bf16.gmra.mrb[0].mxu0 %v5295
  %v5352 = vpop.f32.mrb[0].mxu0
  %v5353 = vadd.f32 %v5280, %v5352
  %v5354 = vpop.f32.mrb[0].mxu0
  %v5355 = vpop.f32.mrb[0].mxu0
  %v5356 = vadd.f32 %v5280, %v5355
  %v5357 = vpop.f32.mrb[0].mxu0
  %5358 = vmatprep.mubr.bf16.mxu0 0
  %5359 = vmatmul.mubr.bf16.gmra.mrb[0].mxu0 %v5298
  %v5360 = vpop.f32.mrb[0].mxu0
  %v5361 = vadd.f32 %v5280, %v5360
  %v5362 = vpop.f32.mrb[0].mxu0
  %v5363 = vpop.f32.mrb[0].mxu0
  %v5364 = vadd.f32 %v5280, %v5363
  %v5365 = vpop.f32.mrb[0].mxu0
  %5366 = vmatprep.mubr.bf16.mxu0 0
  %5367 = vmatmul.mubr.bf16.gmra.mrb[0].mxu0 %v5301
  %v5368 = vpop.f32.mrb[0].mxu0
  %v5369 = vadd.f32 %v5280, %v5368
  %v5370 = vpop.f32.mrb[0].mxu0
  %v5371 = vpop.f32.mrb[0].mxu0
  %v5372 = vadd.f32 %v5280, %v5371
  %v5373 = vpop.f32.mrb[0].mxu0
  %5374 = vmatprep.mubr.bf16.mxu0 0
  %5375 = vmatmul.mubr.bf16.gmra.mrb[0].mxu0 %v5304
  %v5376 = vpop.f32.mrb[0].mxu0
  %v5377 = vadd.f32 %v5280, %v5376
  %v5378 = vpop.f32.mrb[0].mxu0
  %v5379 = vpop.f32.mrb[0].mxu0
  %v5380 = vadd.f32 %v5280, %v5379
  %v5381 = vpop.f32.mrb[0].mxu0
  %5382 = vmatprep.mubr.bf16.mxu0 0
  %5383 = vmatmul.mubr.bf16.gmra.mrb[0].mxu0 %v5307
  %v5384 = vpop.f32.mrb[0].mxu0
  %v5385 = vadd.f32 %v5280, %v5384
  %v5386 = vpop.f32.mrb[0].mxu0
  %v5387 = vpop.f32.mrb[0].mxu0
  %v5388 = vadd.f32 %v5280, %v5387
  %v5389 = vpop.f32.mrb[0].mxu0
  %5390 = vmatprep.mubr.bf16.mxu0 0
  %5391 = vmatmul.mubr.bf16.gmra.mrb[0].mxu0 %v5310
  %v5392 = vpop.f32.mrb[0].mxu0
  %v5393 = vadd.f32 %v5280, %v5392
  %v5394 = vpop.f32.mrb[0].mxu0
  %v5395 = vpop.f32.mrb[0].mxu0
  %v5396 = vadd.f32 %v5280, %v5395
  %v5397 = vpop.f32.mrb[0].mxu0
  %5398 = vmatprep.mubr.bf16.mxu0 0
  %5399 = vmatmul.mubr.bf16.gmra.mrb[0].mxu0 %v5313
  %v5400 = vpop.f32.mrb[0].mxu0
  %v5401 = vadd.f32 %v5280, %v5400
  %v5402 = vpop.f32.mrb[0].mxu0
  %v5403 = vpop.f32.mrb[0].mxu0
  %v5404 = vadd.f32 %v5280, %v5403
  %v5405 = vpop.f32.mrb[0].mxu0
  %5406 = vmatprep.mubr.bf16.mxu0 0
  %5407 = vmatmul.mubr.bf16.gmra.mrb[0].mxu0 %v5316
  %v5408 = vpop.f32.mrb[0].mxu0
  %v5409 = vadd.f32 %v5280, %v5408
  %v5410 = vpop.f32.mrb[0].mxu0
  %v5411 = vpop.f32.mrb[0].mxu0
  %v5412 = vadd.f32 %v5280, %v5411
  %v5413 = vpop.f32.mrb[0].mxu0
  %5414 = vdwg.mxu0
  %v5415 = vpack.c.bf16 %v5356, %v5353
  %v5416 = vpack.c.bf16 %v5364, %v5361
  %v5417 = vpack.c.bf16 %v5372, %v5369
  %v5418 = vpack.c.bf16 %v5380, %v5377
  %v5419 = vpack.c.bf16 %v5388, %v5385
  %v5420 = vpack.c.bf16 %v5396, %v5393
  %v5421 = vpack.c.bf16 %v5404, %v5401
  %v5422 = vpack.c.bf16 %v5412, %v5409
  %5427 = vrot.lane.b32.xlu0 %v5415, 120
  %v5428 = vpop.permute.xlu0 %5427
  %5429 = vrot.lane.b32.xlu0 %v5416, 120
  %v5430 = vpop.permute.xlu0 %5429
  %5431 = vrot.lane.b32.xlu0 %v5417, 120
  %v5432 = vpop.permute.xlu0 %5431
  %5433 = vrot.lane.b32.xlu0 %v5418, 120
  %v5434 = vpop.permute.xlu0 %5433
  %5435 = vrot.lane.b32.xlu0 %v5415, 112
  %v5436 = vpop.permute.xlu0 %5435
  %5437 = vrot.lane.b32.xlu0 %v5416, 112
  %v5438 = vpop.permute.xlu0 %5437
  %5439 = vrot.lane.b32.xlu0 %v5417, 112
  %v5440 = vpop.permute.xlu0 %5439
  %5441 = vrot.lane.b32.xlu0 %v5418, 112
  %v5442 = vpop.permute.xlu0 %5441
  %5443 = vrot.lane.b32.xlu0 %v5415, 104
  %v5444 = vpop.permute.xlu0 %5443
  %5445 = vrot.lane.b32.xlu0 %v5416, 104
  %v5446 = vpop.permute.xlu0 %5445
  %5447 = vrot.lane.b32.xlu0 %v5417, 104
  %v5448 = vpop.permute.xlu0 %5447
  %5449 = vrot.lane.b32.xlu0 %v5418, 104
  %v5450 = vpop.permute.xlu0 %5449
  %5455 = vrot.lane.b32.xlu0 %v5419, 120
  %v5456 = vpop.permute.xlu0 %5455
  %5457 = vrot.lane.b32.xlu0 %v5420, 120
  %v5458 = vpop.permute.xlu0 %5457
  %5459 = vrot.lane.b32.xlu0 %v5421, 120
  %v5460 = vpop.permute.xlu0 %5459
  %5461 = vrot.lane.b32.xlu0 %v5422, 120
  %v5462 = vpop.permute.xlu0 %5461
  %5463 = vrot.lane.b32.xlu0 %v5419, 112
  %v5464 = vpop.permute.xlu0 %5463
  %5465 = vrot.lane.b32.xlu0 %v5420, 112
  %v5466 = vpop.permute.xlu0 %5465
  %5467 = vrot.lane.b32.xlu0 %v5421, 112
  %v5468 = vpop.permute.xlu0 %5467
  %5469 = vrot.lane.b32.xlu0 %v5422, 112
  %v5470 = vpop.permute.xlu0 %5469
  %5471 = vrot.lane.b32.xlu0 %v5419, 104
  %v5472 = vpop.permute.xlu0 %5471
  %5473 = vrot.lane.b32.xlu0 %v5420, 104
  %v5474 = vpop.permute.xlu0 %5473
  %5475 = vrot.lane.b32.xlu0 %v5421, 104
  %v5476 = vpop.permute.xlu0 %5475
  %5477 = vrot.lane.b32.xlu0 %v5422, 104
  %v5478 = vpop.permute.xlu0 %5477
  %5479 = vrot.lane.b32.xlu0 %v5415, 96
  %v5480 = vpop.permute.xlu0 %5479
  %5481 = vrot.lane.b32.xlu0 %v5416, 96
  %v5482 = vpop.permute.xlu0 %5481
  %5483 = vrot.lane.b32.xlu0 %v5417, 96
  %v5484 = vpop.permute.xlu0 %5483
  %5485 = vrot.lane.b32.xlu0 %v5418, 96
  %v5486 = vpop.permute.xlu0 %5485
  %v5488 = vsel %vm747, %v5415, 0
  %v5491 = vsel %vm747, %v5416, 0
  %v5494 = vsel %vm747, %v5417, 0
  %v5497 = vsel %vm747, %v5418, 0
  %v5500 = vsel %vm747, %v5480, 0
  %v5503 = vsel %vm747, %v5482, 0
  %v5506 = vsel %vm747, %v5484, 0
  %v5509 = vsel %vm747, %v5486, 0
  %5511 = vmatprep.subr.bf16.mxu0 0
  %5512 = vmatpush1.bf16.xpose.msra.mxu0 %v5500
  %5513 = vmatprep.subr.bf16.mxu0 0
  %5514 = vmatpush1.bf16.xpose.msra.mxu0 %v5503
  %5515 = vmatprep.subr.bf16.mxu0 0
  %5516 = vmatpush1.bf16.xpose.msra.mxu0 %v5506
  %5517 = vmatprep.subr.bf16.mxu0 0
  %5518 = vmatpush1.bf16.xpose.msra.mxu0 %v5509
  %5519 = vmatprep.subr.bf16.mxu0 0
  %5520 = vmatpush1.bf16.xpose.msra.mxu0 0
  %5521 = vmatprep.subr.bf16.mxu0 0
  %5522 = vmatpush1.bf16.xpose.msra.mxu0 0
  %5523 = vmatprep.subr.bf16.mxu0 0
  %5524 = vmatpush1.bf16.xpose.msra.mxu0 0
  %5525 = vmatprep.subr.bf16.mxu0 0
  %5526 = vmatpush1.bf16.xpose.msra.mxu0 0
  %5527 = vmatprep.subr.bf16.mxu0 0
  %5528 = vmatpush1.bf16.xpose.msra.mxu0 0
  %5529 = vmatprep.subr.bf16.mxu0 0
  %5530 = vmatpush1.bf16.xpose.msra.mxu0 0
  %5531 = vmatprep.subr.bf16.mxu0 0
  %5532 = vmatpush1.bf16.xpose.msra.mxu0 0
  %5533 = vmatprep.subr.bf16.mxu0 0
  %5534 = vmatpush1.bf16.xpose.msra.mxu0 0
  %5535 = vmatprep.subr.bf16.mxu0 0
  %5536 = vmatpush1.bf16.xpose.msra.mxu0 0
  %5537 = vmatprep.subr.bf16.mxu0 0
  %5538 = vmatpush1.bf16.xpose.msra.mxu0 0
  %5539 = vmatprep.subr.bf16.mxu0 0
  %5540 = vmatpush1.bf16.xpose.msra.mxu0 0
  %5541 = vmatprep.subr.bf16.mxu0 0
  %5542 = vmatpush1.bf16.xpose.msra.mxu0 0
  %5543 = vmatprep.mubr.bf16.mxu0 0
  %5544 = vmatmul.mubr.bf16.gmra.mrb[0].mxu0 %v5488
  %v5545 = vpop.f32.mrb[0].mxu0
  %v5546 = vadd.f32 0.0, %v5545
  %v5547 = vpop.f32.mrb[0].mxu0
  %v5548 = vpop.f32.mrb[0].mxu0
  %v5549 = vadd.f32 0.0, %v5548
  %v5550 = vpop.f32.mrb[0].mxu0
  %5551 = vmatprep.mubr.bf16.mxu0 0
  %5552 = vmatmul.mubr.bf16.gmra.mrb[0].mxu0 %v5491
  %v5553 = vpop.f32.mrb[0].mxu0
  %v5554 = vadd.f32 0.0, %v5553
  %v5555 = vpop.f32.mrb[0].mxu0
  %v5556 = vpop.f32.mrb[0].mxu0
  %v5557 = vadd.f32 0.0, %v5556
  %v5558 = vpop.f32.mrb[0].mxu0
  %5559 = vmatprep.mubr.bf16.mxu0 0
  %5560 = vmatmul.mubr.bf16.gmra.mrb[0].mxu0 %v5494
  %v5561 = vpop.f32.mrb[0].mxu0
  %v5562 = vadd.f32 0.0, %v5561
  %v5563 = vpop.f32.mrb[0].mxu0
  %v5564 = vpop.f32.mrb[0].mxu0
  %v5565 = vadd.f32 0.0, %v5564
  %v5566 = vpop.f32.mrb[0].mxu0
  %5567 = vmatprep.mubr.bf16.mxu0 0
  %5568 = vmatmul.mubr.bf16.gmra.mrb[0].mxu0 %v5497
  %v5569 = vpop.f32.mrb[0].mxu0
  %v5570 = vadd.f32 0.0, %v5569
  %v5571 = vpop.f32.mrb[0].mxu0
  %v5572 = vpop.f32.mrb[0].mxu0
  %v5573 = vadd.f32 0.0, %v5572
  %v5574 = vpop.f32.mrb[0].mxu0
  %5575 = vdwg.mxu0
  %5576 = vrot.lane.b32.xlu0 %v5428, 96
  %v5577 = vpop.permute.xlu0 %5576
  %5578 = vrot.lane.b32.xlu0 %v5430, 96
  %v5579 = vpop.permute.xlu0 %5578
  %5580 = vrot.lane.b32.xlu0 %v5432, 96
  %v5581 = vpop.permute.xlu0 %5580
  %5582 = vrot.lane.b32.xlu0 %v5434, 96
  %v5583 = vpop.permute.xlu0 %5582
  %v5585 = vsel %vm747, %v5428, 0
  %v5588 = vsel %vm747, %v5430, 0
  %v5591 = vsel %vm747, %v5432, 0
  %v5594 = vsel %vm747, %v5434, 0
  %v5597 = vsel %vm747, %v5577, 0
  %v5600 = vsel %vm747, %v5579, 0
  %v5603 = vsel %vm747, %v5581, 0
  %v5606 = vsel %vm747, %v5583, 0
  %5608 = vmatprep.subr.bf16.mxu0 0
  %5609 = vmatpush1.bf16.xpose.msra.mxu0 %v5597
  %5610 = vmatprep.subr.bf16.mxu0 0
  %5611 = vmatpush1.bf16.xpose.msra.mxu0 %v5600
  %5612 = vmatprep.subr.bf16.mxu0 0
  %5613 = vmatpush1.bf16.xpose.msra.mxu0 %v5603
  %5614 = vmatprep.subr.bf16.mxu0 0
  %5615 = vmatpush1.bf16.xpose.msra.mxu0 %v5606
  %5616 = vmatprep.subr.bf16.mxu0 0
  %5617 = vmatpush1.bf16.xpose.msra.mxu0 0
  %5618 = vmatprep.subr.bf16.mxu0 0
  %5619 = vmatpush1.bf16.xpose.msra.mxu0 0
  %5620 = vmatprep.subr.bf16.mxu0 0
  %5621 = vmatpush1.bf16.xpose.msra.mxu0 0
  %5622 = vmatprep.subr.bf16.mxu0 0
  %5623 = vmatpush1.bf16.xpose.msra.mxu0 0
  %5624 = vmatprep.subr.bf16.mxu0 0
  %5625 = vmatpush1.bf16.xpose.msra.mxu0 0
  %5626 = vmatprep.subr.bf16.mxu0 0
  %5627 = vmatpush1.bf16.xpose.msra.mxu0 0
  %5628 = vmatprep.subr.bf16.mxu0 0
  %5629 = vmatpush1.bf16.xpose.msra.mxu0 0
  %5630 = vmatprep.subr.bf16.mxu0 0
  %5631 = vmatpush1.bf16.xpose.msra.mxu0 0
  %5632 = vmatprep.subr.bf16.mxu0 0
  %5633 = vmatpush1.bf16.xpose.msra.mxu0 0
  %5634 = vmatprep.subr.bf16.mxu0 0
  %5635 = vmatpush1.bf16.xpose.msra.mxu0 0
  %5636 = vmatprep.subr.bf16.mxu0 0
  %5637 = vmatpush1.bf16.xpose.msra.mxu0 0
  %5638 = vmatprep.subr.bf16.mxu0 0
  %5639 = vmatpush1.bf16.xpose.msra.mxu0 0
  %5640 = vmatprep.mubr.bf16.mxu0 0
  %5641 = vmatmul.mubr.bf16.gmra.mrb[0].mxu0 %v5585
  %v5642 = vpop.f32.mrb[0].mxu0
  %v5643 = vadd.f32 0.0, %v5642
  %v5644 = vpop.f32.mrb[0].mxu0
  %v5645 = vpop.f32.mrb[0].mxu0
  %v5646 = vadd.f32 0.0, %v5645
  %v5647 = vpop.f32.mrb[0].mxu0
  %5648 = vmatprep.mubr.bf16.mxu0 0
  %5649 = vmatmul.mubr.bf16.gmra.mrb[0].mxu0 %v5588
  %v5650 = vpop.f32.mrb[0].mxu0
  %v5651 = vadd.f32 0.0, %v5650
  %v5652 = vpop.f32.mrb[0].mxu0
  %v5653 = vpop.f32.mrb[0].mxu0
  %v5654 = vadd.f32 0.0, %v5653
  %v5655 = vpop.f32.mrb[0].mxu0
  %5656 = vmatprep.mubr.bf16.mxu0 0
  %5657 = vmatmul.mubr.bf16.gmra.mrb[0].mxu0 %v5591
  %v5658 = vpop.f32.mrb[0].mxu0
  %v5659 = vadd.f32 0.0, %v5658
  %v5660 = vpop.f32.mrb[0].mxu0
  %v5661 = vpop.f32.mrb[0].mxu0
  %v5662 = vadd.f32 0.0, %v5661
  %v5663 = vpop.f32.mrb[0].mxu0
  %5664 = vmatprep.mubr.bf16.mxu0 0
  %5665 = vmatmul.mubr.bf16.gmra.mrb[0].mxu0 %v5594
  %v5666 = vpop.f32.mrb[0].mxu0
  %v5667 = vadd.f32 0.0, %v5666
  %v5668 = vpop.f32.mrb[0].mxu0
  %v5669 = vpop.f32.mrb[0].mxu0
  %v5670 = vadd.f32 0.0, %v5669
  %v5671 = vpop.f32.mrb[0].mxu0
  %5672 = vdwg.mxu0
  %5673 = vrot.lane.b32.xlu0 %v5436, 96
  %v5674 = vpop.permute.xlu0 %5673
  %5675 = vrot.lane.b32.xlu0 %v5438, 96
  %v5676 = vpop.permute.xlu0 %5675
  %5677 = vrot.lane.b32.xlu0 %v5440, 96
  %v5678 = vpop.permute.xlu0 %5677
  %5679 = vrot.lane.b32.xlu0 %v5442, 96
  %v5680 = vpop.permute.xlu0 %5679
  %v5682 = vsel %vm747, %v5436, 0
  %v5685 = vsel %vm747, %v5438, 0
  %v5688 = vsel %vm747, %v5440, 0
  %v5691 = vsel %vm747, %v5442, 0
  %v5694 = vsel %vm747, %v5674, 0
  %v5697 = vsel %vm747, %v5676, 0
  %v5700 = vsel %vm747, %v5678, 0
  %v5703 = vsel %vm747, %v5680, 0
  %5705 = vmatprep.subr.bf16.mxu0 0
  %5706 = vmatpush1.bf16.xpose.msra.mxu0 %v5694
  %5707 = vmatprep.subr.bf16.mxu0 0
  %5708 = vmatpush1.bf16.xpose.msra.mxu0 %v5697
  %5709 = vmatprep.subr.bf16.mxu0 0
  %5710 = vmatpush1.bf16.xpose.msra.mxu0 %v5700
  %5711 = vmatprep.subr.bf16.mxu0 0
  %5712 = vmatpush1.bf16.xpose.msra.mxu0 %v5703
  %5713 = vmatprep.subr.bf16.mxu0 0
  %5714 = vmatpush1.bf16.xpose.msra.mxu0 0
  %5715 = vmatprep.subr.bf16.mxu0 0
  %5716 = vmatpush1.bf16.xpose.msra.mxu0 0
  %5717 = vmatprep.subr.bf16.mxu0 0
  %5718 = vmatpush1.bf16.xpose.msra.mxu0 0
  %5719 = vmatprep.subr.bf16.mxu0 0
  %5720 = vmatpush1.bf16.xpose.msra.mxu0 0
  %5721 = vmatprep.subr.bf16.mxu0 0
  %5722 = vmatpush1.bf16.xpose.msra.mxu0 0
  %5723 = vmatprep.subr.bf16.mxu0 0
  %5724 = vmatpush1.bf16.xpose.msra.mxu0 0
  %5725 = vmatprep.subr.bf16.mxu0 0
  %5726 = vmatpush1.bf16.xpose.msra.mxu0 0
  %5727 = vmatprep.subr.bf16.mxu0 0
  %5728 = vmatpush1.bf16.xpose.msra.mxu0 0
  %5729 = vmatprep.subr.bf16.mxu0 0
  %5730 = vmatpush1.bf16.xpose.msra.mxu0 0
  %5731 = vmatprep.subr.bf16.mxu0 0
  %5732 = vmatpush1.bf16.xpose.msra.mxu0 0
  %5733 = vmatprep.subr.bf16.mxu0 0
  %5734 = vmatpush1.bf16.xpose.msra.mxu0 0
  %5735 = vmatprep.subr.bf16.mxu0 0
  %5736 = vmatpush1.bf16.xpose.msra.mxu0 0
  %5737 = vmatprep.mubr.bf16.mxu0 0
  %5738 = vmatmul.mubr.bf16.gmra.mrb[0].mxu0 %v5682
  %v5739 = vpop.f32.mrb[0].mxu0
  %v5740 = vadd.f32 0.0, %v5739
  %v5741 = vpop.f32.mrb[0].mxu0
  %v5742 = vpop.f32.mrb[0].mxu0
  %v5743 = vadd.f32 0.0, %v5742
  %v5744 = vpop.f32.mrb[0].mxu0
  %5745 = vmatprep.mubr.bf16.mxu0 0
  %5746 = vmatmul.mubr.bf16.gmra.mrb[0].mxu0 %v5685
  %v5747 = vpop.f32.mrb[0].mxu0
  %v5748 = vadd.f32 0.0, %v5747
  %v5749 = vpop.f32.mrb[0].mxu0
  %v5750 = vpop.f32.mrb[0].mxu0
  %v5751 = vadd.f32 0.0, %v5750
  %v5752 = vpop.f32.mrb[0].mxu0
  %5753 = vmatprep.mubr.bf16.mxu0 0
  %5754 = vmatmul.mubr.bf16.gmra.mrb[0].mxu0 %v5688
  %v5755 = vpop.f32.mrb[0].mxu0
  %v5756 = vadd.f32 0.0, %v5755
  %v5757 = vpop.f32.mrb[0].mxu0
  %v5758 = vpop.f32.mrb[0].mxu0
  %v5759 = vadd.f32 0.0, %v5758
  %v5760 = vpop.f32.mrb[0].mxu0
  %5761 = vmatprep.mubr.bf16.mxu0 0
  %5762 = vmatmul.mubr.bf16.gmra.mrb[0].mxu0 %v5691
  %v5763 = vpop.f32.mrb[0].mxu0
  %v5764 = vadd.f32 0.0, %v5763
  %v5765 = vpop.f32.mrb[0].mxu0
  %v5766 = vpop.f32.mrb[0].mxu0
  %v5767 = vadd.f32 0.0, %v5766
  %v5768 = vpop.f32.mrb[0].mxu0
  %5769 = vdwg.mxu0
  %5770 = vrot.lane.b32.xlu0 %v5444, 96
  %v5771 = vpop.permute.xlu0 %5770
  %5772 = vrot.lane.b32.xlu0 %v5446, 96
  %v5773 = vpop.permute.xlu0 %5772
  %5774 = vrot.lane.b32.xlu0 %v5448, 96
  %v5775 = vpop.permute.xlu0 %5774
  %5776 = vrot.lane.b32.xlu0 %v5450, 96
  %v5777 = vpop.permute.xlu0 %5776
  %v5779 = vsel %vm747, %v5444, 0
  %v5782 = vsel %vm747, %v5446, 0
  %v5785 = vsel %vm747, %v5448, 0
  %v5788 = vsel %vm747, %v5450, 0
  %v5791 = vsel %vm747, %v5771, 0
  %v5794 = vsel %vm747, %v5773, 0
  %v5797 = vsel %vm747, %v5775, 0
  %v5800 = vsel %vm747, %v5777, 0
  %5802 = vmatprep.subr.bf16.mxu0 0
  %5803 = vmatpush1.bf16.xpose.msra.mxu0 %v5791
  %5804 = vmatprep.subr.bf16.mxu0 0
  %5805 = vmatpush1.bf16.xpose.msra.mxu0 %v5794
  %5806 = vmatprep.subr.bf16.mxu0 0
  %5807 = vmatpush1.bf16.xpose.msra.mxu0 %v5797
  %5808 = vmatprep.subr.bf16.mxu0 0
  %5809 = vmatpush1.bf16.xpose.msra.mxu0 %v5800
  %5810 = vmatprep.subr.bf16.mxu0 0
  %5811 = vmatpush1.bf16.xpose.msra.mxu0 0
  %5812 = vmatprep.subr.bf16.mxu0 0
  %5813 = vmatpush1.bf16.xpose.msra.mxu0 0
  %5814 = vmatprep.subr.bf16.mxu0 0
  %5815 = vmatpush1.bf16.xpose.msra.mxu0 0
  %5816 = vmatprep.subr.bf16.mxu0 0
  %5817 = vmatpush1.bf16.xpose.msra.mxu0 0
  %5818 = vmatprep.subr.bf16.mxu0 0
  %5819 = vmatpush1.bf16.xpose.msra.mxu0 0
  %5820 = vmatprep.subr.bf16.mxu0 0
  %5821 = vmatpush1.bf16.xpose.msra.mxu0 0
  %5822 = vmatprep.subr.bf16.mxu0 0
  %5823 = vmatpush1.bf16.xpose.msra.mxu0 0
  %5824 = vmatprep.subr.bf16.mxu0 0
  %5825 = vmatpush1.bf16.xpose.msra.mxu0 0
  %5826 = vmatprep.subr.bf16.mxu0 0
  %5827 = vmatpush1.bf16.xpose.msra.mxu0 0
  %5828 = vmatprep.subr.bf16.mxu0 0
  %5829 = vmatpush1.bf16.xpose.msra.mxu0 0
  %5830 = vmatprep.subr.bf16.mxu0 0
  %5831 = vmatpush1.bf16.xpose.msra.mxu0 0
  %5832 = vmatprep.subr.bf16.mxu0 0
  %5833 = vmatpush1.bf16.xpose.msra.mxu0 0
  %5834 = vmatprep.mubr.bf16.mxu0 0
  %5835 = vmatmul.mubr.bf16.gmra.mrb[0].mxu0 %v5779
  %v5836 = vpop.f32.mrb[0].mxu0
  %v5837 = vadd.f32 0.0, %v5836
  %v5838 = vpop.f32.mrb[0].mxu0
  %v5839 = vpop.f32.mrb[0].mxu0
  %v5840 = vadd.f32 0.0, %v5839
  %v5841 = vpop.f32.mrb[0].mxu0
  %5842 = vmatprep.mubr.bf16.mxu0 0
  %5843 = vmatmul.mubr.bf16.gmra.mrb[0].mxu0 %v5782
  %v5844 = vpop.f32.mrb[0].mxu0
  %v5845 = vadd.f32 0.0, %v5844
  %v5846 = vpop.f32.mrb[0].mxu0
  %v5847 = vpop.f32.mrb[0].mxu0
  %v5848 = vadd.f32 0.0, %v5847
  %v5849 = vpop.f32.mrb[0].mxu0
  %5850 = vmatprep.mubr.bf16.mxu0 0
  %5851 = vmatmul.mubr.bf16.gmra.mrb[0].mxu0 %v5785
  %v5852 = vpop.f32.mrb[0].mxu0
  %v5853 = vadd.f32 0.0, %v5852
  %v5854 = vpop.f32.mrb[0].mxu0
  %v5855 = vpop.f32.mrb[0].mxu0
  %v5856 = vadd.f32 0.0, %v5855
  %v5857 = vpop.f32.mrb[0].mxu0
  %5858 = vmatprep.mubr.bf16.mxu0 0
  %5859 = vmatmul.mubr.bf16.gmra.mrb[0].mxu0 %v5788
  %v5860 = vpop.f32.mrb[0].mxu0
  %v5861 = vadd.f32 0.0, %v5860
  %v5862 = vpop.f32.mrb[0].mxu0
  %v5863 = vpop.f32.mrb[0].mxu0
  %v5864 = vadd.f32 0.0, %v5863
  %v5865 = vpop.f32.mrb[0].mxu0
  %5866 = vdwg.mxu0
  %5867 = vrot.lane.b32.xlu0 %v5419, 96
  %v5868 = vpop.permute.xlu0 %5867
  %5869 = vrot.lane.b32.xlu0 %v5420, 96
  %v5870 = vpop.permute.xlu0 %5869
  %5871 = vrot.lane.b32.xlu0 %v5421, 96
  %v5872 = vpop.permute.xlu0 %5871
  %5873 = vrot.lane.b32.xlu0 %v5422, 96
  %v5874 = vpop.permute.xlu0 %5873
  %v5876 = vsel %vm747, %v5419, 0
  %v5879 = vsel %vm747, %v5420, 0
  %v5882 = vsel %vm747, %v5421, 0
  %v5885 = vsel %vm747, %v5422, 0
  %v5888 = vsel %vm747, %v5868, 0
  %v5891 = vsel %vm747, %v5870, 0
  %v5894 = vsel %vm747, %v5872, 0
  %v5897 = vsel %vm747, %v5874, 0
  %5899 = vmatprep.subr.bf16.mxu0 0
  %5900 = vmatpush1.bf16.xpose.msra.mxu0 %v5888
  %5901 = vmatprep.subr.bf16.mxu0 0
  %5902 = vmatpush1.bf16.xpose.msra.mxu0 %v5891
  %5903 = vmatprep.subr.bf16.mxu0 0
  %5904 = vmatpush1.bf16.xpose.msra.mxu0 %v5894
  %5905 = vmatprep.subr.bf16.mxu0 0
  %5906 = vmatpush1.bf16.xpose.msra.mxu0 %v5897
  %5907 = vmatprep.subr.bf16.mxu0 0
  %5908 = vmatpush1.bf16.xpose.msra.mxu0 0
  %5909 = vmatprep.subr.bf16.mxu0 0
  %5910 = vmatpush1.bf16.xpose.msra.mxu0 0
  %5911 = vmatprep.subr.bf16.mxu0 0
  %5912 = vmatpush1.bf16.xpose.msra.mxu0 0
  %5913 = vmatprep.subr.bf16.mxu0 0
  %5914 = vmatpush1.bf16.xpose.msra.mxu0 0
  %5915 = vmatprep.subr.bf16.mxu0 0
  %5916 = vmatpush1.bf16.xpose.msra.mxu0 0
  %5917 = vmatprep.subr.bf16.mxu0 0
  %5918 = vmatpush1.bf16.xpose.msra.mxu0 0
  %5919 = vmatprep.subr.bf16.mxu0 0
  %5920 = vmatpush1.bf16.xpose.msra.mxu0 0
  %5921 = vmatprep.subr.bf16.mxu0 0
  %5922 = vmatpush1.bf16.xpose.msra.mxu0 0
  %5923 = vmatprep.subr.bf16.mxu0 0
  %5924 = vmatpush1.bf16.xpose.msra.mxu0 0
  %5925 = vmatprep.subr.bf16.mxu0 0
  %5926 = vmatpush1.bf16.xpose.msra.mxu0 0
  %5927 = vmatprep.subr.bf16.mxu0 0
  %5928 = vmatpush1.bf16.xpose.msra.mxu0 0
  %5929 = vmatprep.subr.bf16.mxu0 0
  %5930 = vmatpush1.bf16.xpose.msra.mxu0 0
  %5931 = vmatprep.mubr.bf16.mxu0 0
  %5932 = vmatmul.mubr.bf16.gmra.mrb[0].mxu0 %v5876
  %v5933 = vpop.f32.mrb[0].mxu0
  %v5934 = vadd.f32 0.0, %v5933
  %v5935 = vpop.f32.mrb[0].mxu0
  %v5936 = vpop.f32.mrb[0].mxu0
  %v5937 = vadd.f32 0.0, %v5936
  %v5938 = vpop.f32.mrb[0].mxu0
  %5939 = vmatprep.mubr.bf16.mxu0 0
  %5940 = vmatmul.mubr.bf16.gmra.mrb[0].mxu0 %v5879
  %v5941 = vpop.f32.mrb[0].mxu0
  %v5942 = vadd.f32 0.0, %v5941
  %v5943 = vpop.f32.mrb[0].mxu0
  %v5944 = vpop.f32.mrb[0].mxu0
  %v5945 = vadd.f32 0.0, %v5944
  %v5946 = vpop.f32.mrb[0].mxu0
  %5947 = vmatprep.mubr.bf16.mxu0 0
  %5948 = vmatmul.mubr.bf16.gmra.mrb[0].mxu0 %v5882
  %v5949 = vpop.f32.mrb[0].mxu0
  %v5950 = vadd.f32 0.0, %v5949
  %v5951 = vpop.f32.mrb[0].mxu0
  %v5952 = vpop.f32.mrb[0].mxu0
  %v5953 = vadd.f32 0.0, %v5952
  %v5954 = vpop.f32.mrb[0].mxu0
  %5955 = vmatprep.mubr.bf16.mxu0 0
  %5956 = vmatmul.mubr.bf16.gmra.mrb[0].mxu0 %v5885
  %v5957 = vpop.f32.mrb[0].mxu0
  %v5958 = vadd.f32 0.0, %v5957
  %v5959 = vpop.f32.mrb[0].mxu0
  %v5960 = vpop.f32.mrb[0].mxu0
  %v5961 = vadd.f32 0.0, %v5960
  %v5962 = vpop.f32.mrb[0].mxu0
  %5963 = vdwg.mxu0
  %5964 = vrot.lane.b32.xlu0 %v5456, 96
  %v5965 = vpop.permute.xlu0 %5964
  %5966 = vrot.lane.b32.xlu0 %v5458, 96
  %v5967 = vpop.permute.xlu0 %5966
  %5968 = vrot.lane.b32.xlu0 %v5460, 96
  %v5969 = vpop.permute.xlu0 %5968
  %5970 = vrot.lane.b32.xlu0 %v5462, 96
  %v5971 = vpop.permute.xlu0 %5970
  %v5973 = vsel %vm747, %v5456, 0
  %v5976 = vsel %vm747, %v5458, 0
  %v5979 = vsel %vm747, %v5460, 0
  %v5982 = vsel %vm747, %v5462, 0
  %v5985 = vsel %vm747, %v5965, 0
  %v5988 = vsel %vm747, %v5967, 0
  %v5991 = vsel %vm747, %v5969, 0
  %v5994 = vsel %vm747, %v5971, 0
  %5996 = vmatprep.subr.bf16.mxu0 0
  %5997 = vmatpush1.bf16.xpose.msra.mxu0 %v5985
  %5998 = vmatprep.subr.bf16.mxu0 0
  %5999 = vmatpush1.bf16.xpose.msra.mxu0 %v5988
  %6000 = vmatprep.subr.bf16.mxu0 0
  %6001 = vmatpush1.bf16.xpose.msra.mxu0 %v5991
  %6002 = vmatprep.subr.bf16.mxu0 0
  %6003 = vmatpush1.bf16.xpose.msra.mxu0 %v5994
  %6004 = vmatprep.subr.bf16.mxu0 0
  %6005 = vmatpush1.bf16.xpose.msra.mxu0 0
  %6006 = vmatprep.subr.bf16.mxu0 0
  %6007 = vmatpush1.bf16.xpose.msra.mxu0 0
  %6008 = vmatprep.subr.bf16.mxu0 0
  %6009 = vmatpush1.bf16.xpose.msra.mxu0 0
  %6010 = vmatprep.subr.bf16.mxu0 0
  %6011 = vmatpush1.bf16.xpose.msra.mxu0 0
  %6012 = vmatprep.subr.bf16.mxu0 0
  %6013 = vmatpush1.bf16.xpose.msra.mxu0 0
  %6014 = vmatprep.subr.bf16.mxu0 0
  %6015 = vmatpush1.bf16.xpose.msra.mxu0 0
  %6016 = vmatprep.subr.bf16.mxu0 0
  %6017 = vmatpush1.bf16.xpose.msra.mxu0 0
  %6018 = vmatprep.subr.bf16.mxu0 0
  %6019 = vmatpush1.bf16.xpose.msra.mxu0 0
  %6020 = vmatprep.subr.bf16.mxu0 0
  %6021 = vmatpush1.bf16.xpose.msra.mxu0 0
  %6022 = vmatprep.subr.bf16.mxu0 0
  %6023 = vmatpush1.bf16.xpose.msra.mxu0 0
  %6024 = vmatprep.subr.bf16.mxu0 0
  %6025 = vmatpush1.bf16.xpose.msra.mxu0 0
  %6026 = vmatprep.subr.bf16.mxu0 0
  %6027 = vmatpush1.bf16.xpose.msra.mxu0 0
  %6028 = vmatprep.mubr.bf16.mxu0 0
  %6029 = vmatmul.mubr.bf16.gmra.mrb[0].mxu0 %v5973
  %v6030 = vpop.f32.mrb[0].mxu0
  %v6031 = vadd.f32 0.0, %v6030
  %v6032 = vpop.f32.mrb[0].mxu0
  %v6033 = vpop.f32.mrb[0].mxu0
  %v6034 = vadd.f32 0.0, %v6033
  %v6035 = vpop.f32.mrb[0].mxu0
  %6036 = vmatprep.mubr.bf16.mxu0 0
  %6037 = vmatmul.mubr.bf16.gmra.mrb[0].mxu0 %v5976
  %v6038 = vpop.f32.mrb[0].mxu0
  %v6039 = vadd.f32 0.0, %v6038
  %v6040 = vpop.f32.mrb[0].mxu0
  %v6041 = vpop.f32.mrb[0].mxu0
  %v6042 = vadd.f32 0.0, %v6041
  %v6043 = vpop.f32.mrb[0].mxu0
  %6044 = vmatprep.mubr.bf16.mxu0 0
  %6045 = vmatmul.mubr.bf16.gmra.mrb[0].mxu0 %v5979
  %v6046 = vpop.f32.mrb[0].mxu0
  %v6047 = vadd.f32 0.0, %v6046
  %v6048 = vpop.f32.mrb[0].mxu0
  %v6049 = vpop.f32.mrb[0].mxu0
  %v6050 = vadd.f32 0.0, %v6049
  %v6051 = vpop.f32.mrb[0].mxu0
  %6052 = vmatprep.mubr.bf16.mxu0 0
  %6053 = vmatmul.mubr.bf16.gmra.mrb[0].mxu0 %v5982
  %v6054 = vpop.f32.mrb[0].mxu0
  %v6055 = vadd.f32 0.0, %v6054
  %v6056 = vpop.f32.mrb[0].mxu0
  %v6057 = vpop.f32.mrb[0].mxu0
  %v6058 = vadd.f32 0.0, %v6057
  %v6059 = vpop.f32.mrb[0].mxu0
  %6060 = vdwg.mxu0
  %6061 = vrot.lane.b32.xlu0 %v5464, 96
  %v6062 = vpop.permute.xlu0 %6061
  %6063 = vrot.lane.b32.xlu0 %v5466, 96
  %v6064 = vpop.permute.xlu0 %6063
  %6065 = vrot.lane.b32.xlu0 %v5468, 96
  %v6066 = vpop.permute.xlu0 %6065
  %6067 = vrot.lane.b32.xlu0 %v5470, 96
  %v6068 = vpop.permute.xlu0 %6067
  %v6070 = vsel %vm747, %v5464, 0
  %v6073 = vsel %vm747, %v5466, 0
  %v6076 = vsel %vm747, %v5468, 0
  %v6079 = vsel %vm747, %v5470, 0
  %v6082 = vsel %vm747, %v6062, 0
  %v6085 = vsel %vm747, %v6064, 0
  %v6088 = vsel %vm747, %v6066, 0
  %v6091 = vsel %vm747, %v6068, 0
  %6093 = vmatprep.subr.bf16.mxu0 0
  %6094 = vmatpush1.bf16.xpose.msra.mxu0 %v6082
  %6095 = vmatprep.subr.bf16.mxu0 0
  %6096 = vmatpush1.bf16.xpose.msra.mxu0 %v6085
  %6097 = vmatprep.subr.bf16.mxu0 0
  %6098 = vmatpush1.bf16.xpose.msra.mxu0 %v6088
  %6099 = vmatprep.subr.bf16.mxu0 0
  %6100 = vmatpush1.bf16.xpose.msra.mxu0 %v6091
  %6101 = vmatprep.subr.bf16.mxu0 0
  %6102 = vmatpush1.bf16.xpose.msra.mxu0 0
  %6103 = vmatprep.subr.bf16.mxu0 0
  %6104 = vmatpush1.bf16.xpose.msra.mxu0 0
  %6105 = vmatprep.subr.bf16.mxu0 0
  %6106 = vmatpush1.bf16.xpose.msra.mxu0 0
  %6107 = vmatprep.subr.bf16.mxu0 0
  %6108 = vmatpush1.bf16.xpose.msra.mxu0 0
  %6109 = vmatprep.subr.bf16.mxu0 0
  %6110 = vmatpush1.bf16.xpose.msra.mxu0 0
  %6111 = vmatprep.subr.bf16.mxu0 0
  %6112 = vmatpush1.bf16.xpose.msra.mxu0 0
  %6113 = vmatprep.subr.bf16.mxu0 0
  %6114 = vmatpush1.bf16.xpose.msra.mxu0 0
  %6115 = vmatprep.subr.bf16.mxu0 0
  %6116 = vmatpush1.bf16.xpose.msra.mxu0 0
  %6117 = vmatprep.subr.bf16.mxu0 0
  %6118 = vmatpush1.bf16.xpose.msra.mxu0 0
  %6119 = vmatprep.subr.bf16.mxu0 0
  %6120 = vmatpush1.bf16.xpose.msra.mxu0 0
  %6121 = vmatprep.subr.bf16.mxu0 0
  %6122 = vmatpush1.bf16.xpose.msra.mxu0 0
  %6123 = vmatprep.subr.bf16.mxu0 0
  %6124 = vmatpush1.bf16.xpose.msra.mxu0 0
  %6125 = vmatprep.mubr.bf16.mxu0 0
  %6126 = vmatmul.mubr.bf16.gmra.mrb[0].mxu0 %v6070
  %v6127 = vpop.f32.mrb[0].mxu0
  %v6128 = vadd.f32 0.0, %v6127
  %v6129 = vpop.f32.mrb[0].mxu0
  %v6130 = vpop.f32.mrb[0].mxu0
  %v6131 = vadd.f32 0.0, %v6130
  %v6132 = vpop.f32.mrb[0].mxu0
  %6133 = vmatprep.mubr.bf16.mxu0 0
  %6134 = vmatmul.mubr.bf16.gmra.mrb[0].mxu0 %v6073
  %v6135 = vpop.f32.mrb[0].mxu0
  %v6136 = vadd.f32 0.0, %v6135
  %v6137 = vpop.f32.mrb[0].mxu0
  %v6138 = vpop.f32.mrb[0].mxu0
  %v6139 = vadd.f32 0.0, %v6138
  %v6140 = vpop.f32.mrb[0].mxu0
  %6141 = vmatprep.mubr.bf16.mxu0 0
  %6142 = vmatmul.mubr.bf16.gmra.mrb[0].mxu0 %v6076
  %v6143 = vpop.f32.mrb[0].mxu0
  %v6144 = vadd.f32 0.0, %v6143
  %v6145 = vpop.f32.mrb[0].mxu0
  %v6146 = vpop.f32.mrb[0].mxu0
  %v6147 = vadd.f32 0.0, %v6146
  %v6148 = vpop.f32.mrb[0].mxu0
  %6149 = vmatprep.mubr.bf16.mxu0 0
  %6150 = vmatmul.mubr.bf16.gmra.mrb[0].mxu0 %v6079
  %v6151 = vpop.f32.mrb[0].mxu0
  %v6152 = vadd.f32 0.0, %v6151
  %v6153 = vpop.f32.mrb[0].mxu0
  %v6154 = vpop.f32.mrb[0].mxu0
  %v6155 = vadd.f32 0.0, %v6154
  %v6156 = vpop.f32.mrb[0].mxu0
  %6157 = vdwg.mxu0
  %6158 = vrot.lane.b32.xlu0 %v5472, 96
  %v6159 = vpop.permute.xlu0 %6158
  %6160 = vrot.lane.b32.xlu0 %v5474, 96
  %v6161 = vpop.permute.xlu0 %6160
  %6162 = vrot.lane.b32.xlu0 %v5476, 96
  %v6163 = vpop.permute.xlu0 %6162
  %6164 = vrot.lane.b32.xlu0 %v5478, 96
  %v6165 = vpop.permute.xlu0 %6164
  %v6167 = vsel %vm747, %v5472, 0
  %v6170 = vsel %vm747, %v5474, 0
  %v6173 = vsel %vm747, %v5476, 0
  %v6176 = vsel %vm747, %v5478, 0
  %v6179 = vsel %vm747, %v6159, 0
  %v6182 = vsel %vm747, %v6161, 0
  %v6185 = vsel %vm747, %v6163, 0
  %v6188 = vsel %vm747, %v6165, 0
  %6190 = vmatprep.subr.bf16.mxu0 0
  %6191 = vmatpush1.bf16.xpose.msra.mxu0 %v6179
  %6192 = vmatprep.subr.bf16.mxu0 0
  %6193 = vmatpush1.bf16.xpose.msra.mxu0 %v6182
  %6194 = vmatprep.subr.bf16.mxu0 0
  %6195 = vmatpush1.bf16.xpose.msra.mxu0 %v6185
  %6196 = vmatprep.subr.bf16.mxu0 0
  %6197 = vmatpush1.bf16.xpose.msra.mxu0 %v6188
  %6198 = vmatprep.subr.bf16.mxu0 0
  %6199 = vmatpush1.bf16.xpose.msra.mxu0 0
  %6200 = vmatprep.subr.bf16.mxu0 0
  %6201 = vmatpush1.bf16.xpose.msra.mxu0 0
  %6202 = vmatprep.subr.bf16.mxu0 0
  %6203 = vmatpush1.bf16.xpose.msra.mxu0 0
  %6204 = vmatprep.subr.bf16.mxu0 0
  %6205 = vmatpush1.bf16.xpose.msra.mxu0 0
  %6206 = vmatprep.subr.bf16.mxu0 0
  %6207 = vmatpush1.bf16.xpose.msra.mxu0 0
  %6208 = vmatprep.subr.bf16.mxu0 0
  %6209 = vmatpush1.bf16.xpose.msra.mxu0 0
  %6210 = vmatprep.subr.bf16.mxu0 0
  %6211 = vmatpush1.bf16.xpose.msra.mxu0 0
  %6212 = vmatprep.subr.bf16.mxu0 0
  %6213 = vmatpush1.bf16.xpose.msra.mxu0 0
  %6214 = vmatprep.subr.bf16.mxu0 0
  %6215 = vmatpush1.bf16.xpose.msra.mxu0 0
  %6216 = vmatprep.subr.bf16.mxu0 0
  %6217 = vmatpush1.bf16.xpose.msra.mxu0 0
  %6218 = vmatprep.subr.bf16.mxu0 0
  %6219 = vmatpush1.bf16.xpose.msra.mxu0 0
  %6220 = vmatprep.subr.bf16.mxu0 0
  %6221 = vmatpush1.bf16.xpose.msra.mxu0 0
  %6222 = vmatprep.mubr.bf16.mxu0 0
  %6223 = vmatmul.mubr.bf16.gmra.mrb[0].mxu0 %v6167
  %v6224 = vpop.f32.mrb[0].mxu0
  %v6225 = vadd.f32 0.0, %v6224
  %v6226 = vpop.f32.mrb[0].mxu0
  %v6227 = vpop.f32.mrb[0].mxu0
  %v6228 = vadd.f32 0.0, %v6227
  %v6229 = vpop.f32.mrb[0].mxu0
  %6230 = vmatprep.mubr.bf16.mxu0 0
  %6231 = vmatmul.mubr.bf16.gmra.mrb[0].mxu0 %v6170
  %v6232 = vpop.f32.mrb[0].mxu0
  %v6233 = vadd.f32 0.0, %v6232
  %v6234 = vpop.f32.mrb[0].mxu0
  %v6235 = vpop.f32.mrb[0].mxu0
  %v6236 = vadd.f32 0.0, %v6235
  %v6237 = vpop.f32.mrb[0].mxu0
  %6238 = vmatprep.mubr.bf16.mxu0 0
  %6239 = vmatmul.mubr.bf16.gmra.mrb[0].mxu0 %v6173
  %v6240 = vpop.f32.mrb[0].mxu0
  %v6241 = vadd.f32 0.0, %v6240
  %v6242 = vpop.f32.mrb[0].mxu0
  %v6243 = vpop.f32.mrb[0].mxu0
  %v6244 = vadd.f32 0.0, %v6243
  %v6245 = vpop.f32.mrb[0].mxu0
  %6246 = vmatprep.mubr.bf16.mxu0 0
  %6247 = vmatmul.mubr.bf16.gmra.mrb[0].mxu0 %v6176
  %v6248 = vpop.f32.mrb[0].mxu0
  %v6249 = vadd.f32 0.0, %v6248
  %v6250 = vpop.f32.mrb[0].mxu0
  %v6251 = vpop.f32.mrb[0].mxu0
  %v6252 = vadd.f32 0.0, %v6251
  %v6253 = vpop.f32.mrb[0].mxu0
  %6254 = vdwg.mxu0
  %v6255 = vmul.f32 %v5546, 0.35355338
  %v6256 = vmul.f32 %v5549, 0.35355338
  %v6257 = vmul.f32 %v5554, 0.35355338
  %v6258 = vmul.f32 %v5557, 0.35355338
  %v6259 = vmul.f32 %v5562, 0.35355338
  %v6260 = vmul.f32 %v5565, 0.35355338
  %v6261 = vmul.f32 %v5570, 0.35355338
  %v6262 = vmul.f32 %v5573, 0.35355338
  %v6263 = vmul.f32 %v5643, 0.35355338
  %v6264 = vmul.f32 %v5646, 0.35355338
  %v6265 = vmul.f32 %v5651, 0.35355338
  %v6266 = vmul.f32 %v5654, 0.35355338
  %v6267 = vmul.f32 %v5659, 0.35355338
  %v6268 = vmul.f32 %v5662, 0.35355338
  %v6269 = vmul.f32 %v5667, 0.35355338
  %v6270 = vmul.f32 %v5670, 0.35355338
  %v6271 = vmul.f32 %v5740, 0.35355338
  %v6272 = vmul.f32 %v5743, 0.35355338
  %v6273 = vmul.f32 %v5748, 0.35355338
  %v6274 = vmul.f32 %v5751, 0.35355338
  %v6275 = vmul.f32 %v5756, 0.35355338
  %v6276 = vmul.f32 %v5759, 0.35355338
  %v6277 = vmul.f32 %v5764, 0.35355338
  %v6278 = vmul.f32 %v5767, 0.35355338
  %v6279 = vmul.f32 %v5837, 0.35355338
  %v6280 = vmul.f32 %v5840, 0.35355338
  %v6281 = vmul.f32 %v5845, 0.35355338
  %v6282 = vmul.f32 %v5848, 0.35355338
  %v6283 = vmul.f32 %v5853, 0.35355338
  %v6284 = vmul.f32 %v5856, 0.35355338
  %v6285 = vmul.f32 %v5861, 0.35355338
  %v6286 = vmul.f32 %v5864, 0.35355338
  %v6287 = vmul.f32 %v5934, 0.35355338
  %v6288 = vmul.f32 %v5937, 0.35355338
  %v6289 = vmul.f32 %v5942, 0.35355338
  %v6290 = vmul.f32 %v5945, 0.35355338
  %v6291 = vmul.f32 %v5950, 0.35355338
  %v6292 = vmul.f32 %v5953, 0.35355338
  %v6293 = vmul.f32 %v5958, 0.35355338
  %v6294 = vmul.f32 %v5961, 0.35355338
  %v6295 = vmul.f32 %v6031, 0.35355338
  %v6296 = vmul.f32 %v6034, 0.35355338
  %v6297 = vmul.f32 %v6039, 0.35355338
  %v6298 = vmul.f32 %v6042, 0.35355338
  %v6299 = vmul.f32 %v6047, 0.35355338
  %v6300 = vmul.f32 %v6050, 0.35355338
  %v6301 = vmul.f32 %v6055, 0.35355338
  %v6302 = vmul.f32 %v6058, 0.35355338
  %v6303 = vmul.f32 %v6128, 0.35355338
  %v6304 = vmul.f32 %v6131, 0.35355338
  %v6305 = vmul.f32 %v6136, 0.35355338
  %v6306 = vmul.f32 %v6139, 0.35355338
  %v6307 = vmul.f32 %v6144, 0.35355338
  %v6308 = vmul.f32 %v6147, 0.35355338
  %v6309 = vmul.f32 %v6152, 0.35355338
  %v6310 = vmul.f32 %v6155, 0.35355338
  %v6311 = vmul.f32 %v6225, 0.35355338
  %v6312 = vmul.f32 %v6228, 0.35355338
  %v6313 = vmul.f32 %v6233, 0.35355338
  %v6314 = vmul.f32 %v6236, 0.35355338
  %v6315 = vmul.f32 %v6241, 0.35355338
  %v6316 = vmul.f32 %v6244, 0.35355338
  %v6317 = vmul.f32 %v6249, 0.35355338
  %v6318 = vmul.f32 %v6252, 0.35355338
  %v6319 = vsel %vm1580, %v6255, -inf
  %6320 = vmax.xlane.f32.xlu0 %v6319
  %v6321 = vpop.xlane.xlu0 %6320
  %v6322 = vsel %vm1580, %v6256, -inf
  %6323 = vmax.xlane.f32.xlu0 %v6322
  %v6324 = vpop.xlane.xlu0 %6323
  %v6325 = vsel %vm1580, %v6257, -inf
  %6326 = vmax.xlane.f32.xlu0 %v6325
  %v6327 = vpop.xlane.xlu0 %6326
  %v6328 = vsel %vm1580, %v6258, -inf
  %6329 = vmax.xlane.f32.xlu0 %v6328
  %v6330 = vpop.xlane.xlu0 %6329
  %v6331 = vsel %vm1580, %v6259, -inf
  %6332 = vmax.xlane.f32.xlu0 %v6331
  %v6333 = vpop.xlane.xlu0 %6332
  %v6334 = vsel %vm1580, %v6260, -inf
  %6335 = vmax.xlane.f32.xlu0 %v6334
  %v6336 = vpop.xlane.xlu0 %6335
  %v6337 = vsel %vm1580, %v6261, -inf
  %6338 = vmax.xlane.f32.xlu0 %v6337
  %v6339 = vpop.xlane.xlu0 %6338
  %v6340 = vsel %vm1580, %v6262, -inf
  %6341 = vmax.xlane.f32.xlu0 %v6340
  %v6342 = vpop.xlane.xlu0 %6341
  %v6343 = vsel %vm1580, %v6263, -inf
  %6344 = vmax.xlane.f32.xlu0 %v6343
  %v6345 = vpop.xlane.xlu0 %6344
  %v6346 = vsel %vm1580, %v6264, -inf
  %6347 = vmax.xlane.f32.xlu0 %v6346
  %v6348 = vpop.xlane.xlu0 %6347
  %v6349 = vsel %vm1580, %v6265, -inf
  %6350 = vmax.xlane.f32.xlu0 %v6349
  %v6351 = vpop.xlane.xlu0 %6350
  %v6352 = vsel %vm1580, %v6266, -inf
  %6353 = vmax.xlane.f32.xlu0 %v6352
  %v6354 = vpop.xlane.xlu0 %6353
  %v6355 = vsel %vm1580, %v6267, -inf
  %6356 = vmax.xlane.f32.xlu0 %v6355
  %v6357 = vpop.xlane.xlu0 %6356
  %v6358 = vsel %vm1580, %v6268, -inf
  %6359 = vmax.xlane.f32.xlu0 %v6358
  %v6360 = vpop.xlane.xlu0 %6359
  %v6361 = vsel %vm1580, %v6269, -inf
  %6362 = vmax.xlane.f32.xlu0 %v6361
  %v6363 = vpop.xlane.xlu0 %6362
  %v6364 = vsel %vm1580, %v6270, -inf
  %6365 = vmax.xlane.f32.xlu0 %v6364
  %v6366 = vpop.xlane.xlu0 %6365
  %v6367 = vsel %vm1580, %v6271, -inf
  %6368 = vmax.xlane.f32.xlu0 %v6367
  %v6369 = vpop.xlane.xlu0 %6368
  %v6370 = vsel %vm1580, %v6272, -inf
  %6371 = vmax.xlane.f32.xlu0 %v6370
  %v6372 = vpop.xlane.xlu0 %6371
  %v6373 = vsel %vm1580, %v6273, -inf
  %6374 = vmax.xlane.f32.xlu0 %v6373
  %v6375 = vpop.xlane.xlu0 %6374
  %v6376 = vsel %vm1580, %v6274, -inf
  %6377 = vmax.xlane.f32.xlu0 %v6376
  %v6378 = vpop.xlane.xlu0 %6377
  %v6379 = vsel %vm1580, %v6275, -inf
  %6380 = vmax.xlane.f32.xlu0 %v6379
  %v6381 = vpop.xlane.xlu0 %6380
  %v6382 = vsel %vm1580, %v6276, -inf
  %6383 = vmax.xlane.f32.xlu0 %v6382
  %v6384 = vpop.xlane.xlu0 %6383
  %v6385 = vsel %vm1580, %v6277, -inf
  %6386 = vmax.xlane.f32.xlu0 %v6385
  %v6387 = vpop.xlane.xlu0 %6386
  %v6388 = vsel %vm1580, %v6278, -inf
  %6389 = vmax.xlane.f32.xlu0 %v6388
  %v6390 = vpop.xlane.xlu0 %6389
  %v6391 = vsel %vm1580, %v6279, -inf
  %6392 = vmax.xlane.f32.xlu0 %v6391
  %v6393 = vpop.xlane.xlu0 %6392
  %v6394 = vsel %vm1580, %v6280, -inf
  %6395 = vmax.xlane.f32.xlu0 %v6394
  %v6396 = vpop.xlane.xlu0 %6395
  %v6397 = vsel %vm1580, %v6281, -inf
  %6398 = vmax.xlane.f32.xlu0 %v6397
  %v6399 = vpop.xlane.xlu0 %6398
  %v6400 = vsel %vm1580, %v6282, -inf
  %6401 = vmax.xlane.f32.xlu0 %v6400
  %v6402 = vpop.xlane.xlu0 %6401
  %v6403 = vsel %vm1580, %v6283, -inf
  %6404 = vmax.xlane.f32.xlu0 %v6403
  %v6405 = vpop.xlane.xlu0 %6404
  %v6406 = vsel %vm1580, %v6284, -inf
  %6407 = vmax.xlane.f32.xlu0 %v6406
  %v6408 = vpop.xlane.xlu0 %6407
  %v6409 = vsel %vm1580, %v6285, -inf
  %6410 = vmax.xlane.f32.xlu0 %v6409
  %v6411 = vpop.xlane.xlu0 %6410
  %v6412 = vsel %vm1580, %v6286, -inf
  %6413 = vmax.xlane.f32.xlu0 %v6412
  %v6414 = vpop.xlane.xlu0 %6413
  %v6415 = vsel %vm1580, %v6287, -inf
  %6416 = vmax.xlane.f32.xlu0 %v6415
  %v6417 = vpop.xlane.xlu0 %6416
  %v6418 = vsel %vm1580, %v6288, -inf
  %6419 = vmax.xlane.f32.xlu0 %v6418
  %v6420 = vpop.xlane.xlu0 %6419
  %v6421 = vsel %vm1580, %v6289, -inf
  %6422 = vmax.xlane.f32.xlu0 %v6421
  %v6423 = vpop.xlane.xlu0 %6422
  %v6424 = vsel %vm1580, %v6290, -inf
  %6425 = vmax.xlane.f32.xlu0 %v6424
  %v6426 = vpop.xlane.xlu0 %6425
  %v6427 = vsel %vm1580, %v6291, -inf
  %6428 = vmax.xlane.f32.xlu0 %v6427
  %v6429 = vpop.xlane.xlu0 %6428
  %v6430 = vsel %vm1580, %v6292, -inf
  %6431 = vmax.xlane.f32.xlu0 %v6430
  %v6432 = vpop.xlane.xlu0 %6431
  %v6433 = vsel %vm1580, %v6293, -inf
  %6434 = vmax.xlane.f32.xlu0 %v6433
  %v6435 = vpop.xlane.xlu0 %6434
  %v6436 = vsel %vm1580, %v6294, -inf
  %6437 = vmax.xlane.f32.xlu0 %v6436
  %v6438 = vpop.xlane.xlu0 %6437
  %v6439 = vsel %vm1580, %v6295, -inf
  %6440 = vmax.xlane.f32.xlu0 %v6439
  %v6441 = vpop.xlane.xlu0 %6440
  %v6442 = vsel %vm1580, %v6296, -inf
  %6443 = vmax.xlane.f32.xlu0 %v6442
  %v6444 = vpop.xlane.xlu0 %6443
  %v6445 = vsel %vm1580, %v6297, -inf
  %6446 = vmax.xlane.f32.xlu0 %v6445
  %v6447 = vpop.xlane.xlu0 %6446
  %v6448 = vsel %vm1580, %v6298, -inf
  %6449 = vmax.xlane.f32.xlu0 %v6448
  %v6450 = vpop.xlane.xlu0 %6449
  %v6451 = vsel %vm1580, %v6299, -inf
  %6452 = vmax.xlane.f32.xlu0 %v6451
  %v6453 = vpop.xlane.xlu0 %6452
  %v6454 = vsel %vm1580, %v6300, -inf
  %6455 = vmax.xlane.f32.xlu0 %v6454
  %v6456 = vpop.xlane.xlu0 %6455
  %v6457 = vsel %vm1580, %v6301, -inf
  %6458 = vmax.xlane.f32.xlu0 %v6457
  %v6459 = vpop.xlane.xlu0 %6458
  %v6460 = vsel %vm1580, %v6302, -inf
  %6461 = vmax.xlane.f32.xlu0 %v6460
  %v6462 = vpop.xlane.xlu0 %6461
  %v6463 = vsel %vm1580, %v6303, -inf
  %6464 = vmax.xlane.f32.xlu0 %v6463
  %v6465 = vpop.xlane.xlu0 %6464
  %v6466 = vsel %vm1580, %v6304, -inf
  %6467 = vmax.xlane.f32.xlu0 %v6466
  %v6468 = vpop.xlane.xlu0 %6467
  %v6469 = vsel %vm1580, %v6305, -inf
  %6470 = vmax.xlane.f32.xlu0 %v6469
  %v6471 = vpop.xlane.xlu0 %6470
  %v6472 = vsel %vm1580, %v6306, -inf
  %6473 = vmax.xlane.f32.xlu0 %v6472
  %v6474 = vpop.xlane.xlu0 %6473
  %v6475 = vsel %vm1580, %v6307, -inf
  %6476 = vmax.xlane.f32.xlu0 %v6475
  %v6477 = vpop.xlane.xlu0 %6476
  %v6478 = vsel %vm1580, %v6308, -inf
  %6479 = vmax.xlane.f32.xlu0 %v6478
  %v6480 = vpop.xlane.xlu0 %6479
  %v6481 = vsel %vm1580, %v6309, -inf
  %6482 = vmax.xlane.f32.xlu0 %v6481
  %v6483 = vpop.xlane.xlu0 %6482
  %v6484 = vsel %vm1580, %v6310, -inf
  %6485 = vmax.xlane.f32.xlu0 %v6484
  %v6486 = vpop.xlane.xlu0 %6485
  %v6487 = vsel %vm1580, %v6311, -inf
  %6488 = vmax.xlane.f32.xlu0 %v6487
  %v6489 = vpop.xlane.xlu0 %6488
  %v6490 = vsel %vm1580, %v6312, -inf
  %6491 = vmax.xlane.f32.xlu0 %v6490
  %v6492 = vpop.xlane.xlu0 %6491
  %v6493 = vsel %vm1580, %v6313, -inf
  %6494 = vmax.xlane.f32.xlu0 %v6493
  %v6495 = vpop.xlane.xlu0 %6494
  %v6496 = vsel %vm1580, %v6314, -inf
  %6497 = vmax.xlane.f32.xlu0 %v6496
  %v6498 = vpop.xlane.xlu0 %6497
  %v6499 = vsel %vm1580, %v6315, -inf
  %6500 = vmax.xlane.f32.xlu0 %v6499
  %v6501 = vpop.xlane.xlu0 %6500
  %v6502 = vsel %vm1580, %v6316, -inf
  %6503 = vmax.xlane.f32.xlu0 %v6502
  %v6504 = vpop.xlane.xlu0 %6503
  %v6505 = vsel %vm1580, %v6317, -inf
  %6506 = vmax.xlane.f32.xlu0 %v6505
  %v6507 = vpop.xlane.xlu0 %6506
  %v6508 = vsel %vm1580, %v6318, -inf
  %6509 = vmax.xlane.f32.xlu0 %v6508
  %v6510 = vpop.xlane.xlu0 %6509
  %v6511 = vsub.f32 %v6255, %v6321
  %v6512 = vsub.f32 %v6256, %v6324
  %v6513 = vsub.f32 %v6257, %v6327
  %v6514 = vsub.f32 %v6258, %v6330
  %v6515 = vsub.f32 %v6259, %v6333
  %v6516 = vsub.f32 %v6260, %v6336
  %v6517 = vsub.f32 %v6261, %v6339
  %v6518 = vsub.f32 %v6262, %v6342
  %v6519 = vsub.f32 %v6263, %v6345
  %v6520 = vsub.f32 %v6264, %v6348
  %v6521 = vsub.f32 %v6265, %v6351
  %v6522 = vsub.f32 %v6266, %v6354
  %v6523 = vsub.f32 %v6267, %v6357
  %v6524 = vsub.f32 %v6268, %v6360
  %v6525 = vsub.f32 %v6269, %v6363
  %v6526 = vsub.f32 %v6270, %v6366
  %v6527 = vsub.f32 %v6271, %v6369
  %v6528 = vsub.f32 %v6272, %v6372
  %v6529 = vsub.f32 %v6273, %v6375
  %v6530 = vsub.f32 %v6274, %v6378
  %v6531 = vsub.f32 %v6275, %v6381
  %v6532 = vsub.f32 %v6276, %v6384
  %v6533 = vsub.f32 %v6277, %v6387
  %v6534 = vsub.f32 %v6278, %v6390
  %v6535 = vsub.f32 %v6279, %v6393
  %v6536 = vsub.f32 %v6280, %v6396
  %v6537 = vsub.f32 %v6281, %v6399
  %v6538 = vsub.f32 %v6282, %v6402
  %v6539 = vsub.f32 %v6283, %v6405
  %v6540 = vsub.f32 %v6284, %v6408
  %v6541 = vsub.f32 %v6285, %v6411
  %v6542 = vsub.f32 %v6286, %v6414
  %v6543 = vsub.f32 %v6287, %v6417
  %v6544 = vsub.f32 %v6288, %v6420
  %v6545 = vsub.f32 %v6289, %v6423
  %v6546 = vsub.f32 %v6290, %v6426
  %v6547 = vsub.f32 %v6291, %v6429
  %v6548 = vsub.f32 %v6292, %v6432
  %v6549 = vsub.f32 %v6293, %v6435
  %v6550 = vsub.f32 %v6294, %v6438
  %v6551 = vsub.f32 %v6295, %v6441
  %v6552 = vsub.f32 %v6296, %v6444
  %v6553 = vsub.f32 %v6297, %v6447
  %v6554 = vsub.f32 %v6298, %v6450
  %v6555 = vsub.f32 %v6299, %v6453
  %v6556 = vsub.f32 %v6300, %v6456
  %v6557 = vsub.f32 %v6301, %v6459
  %v6558 = vsub.f32 %v6302, %v6462
  %v6559 = vsub.f32 %v6303, %v6465
  %v6560 = vsub.f32 %v6304, %v6468
  %v6561 = vsub.f32 %v6305, %v6471
  %v6562 = vsub.f32 %v6306, %v6474
  %v6563 = vsub.f32 %v6307, %v6477
  %v6564 = vsub.f32 %v6308, %v6480
  %v6565 = vsub.f32 %v6309, %v6483
  %v6566 = vsub.f32 %v6310, %v6486
  %v6567 = vsub.f32 %v6311, %v6489
  %v6568 = vsub.f32 %v6312, %v6492
  %v6569 = vsub.f32 %v6313, %v6495
  %v6570 = vsub.f32 %v6314, %v6498
  %v6571 = vsub.f32 %v6315, %v6501
  %v6572 = vsub.f32 %v6316, %v6504
  %v6573 = vsub.f32 %v6317, %v6507
  %v6574 = vsub.f32 %v6318, %v6510
  %v6575 = vmul.f32 %v6511, 1.442695
  %v6576 = vpow.pop %v6575
  %v6577 = vmul.f32 %v6512, 1.442695
  %v6578 = vpow.pop %v6577
  %v6579 = vmul.f32 %v6513, 1.442695
  %v6580 = vpow.pop %v6579
  %v6581 = vmul.f32 %v6514, 1.442695
  %v6582 = vpow.pop %v6581
  %v6583 = vmul.f32 %v6515, 1.442695
  %v6584 = vpow.pop %v6583
  %v6585 = vmul.f32 %v6516, 1.442695
  %v6586 = vpow.pop %v6585
  %v6587 = vmul.f32 %v6517, 1.442695
  %v6588 = vpow.pop %v6587
  %v6589 = vmul.f32 %v6518, 1.442695
  %v6590 = vpow.pop %v6589
  %v6591 = vmul.f32 %v6519, 1.442695
  %v6592 = vpow.pop %v6591
  %v6593 = vmul.f32 %v6520, 1.442695
  %v6594 = vpow.pop %v6593
  %v6595 = vmul.f32 %v6521, 1.442695
  %v6596 = vpow.pop %v6595
  %v6597 = vmul.f32 %v6522, 1.442695
  %v6598 = vpow.pop %v6597
  %v6599 = vmul.f32 %v6523, 1.442695
  %v6600 = vpow.pop %v6599
  %v6601 = vmul.f32 %v6524, 1.442695
  %v6602 = vpow.pop %v6601
  %v6603 = vmul.f32 %v6525, 1.442695
  %v6604 = vpow.pop %v6603
  %v6605 = vmul.f32 %v6526, 1.442695
  %v6606 = vpow.pop %v6605
  %v6607 = vmul.f32 %v6527, 1.442695
  %v6608 = vpow.pop %v6607
  %v6609 = vmul.f32 %v6528, 1.442695
  %v6610 = vpow.pop %v6609
  %v6611 = vmul.f32 %v6529, 1.442695
  %v6612 = vpow.pop %v6611
  %v6613 = vmul.f32 %v6530, 1.442695
  %v6614 = vpow.pop %v6613
  %v6615 = vmul.f32 %v6531, 1.442695
  %v6616 = vpow.pop %v6615
  %v6617 = vmul.f32 %v6532, 1.442695
  %v6618 = vpow.pop %v6617
  %v6619 = vmul.f32 %v6533, 1.442695
  %v6620 = vpow.pop %v6619
  %v6621 = vmul.f32 %v6534, 1.442695
  %v6622 = vpow.pop %v6621
  %v6623 = vmul.f32 %v6535, 1.442695
  %v6624 = vpow.pop %v6623
  %v6625 = vmul.f32 %v6536, 1.442695
  %v6626 = vpow.pop %v6625
  %v6627 = vmul.f32 %v6537, 1.442695
  %v6628 = vpow.pop %v6627
  %v6629 = vmul.f32 %v6538, 1.442695
  %v6630 = vpow.pop %v6629
  %v6631 = vmul.f32 %v6539, 1.442695
  %v6632 = vpow.pop %v6631
  %v6633 = vmul.f32 %v6540, 1.442695
  %v6634 = vpow.pop %v6633
  %v6635 = vmul.f32 %v6541, 1.442695
  %v6636 = vpow.pop %v6635
  %v6637 = vmul.f32 %v6542, 1.442695
  %v6638 = vpow.pop %v6637
  %v6639 = vmul.f32 %v6543, 1.442695
  %v6640 = vpow.pop %v6639
  %v6641 = vmul.f32 %v6544, 1.442695
  %v6642 = vpow.pop %v6641
  %v6643 = vmul.f32 %v6545, 1.442695
  %v6644 = vpow.pop %v6643
  %v6645 = vmul.f32 %v6546, 1.442695
  %v6646 = vpow.pop %v6645
  %v6647 = vmul.f32 %v6547, 1.442695
  %v6648 = vpow.pop %v6647
  %v6649 = vmul.f32 %v6548, 1.442695
  %v6650 = vpow.pop %v6649
  %v6651 = vmul.f32 %v6549, 1.442695
  %v6652 = vpow.pop %v6651
  %v6653 = vmul.f32 %v6550, 1.442695
  %v6654 = vpow.pop %v6653
  %v6655 = vmul.f32 %v6551, 1.442695
  %v6656 = vpow.pop %v6655
  %v6657 = vmul.f32 %v6552, 1.442695
  %v6658 = vpow.pop %v6657
  %v6659 = vmul.f32 %v6553, 1.442695
  %v6660 = vpow.pop %v6659
  %v6661 = vmul.f32 %v6554, 1.442695
  %v6662 = vpow.pop %v6661
  %v6663 = vmul.f32 %v6555, 1.442695
  %v6664 = vpow.pop %v6663
  %v6665 = vmul.f32 %v6556, 1.442695
  %v6666 = vpow.pop %v6665
  %v6667 = vmul.f32 %v6557, 1.442695
  %v6668 = vpow.pop %v6667
  %v6669 = vmul.f32 %v6558, 1.442695
  %v6670 = vpow.pop %v6669
  %v6671 = vmul.f32 %v6559, 1.442695
  %v6672 = vpow.pop %v6671
  %v6673 = vmul.f32 %v6560, 1.442695
  %v6674 = vpow.pop %v6673
  %v6675 = vmul.f32 %v6561, 1.442695
  %v6676 = vpow.pop %v6675
  %v6677 = vmul.f32 %v6562, 1.442695
  %v6678 = vpow.pop %v6677
  %v6679 = vmul.f32 %v6563, 1.442695
  %v6680 = vpow.pop %v6679
  %v6681 = vmul.f32 %v6564, 1.442695
  %v6682 = vpow.pop %v6681
  %v6683 = vmul.f32 %v6565, 1.442695
  %v6684 = vpow.pop %v6683
  %v6685 = vmul.f32 %v6566, 1.442695
  %v6686 = vpow.pop %v6685
  %v6687 = vmul.f32 %v6567, 1.442695
  %v6688 = vpow.pop %v6687
  %v6689 = vmul.f32 %v6568, 1.442695
  %v6690 = vpow.pop %v6689
  %v6691 = vmul.f32 %v6569, 1.442695
  %v6692 = vpow.pop %v6691
  %v6693 = vmul.f32 %v6570, 1.442695
  %v6694 = vpow.pop %v6693
  %v6695 = vmul.f32 %v6571, 1.442695
  %v6696 = vpow.pop %v6695
  %v6697 = vmul.f32 %v6572, 1.442695
  %v6698 = vpow.pop %v6697
  %v6699 = vmul.f32 %v6573, 1.442695
  %v6700 = vpow.pop %v6699
  %v6701 = vmul.f32 %v6574, 1.442695
  %v6702 = vpow.pop %v6701
  %v6703 = vsel %vm1580, %v6576, 0.0
  %6704 = vadd.xlane.f32.xlu0 %v6703
  %v6705 = vpop.xlane.xlu0 %6704
  %v6706 = vsel %vm1580, %v6578, 0.0
  %6707 = vadd.xlane.f32.xlu0 %v6706
  %v6708 = vpop.xlane.xlu0 %6707
  %v6709 = vsel %vm1580, %v6580, 0.0
  %6710 = vadd.xlane.f32.xlu0 %v6709
  %v6711 = vpop.xlane.xlu0 %6710
  %v6712 = vsel %vm1580, %v6582, 0.0
  %6713 = vadd.xlane.f32.xlu0 %v6712
  %v6714 = vpop.xlane.xlu0 %6713
  %v6715 = vsel %vm1580, %v6584, 0.0
  %6716 = vadd.xlane.f32.xlu0 %v6715
  %v6717 = vpop.xlane.xlu0 %6716
  %v6718 = vsel %vm1580, %v6586, 0.0
  %6719 = vadd.xlane.f32.xlu0 %v6718
  %v6720 = vpop.xlane.xlu0 %6719
  %v6721 = vsel %vm1580, %v6588, 0.0
  %6722 = vadd.xlane.f32.xlu0 %v6721
  %v6723 = vpop.xlane.xlu0 %6722
  %v6724 = vsel %vm1580, %v6590, 0.0
  %6725 = vadd.xlane.f32.xlu0 %v6724
  %v6726 = vpop.xlane.xlu0 %6725
  %v6727 = vsel %vm1580, %v6592, 0.0
  %6728 = vadd.xlane.f32.xlu0 %v6727
  %v6729 = vpop.xlane.xlu0 %6728
  %v6730 = vsel %vm1580, %v6594, 0.0
  %6731 = vadd.xlane.f32.xlu0 %v6730
  %v6732 = vpop.xlane.xlu0 %6731
  %v6733 = vsel %vm1580, %v6596, 0.0
  %6734 = vadd.xlane.f32.xlu0 %v6733
  %v6735 = vpop.xlane.xlu0 %6734
  %v6736 = vsel %vm1580, %v6598, 0.0
  %6737 = vadd.xlane.f32.xlu0 %v6736
  %v6738 = vpop.xlane.xlu0 %6737
  %v6739 = vsel %vm1580, %v6600, 0.0
  %6740 = vadd.xlane.f32.xlu0 %v6739
  %v6741 = vpop.xlane.xlu0 %6740
  %v6742 = vsel %vm1580, %v6602, 0.0
  %6743 = vadd.xlane.f32.xlu0 %v6742
  %v6744 = vpop.xlane.xlu0 %6743
  %v6745 = vsel %vm1580, %v6604, 0.0
  %6746 = vadd.xlane.f32.xlu0 %v6745
  %v6747 = vpop.xlane.xlu0 %6746
  %v6748 = vsel %vm1580, %v6606, 0.0
  %6749 = vadd.xlane.f32.xlu0 %v6748
  %v6750 = vpop.xlane.xlu0 %6749
  %v6751 = vsel %vm1580, %v6608, 0.0
  %6752 = vadd.xlane.f32.xlu0 %v6751
  %v6753 = vpop.xlane.xlu0 %6752
  %v6754 = vsel %vm1580, %v6610, 0.0
  %6755 = vadd.xlane.f32.xlu0 %v6754
  %v6756 = vpop.xlane.xlu0 %6755
  %v6757 = vsel %vm1580, %v6612, 0.0
  %6758 = vadd.xlane.f32.xlu0 %v6757
  %v6759 = vpop.xlane.xlu0 %6758
  %v6760 = vsel %vm1580, %v6614, 0.0
  %6761 = vadd.xlane.f32.xlu0 %v6760
  %v6762 = vpop.xlane.xlu0 %6761
  %v6763 = vsel %vm1580, %v6616, 0.0
  %6764 = vadd.xlane.f32.xlu0 %v6763
  %v6765 = vpop.xlane.xlu0 %6764
  %v6766 = vsel %vm1580, %v6618, 0.0
  %6767 = vadd.xlane.f32.xlu0 %v6766
  %v6768 = vpop.xlane.xlu0 %6767
  %v6769 = vsel %vm1580, %v6620, 0.0
  %6770 = vadd.xlane.f32.xlu0 %v6769
  %v6771 = vpop.xlane.xlu0 %6770
  %v6772 = vsel %vm1580, %v6622, 0.0
  %6773 = vadd.xlane.f32.xlu0 %v6772
  %v6774 = vpop.xlane.xlu0 %6773
  %v6775 = vsel %vm1580, %v6624, 0.0
  %6776 = vadd.xlane.f32.xlu0 %v6775
  %v6777 = vpop.xlane.xlu0 %6776
  %v6778 = vsel %vm1580, %v6626, 0.0
  %6779 = vadd.xlane.f32.xlu0 %v6778
  %v6780 = vpop.xlane.xlu0 %6779
  %v6781 = vsel %vm1580, %v6628, 0.0
  %6782 = vadd.xlane.f32.xlu0 %v6781
  %v6783 = vpop.xlane.xlu0 %6782
  %v6784 = vsel %vm1580, %v6630, 0.0
  %6785 = vadd.xlane.f32.xlu0 %v6784
  %v6786 = vpop.xlane.xlu0 %6785
  %v6787 = vsel %vm1580, %v6632, 0.0
  %6788 = vadd.xlane.f32.xlu0 %v6787
  %v6789 = vpop.xlane.xlu0 %6788
  %v6790 = vsel %vm1580, %v6634, 0.0
  %6791 = vadd.xlane.f32.xlu0 %v6790
  %v6792 = vpop.xlane.xlu0 %6791
  %v6793 = vsel %vm1580, %v6636, 0.0
  %6794 = vadd.xlane.f32.xlu0 %v6793
  %v6795 = vpop.xlane.xlu0 %6794
  %v6796 = vsel %vm1580, %v6638, 0.0
  %6797 = vadd.xlane.f32.xlu0 %v6796
  %v6798 = vpop.xlane.xlu0 %6797
  %v6799 = vsel %vm1580, %v6640, 0.0
  %6800 = vadd.xlane.f32.xlu0 %v6799
  %v6801 = vpop.xlane.xlu0 %6800
  %v6802 = vsel %vm1580, %v6642, 0.0
  %6803 = vadd.xlane.f32.xlu0 %v6802
  %v6804 = vpop.xlane.xlu0 %6803
  %v6805 = vsel %vm1580, %v6644, 0.0
  %6806 = vadd.xlane.f32.xlu0 %v6805
  %v6807 = vpop.xlane.xlu0 %6806
  %v6808 = vsel %vm1580, %v6646, 0.0
  %6809 = vadd.xlane.f32.xlu0 %v6808
  %v6810 = vpop.xlane.xlu0 %6809
  %v6811 = vsel %vm1580, %v6648, 0.0
  %6812 = vadd.xlane.f32.xlu0 %v6811
  %v6813 = vpop.xlane.xlu0 %6812
  %v6814 = vsel %vm1580, %v6650, 0.0
  %6815 = vadd.xlane.f32.xlu0 %v6814
  %v6816 = vpop.xlane.xlu0 %6815
  %v6817 = vsel %vm1580, %v6652, 0.0
  %6818 = vadd.xlane.f32.xlu0 %v6817
  %v6819 = vpop.xlane.xlu0 %6818
  %v6820 = vsel %vm1580, %v6654, 0.0
  %6821 = vadd.xlane.f32.xlu0 %v6820
  %v6822 = vpop.xlane.xlu0 %6821
  %v6823 = vsel %vm1580, %v6656, 0.0
  %6824 = vadd.xlane.f32.xlu0 %v6823
  %v6825 = vpop.xlane.xlu0 %6824
  %v6826 = vsel %vm1580, %v6658, 0.0
  %6827 = vadd.xlane.f32.xlu0 %v6826
  %v6828 = vpop.xlane.xlu0 %6827
  %v6829 = vsel %vm1580, %v6660, 0.0
  %6830 = vadd.xlane.f32.xlu0 %v6829
  %v6831 = vpop.xlane.xlu0 %6830
  %v6832 = vsel %vm1580, %v6662, 0.0
  %6833 = vadd.xlane.f32.xlu0 %v6832
  %v6834 = vpop.xlane.xlu0 %6833
  %v6835 = vsel %vm1580, %v6664, 0.0
  %6836 = vadd.xlane.f32.xlu0 %v6835
  %v6837 = vpop.xlane.xlu0 %6836
  %v6838 = vsel %vm1580, %v6666, 0.0
  %6839 = vadd.xlane.f32.xlu0 %v6838
  %v6840 = vpop.xlane.xlu0 %6839
  %v6841 = vsel %vm1580, %v6668, 0.0
  %6842 = vadd.xlane.f32.xlu0 %v6841
  %v6843 = vpop.xlane.xlu0 %6842
  %v6844 = vsel %vm1580, %v6670, 0.0
  %6845 = vadd.xlane.f32.xlu0 %v6844
  %v6846 = vpop.xlane.xlu0 %6845
  %v6847 = vsel %vm1580, %v6672, 0.0
  %6848 = vadd.xlane.f32.xlu0 %v6847
  %v6849 = vpop.xlane.xlu0 %6848
  %v6850 = vsel %vm1580, %v6674, 0.0
  %6851 = vadd.xlane.f32.xlu0 %v6850
  %v6852 = vpop.xlane.xlu0 %6851
  %v6853 = vsel %vm1580, %v6676, 0.0
  %6854 = vadd.xlane.f32.xlu0 %v6853
  %v6855 = vpop.xlane.xlu0 %6854
  %v6856 = vsel %vm1580, %v6678, 0.0
  %6857 = vadd.xlane.f32.xlu0 %v6856
  %v6858 = vpop.xlane.xlu0 %6857
  %v6859 = vsel %vm1580, %v6680, 0.0
  %6860 = vadd.xlane.f32.xlu0 %v6859
  %v6861 = vpop.xlane.xlu0 %6860
  %v6862 = vsel %vm1580, %v6682, 0.0
  %6863 = vadd.xlane.f32.xlu0 %v6862
  %v6864 = vpop.xlane.xlu0 %6863
  %v6865 = vsel %vm1580, %v6684, 0.0
  %6866 = vadd.xlane.f32.xlu0 %v6865
  %v6867 = vpop.xlane.xlu0 %6866
  %v6868 = vsel %vm1580, %v6686, 0.0
  %6869 = vadd.xlane.f32.xlu0 %v6868
  %v6870 = vpop.xlane.xlu0 %6869
  %v6871 = vsel %vm1580, %v6688, 0.0
  %6872 = vadd.xlane.f32.xlu0 %v6871
  %v6873 = vpop.xlane.xlu0 %6872
  %v6874 = vsel %vm1580, %v6690, 0.0
  %6875 = vadd.xlane.f32.xlu0 %v6874
  %v6876 = vpop.xlane.xlu0 %6875
  %v6877 = vsel %vm1580, %v6692, 0.0
  %6878 = vadd.xlane.f32.xlu0 %v6877
  %v6879 = vpop.xlane.xlu0 %6878
  %v6880 = vsel %vm1580, %v6694, 0.0
  %6881 = vadd.xlane.f32.xlu0 %v6880
  %v6882 = vpop.xlane.xlu0 %6881
  %v6883 = vsel %vm1580, %v6696, 0.0
  %6884 = vadd.xlane.f32.xlu0 %v6883
  %v6885 = vpop.xlane.xlu0 %6884
  %v6886 = vsel %vm1580, %v6698, 0.0
  %6887 = vadd.xlane.f32.xlu0 %v6886
  %v6888 = vpop.xlane.xlu0 %6887
  %v6889 = vsel %vm1580, %v6700, 0.0
  %6890 = vadd.xlane.f32.xlu0 %v6889
  %v6891 = vpop.xlane.xlu0 %6890
  %v6892 = vsel %vm1580, %v6702, 0.0
  %6893 = vadd.xlane.f32.xlu0 %v6892
  %v6894 = vpop.xlane.xlu0 %6893
  %v6895 = vrcp.pop %v6705
  %v6896 = vrcp.pop %v6708
  %v6897 = vrcp.pop %v6711
  %v6898 = vrcp.pop %v6714
  %v6899 = vrcp.pop %v6717
  %v6900 = vrcp.pop %v6720
  %v6901 = vrcp.pop %v6723
  %v6902 = vrcp.pop %v6726
  %v6903 = vrcp.pop %v6729
  %v6904 = vrcp.pop %v6732
  %v6905 = vrcp.pop %v6735
  %v6906 = vrcp.pop %v6738
  %v6907 = vrcp.pop %v6741
  %v6908 = vrcp.pop %v6744
  %v6909 = vrcp.pop %v6747
  %v6910 = vrcp.pop %v6750
  %v6911 = vrcp.pop %v6753
  %v6912 = vrcp.pop %v6756
  %v6913 = vrcp.pop %v6759
  %v6914 = vrcp.pop %v6762
  %v6915 = vrcp.pop %v6765
  %v6916 = vrcp.pop %v6768
  %v6917 = vrcp.pop %v6771
  %v6918 = vrcp.pop %v6774
  %v6919 = vrcp.pop %v6777
  %v6920 = vrcp.pop %v6780
  %v6921 = vrcp.pop %v6783
  %v6922 = vrcp.pop %v6786
  %v6923 = vrcp.pop %v6789
  %v6924 = vrcp.pop %v6792
  %v6925 = vrcp.pop %v6795
  %v6926 = vrcp.pop %v6798
  %v6927 = vrcp.pop %v6801
  %v6928 = vrcp.pop %v6804
  %v6929 = vrcp.pop %v6807
  %v6930 = vrcp.pop %v6810
  %v6931 = vrcp.pop %v6813
  %v6932 = vrcp.pop %v6816
  %v6933 = vrcp.pop %v6819
  %v6934 = vrcp.pop %v6822
  %v6935 = vrcp.pop %v6825
  %v6936 = vrcp.pop %v6828
  %v6937 = vrcp.pop %v6831
  %v6938 = vrcp.pop %v6834
  %v6939 = vrcp.pop %v6837
  %v6940 = vrcp.pop %v6840
  %v6941 = vrcp.pop %v6843
  %v6942 = vrcp.pop %v6846
  %v6943 = vrcp.pop %v6849
  %v6944 = vrcp.pop %v6852
  %v6945 = vrcp.pop %v6855
  %v6946 = vrcp.pop %v6858
  %v6947 = vrcp.pop %v6861
  %v6948 = vrcp.pop %v6864
  %v6949 = vrcp.pop %v6867
  %v6950 = vrcp.pop %v6870
  %v6951 = vrcp.pop %v6873
  %v6952 = vrcp.pop %v6876
  %v6953 = vrcp.pop %v6879
  %v6954 = vrcp.pop %v6882
  %v6955 = vrcp.pop %v6885
  %v6956 = vrcp.pop %v6888
  %v6957 = vrcp.pop %v6891
  %v6958 = vrcp.pop %v6894
  %v6959 = vmul.f32 %v6576, %v6895
  %v6960 = vmul.f32 %v6578, %v6896
  %v6961 = vmul.f32 %v6580, %v6897
  %v6962 = vmul.f32 %v6582, %v6898
  %v6963 = vmul.f32 %v6584, %v6899
  %v6964 = vmul.f32 %v6586, %v6900
  %v6965 = vmul.f32 %v6588, %v6901
  %v6966 = vmul.f32 %v6590, %v6902
  %v6967 = vmul.f32 %v6592, %v6903
  %v6968 = vmul.f32 %v6594, %v6904
  %v6969 = vmul.f32 %v6596, %v6905
  %v6970 = vmul.f32 %v6598, %v6906
  %v6971 = vmul.f32 %v6600, %v6907
  %v6972 = vmul.f32 %v6602, %v6908
  %v6973 = vmul.f32 %v6604, %v6909
  %v6974 = vmul.f32 %v6606, %v6910
  %v6975 = vmul.f32 %v6608, %v6911
  %v6976 = vmul.f32 %v6610, %v6912
  %v6977 = vmul.f32 %v6612, %v6913
  %v6978 = vmul.f32 %v6614, %v6914
  %v6979 = vmul.f32 %v6616, %v6915
  %v6980 = vmul.f32 %v6618, %v6916
  %v6981 = vmul.f32 %v6620, %v6917
  %v6982 = vmul.f32 %v6622, %v6918
  %v6983 = vmul.f32 %v6624, %v6919
  %v6984 = vmul.f32 %v6626, %v6920
  %v6985 = vmul.f32 %v6628, %v6921
  %v6986 = vmul.f32 %v6630, %v6922
  %v6987 = vmul.f32 %v6632, %v6923
  %v6988 = vmul.f32 %v6634, %v6924
  %v6989 = vmul.f32 %v6636, %v6925
  %v6990 = vmul.f32 %v6638, %v6926
  %v6991 = vmul.f32 %v6640, %v6927
  %v6992 = vmul.f32 %v6642, %v6928
  %v6993 = vmul.f32 %v6644, %v6929
  %v6994 = vmul.f32 %v6646, %v6930
  %v6995 = vmul.f32 %v6648, %v6931
  %v6996 = vmul.f32 %v6650, %v6932
  %v6997 = vmul.f32 %v6652, %v6933
  %v6998 = vmul.f32 %v6654, %v6934
  %v6999 = vmul.f32 %v6656, %v6935
  %v7000 = vmul.f32 %v6658, %v6936
  %v7001 = vmul.f32 %v6660, %v6937
  %v7002 = vmul.f32 %v6662, %v6938
  %v7003 = vmul.f32 %v6664, %v6939
  %v7004 = vmul.f32 %v6666, %v6940
  %v7005 = vmul.f32 %v6668, %v6941
  %v7006 = vmul.f32 %v6670, %v6942
  %v7007 = vmul.f32 %v6672, %v6943
  %v7008 = vmul.f32 %v6674, %v6944
  %v7009 = vmul.f32 %v6676, %v6945
  %v7010 = vmul.f32 %v6678, %v6946
  %v7011 = vmul.f32 %v6680, %v6947
  %v7012 = vmul.f32 %v6682, %v6948
  %v7013 = vmul.f32 %v6684, %v6949
  %v7014 = vmul.f32 %v6686, %v6950
  %v7015 = vmul.f32 %v6688, %v6951
  %v7016 = vmul.f32 %v6690, %v6952
  %v7017 = vmul.f32 %v6692, %v6953
  %v7018 = vmul.f32 %v6694, %v6954
  %v7019 = vmul.f32 %v6696, %v6955
  %v7020 = vmul.f32 %v6698, %v6956
  %v7021 = vmul.f32 %v6700, %v6957
  %v7022 = vmul.f32 %v6702, %v6958
  %v7023 = vpack.c.bf16 %v6960, %v6959
  %v7024 = vpack.c.bf16 %v6962, %v6961
  %v7025 = vpack.c.bf16 %v6964, %v6963
  %v7026 = vpack.c.bf16 %v6966, %v6965
  %v7027 = vpack.c.bf16 %v6968, %v6967
  %v7028 = vpack.c.bf16 %v6970, %v6969
  %v7029 = vpack.c.bf16 %v6972, %v6971
  %v7030 = vpack.c.bf16 %v6974, %v6973
  %v7031 = vpack.c.bf16 %v6976, %v6975
  %v7032 = vpack.c.bf16 %v6978, %v6977
  %v7033 = vpack.c.bf16 %v6980, %v6979
  %v7034 = vpack.c.bf16 %v6982, %v6981
  %v7035 = vpack.c.bf16 %v6984, %v6983
  %v7036 = vpack.c.bf16 %v6986, %v6985
  %v7037 = vpack.c.bf16 %v6988, %v6987
  %v7038 = vpack.c.bf16 %v6990, %v6989
  %v7039 = vpack.c.bf16 %v6992, %v6991
  %v7040 = vpack.c.bf16 %v6994, %v6993
  %v7041 = vpack.c.bf16 %v6996, %v6995
  %v7042 = vpack.c.bf16 %v6998, %v6997
  %v7043 = vpack.c.bf16 %v7000, %v6999
  %v7044 = vpack.c.bf16 %v7002, %v7001
  %v7045 = vpack.c.bf16 %v7004, %v7003
  %v7046 = vpack.c.bf16 %v7006, %v7005
  %v7047 = vpack.c.bf16 %v7008, %v7007
  %v7048 = vpack.c.bf16 %v7010, %v7009
  %v7049 = vpack.c.bf16 %v7012, %v7011
  %v7050 = vpack.c.bf16 %v7014, %v7013
  %v7051 = vpack.c.bf16 %v7016, %v7015
  %v7052 = vpack.c.bf16 %v7018, %v7017
  %v7053 = vpack.c.bf16 %v7020, %v7019
  %v7054 = vpack.c.bf16 %v7022, %v7021
  %7055 = vrot.lane.b32.xlu0 %v5415, 64
  %v7056 = vpop.permute.xlu0 %7055
  %7057 = vrot.lane.b32.xlu0 %v5416, 64
  %v7058 = vpop.permute.xlu0 %7057
  %7059 = vrot.lane.b32.xlu0 %v5417, 64
  %v7060 = vpop.permute.xlu0 %7059
  %7061 = vrot.lane.b32.xlu0 %v5418, 64
  %v7062 = vpop.permute.xlu0 %7061
  %v7068 = vsel %vm1580, %v7023, 0
  %v7071 = vsel %vm1580, %v7024, 0
  %v7074 = vsel %vm1580, %v7025, 0
  %v7077 = vsel %vm1580, %v7026, 0
  %7079 = vmatprep.subr.bf16.mxu0 0
  %7080 = vmatpush1.bf16.msra.mxu0 %v7056
  %7081 = vmatprep.subr.bf16.mxu0 0
  %7082 = vmatpush1.bf16.msra.mxu0 %v7058
  %7083 = vmatprep.subr.bf16.mxu0 0
  %7084 = vmatpush1.bf16.msra.mxu0 %v7060
  %7085 = vmatprep.subr.bf16.mxu0 0
  %7086 = vmatpush1.bf16.msra.mxu0 %v7062
  %7087 = vmatprep.subr.bf16.mxu0 0
  %7088 = vmatpush1.bf16.msra.mxu0 0
  %7089 = vmatprep.subr.bf16.mxu0 0
  %7090 = vmatpush1.bf16.msra.mxu0 0
  %7091 = vmatprep.subr.bf16.mxu0 0
  %7092 = vmatpush1.bf16.msra.mxu0 0
  %7093 = vmatprep.subr.bf16.mxu0 0
  %7094 = vmatpush1.bf16.msra.mxu0 0
  %7095 = vmatprep.subr.bf16.mxu0 0
  %7096 = vmatpush1.bf16.msra.mxu0 0
  %7097 = vmatprep.subr.bf16.mxu0 0
  %7098 = vmatpush1.bf16.msra.mxu0 0
  %7099 = vmatprep.subr.bf16.mxu0 0
  %7100 = vmatpush1.bf16.msra.mxu0 0
  %7101 = vmatprep.subr.bf16.mxu0 0
  %7102 = vmatpush1.bf16.msra.mxu0 0
  %7103 = vmatprep.subr.bf16.mxu0 0
  %7104 = vmatpush1.bf16.msra.mxu0 0
  %7105 = vmatprep.subr.bf16.mxu0 0
  %7106 = vmatpush1.bf16.msra.mxu0 0
  %7107 = vmatprep.subr.bf16.mxu0 0
  %7108 = vmatpush1.bf16.msra.mxu0 0
  %7109 = vmatprep.subr.bf16.mxu0 0
  %7110 = vmatpush1.bf16.msra.mxu0 0
  %7111 = vmatprep.mubr.bf16.mxu0 0
  %7112 = vmatmul.mubr.bf16.gmra.mrb[0].mxu0 %v7068
  %v7113 = vpop.f32.mrb[0].mxu0
  %v7114 = vadd.f32 0.0, %v7113
  %v7115 = vpop.f32.mrb[0].mxu0
  %v7116 = vpop.f32.mrb[0].mxu0
  %v7117 = vadd.f32 0.0, %v7116
  %v7118 = vpop.f32.mrb[0].mxu0
  %7119 = vmatprep.mubr.bf16.mxu0 0
  %7120 = vmatmul.mubr.bf16.gmra.mrb[0].mxu0 %v7071
  %v7121 = vpop.f32.mrb[0].mxu0
  %v7122 = vadd.f32 0.0, %v7121
  %v7123 = vpop.f32.mrb[0].mxu0
  %v7124 = vpop.f32.mrb[0].mxu0
  %v7125 = vadd.f32 0.0, %v7124
  %v7126 = vpop.f32.mrb[0].mxu0
  %7127 = vmatprep.mubr.bf16.mxu0 0
  %7128 = vmatmul.mubr.bf16.gmra.mrb[0].mxu0 %v7074
  %v7129 = vpop.f32.mrb[0].mxu0
  %v7130 = vadd.f32 0.0, %v7129
  %v7131 = vpop.f32.mrb[0].mxu0
  %v7132 = vpop.f32.mrb[0].mxu0
  %v7133 = vadd.f32 0.0, %v7132
  %v7134 = vpop.f32.mrb[0].mxu0
  %7135 = vmatprep.mubr.bf16.mxu0 0
  %7136 = vmatmul.mubr.bf16.gmra.mrb[0].mxu0 %v7077
  %v7137 = vpop.f32.mrb[0].mxu0
  %v7138 = vadd.f32 0.0, %v7137
  %v7139 = vpop.f32.mrb[0].mxu0
  %v7140 = vpop.f32.mrb[0].mxu0
  %v7141 = vadd.f32 0.0, %v7140
  %v7142 = vpop.f32.mrb[0].mxu0
  %7143 = vdwg.mxu0
  %7144 = vrot.lane.b32.xlu0 %v5428, 64
  %v7145 = vpop.permute.xlu0 %7144
  %7146 = vrot.lane.b32.xlu0 %v5430, 64
  %v7147 = vpop.permute.xlu0 %7146
  %7148 = vrot.lane.b32.xlu0 %v5432, 64
  %v7149 = vpop.permute.xlu0 %7148
  %7150 = vrot.lane.b32.xlu0 %v5434, 64
  %v7151 = vpop.permute.xlu0 %7150
  %v7157 = vsel %vm1580, %v7027, 0
  %v7160 = vsel %vm1580, %v7028, 0
  %v7163 = vsel %vm1580, %v7029, 0
  %v7166 = vsel %vm1580, %v7030, 0
  %7168 = vmatprep.subr.bf16.mxu0 0
  %7169 = vmatpush1.bf16.msra.mxu0 %v7145
  %7170 = vmatprep.subr.bf16.mxu0 0
  %7171 = vmatpush1.bf16.msra.mxu0 %v7147
  %7172 = vmatprep.subr.bf16.mxu0 0
  %7173 = vmatpush1.bf16.msra.mxu0 %v7149
  %7174 = vmatprep.subr.bf16.mxu0 0
  %7175 = vmatpush1.bf16.msra.mxu0 %v7151
  %7176 = vmatprep.subr.bf16.mxu0 0
  %7177 = vmatpush1.bf16.msra.mxu0 0
  %7178 = vmatprep.subr.bf16.mxu0 0
  %7179 = vmatpush1.bf16.msra.mxu0 0
  %7180 = vmatprep.subr.bf16.mxu0 0
  %7181 = vmatpush1.bf16.msra.mxu0 0
  %7182 = vmatprep.subr.bf16.mxu0 0
  %7183 = vmatpush1.bf16.msra.mxu0 0
  %7184 = vmatprep.subr.bf16.mxu0 0
  %7185 = vmatpush1.bf16.msra.mxu0 0
  %7186 = vmatprep.subr.bf16.mxu0 0
  %7187 = vmatpush1.bf16.msra.mxu0 0
  %7188 = vmatprep.subr.bf16.mxu0 0
  %7189 = vmatpush1.bf16.msra.mxu0 0
  %7190 = vmatprep.subr.bf16.mxu0 0
  %7191 = vmatpush1.bf16.msra.mxu0 0
  %7192 = vmatprep.subr.bf16.mxu0 0
  %7193 = vmatpush1.bf16.msra.mxu0 0
  %7194 = vmatprep.subr.bf16.mxu0 0
  %7195 = vmatpush1.bf16.msra.mxu0 0
  %7196 = vmatprep.subr.bf16.mxu0 0
  %7197 = vmatpush1.bf16.msra.mxu0 0
  %7198 = vmatprep.subr.bf16.mxu0 0
  %7199 = vmatpush1.bf16.msra.mxu0 0
  %7200 = vmatprep.mubr.bf16.mxu0 0
  %7201 = vmatmul.mubr.bf16.gmra.mrb[0].mxu0 %v7157
  %v7202 = vpop.f32.mrb[0].mxu0
  %v7203 = vadd.f32 0.0, %v7202
  %v7204 = vpop.f32.mrb[0].mxu0
  %v7205 = vpop.f32.mrb[0].mxu0
  %v7206 = vadd.f32 0.0, %v7205
  %v7207 = vpop.f32.mrb[0].mxu0
  %7208 = vmatprep.mubr.bf16.mxu0 0
  %7209 = vmatmul.mubr.bf16.gmra.mrb[0].mxu0 %v7160
  %v7210 = vpop.f32.mrb[0].mxu0
  %v7211 = vadd.f32 0.0, %v7210
  %v7212 = vpop.f32.mrb[0].mxu0
  %v7213 = vpop.f32.mrb[0].mxu0
  %v7214 = vadd.f32 0.0, %v7213
  %v7215 = vpop.f32.mrb[0].mxu0
  %7216 = vmatprep.mubr.bf16.mxu0 0
  %7217 = vmatmul.mubr.bf16.gmra.mrb[0].mxu0 %v7163
  %v7218 = vpop.f32.mrb[0].mxu0
  %v7219 = vadd.f32 0.0, %v7218
  %v7220 = vpop.f32.mrb[0].mxu0
  %v7221 = vpop.f32.mrb[0].mxu0
  %v7222 = vadd.f32 0.0, %v7221
  %v7223 = vpop.f32.mrb[0].mxu0
  %7224 = vmatprep.mubr.bf16.mxu0 0
  %7225 = vmatmul.mubr.bf16.gmra.mrb[0].mxu0 %v7166
  %v7226 = vpop.f32.mrb[0].mxu0
  %v7227 = vadd.f32 0.0, %v7226
  %v7228 = vpop.f32.mrb[0].mxu0
  %v7229 = vpop.f32.mrb[0].mxu0
  %v7230 = vadd.f32 0.0, %v7229
  %v7231 = vpop.f32.mrb[0].mxu0
  %7232 = vdwg.mxu0
  %7233 = vrot.lane.b32.xlu0 %v5436, 64
  %v7234 = vpop.permute.xlu0 %7233
  %7235 = vrot.lane.b32.xlu0 %v5438, 64
  %v7236 = vpop.permute.xlu0 %7235
  %7237 = vrot.lane.b32.xlu0 %v5440, 64
  %v7238 = vpop.permute.xlu0 %7237
  %7239 = vrot.lane.b32.xlu0 %v5442, 64
  %v7240 = vpop.permute.xlu0 %7239
  %v7246 = vsel %vm1580, %v7031, 0
  %v7249 = vsel %vm1580, %v7032, 0
  %v7252 = vsel %vm1580, %v7033, 0
  %v7255 = vsel %vm1580, %v7034, 0
  %7257 = vmatprep.subr.bf16.mxu0 0
  %7258 = vmatpush1.bf16.msra.mxu0 %v7234
  %7259 = vmatprep.subr.bf16.mxu0 0
  %7260 = vmatpush1.bf16.msra.mxu0 %v7236
  %7261 = vmatprep.subr.bf16.mxu0 0
  %7262 = vmatpush1.bf16.msra.mxu0 %v7238
  %7263 = vmatprep.subr.bf16.mxu0 0
  %7264 = vmatpush1.bf16.msra.mxu0 %v7240
  %7265 = vmatprep.subr.bf16.mxu0 0
  %7266 = vmatpush1.bf16.msra.mxu0 0
  %7267 = vmatprep.subr.bf16.mxu0 0
  %7268 = vmatpush1.bf16.msra.mxu0 0
  %7269 = vmatprep.subr.bf16.mxu0 0
  %7270 = vmatpush1.bf16.msra.mxu0 0
  %7271 = vmatprep.subr.bf16.mxu0 0
  %7272 = vmatpush1.bf16.msra.mxu0 0
  %7273 = vmatprep.subr.bf16.mxu0 0
  %7274 = vmatpush1.bf16.msra.mxu0 0
  %7275 = vmatprep.subr.bf16.mxu0 0
  %7276 = vmatpush1.bf16.msra.mxu0 0
  %7277 = vmatprep.subr.bf16.mxu0 0
  %7278 = vmatpush1.bf16.msra.mxu0 0
  %7279 = vmatprep.subr.bf16.mxu0 0
  %7280 = vmatpush1.bf16.msra.mxu0 0
  %7281 = vmatprep.subr.bf16.mxu0 0
  %7282 = vmatpush1.bf16.msra.mxu0 0
  %7283 = vmatprep.subr.bf16.mxu0 0
  %7284 = vmatpush1.bf16.msra.mxu0 0
  %7285 = vmatprep.subr.bf16.mxu0 0
  %7286 = vmatpush1.bf16.msra.mxu0 0
  %7287 = vmatprep.subr.bf16.mxu0 0
  %7288 = vmatpush1.bf16.msra.mxu0 0
  %7289 = vmatprep.mubr.bf16.mxu0 0
  %7290 = vmatmul.mubr.bf16.gmra.mrb[0].mxu0 %v7246
  %v7291 = vpop.f32.mrb[0].mxu0
  %v7292 = vadd.f32 0.0, %v7291
  %v7293 = vpop.f32.mrb[0].mxu0
  %v7294 = vpop.f32.mrb[0].mxu0
  %v7295 = vadd.f32 0.0, %v7294
  %v7296 = vpop.f32.mrb[0].mxu0
  %7297 = vmatprep.mubr.bf16.mxu0 0
  %7298 = vmatmul.mubr.bf16.gmra.mrb[0].mxu0 %v7249
  %v7299 = vpop.f32.mrb[0].mxu0
  %v7300 = vadd.f32 0.0, %v7299
  %v7301 = vpop.f32.mrb[0].mxu0
  %v7302 = vpop.f32.mrb[0].mxu0
  %v7303 = vadd.f32 0.0, %v7302
  %v7304 = vpop.f32.mrb[0].mxu0
  %7305 = vmatprep.mubr.bf16.mxu0 0
  %7306 = vmatmul.mubr.bf16.gmra.mrb[0].mxu0 %v7252
  %v7307 = vpop.f32.mrb[0].mxu0
  %v7308 = vadd.f32 0.0, %v7307
  %v7309 = vpop.f32.mrb[0].mxu0
  %v7310 = vpop.f32.mrb[0].mxu0
  %v7311 = vadd.f32 0.0, %v7310
  %v7312 = vpop.f32.mrb[0].mxu0
  %7313 = vmatprep.mubr.bf16.mxu0 0
  %7314 = vmatmul.mubr.bf16.gmra.mrb[0].mxu0 %v7255
  %v7315 = vpop.f32.mrb[0].mxu0
  %v7316 = vadd.f32 0.0, %v7315
  %v7317 = vpop.f32.mrb[0].mxu0
  %v7318 = vpop.f32.mrb[0].mxu0
  %v7319 = vadd.f32 0.0, %v7318
  %v7320 = vpop.f32.mrb[0].mxu0
  %7321 = vdwg.mxu0
  %7322 = vrot.lane.b32.xlu0 %v5444, 64
  %v7323 = vpop.permute.xlu0 %7322
  %7324 = vrot.lane.b32.xlu0 %v5446, 64
  %v7325 = vpop.permute.xlu0 %7324
  %7326 = vrot.lane.b32.xlu0 %v5448, 64
  %v7327 = vpop.permute.xlu0 %7326
  %7328 = vrot.lane.b32.xlu0 %v5450, 64
  %v7329 = vpop.permute.xlu0 %7328
  %v7335 = vsel %vm1580, %v7035, 0
  %v7338 = vsel %vm1580, %v7036, 0
  %v7341 = vsel %vm1580, %v7037, 0
  %v7344 = vsel %vm1580, %v7038, 0
  %7346 = vmatprep.subr.bf16.mxu0 0
  %7347 = vmatpush1.bf16.msra.mxu0 %v7323
  %7348 = vmatprep.subr.bf16.mxu0 0
  %7349 = vmatpush1.bf16.msra.mxu0 %v7325
  %7350 = vmatprep.subr.bf16.mxu0 0
  %7351 = vmatpush1.bf16.msra.mxu0 %v7327
  %7352 = vmatprep.subr.bf16.mxu0 0
  %7353 = vmatpush1.bf16.msra.mxu0 %v7329
  %7354 = vmatprep.subr.bf16.mxu0 0
  %7355 = vmatpush1.bf16.msra.mxu0 0
  %7356 = vmatprep.subr.bf16.mxu0 0
  %7357 = vmatpush1.bf16.msra.mxu0 0
  %7358 = vmatprep.subr.bf16.mxu0 0
  %7359 = vmatpush1.bf16.msra.mxu0 0
  %7360 = vmatprep.subr.bf16.mxu0 0
  %7361 = vmatpush1.bf16.msra.mxu0 0
  %7362 = vmatprep.subr.bf16.mxu0 0
  %7363 = vmatpush1.bf16.msra.mxu0 0
  %7364 = vmatprep.subr.bf16.mxu0 0
  %7365 = vmatpush1.bf16.msra.mxu0 0
  %7366 = vmatprep.subr.bf16.mxu0 0
  %7367 = vmatpush1.bf16.msra.mxu0 0
  %7368 = vmatprep.subr.bf16.mxu0 0
  %7369 = vmatpush1.bf16.msra.mxu0 0
  %7370 = vmatprep.subr.bf16.mxu0 0
  %7371 = vmatpush1.bf16.msra.mxu0 0
  %7372 = vmatprep.subr.bf16.mxu0 0
  %7373 = vmatpush1.bf16.msra.mxu0 0
  %7374 = vmatprep.subr.bf16.mxu0 0
  %7375 = vmatpush1.bf16.msra.mxu0 0
  %7376 = vmatprep.subr.bf16.mxu0 0
  %7377 = vmatpush1.bf16.msra.mxu0 0
  %7378 = vmatprep.mubr.bf16.mxu0 0
  %7379 = vmatmul.mubr.bf16.gmra.mrb[0].mxu0 %v7335
  %v7380 = vpop.f32.mrb[0].mxu0
  %v7381 = vadd.f32 0.0, %v7380
  %v7382 = vpop.f32.mrb[0].mxu0
  %v7383 = vpop.f32.mrb[0].mxu0
  %v7384 = vadd.f32 0.0, %v7383
  %v7385 = vpop.f32.mrb[0].mxu0
  %7386 = vmatprep.mubr.bf16.mxu0 0
  %7387 = vmatmul.mubr.bf16.gmra.mrb[0].mxu0 %v7338
  %v7388 = vpop.f32.mrb[0].mxu0
  %v7389 = vadd.f32 0.0, %v7388
  %v7390 = vpop.f32.mrb[0].mxu0
  %v7391 = vpop.f32.mrb[0].mxu0
  %v7392 = vadd.f32 0.0, %v7391
  %v7393 = vpop.f32.mrb[0].mxu0
  %7394 = vmatprep.mubr.bf16.mxu0 0
  %7395 = vmatmul.mubr.bf16.gmra.mrb[0].mxu0 %v7341
  %v7396 = vpop.f32.mrb[0].mxu0
  %v7397 = vadd.f32 0.0, %v7396
  %v7398 = vpop.f32.mrb[0].mxu0
  %v7399 = vpop.f32.mrb[0].mxu0
  %v7400 = vadd.f32 0.0, %v7399
  %v7401 = vpop.f32.mrb[0].mxu0
  %7402 = vmatprep.mubr.bf16.mxu0 0
  %7403 = vmatmul.mubr.bf16.gmra.mrb[0].mxu0 %v7344
  %v7404 = vpop.f32.mrb[0].mxu0
  %v7405 = vadd.f32 0.0, %v7404
  %v7406 = vpop.f32.mrb[0].mxu0
  %v7407 = vpop.f32.mrb[0].mxu0
  %v7408 = vadd.f32 0.0, %v7407
  %v7409 = vpop.f32.mrb[0].mxu0
  %7410 = vdwg.mxu0
  %7411 = vrot.lane.b32.xlu0 %v5419, 64
  %v7412 = vpop.permute.xlu0 %7411
  %7413 = vrot.lane.b32.xlu0 %v5420, 64
  %v7414 = vpop.permute.xlu0 %7413
  %7415 = vrot.lane.b32.xlu0 %v5421, 64
  %v7416 = vpop.permute.xlu0 %7415
  %7417 = vrot.lane.b32.xlu0 %v5422, 64
  %v7418 = vpop.permute.xlu0 %7417
  %v7424 = vsel %vm1580, %v7039, 0
  %v7427 = vsel %vm1580, %v7040, 0
  %v7430 = vsel %vm1580, %v7041, 0
  %v7433 = vsel %vm1580, %v7042, 0
  %7435 = vmatprep.subr.bf16.mxu0 0
  %7436 = vmatpush1.bf16.msra.mxu0 %v7412
  %7437 = vmatprep.subr.bf16.mxu0 0
  %7438 = vmatpush1.bf16.msra.mxu0 %v7414
  %7439 = vmatprep.subr.bf16.mxu0 0
  %7440 = vmatpush1.bf16.msra.mxu0 %v7416
  %7441 = vmatprep.subr.bf16.mxu0 0
  %7442 = vmatpush1.bf16.msra.mxu0 %v7418
  %7443 = vmatprep.subr.bf16.mxu0 0
  %7444 = vmatpush1.bf16.msra.mxu0 0
  %7445 = vmatprep.subr.bf16.mxu0 0
  %7446 = vmatpush1.bf16.msra.mxu0 0
  %7447 = vmatprep.subr.bf16.mxu0 0
  %7448 = vmatpush1.bf16.msra.mxu0 0
  %7449 = vmatprep.subr.bf16.mxu0 0
  %7450 = vmatpush1.bf16.msra.mxu0 0
  %7451 = vmatprep.subr.bf16.mxu0 0
  %7452 = vmatpush1.bf16.msra.mxu0 0
  %7453 = vmatprep.subr.bf16.mxu0 0
  %7454 = vmatpush1.bf16.msra.mxu0 0
  %7455 = vmatprep.subr.bf16.mxu0 0
  %7456 = vmatpush1.bf16.msra.mxu0 0
  %7457 = vmatprep.subr.bf16.mxu0 0
  %7458 = vmatpush1.bf16.msra.mxu0 0
  %7459 = vmatprep.subr.bf16.mxu0 0
  %7460 = vmatpush1.bf16.msra.mxu0 0
  %7461 = vmatprep.subr.bf16.mxu0 0
  %7462 = vmatpush1.bf16.msra.mxu0 0
  %7463 = vmatprep.subr.bf16.mxu0 0
  %7464 = vmatpush1.bf16.msra.mxu0 0
  %7465 = vmatprep.subr.bf16.mxu0 0
  %7466 = vmatpush1.bf16.msra.mxu0 0
  %7467 = vmatprep.mubr.bf16.mxu0 0
  %7468 = vmatmul.mubr.bf16.gmra.mrb[0].mxu0 %v7424
  %v7469 = vpop.f32.mrb[0].mxu0
  %v7470 = vadd.f32 0.0, %v7469
  %v7471 = vpop.f32.mrb[0].mxu0
  %v7472 = vpop.f32.mrb[0].mxu0
  %v7473 = vadd.f32 0.0, %v7472
  %v7474 = vpop.f32.mrb[0].mxu0
  %7475 = vmatprep.mubr.bf16.mxu0 0
  %7476 = vmatmul.mubr.bf16.gmra.mrb[0].mxu0 %v7427
  %v7477 = vpop.f32.mrb[0].mxu0
  %v7478 = vadd.f32 0.0, %v7477
  %v7479 = vpop.f32.mrb[0].mxu0
  %v7480 = vpop.f32.mrb[0].mxu0
  %v7481 = vadd.f32 0.0, %v7480
  %v7482 = vpop.f32.mrb[0].mxu0
  %7483 = vmatprep.mubr.bf16.mxu0 0
  %7484 = vmatmul.mubr.bf16.gmra.mrb[0].mxu0 %v7430
  %v7485 = vpop.f32.mrb[0].mxu0
  %v7486 = vadd.f32 0.0, %v7485
  %v7487 = vpop.f32.mrb[0].mxu0
  %v7488 = vpop.f32.mrb[0].mxu0
  %v7489 = vadd.f32 0.0, %v7488
  %v7490 = vpop.f32.mrb[0].mxu0
  %7491 = vmatprep.mubr.bf16.mxu0 0
  %7492 = vmatmul.mubr.bf16.gmra.mrb[0].mxu0 %v7433
  %v7493 = vpop.f32.mrb[0].mxu0
  %v7494 = vadd.f32 0.0, %v7493
  %v7495 = vpop.f32.mrb[0].mxu0
  %v7496 = vpop.f32.mrb[0].mxu0
  %v7497 = vadd.f32 0.0, %v7496
  %v7498 = vpop.f32.mrb[0].mxu0
  %7499 = vdwg.mxu0
  %7500 = vrot.lane.b32.xlu0 %v5456, 64
  %v7501 = vpop.permute.xlu0 %7500
  %7502 = vrot.lane.b32.xlu0 %v5458, 64
  %v7503 = vpop.permute.xlu0 %7502
  %7504 = vrot.lane.b32.xlu0 %v5460, 64
  %v7505 = vpop.permute.xlu0 %7504
  %7506 = vrot.lane.b32.xlu0 %v5462, 64
  %v7507 = vpop.permute.xlu0 %7506
  %v7513 = vsel %vm1580, %v7043, 0
  %v7516 = vsel %vm1580, %v7044, 0
  %v7519 = vsel %vm1580, %v7045, 0
  %v7522 = vsel %vm1580, %v7046, 0
  %7524 = vmatprep.subr.bf16.mxu0 0
  %7525 = vmatpush1.bf16.msra.mxu0 %v7501
  %7526 = vmatprep.subr.bf16.mxu0 0
  %7527 = vmatpush1.bf16.msra.mxu0 %v7503
  %7528 = vmatprep.subr.bf16.mxu0 0
  %7529 = vmatpush1.bf16.msra.mxu0 %v7505
  %7530 = vmatprep.subr.bf16.mxu0 0
  %7531 = vmatpush1.bf16.msra.mxu0 %v7507
  %7532 = vmatprep.subr.bf16.mxu0 0
  %7533 = vmatpush1.bf16.msra.mxu0 0
  %7534 = vmatprep.subr.bf16.mxu0 0
  %7535 = vmatpush1.bf16.msra.mxu0 0
  %7536 = vmatprep.subr.bf16.mxu0 0
  %7537 = vmatpush1.bf16.msra.mxu0 0
  %7538 = vmatprep.subr.bf16.mxu0 0
  %7539 = vmatpush1.bf16.msra.mxu0 0
  %7540 = vmatprep.subr.bf16.mxu0 0
  %7541 = vmatpush1.bf16.msra.mxu0 0
  %7542 = vmatprep.subr.bf16.mxu0 0
  %7543 = vmatpush1.bf16.msra.mxu0 0
  %7544 = vmatprep.subr.bf16.mxu0 0
  %7545 = vmatpush1.bf16.msra.mxu0 0
  %7546 = vmatprep.subr.bf16.mxu0 0
  %7547 = vmatpush1.bf16.msra.mxu0 0
  %7548 = vmatprep.subr.bf16.mxu0 0
  %7549 = vmatpush1.bf16.msra.mxu0 0
  %7550 = vmatprep.subr.bf16.mxu0 0
  %7551 = vmatpush1.bf16.msra.mxu0 0
  %7552 = vmatprep.subr.bf16.mxu0 0
  %7553 = vmatpush1.bf16.msra.mxu0 0
  %7554 = vmatprep.subr.bf16.mxu0 0
  %7555 = vmatpush1.bf16.msra.mxu0 0
  %7556 = vmatprep.mubr.bf16.mxu0 0
  %7557 = vmatmul.mubr.bf16.gmra.mrb[0].mxu0 %v7513
  %v7558 = vpop.f32.mrb[0].mxu0
  %v7559 = vadd.f32 0.0, %v7558
  %v7560 = vpop.f32.mrb[0].mxu0
  %v7561 = vpop.f32.mrb[0].mxu0
  %v7562 = vadd.f32 0.0, %v7561
  %v7563 = vpop.f32.mrb[0].mxu0
  %7564 = vmatprep.mubr.bf16.mxu0 0
  %7565 = vmatmul.mubr.bf16.gmra.mrb[0].mxu0 %v7516
  %v7566 = vpop.f32.mrb[0].mxu0
  %v7567 = vadd.f32 0.0, %v7566
  %v7568 = vpop.f32.mrb[0].mxu0
  %v7569 = vpop.f32.mrb[0].mxu0
  %v7570 = vadd.f32 0.0, %v7569
  %v7571 = vpop.f32.mrb[0].mxu0
  %7572 = vmatprep.mubr.bf16.mxu0 0
  %7573 = vmatmul.mubr.bf16.gmra.mrb[0].mxu0 %v7519
  %v7574 = vpop.f32.mrb[0].mxu0
  %v7575 = vadd.f32 0.0, %v7574
  %v7576 = vpop.f32.mrb[0].mxu0
  %v7577 = vpop.f32.mrb[0].mxu0
  %v7578 = vadd.f32 0.0, %v7577
  %v7579 = vpop.f32.mrb[0].mxu0
  %7580 = vmatprep.mubr.bf16.mxu0 0
  %7581 = vmatmul.mubr.bf16.gmra.mrb[0].mxu0 %v7522
  %v7582 = vpop.f32.mrb[0].mxu0
  %v7583 = vadd.f32 0.0, %v7582
  %v7584 = vpop.f32.mrb[0].mxu0
  %v7585 = vpop.f32.mrb[0].mxu0
  %v7586 = vadd.f32 0.0, %v7585
  %v7587 = vpop.f32.mrb[0].mxu0
  %7588 = vdwg.mxu0
  %7589 = vrot.lane.b32.xlu0 %v5464, 64
  %v7590 = vpop.permute.xlu0 %7589
  %7591 = vrot.lane.b32.xlu0 %v5466, 64
  %v7592 = vpop.permute.xlu0 %7591
  %7593 = vrot.lane.b32.xlu0 %v5468, 64
  %v7594 = vpop.permute.xlu0 %7593
  %7595 = vrot.lane.b32.xlu0 %v5470, 64
  %v7596 = vpop.permute.xlu0 %7595
  %v7602 = vsel %vm1580, %v7047, 0
  %v7605 = vsel %vm1580, %v7048, 0
  %v7608 = vsel %vm1580, %v7049, 0
  %v7611 = vsel %vm1580, %v7050, 0
  %7613 = vmatprep.subr.bf16.mxu0 0
  %7614 = vmatpush1.bf16.msra.mxu0 %v7590
  %7615 = vmatprep.subr.bf16.mxu0 0
  %7616 = vmatpush1.bf16.msra.mxu0 %v7592
  %7617 = vmatprep.subr.bf16.mxu0 0
  %7618 = vmatpush1.bf16.msra.mxu0 %v7594
  %7619 = vmatprep.subr.bf16.mxu0 0
  %7620 = vmatpush1.bf16.msra.mxu0 %v7596
  %7621 = vmatprep.subr.bf16.mxu0 0
  %7622 = vmatpush1.bf16.msra.mxu0 0
  %7623 = vmatprep.subr.bf16.mxu0 0
  %7624 = vmatpush1.bf16.msra.mxu0 0
  %7625 = vmatprep.subr.bf16.mxu0 0
  %7626 = vmatpush1.bf16.msra.mxu0 0
  %7627 = vmatprep.subr.bf16.mxu0 0
  %7628 = vmatpush1.bf16.msra.mxu0 0
  %7629 = vmatprep.subr.bf16.mxu0 0
  %7630 = vmatpush1.bf16.msra.mxu0 0
  %7631 = vmatprep.subr.bf16.mxu0 0
  %7632 = vmatpush1.bf16.msra.mxu0 0
  %7633 = vmatprep.subr.bf16.mxu0 0
  %7634 = vmatpush1.bf16.msra.mxu0 0
  %7635 = vmatprep.subr.bf16.mxu0 0
  %7636 = vmatpush1.bf16.msra.mxu0 0
  %7637 = vmatprep.subr.bf16.mxu0 0
  %7638 = vmatpush1.bf16.msra.mxu0 0
  %7639 = vmatprep.subr.bf16.mxu0 0
  %7640 = vmatpush1.bf16.msra.mxu0 0
  %7641 = vmatprep.subr.bf16.mxu0 0
  %7642 = vmatpush1.bf16.msra.mxu0 0
  %7643 = vmatprep.subr.bf16.mxu0 0
  %7644 = vmatpush1.bf16.msra.mxu0 0
  %7645 = vmatprep.mubr.bf16.mxu0 0
  %7646 = vmatmul.mubr.bf16.gmra.mrb[0].mxu0 %v7602
  %v7647 = vpop.f32.mrb[0].mxu0
  %v7648 = vadd.f32 0.0, %v7647
  %v7649 = vpop.f32.mrb[0].mxu0
  %v7650 = vpop.f32.mrb[0].mxu0
  %v7651 = vadd.f32 0.0, %v7650
  %v7652 = vpop.f32.mrb[0].mxu0
  %7653 = vmatprep.mubr.bf16.mxu0 0
  %7654 = vmatmul.mubr.bf16.gmra.mrb[0].mxu0 %v7605
  %v7655 = vpop.f32.mrb[0].mxu0
  %v7656 = vadd.f32 0.0, %v7655
  %v7657 = vpop.f32.mrb[0].mxu0
  %v7658 = vpop.f32.mrb[0].mxu0
  %v7659 = vadd.f32 0.0, %v7658
  %v7660 = vpop.f32.mrb[0].mxu0
  %7661 = vmatprep.mubr.bf16.mxu0 0
  %7662 = vmatmul.mubr.bf16.gmra.mrb[0].mxu0 %v7608
  %v7663 = vpop.f32.mrb[0].mxu0
  %v7664 = vadd.f32 0.0, %v7663
  %v7665 = vpop.f32.mrb[0].mxu0
  %v7666 = vpop.f32.mrb[0].mxu0
  %v7667 = vadd.f32 0.0, %v7666
  %v7668 = vpop.f32.mrb[0].mxu0
  %7669 = vmatprep.mubr.bf16.mxu0 0
  %7670 = vmatmul.mubr.bf16.gmra.mrb[0].mxu0 %v7611
  %v7671 = vpop.f32.mrb[0].mxu0
  %v7672 = vadd.f32 0.0, %v7671
  %v7673 = vpop.f32.mrb[0].mxu0
  %v7674 = vpop.f32.mrb[0].mxu0
  %v7675 = vadd.f32 0.0, %v7674
  %v7676 = vpop.f32.mrb[0].mxu0
  %7677 = vdwg.mxu0
  %7678 = vrot.lane.b32.xlu0 %v5472, 64
  %v7679 = vpop.permute.xlu0 %7678
  %7680 = vrot.lane.b32.xlu0 %v5474, 64
  %v7681 = vpop.permute.xlu0 %7680
  %7682 = vrot.lane.b32.xlu0 %v5476, 64
  %v7683 = vpop.permute.xlu0 %7682
  %7684 = vrot.lane.b32.xlu0 %v5478, 64
  %v7685 = vpop.permute.xlu0 %7684
  %v7691 = vsel %vm1580, %v7051, 0
  %v7694 = vsel %vm1580, %v7052, 0
  %v7697 = vsel %vm1580, %v7053, 0
  %v7700 = vsel %vm1580, %v7054, 0
  %7702 = vmatprep.subr.bf16.mxu0 0
  %7703 = vmatpush1.bf16.msra.mxu0 %v7679
  %7704 = vmatprep.subr.bf16.mxu0 0
  %7705 = vmatpush1.bf16.msra.mxu0 %v7681
  %7706 = vmatprep.subr.bf16.mxu0 0
  %7707 = vmatpush1.bf16.msra.mxu0 %v7683
  %7708 = vmatprep.subr.bf16.mxu0 0
  %7709 = vmatpush1.bf16.msra.mxu0 %v7685
  %7710 = vmatprep.subr.bf16.mxu0 0
  %7711 = vmatpush1.bf16.msra.mxu0 0
  %7712 = vmatprep.subr.bf16.mxu0 0
  %7713 = vmatpush1.bf16.msra.mxu0 0
  %7714 = vmatprep.subr.bf16.mxu0 0
  %7715 = vmatpush1.bf16.msra.mxu0 0
  %7716 = vmatprep.subr.bf16.mxu0 0
  %7717 = vmatpush1.bf16.msra.mxu0 0
  %7718 = vmatprep.subr.bf16.mxu0 0
  %7719 = vmatpush1.bf16.msra.mxu0 0
  %7720 = vmatprep.subr.bf16.mxu0 0
  %7721 = vmatpush1.bf16.msra.mxu0 0
  %7722 = vmatprep.subr.bf16.mxu0 0
  %7723 = vmatpush1.bf16.msra.mxu0 0
  %7724 = vmatprep.subr.bf16.mxu0 0
  %7725 = vmatpush1.bf16.msra.mxu0 0
  %7726 = vmatprep.subr.bf16.mxu0 0
  %7727 = vmatpush1.bf16.msra.mxu0 0
  %7728 = vmatprep.subr.bf16.mxu0 0
  %7729 = vmatpush1.bf16.msra.mxu0 0
  %7730 = vmatprep.subr.bf16.mxu0 0
  %7731 = vmatpush1.bf16.msra.mxu0 0
  %7732 = vmatprep.subr.bf16.mxu0 0
  %7733 = vmatpush1.bf16.msra.mxu0 0
  %7734 = vmatprep.mubr.bf16.mxu0 0
  %7735 = vmatmul.mubr.bf16.gmra.mrb[0].mxu0 %v7691
  %v7736 = vpop.f32.mrb[0].mxu0
  %v7737 = vadd.f32 0.0, %v7736
  %v7738 = vpop.f32.mrb[0].mxu0
  %v7739 = vpop.f32.mrb[0].mxu0
  %v7740 = vadd.f32 0.0, %v7739
  %v7741 = vpop.f32.mrb[0].mxu0
  %7742 = vmatprep.mubr.bf16.mxu0 0
  %7743 = vmatmul.mubr.bf16.gmra.mrb[0].mxu0 %v7694
  %v7744 = vpop.f32.mrb[0].mxu0
  %v7745 = vadd.f32 0.0, %v7744
  %v7746 = vpop.f32.mrb[0].mxu0
  %v7747 = vpop.f32.mrb[0].mxu0
  %v7748 = vadd.f32 0.0, %v7747
  %v7749 = vpop.f32.mrb[0].mxu0
  %7750 = vmatprep.mubr.bf16.mxu0 0
  %7751 = vmatmul.mubr.bf16.gmra.mrb[0].mxu0 %v7697
  %v7752 = vpop.f32.mrb[0].mxu0
  %v7753 = vadd.f32 0.0, %v7752
  %v7754 = vpop.f32.mrb[0].mxu0
  %v7755 = vpop.f32.mrb[0].mxu0
  %v7756 = vadd.f32 0.0, %v7755
  %v7757 = vpop.f32.mrb[0].mxu0
  %7758 = vmatprep.mubr.bf16.mxu0 0
  %7759 = vmatmul.mubr.bf16.gmra.mrb[0].mxu0 %v7700
  %v7760 = vpop.f32.mrb[0].mxu0
  %v7761 = vadd.f32 0.0, %v7760
  %v7762 = vpop.f32.mrb[0].mxu0
  %v7763 = vpop.f32.mrb[0].mxu0
  %v7764 = vadd.f32 0.0, %v7763
  %v7765 = vpop.f32.mrb[0].mxu0
  %7766 = vdwg.mxu0
  %7775 = vrot.lane.b32.xlu0 %v7203, 8
  %v7776 = vpop.permute.xlu0 %7775
  %7777 = vrot.lane.b32.xlu0 %v7206, 8
  %v7778 = vpop.permute.xlu0 %7777
  %7779 = vrot.lane.b32.xlu0 %v7211, 8
  %v7780 = vpop.permute.xlu0 %7779
  %7781 = vrot.lane.b32.xlu0 %v7214, 8
  %v7782 = vpop.permute.xlu0 %7781
  %7783 = vrot.lane.b32.xlu0 %v7219, 8
  %v7784 = vpop.permute.xlu0 %7783
  %7785 = vrot.lane.b32.xlu0 %v7222, 8
  %v7786 = vpop.permute.xlu0 %7785
  %7787 = vrot.lane.b32.xlu0 %v7227, 8
  %v7788 = vpop.permute.xlu0 %7787
  %7789 = vrot.lane.b32.xlu0 %v7230, 8
  %v7790 = vpop.permute.xlu0 %7789
  %7807 = vrot.lane.b32.xlu0 %v7292, 16
  %v7808 = vpop.permute.xlu0 %7807
  %7809 = vrot.lane.b32.xlu0 %v7295, 16
  %v7810 = vpop.permute.xlu0 %7809
  %7811 = vrot.lane.b32.xlu0 %v7300, 16
  %v7812 = vpop.permute.xlu0 %7811
  %7813 = vrot.lane.b32.xlu0 %v7303, 16
  %v7814 = vpop.permute.xlu0 %7813
  %7815 = vrot.lane.b32.xlu0 %v7308, 16
  %v7816 = vpop.permute.xlu0 %7815
  %7817 = vrot.lane.b32.xlu0 %v7311, 16
  %v7818 = vpop.permute.xlu0 %7817
  %7819 = vrot.lane.b32.xlu0 %v7316, 16
  %v7820 = vpop.permute.xlu0 %7819
  %7821 = vrot.lane.b32.xlu0 %v7319, 16
  %v7822 = vpop.permute.xlu0 %7821
  %7839 = vrot.lane.b32.xlu0 %v7381, 24
  %v7840 = vpop.permute.xlu0 %7839
  %7841 = vrot.lane.b32.xlu0 %v7384, 24
  %v7842 = vpop.permute.xlu0 %7841
  %7843 = vrot.lane.b32.xlu0 %v7389, 24
  %v7844 = vpop.permute.xlu0 %7843
  %7845 = vrot.lane.b32.xlu0 %v7392, 24
  %v7846 = vpop.permute.xlu0 %7845
  %7847 = vrot.lane.b32.xlu0 %v7397, 24
  %v7848 = vpop.permute.xlu0 %7847
  %7849 = vrot.lane.b32.xlu0 %v7400, 24
  %v7850 = vpop.permute.xlu0 %7849
  %7851 = vrot.lane.b32.xlu0 %v7405, 24
  %v7852 = vpop.permute.xlu0 %7851
  %7853 = vrot.lane.b32.xlu0 %v7408, 24
  %v7854 = vpop.permute.xlu0 %7853
  %v7863 = vsel %vm747, %v7114, %v7776
  %v7864 = vsel %vm747, %v7117, %v7778
  %v7865 = vsel %vm747, %v7122, %v7780
  %v7866 = vsel %vm747, %v7125, %v7782
  %v7867 = vsel %vm747, %v7130, %v7784
  %v7868 = vsel %vm747, %v7133, %v7786
  %v7869 = vsel %vm747, %v7138, %v7788
  %v7870 = vsel %vm747, %v7141, %v7790
  %v7871 = vsel %vm401, %v7863, %v7808
  %v7872 = vsel %vm401, %v7864, %v7810
  %v7873 = vsel %vm401, %v7865, %v7812
  %v7874 = vsel %vm401, %v7866, %v7814
  %v7875 = vsel %vm401, %v7867, %v7816
  %v7876 = vsel %vm401, %v7868, %v7818
  %v7877 = vsel %vm401, %v7869, %v7820
  %v7878 = vsel %vm401, %v7870, %v7822
  %v7879 = vsel %vm3141, %v7871, %v7840
  %v7880 = vsel %vm3141, %v7872, %v7842
  %v7881 = vsel %vm3141, %v7873, %v7844
  %v7882 = vsel %vm3141, %v7874, %v7846
  %v7883 = vsel %vm3141, %v7875, %v7848
  %v7884 = vsel %vm3141, %v7876, %v7850
  %v7885 = vsel %vm3141, %v7877, %v7852
  %v7886 = vsel %vm3141, %v7878, %v7854
  %7895 = vrot.lane.b32.xlu0 %v7559, 8
  %v7896 = vpop.permute.xlu0 %7895
  %7897 = vrot.lane.b32.xlu0 %v7562, 8
  %v7898 = vpop.permute.xlu0 %7897
  %7899 = vrot.lane.b32.xlu0 %v7567, 8
  %v7900 = vpop.permute.xlu0 %7899
  %7901 = vrot.lane.b32.xlu0 %v7570, 8
  %v7902 = vpop.permute.xlu0 %7901
  %7903 = vrot.lane.b32.xlu0 %v7575, 8
  %v7904 = vpop.permute.xlu0 %7903
  %7905 = vrot.lane.b32.xlu0 %v7578, 8
  %v7906 = vpop.permute.xlu0 %7905
  %7907 = vrot.lane.b32.xlu0 %v7583, 8
  %v7908 = vpop.permute.xlu0 %7907
  %7909 = vrot.lane.b32.xlu0 %v7586, 8
  %v7910 = vpop.permute.xlu0 %7909
  %7927 = vrot.lane.b32.xlu0 %v7648, 16
  %v7928 = vpop.permute.xlu0 %7927
  %7929 = vrot.lane.b32.xlu0 %v7651, 16
  %v7930 = vpop.permute.xlu0 %7929
  %7931 = vrot.lane.b32.xlu0 %v7656, 16
  %v7932 = vpop.permute.xlu0 %7931
  %7933 = vrot.lane.b32.xlu0 %v7659, 16
  %v7934 = vpop.permute.xlu0 %7933
  %7935 = vrot.lane.b32.xlu0 %v7664, 16
  %v7936 = vpop.permute.xlu0 %7935
  %7937 = vrot.lane.b32.xlu0 %v7667, 16
  %v7938 = vpop.permute.xlu0 %7937
  %7939 = vrot.lane.b32.xlu0 %v7672, 16
  %v7940 = vpop.permute.xlu0 %7939
  %7941 = vrot.lane.b32.xlu0 %v7675, 16
  %v7942 = vpop.permute.xlu0 %7941
  %7959 = vrot.lane.b32.xlu0 %v7737, 24
  %v7960 = vpop.permute.xlu0 %7959
  %7961 = vrot.lane.b32.xlu0 %v7740, 24
  %v7962 = vpop.permute.xlu0 %7961
  %7963 = vrot.lane.b32.xlu0 %v7745, 24
  %v7964 = vpop.permute.xlu0 %7963
  %7965 = vrot.lane.b32.xlu0 %v7748, 24
  %v7966 = vpop.permute.xlu0 %7965
  %7967 = vrot.lane.b32.xlu0 %v7753, 24
  %v7968 = vpop.permute.xlu0 %7967
  %7969 = vrot.lane.b32.xlu0 %v7756, 24
  %v7970 = vpop.permute.xlu0 %7969
  %7971 = vrot.lane.b32.xlu0 %v7761, 24
  %v7972 = vpop.permute.xlu0 %7971
  %7973 = vrot.lane.b32.xlu0 %v7764, 24
  %v7974 = vpop.permute.xlu0 %7973
  %v7983 = vsel %vm747, %v7470, %v7896
  %v7984 = vsel %vm747, %v7473, %v7898
  %v7985 = vsel %vm747, %v7478, %v7900
  %v7986 = vsel %vm747, %v7481, %v7902
  %v7987 = vsel %vm747, %v7486, %v7904
  %v7988 = vsel %vm747, %v7489, %v7906
  %v7989 = vsel %vm747, %v7494, %v7908
  %v7990 = vsel %vm747, %v7497, %v7910
  %v7991 = vsel %vm401, %v7983, %v7928
  %v7992 = vsel %vm401, %v7984, %v7930
  %v7993 = vsel %vm401, %v7985, %v7932
  %v7994 = vsel %vm401, %v7986, %v7934
  %v7995 = vsel %vm401, %v7987, %v7936
  %v7996 = vsel %vm401, %v7988, %v7938
  %v7997 = vsel %vm401, %v7989, %v7940
  %v7998 = vsel %vm401, %v7990, %v7942
  %v7999 = vsel %vm3141, %v7991, %v7960
  %v8000 = vsel %vm3141, %v7992, %v7962
  %v8001 = vsel %vm3141, %v7993, %v7964
  %v8002 = vsel %vm3141, %v7994, %v7966
  %v8003 = vsel %vm3141, %v7995, %v7968
  %v8004 = vsel %vm3141, %v7996, %v7970
  %v8005 = vsel %vm3141, %v7997, %v7972
  %v8006 = vsel %vm3141, %v7998, %v7974
  %v8007 = vpack.c.bf16 %v7880, %v7879
  %v8008 = vpack.c.bf16 %v7882, %v7881
  %v8009 = vpack.c.bf16 %v7884, %v7883
  %v8010 = vpack.c.bf16 %v7886, %v7885
  %v8011 = vpack.c.bf16 %v8000, %v7999
  %v8012 = vpack.c.bf16 %v8002, %v8001
  %v8013 = vpack.c.bf16 %v8004, %v8003
  %v8014 = vpack.c.bf16 %v8006, %v8005
  %s8015 = scalar_lea.vmem %s9, 16
  %v8016 = vld [vmem:[%s8015] sm:$0xf]
  %v8017 = vld [vmem:[%s8015 + $0x4] sm:$0xf]
  %v8018 = vld [vmem:[%s8015 + $0x8] sm:$0xf]
  %v8019 = vld [vmem:[%s8015 + $0xc] sm:$0xf]
  %v8020 = vld [vmem:[%s4 + $0xf] sm:$0x1]
  %v8021 = vlaneseq
  %v8022 = vshrl.u32 %v8021, 7
  %v8023 = vsub.s32 0, %v8022
  %v8024 = vrot.slane %v8020, %v8023
  %v8029 = vunpack.c.l.b16 %v8016
  %v8030 = vunpack.c.l.b16 %v8017
  %v8031 = vunpack.c.l.b16 %v8018
  %v8032 = vunpack.c.l.b16 %v8019
  %v8033 = vpack.c.b16 %v8030, %v8029
  %v8034 = vpack.c.b16 %v8032, %v8031
  %v8038 = vsel %vm143, %v8007, 0
  %v8041 = vsel %vm143, %v8008, 0
  %v8044 = vsel %vm143, %v8009, 0
  %v8047 = vsel %vm143, %v8010, 0
  %v8050 = vsel %vm143, %v8011, 0
  %v8053 = vsel %vm143, %v8012, 0
  %v8056 = vsel %vm143, %v8013, 0
  %v8059 = vsel %vm143, %v8014, 0
  %8061 = vmatprep.subr.bf16.mxu0 0
  %8062 = vmatpush1.bf16.msra.mxu0 %v8033
  %8063 = vmatprep.subr.bf16.mxu0 0
  %8064 = vmatpush1.bf16.msra.mxu0 %v8034
  %8065 = vmatprep.subr.bf16.mxu0 0
  %8066 = vmatpush1.bf16.msra.mxu0 0
  %8067 = vmatprep.subr.bf16.mxu0 0
  %8068 = vmatpush1.bf16.msra.mxu0 0
  %8069 = vmatprep.subr.bf16.mxu0 0
  %8070 = vmatpush1.bf16.msra.mxu0 0
  %8071 = vmatprep.subr.bf16.mxu0 0
  %8072 = vmatpush1.bf16.msra.mxu0 0
  %8073 = vmatprep.subr.bf16.mxu0 0
  %8074 = vmatpush1.bf16.msra.mxu0 0
  %8075 = vmatprep.subr.bf16.mxu0 0
  %8076 = vmatpush1.bf16.msra.mxu0 0
  %8077 = vmatprep.subr.bf16.mxu0 0
  %8078 = vmatpush1.bf16.msra.mxu0 0
  %8079 = vmatprep.subr.bf16.mxu0 0
  %8080 = vmatpush1.bf16.msra.mxu0 0
  %8081 = vmatprep.subr.bf16.mxu0 0
  %8082 = vmatpush1.bf16.msra.mxu0 0
  %8083 = vmatprep.subr.bf16.mxu0 0
  %8084 = vmatpush1.bf16.msra.mxu0 0
  %8085 = vmatprep.subr.bf16.mxu0 0
  %8086 = vmatpush1.bf16.msra.mxu0 0
  %8087 = vmatprep.subr.bf16.mxu0 0
  %8088 = vmatpush1.bf16.msra.mxu0 0
  %8089 = vmatprep.subr.bf16.mxu0 0
  %8090 = vmatpush1.bf16.msra.mxu0 0
  %8091 = vmatprep.subr.bf16.mxu0 0
  %8092 = vmatpush1.bf16.msra.mxu0 0
  %8093 = vmatprep.mubr.bf16.mxu0 0
  %8094 = vmatmul.mubr.bf16.gmra.mrb[0].mxu0 %v8038
  %v8095 = vpop.f32.mrb[0].mxu0
  %v8096 = vadd.f32 %v8024, %v8095
  %v8097 = vpop.f32.mrb[0].mxu0
  %v8098 = vpop.f32.mrb[0].mxu0
  %v8099 = vadd.f32 %v8024, %v8098
  %v8100 = vpop.f32.mrb[0].mxu0
  %8101 = vmatprep.mubr.bf16.mxu0 0
  %8102 = vmatmul.mubr.bf16.gmra.mrb[0].mxu0 %v8041
  %v8103 = vpop.f32.mrb[0].mxu0
  %v8104 = vadd.f32 %v8024, %v8103
  %v8105 = vpop.f32.mrb[0].mxu0
  %v8106 = vpop.f32.mrb[0].mxu0
  %v8107 = vadd.f32 %v8024, %v8106
  %v8108 = vpop.f32.mrb[0].mxu0
  %8109 = vmatprep.mubr.bf16.mxu0 0
  %8110 = vmatmul.mubr.bf16.gmra.mrb[0].mxu0 %v8044
  %v8111 = vpop.f32.mrb[0].mxu0
  %v8112 = vadd.f32 %v8024, %v8111
  %v8113 = vpop.f32.mrb[0].mxu0
  %v8114 = vpop.f32.mrb[0].mxu0
  %v8115 = vadd.f32 %v8024, %v8114
  %v8116 = vpop.f32.mrb[0].mxu0
  %8117 = vmatprep.mubr.bf16.mxu0 0
  %8118 = vmatmul.mubr.bf16.gmra.mrb[0].mxu0 %v8047
  %v8119 = vpop.f32.mrb[0].mxu0
  %v8120 = vadd.f32 %v8024, %v8119
  %v8121 = vpop.f32.mrb[0].mxu0
  %v8122 = vpop.f32.mrb[0].mxu0
  %v8123 = vadd.f32 %v8024, %v8122
  %v8124 = vpop.f32.mrb[0].mxu0
  %8125 = vmatprep.mubr.bf16.mxu0 0
  %8126 = vmatmul.mubr.bf16.gmra.mrb[0].mxu0 %v8050
  %v8127 = vpop.f32.mrb[0].mxu0
  %v8128 = vadd.f32 %v8024, %v8127
  %v8129 = vpop.f32.mrb[0].mxu0
  %v8130 = vpop.f32.mrb[0].mxu0
  %v8131 = vadd.f32 %v8024, %v8130
  %v8132 = vpop.f32.mrb[0].mxu0
  %8133 = vmatprep.mubr.bf16.mxu0 0
  %8134 = vmatmul.mubr.bf16.gmra.mrb[0].mxu0 %v8053
  %v8135 = vpop.f32.mrb[0].mxu0
  %v8136 = vadd.f32 %v8024, %v8135
  %v8137 = vpop.f32.mrb[0].mxu0
  %v8138 = vpop.f32.mrb[0].mxu0
  %v8139 = vadd.f32 %v8024, %v8138
  %v8140 = vpop.f32.mrb[0].mxu0
  %8141 = vmatprep.mubr.bf16.mxu0 0
  %8142 = vmatmul.mubr.bf16.gmra.mrb[0].mxu0 %v8056
  %v8143 = vpop.f32.mrb[0].mxu0
  %v8144 = vadd.f32 %v8024, %v8143
  %v8145 = vpop.f32.mrb[0].mxu0
  %v8146 = vpop.f32.mrb[0].mxu0
  %v8147 = vadd.f32 %v8024, %v8146
  %v8148 = vpop.f32.mrb[0].mxu0
  %8149 = vmatprep.mubr.bf16.mxu0 0
  %8150 = vmatmul.mubr.bf16.gmra.mrb[0].mxu0 %v8059
  %v8151 = vpop.f32.mrb[0].mxu0
  %v8152 = vadd.f32 %v8024, %v8151
  %v8153 = vpop.f32.mrb[0].mxu0
  %v8154 = vpop.f32.mrb[0].mxu0
  %v8155 = vadd.f32 %v8024, %v8154
  %v8156 = vpop.f32.mrb[0].mxu0
  %8157 = vdwg.mxu0
  %v8158 = vadd.f32 %v5245, %v8096
  %v8159 = vadd.f32 %v5246, %v8099
  %v8160 = vadd.f32 %v5247, %v8104
  %v8161 = vadd.f32 %v5248, %v8107
  %v8162 = vadd.f32 %v5249, %v8112
  %v8163 = vadd.f32 %v5250, %v8115
  %v8164 = vadd.f32 %v5251, %v8120
  %v8165 = vadd.f32 %v5252, %v8123
  %v8166 = vadd.f32 %v5253, %v8128
  %v8167 = vadd.f32 %v5254, %v8131
  %v8168 = vadd.f32 %v5255, %v8136
  %v8169 = vadd.f32 %v5256, %v8139
  %v8170 = vadd.f32 %v5257, %v8144
  %v8171 = vadd.f32 %v5258, %v8147
  %v8172 = vadd.f32 %v5259, %v8152
  %v8173 = vadd.f32 %v5260, %v8155
  %v8174 = vld [vmem:[%s4 + $0x12] sm:$0x1]
  %v8175 = vld [vmem:[%s4 + $0x13] sm:$0x1]
  %v8176 = vsel %vm143, %v8158, 0.0
  %8177 = vadd.xlane.f32.xlu0 %v8176
  %v8178 = vpop.xlane.xlu0 %8177
  %v8179 = vsel %vm143, %v8159, 0.0
  %8180 = vadd.xlane.f32.xlu0 %v8179
  %v8181 = vpop.xlane.xlu0 %8180
  %v8182 = vsel %vm143, %v8160, 0.0
  %8183 = vadd.xlane.f32.xlu0 %v8182
  %v8184 = vpop.xlane.xlu0 %8183
  %v8185 = vsel %vm143, %v8161, 0.0
  %8186 = vadd.xlane.f32.xlu0 %v8185
  %v8187 = vpop.xlane.xlu0 %8186
  %v8188 = vsel %vm143, %v8162, 0.0
  %8189 = vadd.xlane.f32.xlu0 %v8188
  %v8190 = vpop.xlane.xlu0 %8189
  %v8191 = vsel %vm143, %v8163, 0.0
  %8192 = vadd.xlane.f32.xlu0 %v8191
  %v8193 = vpop.xlane.xlu0 %8192
  %v8194 = vsel %vm143, %v8164, 0.0
  %8195 = vadd.xlane.f32.xlu0 %v8194
  %v8196 = vpop.xlane.xlu0 %8195
  %v8197 = vsel %vm143, %v8165, 0.0
  %8198 = vadd.xlane.f32.xlu0 %v8197
  %v8199 = vpop.xlane.xlu0 %8198
  %v8200 = vsel %vm143, %v8166, 0.0
  %8201 = vadd.xlane.f32.xlu0 %v8200
  %v8202 = vpop.xlane.xlu0 %8201
  %v8203 = vsel %vm143, %v8167, 0.0
  %8204 = vadd.xlane.f32.xlu0 %v8203
  %v8205 = vpop.xlane.xlu0 %8204
  %v8206 = vsel %vm143, %v8168, 0.0
  %8207 = vadd.xlane.f32.xlu0 %v8206
  %v8208 = vpop.xlane.xlu0 %8207
  %v8209 = vsel %vm143, %v8169, 0.0
  %8210 = vadd.xlane.f32.xlu0 %v8209
  %v8211 = vpop.xlane.xlu0 %8210
  %v8212 = vsel %vm143, %v8170, 0.0
  %8213 = vadd.xlane.f32.xlu0 %v8212
  %v8214 = vpop.xlane.xlu0 %8213
  %v8215 = vsel %vm143, %v8171, 0.0
  %8216 = vadd.xlane.f32.xlu0 %v8215
  %v8217 = vpop.xlane.xlu0 %8216
  %v8218 = vsel %vm143, %v8172, 0.0
  %8219 = vadd.xlane.f32.xlu0 %v8218
  %v8220 = vpop.xlane.xlu0 %8219
  %v8221 = vsel %vm143, %v8173, 0.0
  %8222 = vadd.xlane.f32.xlu0 %v8221
  %v8223 = vpop.xlane.xlu0 %8222
  %v8224 = vmul.f32 %v8178, %v3486
  %v8225 = vmul.f32 %v8181, %v3486
  %v8226 = vmul.f32 %v8184, %v3486
  %v8227 = vmul.f32 %v8187, %v3486
  %v8228 = vmul.f32 %v8190, %v3486
  %v8229 = vmul.f32 %v8193, %v3486
  %v8230 = vmul.f32 %v8196, %v3486
  %v8231 = vmul.f32 %v8199, %v3486
  %v8232 = vmul.f32 %v8202, %v3486
  %v8233 = vmul.f32 %v8205, %v3486
  %v8234 = vmul.f32 %v8208, %v3486
  %v8235 = vmul.f32 %v8211, %v3486
  %v8236 = vmul.f32 %v8214, %v3486
  %v8237 = vmul.f32 %v8217, %v3486
  %v8238 = vmul.f32 %v8220, %v3486
  %v8239 = vmul.f32 %v8223, %v3486
  %v8240 = vsub.f32 %v8158, %v8224
  %v8241 = vsub.f32 %v8159, %v8225
  %v8242 = vsub.f32 %v8160, %v8226
  %v8243 = vsub.f32 %v8161, %v8227
  %v8244 = vsub.f32 %v8162, %v8228
  %v8245 = vsub.f32 %v8163, %v8229
  %v8246 = vsub.f32 %v8164, %v8230
  %v8247 = vsub.f32 %v8165, %v8231
  %v8248 = vsub.f32 %v8166, %v8232
  %v8249 = vsub.f32 %v8167, %v8233
  %v8250 = vsub.f32 %v8168, %v8234
  %v8251 = vsub.f32 %v8169, %v8235
  %v8252 = vsub.f32 %v8170, %v8236
  %v8253 = vsub.f32 %v8171, %v8237
  %v8254 = vsub.f32 %v8172, %v8238
  %v8255 = vsub.f32 %v8173, %v8239
  %v8256 = vmul.f32 %v8240, %v8240
  %v8257 = vmul.f32 %v8241, %v8241
  %v8258 = vmul.f32 %v8242, %v8242
  %v8259 = vmul.f32 %v8243, %v8243
  %v8260 = vmul.f32 %v8244, %v8244
  %v8261 = vmul.f32 %v8245, %v8245
  %v8262 = vmul.f32 %v8246, %v8246
  %v8263 = vmul.f32 %v8247, %v8247
  %v8264 = vmul.f32 %v8248, %v8248
  %v8265 = vmul.f32 %v8249, %v8249
  %v8266 = vmul.f32 %v8250, %v8250
  %v8267 = vmul.f32 %v8251, %v8251
  %v8268 = vmul.f32 %v8252, %v8252
  %v8269 = vmul.f32 %v8253, %v8253
  %v8270 = vmul.f32 %v8254, %v8254
  %v8271 = vmul.f32 %v8255, %v8255
  %v8272 = vsel %vm143, %v8256, 0.0
  %8273 = vadd.xlane.f32.xlu0 %v8272
  %v8274 = vpop.xlane.xlu0 %8273
  %v8275 = vsel %vm143, %v8257, 0.0
  %8276 = vadd.xlane.f32.xlu0 %v8275
  %v8277 = vpop.xlane.xlu0 %8276
  %v8278 = vsel %vm143, %v8258, 0.0
  %8279 = vadd.xlane.f32.xlu0 %v8278
  %v8280 = vpop.xlane.xlu0 %8279
  %v8281 = vsel %vm143, %v8259, 0.0
  %8282 = vadd.xlane.f32.xlu0 %v8281
  %v8283 = vpop.xlane.xlu0 %8282
  %v8284 = vsel %vm143, %v8260, 0.0
  %8285 = vadd.xlane.f32.xlu0 %v8284
  %v8286 = vpop.xlane.xlu0 %8285
  %v8287 = vsel %vm143, %v8261, 0.0
  %8288 = vadd.xlane.f32.xlu0 %v8287
  %v8289 = vpop.xlane.xlu0 %8288
  %v8290 = vsel %vm143, %v8262, 0.0
  %8291 = vadd.xlane.f32.xlu0 %v8290
  %v8292 = vpop.xlane.xlu0 %8291
  %v8293 = vsel %vm143, %v8263, 0.0
  %8294 = vadd.xlane.f32.xlu0 %v8293
  %v8295 = vpop.xlane.xlu0 %8294
  %v8296 = vsel %vm143, %v8264, 0.0
  %8297 = vadd.xlane.f32.xlu0 %v8296
  %v8298 = vpop.xlane.xlu0 %8297
  %v8299 = vsel %vm143, %v8265, 0.0
  %8300 = vadd.xlane.f32.xlu0 %v8299
  %v8301 = vpop.xlane.xlu0 %8300
  %v8302 = vsel %vm143, %v8266, 0.0
  %8303 = vadd.xlane.f32.xlu0 %v8302
  %v8304 = vpop.xlane.xlu0 %8303
  %v8305 = vsel %vm143, %v8267, 0.0
  %8306 = vadd.xlane.f32.xlu0 %v8305
  %v8307 = vpop.xlane.xlu0 %8306
  %v8308 = vsel %vm143, %v8268, 0.0
  %8309 = vadd.xlane.f32.xlu0 %v8308
  %v8310 = vpop.xlane.xlu0 %8309
  %v8311 = vsel %vm143, %v8269, 0.0
  %8312 = vadd.xlane.f32.xlu0 %v8311
  %v8313 = vpop.xlane.xlu0 %8312
  %v8314 = vsel %vm143, %v8270, 0.0
  %8315 = vadd.xlane.f32.xlu0 %v8314
  %v8316 = vpop.xlane.xlu0 %8315
  %v8317 = vsel %vm143, %v8271, 0.0
  %8318 = vadd.xlane.f32.xlu0 %v8317
  %v8319 = vpop.xlane.xlu0 %8318
  %v8320 = vmul.f32 %v8274, %v3486
  %v8321 = vmul.f32 %v8277, %v3486
  %v8322 = vmul.f32 %v8280, %v3486
  %v8323 = vmul.f32 %v8283, %v3486
  %v8324 = vmul.f32 %v8286, %v3486
  %v8325 = vmul.f32 %v8289, %v3486
  %v8326 = vmul.f32 %v8292, %v3486
  %v8327 = vmul.f32 %v8295, %v3486
  %v8328 = vmul.f32 %v8298, %v3486
  %v8329 = vmul.f32 %v8301, %v3486
  %v8330 = vmul.f32 %v8304, %v3486
  %v8331 = vmul.f32 %v8307, %v3486
  %v8332 = vmul.f32 %v8310, %v3486
  %v8333 = vmul.f32 %v8313, %v3486
  %v8334 = vmul.f32 %v8316, %v3486
  %v8335 = vmul.f32 %v8319, %v3486
  %v8336 = vadd.f32 %v8320, 1e-05
  %v8337 = vadd.f32 %v8321, 1e-05
  %v8338 = vadd.f32 %v8322, 1e-05
  %v8339 = vadd.f32 %v8323, 1e-05
  %v8340 = vadd.f32 %v8324, 1e-05
  %v8341 = vadd.f32 %v8325, 1e-05
  %v8342 = vadd.f32 %v8326, 1e-05
  %v8343 = vadd.f32 %v8327, 1e-05
  %v8344 = vadd.f32 %v8328, 1e-05
  %v8345 = vadd.f32 %v8329, 1e-05
  %v8346 = vadd.f32 %v8330, 1e-05
  %v8347 = vadd.f32 %v8331, 1e-05
  %v8348 = vadd.f32 %v8332, 1e-05
  %v8349 = vadd.f32 %v8333, 1e-05
  %v8350 = vadd.f32 %v8334, 1e-05
  %v8351 = vadd.f32 %v8335, 1e-05
  %v8352 = vrsqrt.pop %v8336
  %v8353 = vrsqrt.pop %v8337
  %v8354 = vrsqrt.pop %v8338
  %v8355 = vrsqrt.pop %v8339
  %v8356 = vrsqrt.pop %v8340
  %v8357 = vrsqrt.pop %v8341
  %v8358 = vrsqrt.pop %v8342
  %v8359 = vrsqrt.pop %v8343
  %v8360 = vrsqrt.pop %v8344
  %v8361 = vrsqrt.pop %v8345
  %v8362 = vrsqrt.pop %v8346
  %v8363 = vrsqrt.pop %v8347
  %v8364 = vrsqrt.pop %v8348
  %v8365 = vrsqrt.pop %v8349
  %v8366 = vrsqrt.pop %v8350
  %v8367 = vrsqrt.pop %v8351
  %v8368 = vmul.f32 %v8240, %v8352
  %v8369 = vmul.f32 %v8241, %v8353
  %v8370 = vmul.f32 %v8242, %v8354
  %v8371 = vmul.f32 %v8243, %v8355
  %v8372 = vmul.f32 %v8244, %v8356
  %v8373 = vmul.f32 %v8245, %v8357
  %v8374 = vmul.f32 %v8246, %v8358
  %v8375 = vmul.f32 %v8247, %v8359
  %v8376 = vmul.f32 %v8248, %v8360
  %v8377 = vmul.f32 %v8249, %v8361
  %v8378 = vmul.f32 %v8250, %v8362
  %v8379 = vmul.f32 %v8251, %v8363
  %v8380 = vmul.f32 %v8252, %v8364
  %v8381 = vmul.f32 %v8253, %v8365
  %v8382 = vmul.f32 %v8254, %v8366
  %v8383 = vmul.f32 %v8255, %v8367
  %v8384 = vlaneseq
  %v8385 = vshrl.u32 %v8384, 7
  %v8386 = vsub.s32 0, %v8385
  %v8387 = vrot.slane %v8174, %v8386
  %v8388 = vmul.f32 %v8368, %v8387
  %v8389 = vmul.f32 %v8369, %v8387
  %v8390 = vmul.f32 %v8370, %v8387
  %v8391 = vmul.f32 %v8371, %v8387
  %v8392 = vmul.f32 %v8372, %v8387
  %v8393 = vmul.f32 %v8373, %v8387
  %v8394 = vmul.f32 %v8374, %v8387
  %v8395 = vmul.f32 %v8375, %v8387
  %v8396 = vmul.f32 %v8376, %v8387
  %v8397 = vmul.f32 %v8377, %v8387
  %v8398 = vmul.f32 %v8378, %v8387
  %v8399 = vmul.f32 %v8379, %v8387
  %v8400 = vmul.f32 %v8380, %v8387
  %v8401 = vmul.f32 %v8381, %v8387
  %v8402 = vmul.f32 %v8382, %v8387
  %v8403 = vmul.f32 %v8383, %v8387
  %v8404 = vlaneseq
  %v8405 = vshrl.u32 %v8404, 7
  %v8406 = vsub.s32 0, %v8405
  %v8407 = vrot.slane %v8175, %v8406
  %v8408 = vadd.f32 %v8388, %v8407
  %v8409 = vadd.f32 %v8389, %v8407
  %v8410 = vadd.f32 %v8390, %v8407
  %v8411 = vadd.f32 %v8391, %v8407
  %v8412 = vadd.f32 %v8392, %v8407
  %v8413 = vadd.f32 %v8393, %v8407
  %v8414 = vadd.f32 %v8394, %v8407
  %v8415 = vadd.f32 %v8395, %v8407
  %v8416 = vadd.f32 %v8396, %v8407
  %v8417 = vadd.f32 %v8397, %v8407
  %v8418 = vadd.f32 %v8398, %v8407
  %v8419 = vadd.f32 %v8399, %v8407
  %v8420 = vadd.f32 %v8400, %v8407
  %v8421 = vadd.f32 %v8401, %v8407
  %v8422 = vadd.f32 %v8402, %v8407
  %v8423 = vadd.f32 %v8403, %v8407
  %v8424 = vld [vmem:[%s3 + $0xa0] sm:$0xf]
  %v8425 = vld [vmem:[%s3 + $0xa4] sm:$0xf]
  %v8426 = vld [vmem:[%s3 + $0xa8] sm:$0xf]
  %v8427 = vld [vmem:[%s3 + $0xac] sm:$0xf]
  %v8428 = vld [vmem:[%s4 + $0x10] sm:$0x1]
  %v8429 = vlaneseq
  %v8430 = vshrl.u32 %v8429, 7
  %v8431 = vsub.s32 0, %v8430
  %v8432 = vrot.slane %v8428, %v8431
  %v8437 = vunpack.c.l.b16 %v8424
  %v8438 = vunpack.c.l.b16 %v8425
  %v8439 = vunpack.c.l.b16 %v8426
  %v8440 = vunpack.c.l.b16 %v8427
  %v8441 = vpack.c.b16 %v8438, %v8437
  %v8442 = vpack.c.b16 %v8440, %v8439
  %8445 = vmatprep.subr.bf16.mxu0 0
  %8446 = vmatpush1.bf16.msra.mxu0 %v8441
  %8447 = vmatprep.subr.bf16.mxu0 0
  %8448 = vmatpush1.bf16.msra.mxu0 %v8442
  %8449 = vmatprep.subr.bf16.mxu0 0
  %8450 = vmatpush1.bf16.msra.mxu0 0
  %8451 = vmatprep.subr.bf16.mxu0 0
  %8452 = vmatpush1.bf16.msra.mxu0 0
  %8453 = vmatprep.subr.bf16.mxu0 0
  %8454 = vmatpush1.bf16.msra.mxu0 0
  %8455 = vmatprep.subr.bf16.mxu0 0
  %8456 = vmatpush1.bf16.msra.mxu0 0
  %8457 = vmatprep.subr.bf16.mxu0 0
  %8458 = vmatpush1.bf16.msra.mxu0 0
  %8459 = vmatprep.subr.bf16.mxu0 0
  %8460 = vmatpush1.bf16.msra.mxu0 0
  %8461 = vmatprep.subr.bf16.mxu0 0
  %8462 = vmatpush1.bf16.msra.mxu0 0
  %8463 = vmatprep.subr.bf16.mxu0 0
  %8464 = vmatpush1.bf16.msra.mxu0 0
  %8465 = vmatprep.subr.bf16.mxu0 0
  %8466 = vmatpush1.bf16.msra.mxu0 0
  %8467 = vmatprep.subr.bf16.mxu0 0
  %8468 = vmatpush1.bf16.msra.mxu0 0
  %8469 = vmatprep.subr.bf16.mxu0 0
  %8470 = vmatpush1.bf16.msra.mxu0 0
  %8471 = vmatprep.subr.bf16.mxu0 0
  %8472 = vmatpush1.bf16.msra.mxu0 0
  %8473 = vmatprep.subr.bf16.mxu0 0
  %8474 = vmatpush1.bf16.msra.mxu0 0
  %8475 = vmatprep.subr.bf16.mxu0 0
  %8476 = vmatpush1.bf16.msra.mxu0 0
  %8477 = vmatprep.mubr.bf16.mxu0 0
  %8478 = vmatmul.mubr.bf16.gmra.mrb[0].mxu0 %v3710
  %v8479 = vpop.f32.mrb[0].mxu0
  %v8480 = vadd.f32 %v8432, %v8479
  %v8481 = vpop.f32.mrb[0].mxu0
  %v8482 = vpop.f32.mrb[0].mxu0
  %v8483 = vpop.f32.mrb[0].mxu0
  %8484 = vdwg.mxu0
  %v8485 = vpack.c.bf16 %v8480, %v8480
  %v8486 = vld [vmem:[%s3 + $0xb0] sm:$0xf]
  %v8487 = vld [vmem:[%s3 + $0xb4] sm:$0xf]
  %v8488 = vld [vmem:[%s3 + $0xb8] sm:$0xf]
  %v8489 = vld [vmem:[%s3 + $0xbc] sm:$0xf]
  %v8490 = vld [vmem:[%s4 + $0x11] sm:$0x1]
  %v8491 = vlaneseq
  %v8492 = vshrl.u32 %v8491, 7
  %v8493 = vsub.s32 0, %v8492
  %v8494 = vrot.slane %v8490, %v8493
  %v8499 = vunpack.c.l.b16 %v8486
  %v8500 = vunpack.c.l.b16 %v8487
  %v8501 = vunpack.c.l.b16 %v8488
  %v8502 = vunpack.c.l.b16 %v8489
  %v8503 = vpack.c.b16 %v8500, %v8499
  %v8504 = vpack.c.b16 %v8502, %v8501
  %v8508 = vsel %vm143, %v8485, 0
  %8510 = vmatprep.subr.bf16.mxu0 0
  %8511 = vmatpush1.bf16.msra.mxu0 %v8503
  %8512 = vmatprep.subr.bf16.mxu0 0
  %8513 = vmatpush1.bf16.msra.mxu0 %v8504
  %8514 = vmatprep.subr.bf16.mxu0 0
  %8515 = vmatpush1.bf16.msra.mxu0 0
  %8516 = vmatprep.subr.bf16.mxu0 0
  %8517 = vmatpush1.bf16.msra.mxu0 0
  %8518 = vmatprep.subr.bf16.mxu0 0
  %8519 = vmatpush1.bf16.msra.mxu0 0
  %8520 = vmatprep.subr.bf16.mxu0 0
  %8521 = vmatpush1.bf16.msra.mxu0 0
  %8522 = vmatprep.subr.bf16.mxu0 0
  %8523 = vmatpush1.bf16.msra.mxu0 0
  %8524 = vmatprep.subr.bf16.mxu0 0
  %8525 = vmatpush1.bf16.msra.mxu0 0
  %8526 = vmatprep.subr.bf16.mxu0 0
  %8527 = vmatpush1.bf16.msra.mxu0 0
  %8528 = vmatprep.subr.bf16.mxu0 0
  %8529 = vmatpush1.bf16.msra.mxu0 0
  %8530 = vmatprep.subr.bf16.mxu0 0
  %8531 = vmatpush1.bf16.msra.mxu0 0
  %8532 = vmatprep.subr.bf16.mxu0 0
  %8533 = vmatpush1.bf16.msra.mxu0 0
  %8534 = vmatprep.subr.bf16.mxu0 0
  %8535 = vmatpush1.bf16.msra.mxu0 0
  %8536 = vmatprep.subr.bf16.mxu0 0
  %8537 = vmatpush1.bf16.msra.mxu0 0
  %8538 = vmatprep.subr.bf16.mxu0 0
  %8539 = vmatpush1.bf16.msra.mxu0 0
  %8540 = vmatprep.subr.bf16.mxu0 0
  %8541 = vmatpush1.bf16.msra.mxu0 0
  %8542 = vmatprep.mubr.bf16.mxu0 0
  %8543 = vmatmul.mubr.bf16.gmra.mrb[0].mxu0 %v8508
  %v8544 = vpop.f32.mrb[0].mxu0
  %v8545 = vadd.f32 %v8494, %v8544
  %v8546 = vpop.f32.mrb[0].mxu0
  %v8547 = vpop.f32.mrb[0].mxu0
  %v8548 = vpop.f32.mrb[0].mxu0
  %8549 = vdwg.mxu0
  %v8552 = vunpack.c.l.s4 1966171168
  %v8553 = vunpack.c.0.s8 %v8552
  %v8554 = vlaneseq
  %v8555 = vshrl.u32 %v8554, 7
  %v8556 = vsub.s32 %v8553, %v8555
  %v8557 = vrot.slane %v8545, %v8556
  %v8558 = vcombine.high %v8557, %v8557
  %v8560 = vunpack.c.l.s4 1966171168
  %v8561 = vunpack.c.0.s8 %v8560
  %v8562 = vlaneseq
  %v8563 = vshrl.u32 %v8562, 7
  %v8564 = vsub.s32 %v8561, %v8563
  %v8565 = vrot.slane %v8557, %v8564
  %v8567 = vunpack.c.l.s4 1966171168
  %v8568 = vunpack.c.0.s8 %v8567
  %v8569 = vlaneseq
  %v8570 = vshrl.u32 %v8569, 7
  %v8571 = vsub.s32 %v8568, %v8570
  %v8572 = vrot.slane %v8558, %v8571
  %v8573 = vlaneseq
  %v8574 = vshrl.u32 %v8573, 7
  %v8575 = vsub.s32 0, %v8574
  %v8576 = vrot.slane %v8565, %v8575
  %v8577 = vlaneseq
  %v8578 = vshrl.u32 %v8577, 7
  %v8579 = vsub.s32 0, %v8578
  %v8580 = vrot.slane %v8572, %v8579
  %v8583 = vadd.f32 %v8408, %v8576
  %v8584 = vadd.f32 %v8409, %v8576
  %v8585 = vadd.f32 %v8410, %v8576
  %v8586 = vadd.f32 %v8411, %v8576
  %v8587 = vadd.f32 %v8412, %v8576
  %v8588 = vadd.f32 %v8413, %v8576
  %v8589 = vadd.f32 %v8414, %v8576
  %v8590 = vadd.f32 %v8415, %v8576
  %v8591 = vadd.f32 %v8416, %v8580
  %v8592 = vadd.f32 %v8417, %v8580
  %v8593 = vadd.f32 %v8418, %v8580
  %v8594 = vadd.f32 %v8419, %v8580
  %v8595 = vadd.f32 %v8420, %v8580
  %v8596 = vadd.f32 %v8421, %v8580
  %v8597 = vadd.f32 %v8422, %v8580
  %v8598 = vadd.f32 %v8423, %v8580
  %v8599 = vld [vmem:[%s4 + $0x14] sm:$0x1]
  %v8600 = vld [vmem:[%s4 + $0x15] sm:$0x1]
  %v8601 = vsel %vm143, %v8583, 0.0
  %8602 = vadd.xlane.f32.xlu0 %v8601
  %v8603 = vpop.xlane.xlu0 %8602
  %v8604 = vsel %vm143, %v8584, 0.0
  %8605 = vadd.xlane.f32.xlu0 %v8604
  %v8606 = vpop.xlane.xlu0 %8605
  %v8607 = vsel %vm143, %v8585, 0.0
  %8608 = vadd.xlane.f32.xlu0 %v8607
  %v8609 = vpop.xlane.xlu0 %8608
  %v8610 = vsel %vm143, %v8586, 0.0
  %8611 = vadd.xlane.f32.xlu0 %v8610
  %v8612 = vpop.xlane.xlu0 %8611
  %v8613 = vsel %vm143, %v8587, 0.0
  %8614 = vadd.xlane.f32.xlu0 %v8613
  %v8615 = vpop.xlane.xlu0 %8614
  %v8616 = vsel %vm143, %v8588, 0.0
  %8617 = vadd.xlane.f32.xlu0 %v8616
  %v8618 = vpop.xlane.xlu0 %8617
  %v8619 = vsel %vm143, %v8589, 0.0
  %8620 = vadd.xlane.f32.xlu0 %v8619
  %v8621 = vpop.xlane.xlu0 %8620
  %v8622 = vsel %vm143, %v8590, 0.0
  %8623 = vadd.xlane.f32.xlu0 %v8622
  %v8624 = vpop.xlane.xlu0 %8623
  %v8625 = vsel %vm143, %v8591, 0.0
  %8626 = vadd.xlane.f32.xlu0 %v8625
  %v8627 = vpop.xlane.xlu0 %8626
  %v8628 = vsel %vm143, %v8592, 0.0
  %8629 = vadd.xlane.f32.xlu0 %v8628
  %v8630 = vpop.xlane.xlu0 %8629
  %v8631 = vsel %vm143, %v8593, 0.0
  %8632 = vadd.xlane.f32.xlu0 %v8631
  %v8633 = vpop.xlane.xlu0 %8632
  %v8634 = vsel %vm143, %v8594, 0.0
  %8635 = vadd.xlane.f32.xlu0 %v8634
  %v8636 = vpop.xlane.xlu0 %8635
  %v8637 = vsel %vm143, %v8595, 0.0
  %8638 = vadd.xlane.f32.xlu0 %v8637
  %v8639 = vpop.xlane.xlu0 %8638
  %v8640 = vsel %vm143, %v8596, 0.0
  %8641 = vadd.xlane.f32.xlu0 %v8640
  %v8642 = vpop.xlane.xlu0 %8641
  %v8643 = vsel %vm143, %v8597, 0.0
  %8644 = vadd.xlane.f32.xlu0 %v8643
  %v8645 = vpop.xlane.xlu0 %8644
  %v8646 = vsel %vm143, %v8598, 0.0
  %8647 = vadd.xlane.f32.xlu0 %v8646
  %v8648 = vpop.xlane.xlu0 %8647
  %v8649 = vmul.f32 %v8603, %v3486
  %v8650 = vmul.f32 %v8606, %v3486
  %v8651 = vmul.f32 %v8609, %v3486
  %v8652 = vmul.f32 %v8612, %v3486
  %v8653 = vmul.f32 %v8615, %v3486
  %v8654 = vmul.f32 %v8618, %v3486
  %v8655 = vmul.f32 %v8621, %v3486
  %v8656 = vmul.f32 %v8624, %v3486
  %v8657 = vmul.f32 %v8627, %v3486
  %v8658 = vmul.f32 %v8630, %v3486
  %v8659 = vmul.f32 %v8633, %v3486
  %v8660 = vmul.f32 %v8636, %v3486
  %v8661 = vmul.f32 %v8639, %v3486
  %v8662 = vmul.f32 %v8642, %v3486
  %v8663 = vmul.f32 %v8645, %v3486
  %v8664 = vmul.f32 %v8648, %v3486
  %v8665 = vsub.f32 %v8583, %v8649
  %v8666 = vsub.f32 %v8584, %v8650
  %v8667 = vsub.f32 %v8585, %v8651
  %v8668 = vsub.f32 %v8586, %v8652
  %v8669 = vsub.f32 %v8587, %v8653
  %v8670 = vsub.f32 %v8588, %v8654
  %v8671 = vsub.f32 %v8589, %v8655
  %v8672 = vsub.f32 %v8590, %v8656
  %v8673 = vsub.f32 %v8591, %v8657
  %v8674 = vsub.f32 %v8592, %v8658
  %v8675 = vsub.f32 %v8593, %v8659
  %v8676 = vsub.f32 %v8594, %v8660
  %v8677 = vsub.f32 %v8595, %v8661
  %v8678 = vsub.f32 %v8596, %v8662
  %v8679 = vsub.f32 %v8597, %v8663
  %v8680 = vsub.f32 %v8598, %v8664
  %v8681 = vmul.f32 %v8665, %v8665
  %v8682 = vmul.f32 %v8666, %v8666
  %v8683 = vmul.f32 %v8667, %v8667
  %v8684 = vmul.f32 %v8668, %v8668
  %v8685 = vmul.f32 %v8669, %v8669
  %v8686 = vmul.f32 %v8670, %v8670
  %v8687 = vmul.f32 %v8671, %v8671
  %v8688 = vmul.f32 %v8672, %v8672
  %v8689 = vmul.f32 %v8673, %v8673
  %v8690 = vmul.f32 %v8674, %v8674
  %v8691 = vmul.f32 %v8675, %v8675
  %v8692 = vmul.f32 %v8676, %v8676
  %v8693 = vmul.f32 %v8677, %v8677
  %v8694 = vmul.f32 %v8678, %v8678
  %v8695 = vmul.f32 %v8679, %v8679
  %v8696 = vmul.f32 %v8680, %v8680
  %v8697 = vsel %vm143, %v8681, 0.0
  %8698 = vadd.xlane.f32.xlu0 %v8697
  %v8699 = vpop.xlane.xlu0 %8698
  %v8700 = vsel %vm143, %v8682, 0.0
  %8701 = vadd.xlane.f32.xlu0 %v8700
  %v8702 = vpop.xlane.xlu0 %8701
  %v8703 = vsel %vm143, %v8683, 0.0
  %8704 = vadd.xlane.f32.xlu0 %v8703
  %v8705 = vpop.xlane.xlu0 %8704
  %v8706 = vsel %vm143, %v8684, 0.0
  %8707 = vadd.xlane.f32.xlu0 %v8706
  %v8708 = vpop.xlane.xlu0 %8707
  %v8709 = vsel %vm143, %v8685, 0.0
  %8710 = vadd.xlane.f32.xlu0 %v8709
  %v8711 = vpop.xlane.xlu0 %8710
  %v8712 = vsel %vm143, %v8686, 0.0
  %8713 = vadd.xlane.f32.xlu0 %v8712
  %v8714 = vpop.xlane.xlu0 %8713
  %v8715 = vsel %vm143, %v8687, 0.0
  %8716 = vadd.xlane.f32.xlu0 %v8715
  %v8717 = vpop.xlane.xlu0 %8716
  %v8718 = vsel %vm143, %v8688, 0.0
  %8719 = vadd.xlane.f32.xlu0 %v8718
  %v8720 = vpop.xlane.xlu0 %8719
  %v8721 = vsel %vm143, %v8689, 0.0
  %8722 = vadd.xlane.f32.xlu0 %v8721
  %v8723 = vpop.xlane.xlu0 %8722
  %v8724 = vsel %vm143, %v8690, 0.0
  %8725 = vadd.xlane.f32.xlu0 %v8724
  %v8726 = vpop.xlane.xlu0 %8725
  %v8727 = vsel %vm143, %v8691, 0.0
  %8728 = vadd.xlane.f32.xlu0 %v8727
  %v8729 = vpop.xlane.xlu0 %8728
  %v8730 = vsel %vm143, %v8692, 0.0
  %8731 = vadd.xlane.f32.xlu0 %v8730
  %v8732 = vpop.xlane.xlu0 %8731
  %v8733 = vsel %vm143, %v8693, 0.0
  %8734 = vadd.xlane.f32.xlu0 %v8733
  %v8735 = vpop.xlane.xlu0 %8734
  %v8736 = vsel %vm143, %v8694, 0.0
  %8737 = vadd.xlane.f32.xlu0 %v8736
  %v8738 = vpop.xlane.xlu0 %8737
  %v8739 = vsel %vm143, %v8695, 0.0
  %8740 = vadd.xlane.f32.xlu0 %v8739
  %v8741 = vpop.xlane.xlu0 %8740
  %v8742 = vsel %vm143, %v8696, 0.0
  %8743 = vadd.xlane.f32.xlu0 %v8742
  %v8744 = vpop.xlane.xlu0 %8743
  %v8745 = vmul.f32 %v8699, %v3486
  %v8746 = vmul.f32 %v8702, %v3486
  %v8747 = vmul.f32 %v8705, %v3486
  %v8748 = vmul.f32 %v8708, %v3486
  %v8749 = vmul.f32 %v8711, %v3486
  %v8750 = vmul.f32 %v8714, %v3486
  %v8751 = vmul.f32 %v8717, %v3486
  %v8752 = vmul.f32 %v8720, %v3486
  %v8753 = vmul.f32 %v8723, %v3486
  %v8754 = vmul.f32 %v8726, %v3486
  %v8755 = vmul.f32 %v8729, %v3486
  %v8756 = vmul.f32 %v8732, %v3486
  %v8757 = vmul.f32 %v8735, %v3486
  %v8758 = vmul.f32 %v8738, %v3486
  %v8759 = vmul.f32 %v8741, %v3486
  %v8760 = vmul.f32 %v8744, %v3486
  %v8761 = vadd.f32 %v8745, 1e-05
  %v8762 = vadd.f32 %v8746, 1e-05
  %v8763 = vadd.f32 %v8747, 1e-05
  %v8764 = vadd.f32 %v8748, 1e-05
  %v8765 = vadd.f32 %v8749, 1e-05
  %v8766 = vadd.f32 %v8750, 1e-05
  %v8767 = vadd.f32 %v8751, 1e-05
  %v8768 = vadd.f32 %v8752, 1e-05
  %v8769 = vadd.f32 %v8753, 1e-05
  %v8770 = vadd.f32 %v8754, 1e-05
  %v8771 = vadd.f32 %v8755, 1e-05
  %v8772 = vadd.f32 %v8756, 1e-05
  %v8773 = vadd.f32 %v8757, 1e-05
  %v8774 = vadd.f32 %v8758, 1e-05
  %v8775 = vadd.f32 %v8759, 1e-05
  %v8776 = vadd.f32 %v8760, 1e-05
  %v8777 = vrsqrt.pop %v8761
  %v8778 = vrsqrt.pop %v8762
  %v8779 = vrsqrt.pop %v8763
  %v8780 = vrsqrt.pop %v8764
  %v8781 = vrsqrt.pop %v8765
  %v8782 = vrsqrt.pop %v8766
  %v8783 = vrsqrt.pop %v8767
  %v8784 = vrsqrt.pop %v8768
  %v8785 = vrsqrt.pop %v8769
  %v8786 = vrsqrt.pop %v8770
  %v8787 = vrsqrt.pop %v8771
  %v8788 = vrsqrt.pop %v8772
  %v8789 = vrsqrt.pop %v8773
  %v8790 = vrsqrt.pop %v8774
  %v8791 = vrsqrt.pop %v8775
  %v8792 = vrsqrt.pop %v8776
  %v8793 = vmul.f32 %v8665, %v8777
  %v8794 = vmul.f32 %v8666, %v8778
  %v8795 = vmul.f32 %v8667, %v8779
  %v8796 = vmul.f32 %v8668, %v8780
  %v8797 = vmul.f32 %v8669, %v8781
  %v8798 = vmul.f32 %v8670, %v8782
  %v8799 = vmul.f32 %v8671, %v8783
  %v8800 = vmul.f32 %v8672, %v8784
  %v8801 = vmul.f32 %v8673, %v8785
  %v8802 = vmul.f32 %v8674, %v8786
  %v8803 = vmul.f32 %v8675, %v8787
  %v8804 = vmul.f32 %v8676, %v8788
  %v8805 = vmul.f32 %v8677, %v8789
  %v8806 = vmul.f32 %v8678, %v8790
  %v8807 = vmul.f32 %v8679, %v8791
  %v8808 = vmul.f32 %v8680, %v8792
  %v8809 = vlaneseq
  %v8810 = vshrl.u32 %v8809, 7
  %v8811 = vsub.s32 0, %v8810
  %v8812 = vrot.slane %v8599, %v8811
  %v8813 = vmul.f32 %v8793, %v8812
  %v8814 = vmul.f32 %v8794, %v8812
  %v8815 = vmul.f32 %v8795, %v8812
  %v8816 = vmul.f32 %v8796, %v8812
  %v8817 = vmul.f32 %v8797, %v8812
  %v8818 = vmul.f32 %v8798, %v8812
  %v8819 = vmul.f32 %v8799, %v8812
  %v8820 = vmul.f32 %v8800, %v8812
  %v8821 = vmul.f32 %v8801, %v8812
  %v8822 = vmul.f32 %v8802, %v8812
  %v8823 = vmul.f32 %v8803, %v8812
  %v8824 = vmul.f32 %v8804, %v8812
  %v8825 = vmul.f32 %v8805, %v8812
  %v8826 = vmul.f32 %v8806, %v8812
  %v8827 = vmul.f32 %v8807, %v8812
  %v8828 = vmul.f32 %v8808, %v8812
  %v8829 = vlaneseq
  %v8830 = vshrl.u32 %v8829, 7
  %v8831 = vsub.s32 0, %v8830
  %v8832 = vrot.slane %v8600, %v8831
  %v8833 = vadd.f32 %v8813, %v8832
  %v8834 = vadd.f32 %v8814, %v8832
  %v8835 = vadd.f32 %v8815, %v8832
  %v8836 = vadd.f32 %v8816, %v8832
  %v8837 = vadd.f32 %v8817, %v8832
  %v8838 = vadd.f32 %v8818, %v8832
  %v8839 = vadd.f32 %v8819, %v8832
  %v8840 = vadd.f32 %v8820, %v8832
  %v8841 = vadd.f32 %v8821, %v8832
  %v8842 = vadd.f32 %v8822, %v8832
  %v8843 = vadd.f32 %v8823, %v8832
  %v8844 = vadd.f32 %v8824, %v8832
  %v8845 = vadd.f32 %v8825, %v8832
  %v8846 = vadd.f32 %v8826, %v8832
  %v8847 = vadd.f32 %v8827, %v8832
  %v8848 = vadd.f32 %v8828, %v8832
  %v8849 = vpack.c.bf16 %v8834, %v8833
  %v8850 = vpack.c.bf16 %v8836, %v8835
  %v8851 = vpack.c.bf16 %v8838, %v8837
  %v8852 = vpack.c.bf16 %v8840, %v8839
  %v8853 = vpack.c.bf16 %v8842, %v8841
  %v8854 = vpack.c.bf16 %v8844, %v8843
  %v8855 = vpack.c.bf16 %v8846, %v8845
  %v8856 = vpack.c.bf16 %v8848, %v8847
  %s8857 = scalar_lea.vmem %s10, 64
  %v8858 = vld [vmem:[%s8857] sm:$0xff]
  %v8859 = vld [vmem:[%s8857 + $0x8] sm:$0xff]
  %v8860 = vld [vmem:[%s8857 + $0x10] sm:$0xff]
  %v8861 = vld [vmem:[%s8857 + $0x18] sm:$0xff]
  %v8862 = vld [vmem:[%s8857 + $0x20] sm:$0xff]
  %v8863 = vld [vmem:[%s8857 + $0x28] sm:$0xff]
  %v8864 = vld [vmem:[%s8857 + $0x30] sm:$0xff]
  %v8865 = vld [vmem:[%s8857 + $0x38] sm:$0xff]
  %s8866 = scalar_lea.vmem %s11, 4
  %v8867 = vld [vmem:[%s8866] sm:$0xf]
  %v8869 = vlaneseq
  %v8870 = vshrl.u32 %v8869, 7
  %v8871 = vsub.s32 0, %v8870
  %v8872 = vrot.slane %v8867, %v8871
  %v8873 = vlaneseq
  %v8874 = vshrl.u32 %v8873, 7
  %v8875 = vsub.s32 1, %v8874
  %v8876 = vrot.slane %v8867, %v8875
  %v8877 = vlaneseq
  %v8878 = vshrl.u32 %v8877, 7
  %v8879 = vsub.s32 2, %v8878
  %v8880 = vrot.slane %v8867, %v8879
  %v8881 = vlaneseq
  %v8882 = vshrl.u32 %v8881, 7
  %v8883 = vsub.s32 3, %v8882
  %v8884 = vrot.slane %v8867, %v8883
  %v8897 = vunpack.c.l.b16 %v8858
  %v8898 = vunpack.c.h.b16 %v8858
  %v8899 = vunpack.c.l.b16 %v8859
  %v8900 = vunpack.c.h.b16 %v8859
  %v8901 = vunpack.c.l.b16 %v8860
  %v8902 = vunpack.c.h.b16 %v8860
  %v8903 = vunpack.c.l.b16 %v8861
  %v8904 = vunpack.c.h.b16 %v8861
  %v8905 = vunpack.c.l.b16 %v8862
  %v8906 = vunpack.c.h.b16 %v8862
  %v8907 = vunpack.c.l.b16 %v8863
  %v8908 = vunpack.c.h.b16 %v8863
  %v8909 = vunpack.c.l.b16 %v8864
  %v8910 = vunpack.c.h.b16 %v8864
  %v8911 = vunpack.c.l.b16 %v8865
  %v8912 = vunpack.c.h.b16 %v8865
  %v8913 = vpack.c.b16 %v8901, %v8897
  %v8914 = vpack.c.b16 %v8902, %v8898
  %v8915 = vpack.c.b16 %v8903, %v8899
  %v8916 = vpack.c.b16 %v8904, %v8900
  %v8917 = vpack.c.b16 %v8909, %v8905
  %v8918 = vpack.c.b16 %v8910, %v8906
  %v8919 = vpack.c.b16 %v8911, %v8907
  %v8920 = vpack.c.b16 %v8912, %v8908
  %v8930 = vsel %vm143, %v8849, 0
  %v8933 = vsel %vm143, %v8850, 0
  %v8936 = vsel %vm143, %v8851, 0
  %v8939 = vsel %vm143, %v8852, 0
  %v8942 = vsel %vm143, %v8853, 0
  %v8945 = vsel %vm143, %v8854, 0
  %v8948 = vsel %vm143, %v8855, 0
  %v8951 = vsel %vm143, %v8856, 0
  %8953 = vmatprep.subr.bf16.mxu0 %v8914
  %8954 = vmatpush1.bf16.msra.mxu0 %v8913
  %8955 = vmatprep.subr.bf16.mxu0 %v8918
  %8956 = vmatpush1.bf16.msra.mxu0 %v8917
  %8957 = vmatprep.subr.bf16.mxu0 0
  %8958 = vmatpush1.bf16.msra.mxu0 0
  %8959 = vmatprep.subr.bf16.mxu0 0
  %8960 = vmatpush1.bf16.msra.mxu0 0
  %8961 = vmatprep.subr.bf16.mxu0 0
  %8962 = vmatpush1.bf16.msra.mxu0 0
  %8963 = vmatprep.subr.bf16.mxu0 0
  %8964 = vmatpush1.bf16.msra.mxu0 0
  %8965 = vmatprep.subr.bf16.mxu0 0
  %8966 = vmatpush1.bf16.msra.mxu0 0
  %8967 = vmatprep.subr.bf16.mxu0 0
  %8968 = vmatpush1.bf16.msra.mxu0 0
  %8969 = vmatprep.subr.bf16.mxu0 0
  %8970 = vmatpush1.bf16.msra.mxu0 0
  %8971 = vmatprep.subr.bf16.mxu0 0
  %8972 = vmatpush1.bf16.msra.mxu0 0
  %8973 = vmatprep.subr.bf16.mxu0 0
  %8974 = vmatpush1.bf16.msra.mxu0 0
  %8975 = vmatprep.subr.bf16.mxu0 0
  %8976 = vmatpush1.bf16.msra.mxu0 0
  %8977 = vmatprep.subr.bf16.mxu0 0
  %8978 = vmatpush1.bf16.msra.mxu0 0
  %8979 = vmatprep.subr.bf16.mxu0 0
  %8980 = vmatpush1.bf16.msra.mxu0 0
  %8981 = vmatprep.subr.bf16.mxu0 0
  %8982 = vmatpush1.bf16.msra.mxu0 0
  %8983 = vmatprep.subr.bf16.mxu0 0
  %8984 = vmatpush1.bf16.msra.mxu0 0
  %8985 = vmatprep.mubr.bf16.mxu0 0
  %8986 = vmatmul.mubr.bf16.gmra.mrb[0].mxu0 %v8930
  %v8987 = vpop.f32.mrb[0].mxu0
  %v8988 = vadd.f32 %v8872, %v8987
  %v8989 = vpop.f32.mrb[0].mxu0
  %v8990 = vadd.f32 %v8876, %v8989
  %v8991 = vpop.f32.mrb[0].mxu0
  %v8992 = vadd.f32 %v8872, %v8991
  %v8993 = vpop.f32.mrb[0].mxu0
  %v8994 = vadd.f32 %v8876, %v8993
  %8995 = vmatprep.mubr.bf16.mxu0 0
  %8996 = vmatmul.mubr.bf16.gmra.mrb[0].mxu0 %v8933
  %v8997 = vpop.f32.mrb[0].mxu0
  %v8998 = vadd.f32 %v8872, %v8997
  %v8999 = vpop.f32.mrb[0].mxu0
  %v9000 = vadd.f32 %v8876, %v8999
  %v9001 = vpop.f32.mrb[0].mxu0
  %v9002 = vadd.f32 %v8872, %v9001
  %v9003 = vpop.f32.mrb[0].mxu0
  %v9004 = vadd.f32 %v8876, %v9003
  %9005 = vmatprep.mubr.bf16.mxu0 0
  %9006 = vmatmul.mubr.bf16.gmra.mrb[0].mxu0 %v8936
  %v9007 = vpop.f32.mrb[0].mxu0
  %v9008 = vadd.f32 %v8872, %v9007
  %v9009 = vpop.f32.mrb[0].mxu0
  %v9010 = vadd.f32 %v8876, %v9009
  %v9011 = vpop.f32.mrb[0].mxu0
  %v9012 = vadd.f32 %v8872, %v9011
  %v9013 = vpop.f32.mrb[0].mxu0
  %v9014 = vadd.f32 %v8876, %v9013
  %9015 = vmatprep.mubr.bf16.mxu0 0
  %9016 = vmatmul.mubr.bf16.gmra.mrb[0].mxu0 %v8939
  %v9017 = vpop.f32.mrb[0].mxu0
  %v9018 = vadd.f32 %v8872, %v9017
  %v9019 = vpop.f32.mrb[0].mxu0
  %v9020 = vadd.f32 %v8876, %v9019
  %v9021 = vpop.f32.mrb[0].mxu0
  %v9022 = vadd.f32 %v8872, %v9021
  %v9023 = vpop.f32.mrb[0].mxu0
  %v9024 = vadd.f32 %v8876, %v9023
  %9025 = vmatprep.mubr.bf16.mxu0 0
  %9026 = vmatmul.mubr.bf16.gmra.mrb[0].mxu0 %v8942
  %v9027 = vpop.f32.mrb[0].mxu0
  %v9028 = vadd.f32 %v8872, %v9027
  %v9029 = vpop.f32.mrb[0].mxu0
  %v9030 = vadd.f32 %v8876, %v9029
  %v9031 = vpop.f32.mrb[0].mxu0
  %v9032 = vadd.f32 %v8872, %v9031
  %v9033 = vpop.f32.mrb[0].mxu0
  %v9034 = vadd.f32 %v8876, %v9033
  %9035 = vmatprep.mubr.bf16.mxu0 0
  %9036 = vmatmul.mubr.bf16.gmra.mrb[0].mxu0 %v8945
  %v9037 = vpop.f32.mrb[0].mxu0
  %v9038 = vadd.f32 %v8872, %v9037
  %v9039 = vpop.f32.mrb[0].mxu0
  %v9040 = vadd.f32 %v8876, %v9039
  %v9041 = vpop.f32.mrb[0].mxu0
  %v9042 = vadd.f32 %v8872, %v9041
  %v9043 = vpop.f32.mrb[0].mxu0
  %v9044 = vadd.f32 %v8876, %v9043
  %9045 = vmatprep.mubr.bf16.mxu0 0
  %9046 = vmatmul.mubr.bf16.gmra.mrb[0].mxu0 %v8948
  %v9047 = vpop.f32.mrb[0].mxu0
  %v9048 = vadd.f32 %v8872, %v9047
  %v9049 = vpop.f32.mrb[0].mxu0
  %v9050 = vadd.f32 %v8876, %v9049
  %v9051 = vpop.f32.mrb[0].mxu0
  %v9052 = vadd.f32 %v8872, %v9051
  %v9053 = vpop.f32.mrb[0].mxu0
  %v9054 = vadd.f32 %v8876, %v9053
  %9055 = vmatprep.mubr.bf16.mxu0 0
  %9056 = vmatmul.mubr.bf16.gmra.mrb[0].mxu0 %v8951
  %v9057 = vpop.f32.mrb[0].mxu0
  %v9058 = vadd.f32 %v8872, %v9057
  %v9059 = vpop.f32.mrb[0].mxu0
  %v9060 = vadd.f32 %v8876, %v9059
  %v9061 = vpop.f32.mrb[0].mxu0
  %v9062 = vadd.f32 %v8872, %v9061
  %v9063 = vpop.f32.mrb[0].mxu0
  %v9064 = vadd.f32 %v8876, %v9063
  %9065 = vdwg.mxu0
  %9066 = vmatprep.subr.bf16.mxu0 %v8916
  %9067 = vmatpush1.bf16.msra.mxu0 %v8915
  %9068 = vmatprep.subr.bf16.mxu0 %v8920
  %9069 = vmatpush1.bf16.msra.mxu0 %v8919
  %9070 = vmatprep.subr.bf16.mxu0 0
  %9071 = vmatpush1.bf16.msra.mxu0 0
  %9072 = vmatprep.subr.bf16.mxu0 0
  %9073 = vmatpush1.bf16.msra.mxu0 0
  %9074 = vmatprep.subr.bf16.mxu0 0
  %9075 = vmatpush1.bf16.msra.mxu0 0
  %9076 = vmatprep.subr.bf16.mxu0 0
  %9077 = vmatpush1.bf16.msra.mxu0 0
  %9078 = vmatprep.subr.bf16.mxu0 0
  %9079 = vmatpush1.bf16.msra.mxu0 0
  %9080 = vmatprep.subr.bf16.mxu0 0
  %9081 = vmatpush1.bf16.msra.mxu0 0
  %9082 = vmatprep.subr.bf16.mxu0 0
  %9083 = vmatpush1.bf16.msra.mxu0 0
  %9084 = vmatprep.subr.bf16.mxu0 0
  %9085 = vmatpush1.bf16.msra.mxu0 0
  %9086 = vmatprep.subr.bf16.mxu0 0
  %9087 = vmatpush1.bf16.msra.mxu0 0
  %9088 = vmatprep.subr.bf16.mxu0 0
  %9089 = vmatpush1.bf16.msra.mxu0 0
  %9090 = vmatprep.subr.bf16.mxu0 0
  %9091 = vmatpush1.bf16.msra.mxu0 0
  %9092 = vmatprep.subr.bf16.mxu0 0
  %9093 = vmatpush1.bf16.msra.mxu0 0
  %9094 = vmatprep.subr.bf16.mxu0 0
  %9095 = vmatpush1.bf16.msra.mxu0 0
  %9096 = vmatprep.subr.bf16.mxu0 0
  %9097 = vmatpush1.bf16.msra.mxu0 0
  %9098 = vmatprep.mubr.bf16.mxu0 0
  %9099 = vmatmul.mubr.bf16.gmra.mrb[0].mxu0 %v8930
  %v9100 = vpop.f32.mrb[0].mxu0
  %v9101 = vadd.f32 %v8880, %v9100
  %v9102 = vpop.f32.mrb[0].mxu0
  %v9103 = vadd.f32 %v8884, %v9102
  %v9104 = vpop.f32.mrb[0].mxu0
  %v9105 = vadd.f32 %v8880, %v9104
  %v9106 = vpop.f32.mrb[0].mxu0
  %v9107 = vadd.f32 %v8884, %v9106
  %9108 = vmatprep.mubr.bf16.mxu0 0
  %9109 = vmatmul.mubr.bf16.gmra.mrb[0].mxu0 %v8933
  %v9110 = vpop.f32.mrb[0].mxu0
  %v9111 = vadd.f32 %v8880, %v9110
  %v9112 = vpop.f32.mrb[0].mxu0
  %v9113 = vadd.f32 %v8884, %v9112
  %v9114 = vpop.f32.mrb[0].mxu0
  %v9115 = vadd.f32 %v8880, %v9114
  %v9116 = vpop.f32.mrb[0].mxu0
  %v9117 = vadd.f32 %v8884, %v9116
  %9118 = vmatprep.mubr.bf16.mxu0 0
  %9119 = vmatmul.mubr.bf16.gmra.mrb[0].mxu0 %v8936
  %v9120 = vpop.f32.mrb[0].mxu0
  %v9121 = vadd.f32 %v8880, %v9120
  %v9122 = vpop.f32.mrb[0].mxu0
  %v9123 = vadd.f32 %v8884, %v9122
  %v9124 = vpop.f32.mrb[0].mxu0
  %v9125 = vadd.f32 %v8880, %v9124
  %v9126 = vpop.f32.mrb[0].mxu0
  %v9127 = vadd.f32 %v8884, %v9126
  %9128 = vmatprep.mubr.bf16.mxu0 0
  %9129 = vmatmul.mubr.bf16.gmra.mrb[0].mxu0 %v8939
  %v9130 = vpop.f32.mrb[0].mxu0
  %v9131 = vadd.f32 %v8880, %v9130
  %v9132 = vpop.f32.mrb[0].mxu0
  %v9133 = vadd.f32 %v8884, %v9132
  %v9134 = vpop.f32.mrb[0].mxu0
  %v9135 = vadd.f32 %v8880, %v9134
  %v9136 = vpop.f32.mrb[0].mxu0
  %v9137 = vadd.f32 %v8884, %v9136
  %9138 = vmatprep.mubr.bf16.mxu0 0
  %9139 = vmatmul.mubr.bf16.gmra.mrb[0].mxu0 %v8942
  %v9140 = vpop.f32.mrb[0].mxu0
  %v9141 = vadd.f32 %v8880, %v9140
  %v9142 = vpop.f32.mrb[0].mxu0
  %v9143 = vadd.f32 %v8884, %v9142
  %v9144 = vpop.f32.mrb[0].mxu0
  %v9145 = vadd.f32 %v8880, %v9144
  %v9146 = vpop.f32.mrb[0].mxu0
  %v9147 = vadd.f32 %v8884, %v9146
  %9148 = vmatprep.mubr.bf16.mxu0 0
  %9149 = vmatmul.mubr.bf16.gmra.mrb[0].mxu0 %v8945
  %v9150 = vpop.f32.mrb[0].mxu0
  %v9151 = vadd.f32 %v8880, %v9150
  %v9152 = vpop.f32.mrb[0].mxu0
  %v9153 = vadd.f32 %v8884, %v9152
  %v9154 = vpop.f32.mrb[0].mxu0
  %v9155 = vadd.f32 %v8880, %v9154
  %v9156 = vpop.f32.mrb[0].mxu0
  %v9157 = vadd.f32 %v8884, %v9156
  %9158 = vmatprep.mubr.bf16.mxu0 0
  %9159 = vmatmul.mubr.bf16.gmra.mrb[0].mxu0 %v8948
  %v9160 = vpop.f32.mrb[0].mxu0
  %v9161 = vadd.f32 %v8880, %v9160
  %v9162 = vpop.f32.mrb[0].mxu0
  %v9163 = vadd.f32 %v8884, %v9162
  %v9164 = vpop.f32.mrb[0].mxu0
  %v9165 = vadd.f32 %v8880, %v9164
  %v9166 = vpop.f32.mrb[0].mxu0
  %v9167 = vadd.f32 %v8884, %v9166
  %9168 = vmatprep.mubr.bf16.mxu0 0
  %9169 = vmatmul.mubr.bf16.gmra.mrb[0].mxu0 %v8951
  %v9170 = vpop.f32.mrb[0].mxu0
  %v9171 = vadd.f32 %v8880, %v9170
  %v9172 = vpop.f32.mrb[0].mxu0
  %v9173 = vadd.f32 %v8884, %v9172
  %v9174 = vpop.f32.mrb[0].mxu0
  %v9175 = vadd.f32 %v8880, %v9174
  %v9176 = vpop.f32.mrb[0].mxu0
  %v9177 = vadd.f32 %v8884, %v9176
  %9178 = vdwg.mxu0
  %v9179 = vmax.f32 %v8988, 0.0
  %v9180 = vmax.f32 %v8990, 0.0
  %v9181 = vmax.f32 %v9101, 0.0
  %v9182 = vmax.f32 %v9103, 0.0
  %v9183 = vmax.f32 %v8992, 0.0
  %v9184 = vmax.f32 %v8994, 0.0
  %v9185 = vmax.f32 %v9105, 0.0
  %v9186 = vmax.f32 %v9107, 0.0
  %v9187 = vmax.f32 %v8998, 0.0
  %v9188 = vmax.f32 %v9000, 0.0
  %v9189 = vmax.f32 %v9111, 0.0
  %v9190 = vmax.f32 %v9113, 0.0
  %v9191 = vmax.f32 %v9002, 0.0
  %v9192 = vmax.f32 %v9004, 0.0
  %v9193 = vmax.f32 %v9115, 0.0
  %v9194 = vmax.f32 %v9117, 0.0
  %v9195 = vmax.f32 %v9008, 0.0
  %v9196 = vmax.f32 %v9010, 0.0
  %v9197 = vmax.f32 %v9121, 0.0
  %v9198 = vmax.f32 %v9123, 0.0
  %v9199 = vmax.f32 %v9012, 0.0
  %v9200 = vmax.f32 %v9014, 0.0
  %v9201 = vmax.f32 %v9125, 0.0
  %v9202 = vmax.f32 %v9127, 0.0
  %v9203 = vmax.f32 %v9018, 0.0
  %v9204 = vmax.f32 %v9020, 0.0
  %v9205 = vmax.f32 %v9131, 0.0
  %v9206 = vmax.f32 %v9133, 0.0
  %v9207 = vmax.f32 %v9022, 0.0
  %v9208 = vmax.f32 %v9024, 0.0
  %v9209 = vmax.f32 %v9135, 0.0
  %v9210 = vmax.f32 %v9137, 0.0
  %v9211 = vmax.f32 %v9028, 0.0
  %v9212 = vmax.f32 %v9030, 0.0
  %v9213 = vmax.f32 %v9141, 0.0
  %v9214 = vmax.f32 %v9143, 0.0
  %v9215 = vmax.f32 %v9032, 0.0
  %v9216 = vmax.f32 %v9034, 0.0
  %v9217 = vmax.f32 %v9145, 0.0
  %v9218 = vmax.f32 %v9147, 0.0
  %v9219 = vmax.f32 %v9038, 0.0
  %v9220 = vmax.f32 %v9040, 0.0
  %v9221 = vmax.f32 %v9151, 0.0
  %v9222 = vmax.f32 %v9153, 0.0
  %v9223 = vmax.f32 %v9042, 0.0
  %v9224 = vmax.f32 %v9044, 0.0
  %v9225 = vmax.f32 %v9155, 0.0
  %v9226 = vmax.f32 %v9157, 0.0
  %v9227 = vmax.f32 %v9048, 0.0
  %v9228 = vmax.f32 %v9050, 0.0
  %v9229 = vmax.f32 %v9161, 0.0
  %v9230 = vmax.f32 %v9163, 0.0
  %v9231 = vmax.f32 %v9052, 0.0
  %v9232 = vmax.f32 %v9054, 0.0
  %v9233 = vmax.f32 %v9165, 0.0
  %v9234 = vmax.f32 %v9167, 0.0
  %v9235 = vmax.f32 %v9058, 0.0
  %v9236 = vmax.f32 %v9060, 0.0
  %v9237 = vmax.f32 %v9171, 0.0
  %v9238 = vmax.f32 %v9173, 0.0
  %v9239 = vmax.f32 %v9062, 0.0
  %v9240 = vmax.f32 %v9064, 0.0
  %v9241 = vmax.f32 %v9175, 0.0
  %v9242 = vmax.f32 %v9177, 0.0
  %v9243 = vpack.c.bf16 %v9183, %v9179
  %v9244 = vpack.c.bf16 %v9184, %v9180
  %v9245 = vpack.c.bf16 %v9185, %v9181
  %v9246 = vpack.c.bf16 %v9186, %v9182
  %v9247 = vpack.c.bf16 %v9191, %v9187
  %v9248 = vpack.c.bf16 %v9192, %v9188
  %v9249 = vpack.c.bf16 %v9193, %v9189
  %v9250 = vpack.c.bf16 %v9194, %v9190
  %v9251 = vpack.c.bf16 %v9199, %v9195
  %v9252 = vpack.c.bf16 %v9200, %v9196
  %v9253 = vpack.c.bf16 %v9201, %v9197
  %v9254 = vpack.c.bf16 %v9202, %v9198
  %v9255 = vpack.c.bf16 %v9207, %v9203
  %v9256 = vpack.c.bf16 %v9208, %v9204
  %v9257 = vpack.c.bf16 %v9209, %v9205
  %v9258 = vpack.c.bf16 %v9210, %v9206
  %v9259 = vpack.c.bf16 %v9215, %v9211
  %v9260 = vpack.c.bf16 %v9216, %v9212
  %v9261 = vpack.c.bf16 %v9217, %v9213
  %v9262 = vpack.c.bf16 %v9218, %v9214
  %v9263 = vpack.c.bf16 %v9223, %v9219
  %v9264 = vpack.c.bf16 %v9224, %v9220
  %v9265 = vpack.c.bf16 %v9225, %v9221
  %v9266 = vpack.c.bf16 %v9226, %v9222
  %v9267 = vpack.c.bf16 %v9231, %v9227
  %v9268 = vpack.c.bf16 %v9232, %v9228
  %v9269 = vpack.c.bf16 %v9233, %v9229
  %v9270 = vpack.c.bf16 %v9234, %v9230
  %v9271 = vpack.c.bf16 %v9239, %v9235
  %v9272 = vpack.c.bf16 %v9240, %v9236
  %v9273 = vpack.c.bf16 %v9241, %v9237
  %v9274 = vpack.c.bf16 %v9242, %v9238
  %s9275 = scalar_lea.vmem %s12, 256
  %v9276 = vld [vmem:[%s9275] sm:$0xf]
  %v9277 = vld [vmem:[%s9275 + $0x4] sm:$0xf]
  %v9278 = vld [vmem:[%s9275 + $0x8] sm:$0xf]
  %v9279 = vld [vmem:[%s9275 + $0xc] sm:$0xf]
  %v9280 = vld [vmem:[%s9275 + $0x10] sm:$0xf]
  %v9281 = vld [vmem:[%s9275 + $0x14] sm:$0xf]
  %v9282 = vld [vmem:[%s9275 + $0x18] sm:$0xf]
  %v9283 = vld [vmem:[%s9275 + $0x1c] sm:$0xf]
  %v9284 = vld [vmem:[%s9275 + $0x20] sm:$0xf]
  %v9285 = vld [vmem:[%s9275 + $0x24] sm:$0xf]
  %v9286 = vld [vmem:[%s9275 + $0x28] sm:$0xf]
  %v9287 = vld [vmem:[%s9275 + $0x2c] sm:$0xf]
  %v9288 = vld [vmem:[%s9275 + $0x30] sm:$0xf]
  %v9289 = vld [vmem:[%s9275 + $0x34] sm:$0xf]
  %v9290 = vld [vmem:[%s9275 + $0x38] sm:$0xf]
  %v9291 = vld [vmem:[%s9275 + $0x3c] sm:$0xf]
  %v9292 = vld [vmem:[%s9275 + $0x40] sm:$0xf]
  %v9293 = vld [vmem:[%s9275 + $0x44] sm:$0xf]
  %v9294 = vld [vmem:[%s9275 + $0x48] sm:$0xf]
  %v9295 = vld [vmem:[%s9275 + $0x4c] sm:$0xf]
  %v9296 = vld [vmem:[%s9275 + $0x50] sm:$0xf]
  %v9297 = vld [vmem:[%s9275 + $0x54] sm:$0xf]
  %v9298 = vld [vmem:[%s9275 + $0x58] sm:$0xf]
  %v9299 = vld [vmem:[%s9275 + $0x5c] sm:$0xf]
  %v9300 = vld [vmem:[%s9275 + $0x60] sm:$0xf]
  %v9301 = vld [vmem:[%s9275 + $0x64] sm:$0xf]
  %v9302 = vld [vmem:[%s9275 + $0x68] sm:$0xf]
  %v9303 = vld [vmem:[%s9275 + $0x6c] sm:$0xf]
  %v9304 = vld [vmem:[%s9275 + $0x70] sm:$0xf]
  %v9305 = vld [vmem:[%s9275 + $0x74] sm:$0xf]
  %v9306 = vld [vmem:[%s9275 + $0x78] sm:$0xf]
  %v9307 = vld [vmem:[%s9275 + $0x7c] sm:$0xf]
  %v9308 = vld [vmem:[%s9275 + $0x80] sm:$0xf]
  %v9309 = vld [vmem:[%s9275 + $0x84] sm:$0xf]
  %v9310 = vld [vmem:[%s9275 + $0x88] sm:$0xf]
  %v9311 = vld [vmem:[%s9275 + $0x8c] sm:$0xf]
  %v9312 = vld [vmem:[%s9275 + $0x90] sm:$0xf]
  %v9313 = vld [vmem:[%s9275 + $0x94] sm:$0xf]
  %v9314 = vld [vmem:[%s9275 + $0x98] sm:$0xf]
  %v9315 = vld [vmem:[%s9275 + $0x9c] sm:$0xf]
  %v9316 = vld [vmem:[%s9275 + $0xa0] sm:$0xf]
  %v9317 = vld [vmem:[%s9275 + $0xa4] sm:$0xf]
  %v9318 = vld [vmem:[%s9275 + $0xa8] sm:$0xf]
  %v9319 = vld [vmem:[%s9275 + $0xac] sm:$0xf]
  %v9320 = vld [vmem:[%s9275 + $0xb0] sm:$0xf]
  %v9321 = vld [vmem:[%s9275 + $0xb4] sm:$0xf]
  %v9322 = vld [vmem:[%s9275 + $0xb8] sm:$0xf]
  %v9323 = vld [vmem:[%s9275 + $0xbc] sm:$0xf]
  %v9324 = vld [vmem:[%s9275 + $0xc0] sm:$0xf]
  %v9325 = vld [vmem:[%s9275 + $0xc4] sm:$0xf]
  %v9326 = vld [vmem:[%s9275 + $0xc8] sm:$0xf]
  %v9327 = vld [vmem:[%s9275 + $0xcc] sm:$0xf]
  %v9328 = vld [vmem:[%s9275 + $0xd0] sm:$0xf]
  %v9329 = vld [vmem:[%s9275 + $0xd4] sm:$0xf]
  %v9330 = vld [vmem:[%s9275 + $0xd8] sm:$0xf]
  %v9331 = vld [vmem:[%s9275 + $0xdc] sm:$0xf]
  %v9332 = vld [vmem:[%s9275 + $0xe0] sm:$0xf]
  %v9333 = vld [vmem:[%s9275 + $0xe4] sm:$0xf]
  %v9334 = vld [vmem:[%s9275 + $0xe8] sm:$0xf]
  %v9335 = vld [vmem:[%s9275 + $0xec] sm:$0xf]
  %v9336 = vld [vmem:[%s9275 + $0xf0] sm:$0xf]
  %v9337 = vld [vmem:[%s9275 + $0xf4] sm:$0xf]
  %v9338 = vld [vmem:[%s9275 + $0xf8] sm:$0xf]
  %v9339 = vld [vmem:[%s9275 + $0xfc] sm:$0xf]
  %v9340 = vld [vmem:[%s4 + $0x18] sm:$0x1]
  %v9341 = vlaneseq
  %v9342 = vshrl.u32 %v9341, 7
  %v9343 = vsub.s32 0, %v9342
  %v9344 = vrot.slane %v9340, %v9343
  %v9409 = vunpack.c.l.b16 %v9276
  %v9410 = vunpack.c.l.b16 %v9277
  %v9411 = vunpack.c.l.b16 %v9278
  %v9412 = vunpack.c.l.b16 %v9279
  %v9413 = vunpack.c.l.b16 %v9280
  %v9414 = vunpack.c.l.b16 %v9281
  %v9415 = vunpack.c.l.b16 %v9282
  %v9416 = vunpack.c.l.b16 %v9283
  %v9417 = vunpack.c.l.b16 %v9284
  %v9418 = vunpack.c.l.b16 %v9285
  %v9419 = vunpack.c.l.b16 %v9286
  %v9420 = vunpack.c.l.b16 %v9287
  %v9421 = vunpack.c.l.b16 %v9288
  %v9422 = vunpack.c.l.b16 %v9289
  %v9423 = vunpack.c.l.b16 %v9290
  %v9424 = vunpack.c.l.b16 %v9291
  %v9425 = vunpack.c.l.b16 %v9292
  %v9426 = vunpack.c.l.b16 %v9293
  %v9427 = vunpack.c.l.b16 %v9294
  %v9428 = vunpack.c.l.b16 %v9295
  %v9429 = vunpack.c.l.b16 %v9296
  %v9430 = vunpack.c.l.b16 %v9297
  %v9431 = vunpack.c.l.b16 %v9298
  %v9432 = vunpack.c.l.b16 %v9299
  %v9433 = vunpack.c.l.b16 %v9300
  %v9434 = vunpack.c.l.b16 %v9301
  %v9435 = vunpack.c.l.b16 %v9302
  %v9436 = vunpack.c.l.b16 %v9303
  %v9437 = vunpack.c.l.b16 %v9304
  %v9438 = vunpack.c.l.b16 %v9305
  %v9439 = vunpack.c.l.b16 %v9306
  %v9440 = vunpack.c.l.b16 %v9307
  %v9441 = vunpack.c.l.b16 %v9308
  %v9442 = vunpack.c.l.b16 %v9309
  %v9443 = vunpack.c.l.b16 %v9310
  %v9444 = vunpack.c.l.b16 %v9311
  %v9445 = vunpack.c.l.b16 %v9312
  %v9446 = vunpack.c.l.b16 %v9313
  %v9447 = vunpack.c.l.b16 %v9314
  %v9448 = vunpack.c.l.b16 %v9315
  %v9449 = vunpack.c.l.b16 %v9316
  %v9450 = vunpack.c.l.b16 %v9317
  %v9451 = vunpack.c.l.b16 %v9318
  %v9452 = vunpack.c.l.b16 %v9319
  %v9453 = vunpack.c.l.b16 %v9320
  %v9454 = vunpack.c.l.b16 %v9321
  %v9455 = vunpack.c.l.b16 %v9322
  %v9456 = vunpack.c.l.b16 %v9323
  %v9457 = vunpack.c.l.b16 %v9324
  %v9458 = vunpack.c.l.b16 %v9325
  %v9459 = vunpack.c.l.b16 %v9326
  %v9460 = vunpack.c.l.b16 %v9327
  %v9461 = vunpack.c.l.b16 %v9328
  %v9462 = vunpack.c.l.b16 %v9329
  %v9463 = vunpack.c.l.b16 %v9330
  %v9464 = vunpack.c.l.b16 %v9331
  %v9465 = vunpack.c.l.b16 %v9332
  %v9466 = vunpack.c.l.b16 %v9333
  %v9467 = vunpack.c.l.b16 %v9334
  %v9468 = vunpack.c.l.b16 %v9335
  %v9469 = vunpack.c.l.b16 %v9336
  %v9470 = vunpack.c.l.b16 %v9337
  %v9471 = vunpack.c.l.b16 %v9338
  %v9472 = vunpack.c.l.b16 %v9339
  %v9473 = vpack.c.b16 %v9410, %v9409
  %v9474 = vpack.c.b16 %v9412, %v9411
  %v9475 = vpack.c.b16 %v9414, %v9413
  %v9476 = vpack.c.b16 %v9416, %v9415
  %v9477 = vpack.c.b16 %v9418, %v9417
  %v9478 = vpack.c.b16 %v9420, %v9419
  %v9479 = vpack.c.b16 %v9422, %v9421
  %v9480 = vpack.c.b16 %v9424, %v9423
  %v9481 = vpack.c.b16 %v9426, %v9425
  %v9482 = vpack.c.b16 %v9428, %v9427
  %v9483 = vpack.c.b16 %v9430, %v9429
  %v9484 = vpack.c.b16 %v9432, %v9431
  %v9485 = vpack.c.b16 %v9434, %v9433
  %v9486 = vpack.c.b16 %v9436, %v9435
  %v9487 = vpack.c.b16 %v9438, %v9437
  %v9488 = vpack.c.b16 %v9440, %v9439
  %v9489 = vpack.c.b16 %v9442, %v9441
  %v9490 = vpack.c.b16 %v9444, %v9443
  %v9491 = vpack.c.b16 %v9446, %v9445
  %v9492 = vpack.c.b16 %v9448, %v9447
  %v9493 = vpack.c.b16 %v9450, %v9449
  %v9494 = vpack.c.b16 %v9452, %v9451
  %v9495 = vpack.c.b16 %v9454, %v9453
  %v9496 = vpack.c.b16 %v9456, %v9455
  %v9497 = vpack.c.b16 %v9458, %v9457
  %v9498 = vpack.c.b16 %v9460, %v9459
  %v9499 = vpack.c.b16 %v9462, %v9461
  %v9500 = vpack.c.b16 %v9464, %v9463
  %v9501 = vpack.c.b16 %v9466, %v9465
  %v9502 = vpack.c.b16 %v9468, %v9467
  %v9503 = vpack.c.b16 %v9470, %v9469
  %v9504 = vpack.c.b16 %v9472, %v9471
  %9537 = vmatprep.subr.bf16.mxu0 0
  %9538 = vmatpush1.bf16.msra.mxu0 %v9473
  %9539 = vmatprep.subr.bf16.mxu0 0
  %9540 = vmatpush1.bf16.msra.mxu0 %v9474
  %9541 = vmatprep.subr.bf16.mxu0 0
  %9542 = vmatpush1.bf16.msra.mxu0 %v9475
  %9543 = vmatprep.subr.bf16.mxu0 0
  %9544 = vmatpush1.bf16.msra.mxu0 %v9476
  %9545 = vmatprep.subr.bf16.mxu0 0
  %9546 = vmatpush1.bf16.msra.mxu0 %v9477
  %9547 = vmatprep.subr.bf16.mxu0 0
  %9548 = vmatpush1.bf16.msra.mxu0 %v9478
  %9549 = vmatprep.subr.bf16.mxu0 0
  %9550 = vmatpush1.bf16.msra.mxu0 %v9479
  %9551 = vmatprep.subr.bf16.mxu0 0
  %9552 = vmatpush1.bf16.msra.mxu0 %v9480
  %9553 = vmatprep.subr.bf16.mxu0 0
  %9554 = vmatpush1.bf16.msra.mxu0 %v9481
  %9555 = vmatprep.subr.bf16.mxu0 0
  %9556 = vmatpush1.bf16.msra.mxu0 %v9482
  %9557 = vmatprep.subr.bf16.mxu0 0
  %9558 = vmatpush1.bf16.msra.mxu0 %v9483
  %9559 = vmatprep.subr.bf16.mxu0 0
  %9560 = vmatpush1.bf16.msra.mxu0 %v9484
  %9561 = vmatprep.subr.bf16.mxu0 0
  %9562 = vmatpush1.bf16.msra.mxu0 %v9485
  %9563 = vmatprep.subr.bf16.mxu0 0
  %9564 = vmatpush1.bf16.msra.mxu0 %v9486
  %9565 = vmatprep.subr.bf16.mxu0 0
  %9566 = vmatpush1.bf16.msra.mxu0 %v9487
  %9567 = vmatprep.subr.bf16.mxu0 0
  %9568 = vmatpush1.bf16.msra.mxu0 %v9488
  %9569 = vmatprep.mubr.bf16.mxu0 %v9244
  %9570 = vmatmul.mubr.bf16.gmra.mrb[0].mxu0 %v9243
  %v9571 = vpop.f32.mrb[0].mxu0
  %v9572 = vadd.f32 %v9344, %v9571
  %v9573 = vpop.f32.mrb[0].mxu0
  %v9574 = vpop.f32.mrb[0].mxu0
  %v9575 = vadd.f32 %v9344, %v9574
  %v9576 = vpop.f32.mrb[0].mxu0
  %9577 = vmatprep.mubr.bf16.mxu0 %v9248
  %9578 = vmatmul.mubr.bf16.gmra.mrb[0].mxu0 %v9247
  %v9579 = vpop.f32.mrb[0].mxu0
  %v9580 = vadd.f32 %v9344, %v9579
  %v9581 = vpop.f32.mrb[0].mxu0
  %v9582 = vpop.f32.mrb[0].mxu0
  %v9583 = vadd.f32 %v9344, %v9582
  %v9584 = vpop.f32.mrb[0].mxu0
  %9585 = vmatprep.mubr.bf16.mxu0 %v9252
  %9586 = vmatmul.mubr.bf16.gmra.mrb[0].mxu0 %v9251
  %v9587 = vpop.f32.mrb[0].mxu0
  %v9588 = vadd.f32 %v9344, %v9587
  %v9589 = vpop.f32.mrb[0].mxu0
  %v9590 = vpop.f32.mrb[0].mxu0
  %v9591 = vadd.f32 %v9344, %v9590
  %v9592 = vpop.f32.mrb[0].mxu0
  %9593 = vmatprep.mubr.bf16.mxu0 %v9256
  %9594 = vmatmul.mubr.bf16.gmra.mrb[0].mxu0 %v9255
  %v9595 = vpop.f32.mrb[0].mxu0
  %v9596 = vadd.f32 %v9344, %v9595
  %v9597 = vpop.f32.mrb[0].mxu0
  %v9598 = vpop.f32.mrb[0].mxu0
  %v9599 = vadd.f32 %v9344, %v9598
  %v9600 = vpop.f32.mrb[0].mxu0
  %9601 = vmatprep.mubr.bf16.mxu0 %v9260
  %9602 = vmatmul.mubr.bf16.gmra.mrb[0].mxu0 %v9259
  %v9603 = vpop.f32.mrb[0].mxu0
  %v9604 = vadd.f32 %v9344, %v9603
  %v9605 = vpop.f32.mrb[0].mxu0
  %v9606 = vpop.f32.mrb[0].mxu0
  %v9607 = vadd.f32 %v9344, %v9606
  %v9608 = vpop.f32.mrb[0].mxu0
  %9609 = vmatprep.mubr.bf16.mxu0 %v9264
  %9610 = vmatmul.mubr.bf16.gmra.mrb[0].mxu0 %v9263
  %v9611 = vpop.f32.mrb[0].mxu0
  %v9612 = vadd.f32 %v9344, %v9611
  %v9613 = vpop.f32.mrb[0].mxu0
  %v9614 = vpop.f32.mrb[0].mxu0
  %v9615 = vadd.f32 %v9344, %v9614
  %v9616 = vpop.f32.mrb[0].mxu0
  %9617 = vmatprep.mubr.bf16.mxu0 %v9268
  %9618 = vmatmul.mubr.bf16.gmra.mrb[0].mxu0 %v9267
  %v9619 = vpop.f32.mrb[0].mxu0
  %v9620 = vadd.f32 %v9344, %v9619
  %v9621 = vpop.f32.mrb[0].mxu0
  %v9622 = vpop.f32.mrb[0].mxu0
  %v9623 = vadd.f32 %v9344, %v9622
  %v9624 = vpop.f32.mrb[0].mxu0
  %9625 = vmatprep.mubr.bf16.mxu0 %v9272
  %9626 = vmatmul.mubr.bf16.gmra.mrb[0].mxu0 %v9271
  %v9627 = vpop.f32.mrb[0].mxu0
  %v9628 = vadd.f32 %v9344, %v9627
  %v9629 = vpop.f32.mrb[0].mxu0
  %v9630 = vpop.f32.mrb[0].mxu0
  %v9631 = vadd.f32 %v9344, %v9630
  %v9632 = vpop.f32.mrb[0].mxu0
  %9633 = vdwg.mxu0
  %9634 = vmatprep.subr.bf16.mxu0 0
  %9635 = vmatpush1.bf16.msra.mxu0 %v9489
  %9636 = vmatprep.subr.bf16.mxu0 0
  %9637 = vmatpush1.bf16.msra.mxu0 %v9490
  %9638 = vmatprep.subr.bf16.mxu0 0
  %9639 = vmatpush1.bf16.msra.mxu0 %v9491
  %9640 = vmatprep.subr.bf16.mxu0 0
  %9641 = vmatpush1.bf16.msra.mxu0 %v9492
  %9642 = vmatprep.subr.bf16.mxu0 0
  %9643 = vmatpush1.bf16.msra.mxu0 %v9493
  %9644 = vmatprep.subr.bf16.mxu0 0
  %9645 = vmatpush1.bf16.msra.mxu0 %v9494
  %9646 = vmatprep.subr.bf16.mxu0 0
  %9647 = vmatpush1.bf16.msra.mxu0 %v9495
  %9648 = vmatprep.subr.bf16.mxu0 0
  %9649 = vmatpush1.bf16.msra.mxu0 %v9496
  %9650 = vmatprep.subr.bf16.mxu0 0
  %9651 = vmatpush1.bf16.msra.mxu0 %v9497
  %9652 = vmatprep.subr.bf16.mxu0 0
  %9653 = vmatpush1.bf16.msra.mxu0 %v9498
  %9654 = vmatprep.subr.bf16.mxu0 0
  %9655 = vmatpush1.bf16.msra.mxu0 %v9499
  %9656 = vmatprep.subr.bf16.mxu0 0
  %9657 = vmatpush1.bf16.msra.mxu0 %v9500
  %9658 = vmatprep.subr.bf16.mxu0 0
  %9659 = vmatpush1.bf16.msra.mxu0 %v9501
  %9660 = vmatprep.subr.bf16.mxu0 0
  %9661 = vmatpush1.bf16.msra.mxu0 %v9502
  %9662 = vmatprep.subr.bf16.mxu0 0
  %9663 = vmatpush1.bf16.msra.mxu0 %v9503
  %9664 = vmatprep.subr.bf16.mxu0 0
  %9665 = vmatpush1.bf16.msra.mxu0 %v9504
  %9666 = vmatprep.mubr.bf16.mxu0 %v9246
  %9667 = vmatmul.mubr.bf16.gmra.mrb[0].mxu0 %v9245
  %v9668 = vpop.f32.mrb[0].mxu0
  %v9669 = vadd.f32 %v9572, %v9668
  %v9670 = vpop.f32.mrb[0].mxu0
  %v9671 = vpop.f32.mrb[0].mxu0
  %v9672 = vadd.f32 %v9575, %v9671
  %v9673 = vpop.f32.mrb[0].mxu0
  %9674 = vmatprep.mubr.bf16.mxu0 %v9250
  %9675 = vmatmul.mubr.bf16.gmra.mrb[0].mxu0 %v9249
  %v9676 = vpop.f32.mrb[0].mxu0
  %v9677 = vadd.f32 %v9580, %v9676
  %v9678 = vpop.f32.mrb[0].mxu0
  %v9679 = vpop.f32.mrb[0].mxu0
  %v9680 = vadd.f32 %v9583, %v9679
  %v9681 = vpop.f32.mrb[0].mxu0
  %9682 = vmatprep.mubr.bf16.mxu0 %v9254
  %9683 = vmatmul.mubr.bf16.gmra.mrb[0].mxu0 %v9253
  %v9684 = vpop.f32.mrb[0].mxu0
  %v9685 = vadd.f32 %v9588, %v9684
  %v9686 = vpop.f32.mrb[0].mxu0
  %v9687 = vpop.f32.mrb[0].mxu0
  %v9688 = vadd.f32 %v9591, %v9687
  %v9689 = vpop.f32.mrb[0].mxu0
  %9690 = vmatprep.mubr.bf16.mxu0 %v9258
  %9691 = vmatmul.mubr.bf16.gmra.mrb[0].mxu0 %v9257
  %v9692 = vpop.f32.mrb[0].mxu0
  %v9693 = vadd.f32 %v9596, %v9692
  %v9694 = vpop.f32.mrb[0].mxu0
  %v9695 = vpop.f32.mrb[0].mxu0
  %v9696 = vadd.f32 %v9599, %v9695
  %v9697 = vpop.f32.mrb[0].mxu0
  %9698 = vmatprep.mubr.bf16.mxu0 %v9262
  %9699 = vmatmul.mubr.bf16.gmra.mrb[0].mxu0 %v9261
  %v9700 = vpop.f32.mrb[0].mxu0
  %v9701 = vadd.f32 %v9604, %v9700
  %v9702 = vpop.f32.mrb[0].mxu0
  %v9703 = vpop.f32.mrb[0].mxu0
  %v9704 = vadd.f32 %v9607, %v9703
  %v9705 = vpop.f32.mrb[0].mxu0
  %9706 = vmatprep.mubr.bf16.mxu0 %v9266
  %9707 = vmatmul.mubr.bf16.gmra.mrb[0].mxu0 %v9265
  %v9708 = vpop.f32.mrb[0].mxu0
  %v9709 = vadd.f32 %v9612, %v9708
  %v9710 = vpop.f32.mrb[0].mxu0
  %v9711 = vpop.f32.mrb[0].mxu0
  %v9712 = vadd.f32 %v9615, %v9711
  %v9713 = vpop.f32.mrb[0].mxu0
  %9714 = vmatprep.mubr.bf16.mxu0 %v9270
  %9715 = vmatmul.mubr.bf16.gmra.mrb[0].mxu0 %v9269
  %v9716 = vpop.f32.mrb[0].mxu0
  %v9717 = vadd.f32 %v9620, %v9716
  %v9718 = vpop.f32.mrb[0].mxu0
  %v9719 = vpop.f32.mrb[0].mxu0
  %v9720 = vadd.f32 %v9623, %v9719
  %v9721 = vpop.f32.mrb[0].mxu0
  %9722 = vmatprep.mubr.bf16.mxu0 %v9274
  %9723 = vmatmul.mubr.bf16.gmra.mrb[0].mxu0 %v9273
  %v9724 = vpop.f32.mrb[0].mxu0
  %v9725 = vadd.f32 %v9628, %v9724
  %v9726 = vpop.f32.mrb[0].mxu0
  %v9727 = vpop.f32.mrb[0].mxu0
  %v9728 = vadd.f32 %v9631, %v9727
  %v9729 = vpop.f32.mrb[0].mxu0
  %9730 = vdwg.mxu0
  %v9731 = vadd.f32 %v8833, %v9669
  %v9732 = vadd.f32 %v8834, %v9672
  %v9733 = vadd.f32 %v8835, %v9677
  %v9734 = vadd.f32 %v8836, %v9680
  %v9735 = vadd.f32 %v8837, %v9685
  %v9736 = vadd.f32 %v8838, %v9688
  %v9737 = vadd.f32 %v8839, %v9693
  %v9738 = vadd.f32 %v8840, %v9696
  %v9739 = vadd.f32 %v8841, %v9701
  %v9740 = vadd.f32 %v8842, %v9704
  %v9741 = vadd.f32 %v8843, %v9709
  %v9742 = vadd.f32 %v8844, %v9712
  %v9743 = vadd.f32 %v8845, %v9717
  %v9744 = vadd.f32 %v8846, %v9720
  %v9745 = vadd.f32 %v8847, %v9725
  %v9746 = vadd.f32 %v8848, %v9728
  %v9747 = vld [vmem:[%s4 + $0x16] sm:$0x1]
  %v9748 = vld [vmem:[%s4 + $0x17] sm:$0x1]
  %v9749 = vsel %vm143, %v9731, 0.0
  %9750 = vadd.xlane.f32.xlu0 %v9749
  %v9751 = vpop.xlane.xlu0 %9750
  %v9752 = vsel %vm143, %v9732, 0.0
  %9753 = vadd.xlane.f32.xlu0 %v9752
  %v9754 = vpop.xlane.xlu0 %9753
  %v9755 = vsel %vm143, %v9733, 0.0
  %9756 = vadd.xlane.f32.xlu0 %v9755
  %v9757 = vpop.xlane.xlu0 %9756
  %v9758 = vsel %vm143, %v9734, 0.0
  %9759 = vadd.xlane.f32.xlu0 %v9758
  %v9760 = vpop.xlane.xlu0 %9759
  %v9761 = vsel %vm143, %v9735, 0.0
  %9762 = vadd.xlane.f32.xlu0 %v9761
  %v9763 = vpop.xlane.xlu0 %9762
  %v9764 = vsel %vm143, %v9736, 0.0
  %9765 = vadd.xlane.f32.xlu0 %v9764
  %v9766 = vpop.xlane.xlu0 %9765
  %v9767 = vsel %vm143, %v9737, 0.0
  %9768 = vadd.xlane.f32.xlu0 %v9767
  %v9769 = vpop.xlane.xlu0 %9768
  %v9770 = vsel %vm143, %v9738, 0.0
  %9771 = vadd.xlane.f32.xlu0 %v9770
  %v9772 = vpop.xlane.xlu0 %9771
  %v9773 = vsel %vm143, %v9739, 0.0
  %9774 = vadd.xlane.f32.xlu0 %v9773
  %v9775 = vpop.xlane.xlu0 %9774
  %v9776 = vsel %vm143, %v9740, 0.0
  %9777 = vadd.xlane.f32.xlu0 %v9776
  %v9778 = vpop.xlane.xlu0 %9777
  %v9779 = vsel %vm143, %v9741, 0.0
  %9780 = vadd.xlane.f32.xlu0 %v9779
  %v9781 = vpop.xlane.xlu0 %9780
  %v9782 = vsel %vm143, %v9742, 0.0
  %9783 = vadd.xlane.f32.xlu0 %v9782
  %v9784 = vpop.xlane.xlu0 %9783
  %v9785 = vsel %vm143, %v9743, 0.0
  %9786 = vadd.xlane.f32.xlu0 %v9785
  %v9787 = vpop.xlane.xlu0 %9786
  %v9788 = vsel %vm143, %v9744, 0.0
  %9789 = vadd.xlane.f32.xlu0 %v9788
  %v9790 = vpop.xlane.xlu0 %9789
  %v9791 = vsel %vm143, %v9745, 0.0
  %9792 = vadd.xlane.f32.xlu0 %v9791
  %v9793 = vpop.xlane.xlu0 %9792
  %v9794 = vsel %vm143, %v9746, 0.0
  %9795 = vadd.xlane.f32.xlu0 %v9794
  %v9796 = vpop.xlane.xlu0 %9795
  %v9797 = vmul.f32 %v9751, %v3486
  %v9798 = vmul.f32 %v9754, %v3486
  %v9799 = vmul.f32 %v9757, %v3486
  %v9800 = vmul.f32 %v9760, %v3486
  %v9801 = vmul.f32 %v9763, %v3486
  %v9802 = vmul.f32 %v9766, %v3486
  %v9803 = vmul.f32 %v9769, %v3486
  %v9804 = vmul.f32 %v9772, %v3486
  %v9805 = vmul.f32 %v9775, %v3486
  %v9806 = vmul.f32 %v9778, %v3486
  %v9807 = vmul.f32 %v9781, %v3486
  %v9808 = vmul.f32 %v9784, %v3486
  %v9809 = vmul.f32 %v9787, %v3486
  %v9810 = vmul.f32 %v9790, %v3486
  %v9811 = vmul.f32 %v9793, %v3486
  %v9812 = vmul.f32 %v9796, %v3486
  %v9813 = vsub.f32 %v9731, %v9797
  %v9814 = vsub.f32 %v9732, %v9798
  %v9815 = vsub.f32 %v9733, %v9799
  %v9816 = vsub.f32 %v9734, %v9800
  %v9817 = vsub.f32 %v9735, %v9801
  %v9818 = vsub.f32 %v9736, %v9802
  %v9819 = vsub.f32 %v9737, %v9803
  %v9820 = vsub.f32 %v9738, %v9804
  %v9821 = vsub.f32 %v9739, %v9805
  %v9822 = vsub.f32 %v9740, %v9806
  %v9823 = vsub.f32 %v9741, %v9807
  %v9824 = vsub.f32 %v9742, %v9808
  %v9825 = vsub.f32 %v9743, %v9809
  %v9826 = vsub.f32 %v9744, %v9810
  %v9827 = vsub.f32 %v9745, %v9811
  %v9828 = vsub.f32 %v9746, %v9812
  %v9829 = vmul.f32 %v9813, %v9813
  %v9830 = vmul.f32 %v9814, %v9814
  %v9831 = vmul.f32 %v9815, %v9815
  %v9832 = vmul.f32 %v9816, %v9816
  %v9833 = vmul.f32 %v9817, %v9817
  %v9834 = vmul.f32 %v9818, %v9818
  %v9835 = vmul.f32 %v9819, %v9819
  %v9836 = vmul.f32 %v9820, %v9820
  %v9837 = vmul.f32 %v9821, %v9821
  %v9838 = vmul.f32 %v9822, %v9822
  %v9839 = vmul.f32 %v9823, %v9823
  %v9840 = vmul.f32 %v9824, %v9824
  %v9841 = vmul.f32 %v9825, %v9825
  %v9842 = vmul.f32 %v9826, %v9826
  %v9843 = vmul.f32 %v9827, %v9827
  %v9844 = vmul.f32 %v9828, %v9828
  %v9845 = vsel %vm143, %v9829, 0.0
  %9846 = vadd.xlane.f32.xlu0 %v9845
  %v9847 = vpop.xlane.xlu0 %9846
  %v9848 = vsel %vm143, %v9830, 0.0
  %9849 = vadd.xlane.f32.xlu0 %v9848
  %v9850 = vpop.xlane.xlu0 %9849
  %v9851 = vsel %vm143, %v9831, 0.0
  %9852 = vadd.xlane.f32.xlu0 %v9851
  %v9853 = vpop.xlane.xlu0 %9852
  %v9854 = vsel %vm143, %v9832, 0.0
  %9855 = vadd.xlane.f32.xlu0 %v9854
  %v9856 = vpop.xlane.xlu0 %9855
  %v9857 = vsel %vm143, %v9833, 0.0
  %9858 = vadd.xlane.f32.xlu0 %v9857
  %v9859 = vpop.xlane.xlu0 %9858
  %v9860 = vsel %vm143, %v9834, 0.0
  %9861 = vadd.xlane.f32.xlu0 %v9860
  %v9862 = vpop.xlane.xlu0 %9861
  %v9863 = vsel %vm143, %v9835, 0.0
  %9864 = vadd.xlane.f32.xlu0 %v9863
  %v9865 = vpop.xlane.xlu0 %9864
  %v9866 = vsel %vm143, %v9836, 0.0
  %9867 = vadd.xlane.f32.xlu0 %v9866
  %v9868 = vpop.xlane.xlu0 %9867
  %v9869 = vsel %vm143, %v9837, 0.0
  %9870 = vadd.xlane.f32.xlu0 %v9869
  %v9871 = vpop.xlane.xlu0 %9870
  %v9872 = vsel %vm143, %v9838, 0.0
  %9873 = vadd.xlane.f32.xlu0 %v9872
  %v9874 = vpop.xlane.xlu0 %9873
  %v9875 = vsel %vm143, %v9839, 0.0
  %9876 = vadd.xlane.f32.xlu0 %v9875
  %v9877 = vpop.xlane.xlu0 %9876
  %v9878 = vsel %vm143, %v9840, 0.0
  %9879 = vadd.xlane.f32.xlu0 %v9878
  %v9880 = vpop.xlane.xlu0 %9879
  %v9881 = vsel %vm143, %v9841, 0.0
  %9882 = vadd.xlane.f32.xlu0 %v9881
  %v9883 = vpop.xlane.xlu0 %9882
  %v9884 = vsel %vm143, %v9842, 0.0
  %9885 = vadd.xlane.f32.xlu0 %v9884
  %v9886 = vpop.xlane.xlu0 %9885
  %v9887 = vsel %vm143, %v9843, 0.0
  %9888 = vadd.xlane.f32.xlu0 %v9887
  %v9889 = vpop.xlane.xlu0 %9888
  %v9890 = vsel %vm143, %v9844, 0.0
  %9891 = vadd.xlane.f32.xlu0 %v9890
  %v9892 = vpop.xlane.xlu0 %9891
  %v9893 = vmul.f32 %v9847, %v3486
  %v9894 = vmul.f32 %v9850, %v3486
  %v9895 = vmul.f32 %v9853, %v3486
  %v9896 = vmul.f32 %v9856, %v3486
  %v9897 = vmul.f32 %v9859, %v3486
  %v9898 = vmul.f32 %v9862, %v3486
  %v9899 = vmul.f32 %v9865, %v3486
  %v9900 = vmul.f32 %v9868, %v3486
  %v9901 = vmul.f32 %v9871, %v3486
  %v9902 = vmul.f32 %v9874, %v3486
  %v9903 = vmul.f32 %v9877, %v3486
  %v9904 = vmul.f32 %v9880, %v3486
  %v9905 = vmul.f32 %v9883, %v3486
  %v9906 = vmul.f32 %v9886, %v3486
  %v9907 = vmul.f32 %v9889, %v3486
  %v9908 = vmul.f32 %v9892, %v3486
  %v9909 = vadd.f32 %v9893, 1e-05
  %v9910 = vadd.f32 %v9894, 1e-05
  %v9911 = vadd.f32 %v9895, 1e-05
  %v9912 = vadd.f32 %v9896, 1e-05
  %v9913 = vadd.f32 %v9897, 1e-05
  %v9914 = vadd.f32 %v9898, 1e-05
  %v9915 = vadd.f32 %v9899, 1e-05
  %v9916 = vadd.f32 %v9900, 1e-05
  %v9917 = vadd.f32 %v9901, 1e-05
  %v9918 = vadd.f32 %v9902, 1e-05
  %v9919 = vadd.f32 %v9903, 1e-05
  %v9920 = vadd.f32 %v9904, 1e-05
  %v9921 = vadd.f32 %v9905, 1e-05
  %v9922 = vadd.f32 %v9906, 1e-05
  %v9923 = vadd.f32 %v9907, 1e-05
  %v9924 = vadd.f32 %v9908, 1e-05
  %v9925 = vrsqrt.pop %v9909
  %v9926 = vrsqrt.pop %v9910
  %v9927 = vrsqrt.pop %v9911
  %v9928 = vrsqrt.pop %v9912
  %v9929 = vrsqrt.pop %v9913
  %v9930 = vrsqrt.pop %v9914
  %v9931 = vrsqrt.pop %v9915
  %v9932 = vrsqrt.pop %v9916
  %v9933 = vrsqrt.pop %v9917
  %v9934 = vrsqrt.pop %v9918
  %v9935 = vrsqrt.pop %v9919
  %v9936 = vrsqrt.pop %v9920
  %v9937 = vrsqrt.pop %v9921
  %v9938 = vrsqrt.pop %v9922
  %v9939 = vrsqrt.pop %v9923
  %v9940 = vrsqrt.pop %v9924
  %v9941 = vmul.f32 %v9813, %v9925
  %v9942 = vmul.f32 %v9814, %v9926
  %v9943 = vmul.f32 %v9815, %v9927
  %v9944 = vmul.f32 %v9816, %v9928
  %v9945 = vmul.f32 %v9817, %v9929
  %v9946 = vmul.f32 %v9818, %v9930
  %v9947 = vmul.f32 %v9819, %v9931
  %v9948 = vmul.f32 %v9820, %v9932
  %v9949 = vmul.f32 %v9821, %v9933
  %v9950 = vmul.f32 %v9822, %v9934
  %v9951 = vmul.f32 %v9823, %v9935
  %v9952 = vmul.f32 %v9824, %v9936
  %v9953 = vmul.f32 %v9825, %v9937
  %v9954 = vmul.f32 %v9826, %v9938
  %v9955 = vmul.f32 %v9827, %v9939
  %v9956 = vmul.f32 %v9828, %v9940
  %v9957 = vlaneseq
  %v9958 = vshrl.u32 %v9957, 7
  %v9959 = vsub.s32 0, %v9958
  %v9960 = vrot.slane %v9747, %v9959
  %v9961 = vmul.f32 %v9941, %v9960
  %v9962 = vmul.f32 %v9942, %v9960
  %v9963 = vmul.f32 %v9943, %v9960
  %v9964 = vmul.f32 %v9944, %v9960
  %v9965 = vmul.f32 %v9945, %v9960
  %v9966 = vmul.f32 %v9946, %v9960
  %v9967 = vmul.f32 %v9947, %v9960
  %v9968 = vmul.f32 %v9948, %v9960
  %v9969 = vmul.f32 %v9949, %v9960
  %v9970 = vmul.f32 %v9950, %v9960
  %v9971 = vmul.f32 %v9951, %v9960
  %v9972 = vmul.f32 %v9952, %v9960
  %v9973 = vmul.f32 %v9953, %v9960
  %v9974 = vmul.f32 %v9954, %v9960
  %v9975 = vmul.f32 %v9955, %v9960
  %v9976 = vmul.f32 %v9956, %v9960
  %v9977 = vlaneseq
  %v9978 = vshrl.u32 %v9977, 7
  %v9979 = vsub.s32 0, %v9978
  %v9980 = vrot.slane %v9748, %v9979
  %v9981 = vadd.f32 %v9961, %v9980
  %v9982 = vadd.f32 %v9962, %v9980
  %v9983 = vadd.f32 %v9963, %v9980
  %v9984 = vadd.f32 %v9964, %v9980
  %v9985 = vadd.f32 %v9965, %v9980
  %v9986 = vadd.f32 %v9966, %v9980
  %v9987 = vadd.f32 %v9967, %v9980
  %v9988 = vadd.f32 %v9968, %v9980
  %v9989 = vadd.f32 %v9969, %v9980
  %v9990 = vadd.f32 %v9970, %v9980
  %v9991 = vadd.f32 %v9971, %v9980
  %v9992 = vadd.f32 %v9972, %v9980
  %v9993 = vadd.f32 %v9973, %v9980
  %v9994 = vadd.f32 %v9974, %v9980
  %v9995 = vadd.f32 %v9975, %v9980
  %v9996 = vadd.f32 %v9976, %v9980
  %v9997 = vmax.f32 %v461, 0.0
  %v9998 = vmax.f32 %v464, 0.0
  %v9999 = vmax.f32 %v469, 0.0
  %v10000 = vmax.f32 %v472, 0.0
  %v10001 = vmax.f32 %v477, 0.0
  %v10002 = vmax.f32 %v480, 0.0
  %v10003 = vmax.f32 %v485, 0.0
  %v10004 = vmax.f32 %v488, 0.0
  %v10005 = vmax.f32 %v493, 0.0
  %v10006 = vmax.f32 %v496, 0.0
  %v10007 = vmax.f32 %v501, 0.0
  %v10008 = vmax.f32 %v504, 0.0
  %v10009 = vmax.f32 %v509, 0.0
  %v10010 = vmax.f32 %v512, 0.0
  %v10011 = vmax.f32 %v517, 0.0
  %v10012 = vmax.f32 %v520, 0.0
  %v10013 = vmax.f32 %v9981, 0.0
  %v10014 = vmax.f32 %v9982, 0.0
  %v10015 = vmax.f32 %v9983, 0.0
  %v10016 = vmax.f32 %v9984, 0.0
  %v10017 = vmax.f32 %v9985, 0.0
  %v10018 = vmax.f32 %v9986, 0.0
  %v10019 = vmax.f32 %v9987, 0.0
  %v10020 = vmax.f32 %v9988, 0.0
  %v10021 = vmax.f32 %v9989, 0.0
  %v10022 = vmax.f32 %v9990, 0.0
  %v10023 = vmax.f32 %v9991, 0.0
  %v10024 = vmax.f32 %v9992, 0.0
  %v10025 = vmax.f32 %v9993, 0.0
  %v10026 = vmax.f32 %v9994, 0.0
  %v10027 = vmax.f32 %v9995, 0.0
  %v10028 = vmax.f32 %v9996, 0.0
  %10045 = vrot.lane.b32.xlu0 %v10013, 32
  %v10046 = vpop.permute.xlu0 %10045
  %10047 = vrot.lane.b32.xlu0 %v10014, 32
  %v10048 = vpop.permute.xlu0 %10047
  %10049 = vrot.lane.b32.xlu0 %v10015, 32
  %v10050 = vpop.permute.xlu0 %10049
  %10051 = vrot.lane.b32.xlu0 %v10016, 32
  %v10052 = vpop.permute.xlu0 %10051
  %10053 = vrot.lane.b32.xlu0 %v10017, 32
  %v10054 = vpop.permute.xlu0 %10053
  %10055 = vrot.lane.b32.xlu0 %v10018, 32
  %v10056 = vpop.permute.xlu0 %10055
  %10057 = vrot.lane.b32.xlu0 %v10019, 32
  %v10058 = vpop.permute.xlu0 %10057
  %10059 = vrot.lane.b32.xlu0 %v10020, 32
  %v10060 = vpop.permute.xlu0 %10059
  %10061 = vrot.lane.b32.xlu0 %v10021, 32
  %v10062 = vpop.permute.xlu0 %10061
  %10063 = vrot.lane.b32.xlu0 %v10022, 32
  %v10064 = vpop.permute.xlu0 %10063
  %10065 = vrot.lane.b32.xlu0 %v10023, 32
  %v10066 = vpop.permute.xlu0 %10065
  %10067 = vrot.lane.b32.xlu0 %v10024, 32
  %v10068 = vpop.permute.xlu0 %10067
  %10069 = vrot.lane.b32.xlu0 %v10025, 32
  %v10070 = vpop.permute.xlu0 %10069
  %10071 = vrot.lane.b32.xlu0 %v10026, 32
  %v10072 = vpop.permute.xlu0 %10071
  %10073 = vrot.lane.b32.xlu0 %v10027, 32
  %v10074 = vpop.permute.xlu0 %10073
  %10075 = vrot.lane.b32.xlu0 %v10028, 32
  %v10076 = vpop.permute.xlu0 %10075
  %v10093 = vsel %vm143, %v9997, %v10046
  %v10094 = vsel %vm143, %v9998, %v10048
  %v10095 = vsel %vm143, %v9999, %v10050
  %v10096 = vsel %vm143, %v10000, %v10052
  %v10097 = vsel %vm143, %v10001, %v10054
  %v10098 = vsel %vm143, %v10002, %v10056
  %v10099 = vsel %vm143, %v10003, %v10058
  %v10100 = vsel %vm143, %v10004, %v10060
  %v10101 = vsel %vm143, %v10005, %v10062
  %v10102 = vsel %vm143, %v10006, %v10064
  %v10103 = vsel %vm143, %v10007, %v10066
  %v10104 = vsel %vm143, %v10008, %v10068
  %v10105 = vsel %vm143, %v10009, %v10070
  %v10106 = vsel %vm143, %v10010, %v10072
  %v10107 = vsel %vm143, %v10011, %v10074
  %v10108 = vsel %vm143, %v10012, %v10076
  %v10109 = vpack.c.bf16 %v10094, %v10093
  %v10110 = vpack.c.bf16 %v10096, %v10095
  %v10111 = vpack.c.bf16 %v10098, %v10097
  %v10112 = vpack.c.bf16 %v10100, %v10099
  %v10113 = vpack.c.bf16 %v10102, %v10101
  %v10114 = vpack.c.bf16 %v10104, %v10103
  %v10115 = vpack.c.bf16 %v10106, %v10105
  %v10116 = vpack.c.bf16 %v10108, %v10107
  %v10117 = vld [vmem:[%s5] sm:$0xf]
  %v10118 = vld [vmem:[%s5 + $0x4] sm:$0xf]
  %v10119 = vld [vmem:[%s5 + $0x8] sm:$0xf]
  %v10120 = vld [vmem:[%s5 + $0xc] sm:$0xf]
  %v10121 = vld [vmem:[%s5 + $0x10] sm:$0xf]
  %v10122 = vld [vmem:[%s5 + $0x14] sm:$0xf]
  %v10123 = vld [vmem:[%s5 + $0x18] sm:$0xf]
  %v10124 = vld [vmem:[%s5 + $0x1c] sm:$0xf]
  %v10125 = vmax.f32 %v359, 0.0
  %v10126 = vmax.f32 %v182, 0.0
  %10128 = vrot.lane.b32.xlu0 %v10126, 32
  %v10129 = vpop.permute.xlu0 %10128
  %v10131 = vsel %vm143, %v10125, %v10129
  %v10132 = vpack.c.bf16 %v10131, %v10131
  %v10133 = vld [vmem:[%s5 + $0x20] sm:$0xf]
  %v10134 = vld [vmem:[%s5 + $0x24] sm:$0xf]
  %v10135 = vld [vmem:[%s5 + $0x28] sm:$0xf]
  %v10136 = vld [vmem:[%s5 + $0x2c] sm:$0xf]
  %v10137 = vld [vmem:[%s5 + $0x30] sm:$0xf]
  %v10138 = vld [vmem:[%s5 + $0x34] sm:$0xf]
  %v10139 = vld [vmem:[%s5 + $0x38] sm:$0xf]
  %v10140 = vld [vmem:[%s5 + $0x3c] sm:$0xf]
  %v10141 = vld [vmem:[%s6] sm:$0x1]
  %v10142 = vlaneseq
  %v10143 = vshrl.u32 %v10142, 7
  %v10144 = vsub.s32 0, %v10143
  %v10145 = vrot.slane %v10141, %v10144
  %v10154 = vunpack.c.l.b16 %v10133
  %v10155 = vunpack.c.l.b16 %v10134
  %v10156 = vunpack.c.l.b16 %v10135
  %v10157 = vunpack.c.l.b16 %v10136
  %v10158 = vunpack.c.l.b16 %v10137
  %v10159 = vunpack.c.l.b16 %v10138
  %v10160 = vunpack.c.l.b16 %v10139
  %v10161 = vunpack.c.l.b16 %v10140
  %v10162 = vpack.c.b16 %v10155, %v10154
  %v10163 = vpack.c.b16 %v10157, %v10156
  %v10164 = vpack.c.b16 %v10159, %v10158
  %v10165 = vpack.c.b16 %v10161, %v10160
  %v10171 = vsel %vm1580, %v10132, 0
  %10173 = vmatprep.subr.bf16.mxu0 0
  %10174 = vmatpush1.bf16.msra.mxu0 %v10162
  %10175 = vmatprep.subr.bf16.mxu0 0
  %10176 = vmatpush1.bf16.msra.mxu0 %v10163
  %10177 = vmatprep.subr.bf16.mxu0 0
  %10178 = vmatpush1.bf16.msra.mxu0 %v10164
  %10179 = vmatprep.subr.bf16.mxu0 0
  %10180 = vmatpush1.bf16.msra.mxu0 %v10165
  %10181 = vmatprep.subr.bf16.mxu0 0
  %10182 = vmatpush1.bf16.msra.mxu0 0
  %10183 = vmatprep.subr.bf16.mxu0 0
  %10184 = vmatpush1.bf16.msra.mxu0 0
  %10185 = vmatprep.subr.bf16.mxu0 0
  %10186 = vmatpush1.bf16.msra.mxu0 0
  %10187 = vmatprep.subr.bf16.mxu0 0
  %10188 = vmatpush1.bf16.msra.mxu0 0
  %10189 = vmatprep.subr.bf16.mxu0 0
  %10190 = vmatpush1.bf16.msra.mxu0 0
  %10191 = vmatprep.subr.bf16.mxu0 0
  %10192 = vmatpush1.bf16.msra.mxu0 0
  %10193 = vmatprep.subr.bf16.mxu0 0
  %10194 = vmatpush1.bf16.msra.mxu0 0
  %10195 = vmatprep.subr.bf16.mxu0 0
  %10196 = vmatpush1.bf16.msra.mxu0 0
  %10197 = vmatprep.subr.bf16.mxu0 0
  %10198 = vmatpush1.bf16.msra.mxu0 0
  %10199 = vmatprep.subr.bf16.mxu0 0
  %10200 = vmatpush1.bf16.msra.mxu0 0
  %10201 = vmatprep.subr.bf16.mxu0 0
  %10202 = vmatpush1.bf16.msra.mxu0 0
  %10203 = vmatprep.subr.bf16.mxu0 0
  %10204 = vmatpush1.bf16.msra.mxu0 0
  %10205 = vmatprep.mubr.bf16.mxu0 0
  %10206 = vmatmul.mubr.bf16.gmra.mrb[0].mxu0 %v10171
  %v10207 = vpop.f32.mrb[0].mxu0
  %v10208 = vadd.f32 %v10145, %v10207
  %v10209 = vpop.f32.mrb[0].mxu0
  %v10210 = vpop.f32.mrb[0].mxu0
  %v10211 = vpop.f32.mrb[0].mxu0
  %10212 = vdwg.mxu0
  %v10215 = vunpack.c.l.s4 1966171168
  %v10216 = vunpack.c.0.s8 %v10215
  %v10217 = vlaneseq
  %v10218 = vshrl.u32 %v10217, 7
  %v10219 = vsub.s32 %v10216, %v10218
  %v10220 = vrot.slane %v10208, %v10219
  %v10221 = vcombine.high %v10220, %v10220
  %v10223 = vunpack.c.l.s4 1966171168
  %v10224 = vunpack.c.0.s8 %v10223
  %v10225 = vlaneseq
  %v10226 = vshrl.u32 %v10225, 7
  %v10227 = vsub.s32 %v10224, %v10226
  %v10228 = vrot.slane %v10220, %v10227
  %v10230 = vunpack.c.l.s4 1966171168
  %v10231 = vunpack.c.0.s8 %v10230
  %v10232 = vlaneseq
  %v10233 = vshrl.u32 %v10232, 7
  %v10234 = vsub.s32 %v10231, %v10233
  %v10235 = vrot.slane %v10221, %v10234
  %v10236 = vlaneseq
  %v10237 = vshrl.u32 %v10236, 7
  %v10238 = vsub.s32 0, %v10237
  %v10239 = vrot.slane %v10228, %v10238
  %v10240 = vlaneseq
  %v10241 = vshrl.u32 %v10240, 7
  %v10242 = vsub.s32 0, %v10241
  %v10243 = vrot.slane %v10235, %v10242
  %v10254 = vunpack.c.l.b16 %v10117
  %v10255 = vunpack.c.l.b16 %v10118
  %v10256 = vunpack.c.l.b16 %v10119
  %v10257 = vunpack.c.l.b16 %v10120
  %v10258 = vunpack.c.l.b16 %v10121
  %v10259 = vunpack.c.l.b16 %v10122
  %v10260 = vunpack.c.l.b16 %v10123
  %v10261 = vunpack.c.l.b16 %v10124
  %v10262 = vpack.c.b16 %v10255, %v10254
  %v10263 = vpack.c.b16 %v10257, %v10256
  %v10264 = vpack.c.b16 %v10259, %v10258
  %v10265 = vpack.c.b16 %v10261, %v10260
  %v10271 = vsel %vm1580, %v10109, 0
  %v10274 = vsel %vm1580, %v10110, 0
  %v10277 = vsel %vm1580, %v10111, 0
  %v10280 = vsel %vm1580, %v10112, 0
  %v10283 = vsel %vm1580, %v10113, 0
  %v10286 = vsel %vm1580, %v10114, 0
  %v10289 = vsel %vm1580, %v10115, 0
  %v10292 = vsel %vm1580, %v10116, 0
  %10294 = vmatprep.subr.bf16.mxu0 0
  %10295 = vmatpush1.bf16.msra.mxu0 %v10262
  %10296 = vmatprep.subr.bf16.mxu0 0
  %10297 = vmatpush1.bf16.msra.mxu0 %v10263
  %10298 = vmatprep.subr.bf16.mxu0 0
  %10299 = vmatpush1.bf16.msra.mxu0 %v10264
  %10300 = vmatprep.subr.bf16.mxu0 0
  %10301 = vmatpush1.bf16.msra.mxu0 %v10265
  %10302 = vmatprep.subr.bf16.mxu0 0
  %10303 = vmatpush1.bf16.msra.mxu0 0
  %10304 = vmatprep.subr.bf16.mxu0 0
  %10305 = vmatpush1.bf16.msra.mxu0 0
  %10306 = vmatprep.subr.bf16.mxu0 0
  %10307 = vmatpush1.bf16.msra.mxu0 0
  %10308 = vmatprep.subr.bf16.mxu0 0
  %10309 = vmatpush1.bf16.msra.mxu0 0
  %10310 = vmatprep.subr.bf16.mxu0 0
  %10311 = vmatpush1.bf16.msra.mxu0 0
  %10312 = vmatprep.subr.bf16.mxu0 0
  %10313 = vmatpush1.bf16.msra.mxu0 0
  %10314 = vmatprep.subr.bf16.mxu0 0
  %10315 = vmatpush1.bf16.msra.mxu0 0
  %10316 = vmatprep.subr.bf16.mxu0 0
  %10317 = vmatpush1.bf16.msra.mxu0 0
  %10318 = vmatprep.subr.bf16.mxu0 0
  %10319 = vmatpush1.bf16.msra.mxu0 0
  %10320 = vmatprep.subr.bf16.mxu0 0
  %10321 = vmatpush1.bf16.msra.mxu0 0
  %10322 = vmatprep.subr.bf16.mxu0 0
  %10323 = vmatpush1.bf16.msra.mxu0 0
  %10324 = vmatprep.subr.bf16.mxu0 0
  %10325 = vmatpush1.bf16.msra.mxu0 0
  %10326 = vmatprep.mubr.bf16.mxu0 0
  %10327 = vmatmul.mubr.bf16.gmra.mrb[0].mxu0 %v10271
  %v10328 = vpop.f32.mrb[0].mxu0
  %v10329 = vadd.f32 %v10239, %v10328
  %v10330 = vpop.f32.mrb[0].mxu0
  %v10331 = vpop.f32.mrb[0].mxu0
  %v10332 = vadd.f32 %v10239, %v10331
  %v10333 = vpop.f32.mrb[0].mxu0
  %10334 = vmatprep.mubr.bf16.mxu0 0
  %10335 = vmatmul.mubr.bf16.gmra.mrb[0].mxu0 %v10274
  %v10336 = vpop.f32.mrb[0].mxu0
  %v10337 = vadd.f32 %v10239, %v10336
  %v10338 = vpop.f32.mrb[0].mxu0
  %v10339 = vpop.f32.mrb[0].mxu0
  %v10340 = vadd.f32 %v10239, %v10339
  %v10341 = vpop.f32.mrb[0].mxu0
  %10342 = vmatprep.mubr.bf16.mxu0 0
  %10343 = vmatmul.mubr.bf16.gmra.mrb[0].mxu0 %v10277
  %v10344 = vpop.f32.mrb[0].mxu0
  %v10345 = vadd.f32 %v10239, %v10344
  %v10346 = vpop.f32.mrb[0].mxu0
  %v10347 = vpop.f32.mrb[0].mxu0
  %v10348 = vadd.f32 %v10239, %v10347
  %v10349 = vpop.f32.mrb[0].mxu0
  %10350 = vmatprep.mubr.bf16.mxu0 0
  %10351 = vmatmul.mubr.bf16.gmra.mrb[0].mxu0 %v10280
  %v10352 = vpop.f32.mrb[0].mxu0
  %v10353 = vadd.f32 %v10239, %v10352
  %v10354 = vpop.f32.mrb[0].mxu0
  %v10355 = vpop.f32.mrb[0].mxu0
  %v10356 = vadd.f32 %v10239, %v10355
  %v10357 = vpop.f32.mrb[0].mxu0
  %10358 = vmatprep.mubr.bf16.mxu0 0
  %10359 = vmatmul.mubr.bf16.gmra.mrb[0].mxu0 %v10283
  %v10360 = vpop.f32.mrb[0].mxu0
  %v10361 = vadd.f32 %v10243, %v10360
  %v10362 = vpop.f32.mrb[0].mxu0
  %v10363 = vpop.f32.mrb[0].mxu0
  %v10364 = vadd.f32 %v10243, %v10363
  %v10365 = vpop.f32.mrb[0].mxu0
  %10366 = vmatprep.mubr.bf16.mxu0 0
  %10367 = vmatmul.mubr.bf16.gmra.mrb[0].mxu0 %v10286
  %v10368 = vpop.f32.mrb[0].mxu0
  %v10369 = vadd.f32 %v10243, %v10368
  %v10370 = vpop.f32.mrb[0].mxu0
  %v10371 = vpop.f32.mrb[0].mxu0
  %v10372 = vadd.f32 %v10243, %v10371
  %v10373 = vpop.f32.mrb[0].mxu0
  %10374 = vmatprep.mubr.bf16.mxu0 0
  %10375 = vmatmul.mubr.bf16.gmra.mrb[0].mxu0 %v10289
  %v10376 = vpop.f32.mrb[0].mxu0
  %v10377 = vadd.f32 %v10243, %v10376
  %v10378 = vpop.f32.mrb[0].mxu0
  %v10379 = vpop.f32.mrb[0].mxu0
  %v10380 = vadd.f32 %v10243, %v10379
  %v10381 = vpop.f32.mrb[0].mxu0
  %10382 = vmatprep.mubr.bf16.mxu0 0
  %10383 = vmatmul.mubr.bf16.gmra.mrb[0].mxu0 %v10292
  %v10384 = vpop.f32.mrb[0].mxu0
  %v10385 = vadd.f32 %v10243, %v10384
  %v10386 = vpop.f32.mrb[0].mxu0
  %v10387 = vpop.f32.mrb[0].mxu0
  %v10388 = vadd.f32 %v10243, %v10387
  %v10389 = vpop.f32.mrb[0].mxu0
  %10390 = vdwg.mxu0
  %v10391 = vmax.f32 %v10329, 0.0
  %v10392 = vmax.f32 %v10332, 0.0
  %v10393 = vmax.f32 %v10337, 0.0
  %v10394 = vmax.f32 %v10340, 0.0
  %v10395 = vmax.f32 %v10345, 0.0
  %v10396 = vmax.f32 %v10348, 0.0
  %v10397 = vmax.f32 %v10353, 0.0
  %v10398 = vmax.f32 %v10356, 0.0
  %v10399 = vmax.f32 %v10361, 0.0
  %v10400 = vmax.f32 %v10364, 0.0
  %v10401 = vmax.f32 %v10369, 0.0
  %v10402 = vmax.f32 %v10372, 0.0
  %v10403 = vmax.f32 %v10377, 0.0
  %v10404 = vmax.f32 %v10380, 0.0
  %v10405 = vmax.f32 %v10385, 0.0
  %v10406 = vmax.f32 %v10388, 0.0
  %v10407 = vld [vmem:[%s6 + $0x1] sm:$0x1]
  %v10408 = vlaneseq
  %v10409 = vshrl.u32 %v10408, 7
  %v10410 = vsub.s32 0, %v10409
  %v10411 = vrot.slane %v10407, %v10410
  %v10412 = vmul.f32 %v10391, %v10411
  %v10413 = vmul.f32 %v10392, %v10411
  %v10414 = vmul.f32 %v10393, %v10411
  %v10415 = vmul.f32 %v10394, %v10411
  %v10416 = vmul.f32 %v10395, %v10411
  %v10417 = vmul.f32 %v10396, %v10411
  %v10418 = vmul.f32 %v10397, %v10411
  %v10419 = vmul.f32 %v10398, %v10411
  %v10420 = vmul.f32 %v10399, %v10411
  %v10421 = vmul.f32 %v10400, %v10411
  %v10422 = vmul.f32 %v10401, %v10411
  %v10423 = vmul.f32 %v10402, %v10411
  %v10424 = vmul.f32 %v10403, %v10411
  %v10425 = vmul.f32 %v10404, %v10411
  %v10426 = vmul.f32 %v10405, %v10411
  %v10427 = vmul.f32 %v10406, %v10411
  %10428 = vadd.xlane.f32.xlu0 %v10412
  %v10429 = vpop.xlane.xlu0 %10428
  %10430 = vadd.xlane.f32.xlu0 %v10413
  %v10431 = vpop.xlane.xlu0 %10430
  %10432 = vadd.xlane.f32.xlu0 %v10414
  %v10433 = vpop.xlane.xlu0 %10432
  %10434 = vadd.xlane.f32.xlu0 %v10415
  %v10435 = vpop.xlane.xlu0 %10434
  %10436 = vadd.xlane.f32.xlu0 %v10416
  %v10437 = vpop.xlane.xlu0 %10436
  %10438 = vadd.xlane.f32.xlu0 %v10417
  %v10439 = vpop.xlane.xlu0 %10438
  %10440 = vadd.xlane.f32.xlu0 %v10418
  %v10441 = vpop.xlane.xlu0 %10440
  %10442 = vadd.xlane.f32.xlu0 %v10419
  %v10443 = vpop.xlane.xlu0 %10442
  %10444 = vadd.xlane.f32.xlu0 %v10420
  %v10445 = vpop.xlane.xlu0 %10444
  %10446 = vadd.xlane.f32.xlu0 %v10421
  %v10447 = vpop.xlane.xlu0 %10446
  %10448 = vadd.xlane.f32.xlu0 %v10422
  %v10449 = vpop.xlane.xlu0 %10448
  %10450 = vadd.xlane.f32.xlu0 %v10423
  %v10451 = vpop.xlane.xlu0 %10450
  %10452 = vadd.xlane.f32.xlu0 %v10424
  %v10453 = vpop.xlane.xlu0 %10452
  %10454 = vadd.xlane.f32.xlu0 %v10425
  %v10455 = vpop.xlane.xlu0 %10454
  %10456 = vadd.xlane.f32.xlu0 %v10426
  %v10457 = vpop.xlane.xlu0 %10456
  %10458 = vadd.xlane.f32.xlu0 %v10427
  %v10459 = vpop.xlane.xlu0 %10458
  %v10460 = vld [vmem:[%s6 + $0x2] sm:$0x1]
  %v10461 = vlaneseq
  %v10462 = vshrl.u32 %v10461, 7
  %v10463 = vsub.s32 0, %v10462
  %v10464 = vrot.slane %v10460, %v10463
  %v10465 = vadd.f32 %v10429, %v10464
  %v10466 = vadd.f32 %v10431, %v10464
  %v10467 = vadd.f32 %v10433, %v10464
  %v10468 = vadd.f32 %v10435, %v10464
  %v10469 = vadd.f32 %v10437, %v10464
  %v10470 = vadd.f32 %v10439, %v10464
  %v10471 = vadd.f32 %v10441, %v10464
  %v10472 = vadd.f32 %v10443, %v10464
  %v10473 = vadd.f32 %v10445, %v10464
  %v10474 = vadd.f32 %v10447, %v10464
  %v10475 = vadd.f32 %v10449, %v10464
  %v10476 = vadd.f32 %v10451, %v10464
  %v10477 = vadd.f32 %v10453, %v10464
  %v10478 = vadd.f32 %v10455, %v10464
  %v10479 = vadd.f32 %v10457, %v10464
  %v10480 = vadd.f32 %v10459, %v10464
  %vm10481 = vcmask 7168
  %10482 = vst.msk [vmem:[%s13] sm:$0xff] %vm10481, %v10465
  %10483 = vst.msk [vmem:[%s13 + $0x8] sm:$0xff] %vm10481, %v10466
  %10484 = vst.msk [vmem:[%s13 + $0x10] sm:$0xff] %vm10481, %v10467
  %10485 = vst.msk [vmem:[%s13 + $0x18] sm:$0xff] %vm10481, %v10468
  %10486 = vst.msk [vmem:[%s13 + $0x20] sm:$0xff] %vm10481, %v10469
  %10487 = vst.msk [vmem:[%s13 + $0x28] sm:$0xff] %vm10481, %v10470
  %10488 = vst.msk [vmem:[%s13 + $0x30] sm:$0xff] %vm10481, %v10471
  %10489 = vst.msk [vmem:[%s13 + $0x38] sm:$0xff] %vm10481, %v10472
  %10490 = vst.msk [vmem:[%s13 + $0x40] sm:$0xff] %vm10481, %v10473
  %10491 = vst.msk [vmem:[%s13 + $0x48] sm:$0xff] %vm10481, %v10474
  %10492 = vst.msk [vmem:[%s13 + $0x50] sm:$0xff] %vm10481, %v10475
  %10493 = vst.msk [vmem:[%s13 + $0x58] sm:$0xff] %vm10481, %v10476
  %10494 = vst.msk [vmem:[%s13 + $0x60] sm:$0xff] %vm10481, %v10477
  %10495 = vst.msk [vmem:[%s13 + $0x68] sm:$0xff] %vm10481, %v10478
  %10496 = vst.msk [vmem:[%s13 + $0x70] sm:$0xff] %vm10481, %v10479
  %10497 = vst.msk [vmem:[%s13 + $0x78] sm:$0xff] %vm10481, %v10480
  // Predicated region
  $region54: #{idclp_forward.1} parent=0 // pred_check
    _
  $region55: #{idclp_forward.1} parent=0 // pred_check_branch
    %10499 = sbr.rel (0) target = $region57
  $region56: #{idclp_forward.1} parent=0 // pred_region
    _
  $region57: #{idclp_forward.1} parent=0 // pred_fallthru
    _
  // Predicated region
  $region58: #{idclp_forward.1} parent=0 // pred_check
    _
  $region59: #{idclp_forward.1} parent=0 // pred_check_branch
    %10501 = sbr.rel (0) target = $region61
  $region60: #{idclp_forward.1} parent=0 // pred_region
    _
  $region61: #{idclp_forward.1} parent=0 // pred_fallthru
    _

</llo_original>
